<compile_context>
chip_gen: v6e
topology: v6e:2x2x1
jax: 0.10.0
libtpu: 0.0.40
codegen_flags: <defaults>
</compile_context>

<pallas_src>
import functools

import jax
import jax.numpy as jnp
from jax.experimental import pallas as pl
from jax.experimental.pallas import tpu as pltpu


# Static network configuration (matches the PyTorch module).
KH, KW = 7, 3          # conv kernel (height, width)
PH, PW = 3, 1          # conv padding -> 'same' output
C = 32                 # in-kernel channel width (real Cin/Cout zero-padded to 32)
PWL = 8                # left width padding in the VMEM buffers (sublane-aligned
                       # interior; only the column adjacent to the interior is
                       # ever read, the rest are harmless zeros)
PWR = PW               # right width padding


# ----------------------------------------------------------------------------
# Fused kernel: all layers for one batch item, activations resident in VMEM
# ----------------------------------------------------------------------------
def _dna_fused_kernel(xp_ref, w_ref, b_ref, o_ref, buf0_ref, buf1_ref, *,
                      H, W, n_layers, c_out_real):
    # xp_ref : (1, H+2*PH, PWL+W+PWR, C)  zero-padded input (f32)
    # w_ref  : (n_layers, KH, KW*C, C)    weights, (kw, cin) merged on axis 2 (bf16)
    # b_ref  : (n_layers, 1, C)           biases (f32)
    # o_ref  : (1, H, W, c_out_real)      output (f32)
    # buf*   : (H+2*PH, PWL+W+PWR, C)     ping-pong padded activations (f32)
    HW = H * W
    Hp = H + 2 * PH
    W0 = PWL - PW                          # base column of the conv window

    # Zero the ping-pong buffers once per batch item: the borders provide the
    # conv zero-padding and are never written again (only interiors are).
    buf0_ref[...] = jnp.zeros_like(buf0_ref)
    buf1_ref[...] = jnp.zeros_like(buf1_ref)
    bufs = (buf0_ref, buf1_ref)

    def conv_layer(read_window, layer):
        # Width-im2col, hoisted out of the tap loop: KW width-shifted views
        # concatenated on the lane axis -> (Hp, W, KW*C).
        aw = jnp.concatenate([read_window(kw) for kw in range(KW)], axis=-1)
        # Flatten once; each kh tap below is then an 8-aligned row window.
        aw2 = aw.reshape(Hp * W, KW * C).astype(jnp.bfloat16)
        acc = jnp.zeros((HW, C), dtype=jnp.float32)
        for kh in range(KH):               # 7 fat MXU matmuls, f32 accumulation
            acc = acc + jnp.dot(aw2[kh * W:kh * W + HW, :],
                                w_ref[layer, kh],
                                preferred_element_type=jnp.float32)
        return acc + b_ref[layer]          # (HW, C) f32, bias broadcast

    # ---- layer 0: read directly from the pre-padded input block ----
    read0 = lambda kw: xp_ref[0, :, W0 + kw:W0 + kw + W, :]
    act = jnp.maximum(conv_layer(read0, 0), 0.0)

    # ---- layers 1 .. n-2: ping-pong through the VMEM scratch buffers ----
    for layer in range(1, n_layers - 1):
        src = bufs[(layer - 1) % 2]
        src[PH:PH + H, PWL:PWL + W, :] = act.reshape(H, W, C)
        read = lambda kw, r=src: r[:, W0 + kw:W0 + kw + W, :]
        act = jnp.maximum(conv_layer(read, layer), 0.0)

    # ---- last layer: no ReLU; only the first c_out_real channels are real ----
    src = bufs[(n_layers - 2) % 2]
    src[PH:PH + H, PWL:PWL + W, :] = act.reshape(H, W, C)
    read = lambda kw, r=src: r[:, W0 + kw:W0 + kw + W, :]
    acc = conv_layer(read, n_layers - 1)
    o_ref[0] = acc[:, :c_out_real].reshape(H, W, c_out_real)


# ----------------------------------------------------------------------------
# Wrapper: pack weights, pad input once, launch the fused kernel
# ----------------------------------------------------------------------------
def dna_sequencer_forward(x_nchw, params):
    N, cin0, H, W = x_nchw.shape
    n_layers = len(params)
    c_out_real = params[-1][1].shape[0]
    Hp = H + 2 * PH
    Wb = PWL + W + PWR

    # NCHW -> NHWC, then one pad: spatial (height 3/3, width 8/1) and channels
    # up to C.  The extra padding columns/channels are zeros => exact.
    x_nhwc = jnp.transpose(x_nchw, (0, 2, 3, 1))
    xp = jnp.pad(x_nhwc, ((0, 0), (PH, PH), (PWL, PWR), (0, C - cin0)))

    # Pack weights: pad Cin/Cout to C, merge (KW, Cin) into the contraction
    # axis (matches the in-kernel lane concat order), stack layers, cast bf16.
    w_list, b_list = [], []
    for w, b in params:
        _, _, ci, co = w.shape
        wp = jnp.pad(w, ((0, 0), (0, 0), (0, C - ci), (0, C - co)))
        w_list.append(wp.reshape(KH, KW * C, C))
        b_list.append(jnp.pad(b, (0, C - co)))
    w_all = jnp.stack(w_list).astype(jnp.bfloat16)           # (L, KH, KW*C, C)
    b_all = jnp.stack(b_list).reshape(n_layers, 1, C)         # (L, 1, C) f32

    kernel = functools.partial(_dna_fused_kernel, H=H, W=W,
                               n_layers=n_layers, c_out_real=c_out_real)

    out_nhwc = pl.pallas_call(
        kernel,
        out_shape=jax.ShapeDtypeStruct((N, H, W, c_out_real), jnp.float32),
        grid=(N,),
        in_specs=[
            pl.BlockSpec((1, Hp, Wb, C), lambda n: (n, 0, 0, 0)),
            pl.BlockSpec((n_layers, KH, KW * C, C), lambda n: (0, 0, 0, 0)),
            pl.BlockSpec((n_layers, 1, C), lambda n: (0, 0, 0)),
        ],
        out_specs=pl.BlockSpec((1, H, W, c_out_real), lambda n: (n, 0, 0, 0)),
        scratch_shapes=[
            pltpu.VMEM((Hp, Wb, C), jnp.float32),
            pltpu.VMEM((Hp, Wb, C), jnp.float32),
        ],
        compiler_params=pltpu.CompilerParams(
            dimension_semantics=("parallel",)),
    )(xp, w_all, b_all)

    return jnp.transpose(out_nhwc, (0, 3, 1, 2))              # NHWC -> NCHW


# ----------------------------------------------------------------------------
# Deterministic parameter init (nn.Conv2d-style bounds; HWIO layout)
# ----------------------------------------------------------------------------
def init_params(key):
    layer_io = [(4, 32), (32, 32), (32, 32), (32, 32), (32, 4)]
    params = []
    for i, (cin, cout) in enumerate(layer_io):
        kw_key, kb_key = jax.random.split(jax.random.fold_in(key, i))
        fan_in = cin * KH * KW
        bound = 1.0 / jnp.sqrt(jnp.float32(fan_in))
        w = jax.random.uniform(kw_key, (KH, KW, cin, cout), jnp.float32,
                               -bound, bound)
        b = jax.random.uniform(kb_key, (cout,), jnp.float32, -bound, bound)
        params.append((w, b))
    return params


# Pure-JAX reference with the SAME bf16-input / f32-accumulate matmul precision
# as the kernel, so the comparison is tight.
def _reference_forward(x_nchw, params):
    x = jnp.transpose(x_nchw, (0, 2, 3, 1))
    n_layers = len(params)
    for i, (w, b) in enumerate(params):
        y = jax.lax.conv_general_dilated(
            x.astype(jnp.bfloat16), w.astype(jnp.bfloat16),
            window_strides=(1, 1), padding=((PH, PH), (PW, PW)),
            dimension_numbers=("NHWC", "HWIO", "NHWC"),
            preferred_element_type=jnp.float32)
        x = y + b
        if i < n_layers - 1:
            x = jnp.maximum(x, 0.0)
    return jnp.transpose(x, (0, 3, 1, 2))


if __name__ == "__main__":
    key = jax.random.PRNGKey(0)
    x_key, p_key = jax.random.split(key)

    # Small input consistent with the module: N=2, C=4 (DNA one-hot-ish), 16x16.
    x = jax.random.normal(x_key, (2, 4, 16, 16), jnp.float32)   # NCHW
    params = init_params(p_key)

    fwd = jax.jit(dna_sequencer_forward)
    out = jax.block_until_ready(fwd(x, params))
    assert out.shape == (2, 4, 16, 16), out.shape

    ref = jax.block_until_ready(_reference_forward(x, params))
    assert jnp.allclose(out, ref, atol=2e-3, rtol=2e-3), (
        float(jnp.max(jnp.abs(out - ref))))

    print("KERNEL_OK")
</pallas_src>

<mosaic_0001>
module attributes {stable_mosaic.version = 11 : i64} {
  func.func @_dna_fused_kernel(%arg0: i32, %arg1: memref<1x22x25x32xf32, #tpu.memory_space<vmem>>, %arg2: memref<5x7x96x32xbf16, #tpu.memory_space<vmem>>, %arg3: memref<5x1x32xf32, #tpu.memory_space<vmem>>, %arg4: memref<1x16x16x4xf32, #tpu.memory_space<vmem>>, %arg5: memref<22x25x32xf32, #tpu.memory_space<vmem>>, %arg6: memref<22x25x32xf32, #tpu.memory_space<vmem>>) attributes {dimension_semantics = [#tpu.dimension_semantics<parallel>], iteration_bounds = array<i64: 2>, scalar_prefetch = 0 : i64, scratch_operands = 2 : i64, tpu.core_type = #tpu.core_type<tc>, window_params = [{transform_indices = @transform_0, window_bounds = array<i64: 1, 22, 25, 32>}, {pipeline_mode = #tpu.pipeline_mode<synchronous>, transform_indices = @transform_1, window_bounds = array<i64: 5, 7, 96, 32>}, {pipeline_mode = #tpu.pipeline_mode<synchronous>, transform_indices = @transform_2, window_bounds = array<i64: 5, 1, 32>}, {transform_indices = @transform_3, window_bounds = array<i64: 1, 16, 16, 4>}]} {
    %cst = arith.constant 0.000000e+00 : f32
    %0 = vector.broadcast %cst : f32 to vector<22x25x32xf32>
    %c0 = arith.constant 0 : index
    %c0_0 = arith.constant 0 : index
    %c0_1 = arith.constant 0 : index
    %1 = vector.load %arg5[%c0, %c0_0, %c0_1] : memref<22x25x32xf32, #tpu.memory_space<vmem>>, vector<22x25x32xf32>
    tpu.vector_store %arg5[%c0, %c0_0, %c0_1], %0 {strides = array<i32>} : memref<22x25x32xf32, #tpu.memory_space<vmem>>, vector<22x25x32xf32>,
    %cst_2 = arith.constant 0.000000e+00 : f32
    %2 = vector.broadcast %cst_2 : f32 to vector<22x25x32xf32>
    %c0_3 = arith.constant 0 : index
    %c0_4 = arith.constant 0 : index
    %c0_5 = arith.constant 0 : index
    %3 = vector.load %arg6[%c0_3, %c0_4, %c0_5] : memref<22x25x32xf32, #tpu.memory_space<vmem>>, vector<22x25x32xf32>
    tpu.vector_store %arg6[%c0_3, %c0_4, %c0_5], %2 {strides = array<i32>} : memref<22x25x32xf32, #tpu.memory_space<vmem>>, vector<22x25x32xf32>,
    %c0_6 = arith.constant 0 : index
    %c0_7 = arith.constant 0 : index
    %c7 = arith.constant 7 : index
    %c0_8 = arith.constant 0 : index
    %4 = vector.load %arg1[%c0_6, %c0_7, %c7, %c0_8] : memref<1x22x25x32xf32, #tpu.memory_space<vmem>>, vector<1x22x16x32xf32>
    %5 = vector.shape_cast %4 : vector<1x22x16x32xf32> to vector<22x16x32xf32>
    %c0_9 = arith.constant 0 : index
    %c0_10 = arith.constant 0 : index
    %c8 = arith.constant 8 : index
    %c0_11 = arith.constant 0 : index
    %6 = vector.load %arg1[%c0_9, %c0_10, %c8, %c0_11] : memref<1x22x25x32xf32, #tpu.memory_space<vmem>>, vector<1x22x16x32xf32>
    %7 = vector.shape_cast %6 : vector<1x22x16x32xf32> to vector<22x16x32xf32>
    %c0_12 = arith.constant 0 : index
    %c0_13 = arith.constant 0 : index
    %c9 = arith.constant 9 : index
    %c0_14 = arith.constant 0 : index
    %8 = vector.load %arg1[%c0_12, %c0_13, %c9, %c0_14] : memref<1x22x25x32xf32, #tpu.memory_space<vmem>>, vector<1x22x16x32xf32>
    %9 = vector.shape_cast %8 : vector<1x22x16x32xf32> to vector<22x16x32xf32>
    %10 = tpu.concatenate %5, %7, %9 in 2 : vector<22x16x32xf32>, vector<22x16x32xf32>, vector<22x16x32xf32> -> vector<22x16x96xf32>
    %11 = vector.shape_cast %10 : vector<22x16x96xf32> to vector<352x96xf32>
    %12 = arith.truncf %11 : vector<352x96xf32> to vector<352x96xbf16>
    %cst_15 = arith.constant 0.000000e+00 : f32
    %13 = vector.broadcast %cst_15 : f32 to vector<256x32xf32>
    %14 = vector.extract_strided_slice %12 {offsets = [0, 0], sizes = [256, 96], strides = [1, 1]} : vector<352x96xbf16> to vector<256x96xbf16>
    %c0_16 = arith.constant 0 : index
    %c0_17 = arith.constant 0 : index
    %c0_18 = arith.constant 0 : index
    %c0_19 = arith.constant 0 : index
    %15 = vector.load %arg2[%c0_16, %c0_17, %c0_18, %c0_19] : memref<5x7x96x32xbf16, #tpu.memory_space<vmem>>, vector<1x1x96x32xbf16>
    %16 = vector.shape_cast %15 : vector<1x1x96x32xbf16> to vector<96x32xbf16>
    %cst_20 = arith.constant dense<0.000000e+00> : vector<256x32xf32>
    %17 = tpu.matmul %14, %16, %cst_20 {dimension_numbers = #tpu.dot_dimension_numbers<[1], [0], [0], [1], [0, 0, 1, 1], [], []>} : vector<256x96xbf16>, vector<96x32xbf16>, vector<256x32xf32> -> vector<256x32xf32>
    %18 = arith.addf %13, %17 : vector<256x32xf32>
    %19 = vector.extract_strided_slice %12 {offsets = [16, 0], sizes = [256, 96], strides = [1, 1]} : vector<352x96xbf16> to vector<256x96xbf16>
    %c0_21 = arith.constant 0 : index
    %c1 = arith.constant 1 : index
    %c0_22 = arith.constant 0 : index
    %c0_23 = arith.constant 0 : index
    %20 = vector.load %arg2[%c0_21, %c1, %c0_22, %c0_23] : memref<5x7x96x32xbf16, #tpu.memory_space<vmem>>, vector<1x1x96x32xbf16>
    %21 = vector.shape_cast %20 : vector<1x1x96x32xbf16> to vector<96x32xbf16>
    %cst_24 = arith.constant dense<0.000000e+00> : vector<256x32xf32>
    %22 = tpu.matmul %19, %21, %cst_24 {dimension_numbers = #tpu.dot_dimension_numbers<[1], [0], [0], [1], [0, 0, 1, 1], [], []>} : vector<256x96xbf16>, vector<96x32xbf16>, vector<256x32xf32> -> vector<256x32xf32>
    %23 = arith.addf %18, %22 : vector<256x32xf32>
    %24 = vector.extract_strided_slice %12 {offsets = [32, 0], sizes = [256, 96], strides = [1, 1]} : vector<352x96xbf16> to vector<256x96xbf16>
    %c0_25 = arith.constant 0 : index
    %c2 = arith.constant 2 : index
    %c0_26 = arith.constant 0 : index
    %c0_27 = arith.constant 0 : index
    %25 = vector.load %arg2[%c0_25, %c2, %c0_26, %c0_27] : memref<5x7x96x32xbf16, #tpu.memory_space<vmem>>, vector<1x1x96x32xbf16>
    %26 = vector.shape_cast %25 : vector<1x1x96x32xbf16> to vector<96x32xbf16>
    %cst_28 = arith.constant dense<0.000000e+00> : vector<256x32xf32>
    %27 = tpu.matmul %24, %26, %cst_28 {dimension_numbers = #tpu.dot_dimension_numbers<[1], [0], [0], [1], [0, 0, 1, 1], [], []>} : vector<256x96xbf16>, vector<96x32xbf16>, vector<256x32xf32> -> vector<256x32xf32>
    %28 = arith.addf %23, %27 : vector<256x32xf32>
    %29 = vector.extract_strided_slice %12 {offsets = [48, 0], sizes = [256, 96], strides = [1, 1]} : vector<352x96xbf16> to vector<256x96xbf16>
    %c0_29 = arith.constant 0 : index
    %c3 = arith.constant 3 : index
    %c0_30 = arith.constant 0 : index
    %c0_31 = arith.constant 0 : index
    %30 = vector.load %arg2[%c0_29, %c3, %c0_30, %c0_31] : memref<5x7x96x32xbf16, #tpu.memory_space<vmem>>, vector<1x1x96x32xbf16>
    %31 = vector.shape_cast %30 : vector<1x1x96x32xbf16> to vector<96x32xbf16>
    %cst_32 = arith.constant dense<0.000000e+00> : vector<256x32xf32>
    %32 = tpu.matmul %29, %31, %cst_32 {dimension_numbers = #tpu.dot_dimension_numbers<[1], [0], [0], [1], [0, 0, 1, 1], [], []>} : vector<256x96xbf16>, vector<96x32xbf16>, vector<256x32xf32> -> vector<256x32xf32>
    %33 = arith.addf %28, %32 : vector<256x32xf32>
    %34 = vector.extract_strided_slice %12 {offsets = [64, 0], sizes = [256, 96], strides = [1, 1]} : vector<352x96xbf16> to vector<256x96xbf16>
    %c0_33 = arith.constant 0 : index
    %c4 = arith.constant 4 : index
    %c0_34 = arith.constant 0 : index
    %c0_35 = arith.constant 0 : index
    %35 = vector.load %arg2[%c0_33, %c4, %c0_34, %c0_35] : memref<5x7x96x32xbf16, #tpu.memory_space<vmem>>, vector<1x1x96x32xbf16>
    %36 = vector.shape_cast %35 : vector<1x1x96x32xbf16> to vector<96x32xbf16>
    %cst_36 = arith.constant dense<0.000000e+00> : vector<256x32xf32>
    %37 = tpu.matmul %34, %36, %cst_36 {dimension_numbers = #tpu.dot_dimension_numbers<[1], [0], [0], [1], [0, 0, 1, 1], [], []>} : vector<256x96xbf16>, vector<96x32xbf16>, vector<256x32xf32> -> vector<256x32xf32>
    %38 = arith.addf %33, %37 : vector<256x32xf32>
    %39 = vector.extract_strided_slice %12 {offsets = [80, 0], sizes = [256, 96], strides = [1, 1]} : vector<352x96xbf16> to vector<256x96xbf16>
    %c0_37 = arith.constant 0 : index
    %c5 = arith.constant 5 : index
    %c0_38 = arith.constant 0 : index
    %c0_39 = arith.constant 0 : index
    %40 = vector.load %arg2[%c0_37, %c5, %c0_38, %c0_39] : memref<5x7x96x32xbf16, #tpu.memory_space<vmem>>, vector<1x1x96x32xbf16>
    %41 = vector.shape_cast %40 : vector<1x1x96x32xbf16> to vector<96x32xbf16>
    %cst_40 = arith.constant dense<0.000000e+00> : vector<256x32xf32>
    %42 = tpu.matmul %39, %41, %cst_40 {dimension_numbers = #tpu.dot_dimension_numbers<[1], [0], [0], [1], [0, 0, 1, 1], [], []>} : vector<256x96xbf16>, vector<96x32xbf16>, vector<256x32xf32> -> vector<256x32xf32>
    %43 = arith.addf %38, %42 : vector<256x32xf32>
    %44 = vector.extract_strided_slice %12 {offsets = [96, 0], sizes = [256, 96], strides = [1, 1]} : vector<352x96xbf16> to vector<256x96xbf16>
    %c0_41 = arith.constant 0 : index
    %c6 = arith.constant 6 : index
    %c0_42 = arith.constant 0 : index
    %c0_43 = arith.constant 0 : index
    %45 = vector.load %arg2[%c0_41, %c6, %c0_42, %c0_43] : memref<5x7x96x32xbf16, #tpu.memory_space<vmem>>, vector<1x1x96x32xbf16>
    %46 = vector.shape_cast %45 : vector<1x1x96x32xbf16> to vector<96x32xbf16>
    %cst_44 = arith.constant dense<0.000000e+00> : vector<256x32xf32>
    %47 = tpu.matmul %44, %46, %cst_44 {dimension_numbers = #tpu.dot_dimension_numbers<[1], [0], [0], [1], [0, 0, 1, 1], [], []>} : vector<256x96xbf16>, vector<96x32xbf16>, vector<256x32xf32> -> vector<256x32xf32>
    %48 = arith.addf %43, %47 : vector<256x32xf32>
    %c0_45 = arith.constant 0 : index
    %c0_46 = arith.constant 0 : index
    %c0_47 = arith.constant 0 : index
    %49 = vector.load %arg3[%c0_45, %c0_46, %c0_47] : memref<5x1x32xf32, #tpu.memory_space<vmem>>, vector<1x1x32xf32>
    %50 = vector.shape_cast %49 : vector<1x1x32xf32> to vector<1x32xf32>
    %51 = vector.broadcast %50 : vector<1x32xf32> to vector<256x32xf32>
    %52 = arith.addf %48, %51 : vector<256x32xf32>
    %cst_48 = arith.constant 0.000000e+00 : f32
    %53 = vector.broadcast %cst_48 : f32 to vector<256x32xf32>
    %54 = arith.maximumf %52, %53 : vector<256x32xf32>
    %55 = vector.shape_cast %54 : vector<256x32xf32> to vector<16x16x32xf32>
    %c3_49 = arith.constant 3 : index
    %c8_50 = arith.constant 8 : index
    %c0_51 = arith.constant 0 : index
    %56 = vector.load %arg5[%c3_49, %c8_50, %c0_51] : memref<22x25x32xf32, #tpu.memory_space<vmem>>, vector<16x16x32xf32>
    tpu.vector_store %arg5[%c3_49, %c8_50, %c0_51], %55 {strides = array<i32>} : memref<22x25x32xf32, #tpu.memory_space<vmem>>, vector<16x16x32xf32>,
    %c0_52 = arith.constant 0 : index
    %c7_53 = arith.constant 7 : index
    %c0_54 = arith.constant 0 : index
    %57 = vector.load %arg5[%c0_52, %c7_53, %c0_54] : memref<22x25x32xf32, #tpu.memory_space<vmem>>, vector<22x16x32xf32>
    %c0_55 = arith.constant 0 : index
    %c8_56 = arith.constant 8 : index
    %c0_57 = arith.constant 0 : index
    %58 = vector.load %arg5[%c0_55, %c8_56, %c0_57] : memref<22x25x32xf32, #tpu.memory_space<vmem>>, vector<22x16x32xf32>
    %c0_58 = arith.constant 0 : index
    %c9_59 = arith.constant 9 : index
    %c0_60 = arith.constant 0 : index
    %59 = vector.load %arg5[%c0_58, %c9_59, %c0_60] : memref<22x25x32xf32, #tpu.memory_space<vmem>>, vector<22x16x32xf32>
    %60 = tpu.concatenate %57, %58, %59 in 2 : vector<22x16x32xf32>, vector<22x16x32xf32>, vector<22x16x32xf32> -> vector<22x16x96xf32>
    %61 = vector.shape_cast %60 : vector<22x16x96xf32> to vector<352x96xf32>
    %62 = arith.truncf %61 : vector<352x96xf32> to vector<352x96xbf16>
    %cst_61 = arith.constant 0.000000e+00 : f32
    %63 = vector.broadcast %cst_61 : f32 to vector<256x32xf32>
    %64 = vector.extract_strided_slice %62 {offsets = [0, 0], sizes = [256, 96], strides = [1, 1]} : vector<352x96xbf16> to vector<256x96xbf16>
    %c1_62 = arith.constant 1 : index
    %c0_63 = arith.constant 0 : index
    %c0_64 = arith.constant 0 : index
    %c0_65 = arith.constant 0 : index
    %65 = vector.load %arg2[%c1_62, %c0_63, %c0_64, %c0_65] : memref<5x7x96x32xbf16, #tpu.memory_space<vmem>>, vector<1x1x96x32xbf16>
    %66 = vector.shape_cast %65 : vector<1x1x96x32xbf16> to vector<96x32xbf16>
    %cst_66 = arith.constant dense<0.000000e+00> : vector<256x32xf32>
    %67 = tpu.matmul %64, %66, %cst_66 {dimension_numbers = #tpu.dot_dimension_numbers<[1], [0], [0], [1], [0, 0, 1, 1], [], []>} : vector<256x96xbf16>, vector<96x32xbf16>, vector<256x32xf32> -> vector<256x32xf32>
    %68 = arith.addf %63, %67 : vector<256x32xf32>
    %69 = vector.extract_strided_slice %62 {offsets = [16, 0], sizes = [256, 96], strides = [1, 1]} : vector<352x96xbf16> to vector<256x96xbf16>
    %c1_67 = arith.constant 1 : index
    %c1_68 = arith.constant 1 : index
    %c0_69 = arith.constant 0 : index
    %c0_70 = arith.constant 0 : index
    %70 = vector.load %arg2[%c1_67, %c1_68, %c0_69, %c0_70] : memref<5x7x96x32xbf16, #tpu.memory_space<vmem>>, vector<1x1x96x32xbf16>
    %71 = vector.shape_cast %70 : vector<1x1x96x32xbf16> to vector<96x32xbf16>
    %cst_71 = arith.constant dense<0.000000e+00> : vector<256x32xf32>
    %72 = tpu.matmul %69, %71, %cst_71 {dimension_numbers = #tpu.dot_dimension_numbers<[1], [0], [0], [1], [0, 0, 1, 1], [], []>} : vector<256x96xbf16>, vector<96x32xbf16>, vector<256x32xf32> -> vector<256x32xf32>
    %73 = arith.addf %68, %72 : vector<256x32xf32>
    %74 = vector.extract_strided_slice %62 {offsets = [32, 0], sizes = [256, 96], strides = [1, 1]} : vector<352x96xbf16> to vector<256x96xbf16>
    %c1_72 = arith.constant 1 : index
    %c2_73 = arith.constant 2 : index
    %c0_74 = arith.constant 0 : index
    %c0_75 = arith.constant 0 : index
    %75 = vector.load %arg2[%c1_72, %c2_73, %c0_74, %c0_75] : memref<5x7x96x32xbf16, #tpu.memory_space<vmem>>, vector<1x1x96x32xbf16>
    %76 = vector.shape_cast %75 : vector<1x1x96x32xbf16> to vector<96x32xbf16>
    %cst_76 = arith.constant dense<0.000000e+00> : vector<256x32xf32>
    %77 = tpu.matmul %74, %76, %cst_76 {dimension_numbers = #tpu.dot_dimension_numbers<[1], [0], [0], [1], [0, 0, 1, 1], [], []>} : vector<256x96xbf16>, vector<96x32xbf16>, vector<256x32xf32> -> vector<256x32xf32>
    %78 = arith.addf %73, %77 : vector<256x32xf32>
    %79 = vector.extract_strided_slice %62 {offsets = [48, 0], sizes = [256, 96], strides = [1, 1]} : vector<352x96xbf16> to vector<256x96xbf16>
    %c1_77 = arith.constant 1 : index
    %c3_78 = arith.constant 3 : index
    %c0_79 = arith.constant 0 : index
    %c0_80 = arith.constant 0 : index
    %80 = vector.load %arg2[%c1_77, %c3_78, %c0_79, %c0_80] : memref<5x7x96x32xbf16, #tpu.memory_space<vmem>>, vector<1x1x96x32xbf16>
    %81 = vector.shape_cast %80 : vector<1x1x96x32xbf16> to vector<96x32xbf16>
    %cst_81 = arith.constant dense<0.000000e+00> : vector<256x32xf32>
    %82 = tpu.matmul %79, %81, %cst_81 {dimension_numbers = #tpu.dot_dimension_numbers<[1], [0], [0], [1], [0, 0, 1, 1], [], []>} : vector<256x96xbf16>, vector<96x32xbf16>, vector<256x32xf32> -> vector<256x32xf32>
    %83 = arith.addf %78, %82 : vector<256x32xf32>
    %84 = vector.extract_strided_slice %62 {offsets = [64, 0], sizes = [256, 96], strides = [1, 1]} : vector<352x96xbf16> to vector<256x96xbf16>
    %c1_82 = arith.constant 1 : index
    %c4_83 = arith.constant 4 : index
    %c0_84 = arith.constant 0 : index
    %c0_85 = arith.constant 0 : index
    %85 = vector.load %arg2[%c1_82, %c4_83, %c0_84, %c0_85] : memref<5x7x96x32xbf16, #tpu.memory_space<vmem>>, vector<1x1x96x32xbf16>
    %86 = vector.shape_cast %85 : vector<1x1x96x32xbf16> to vector<96x32xbf16>
    %cst_86 = arith.constant dense<0.000000e+00> : vector<256x32xf32>
    %87 = tpu.matmul %84, %86, %cst_86 {dimension_numbers = #tpu.dot_dimension_numbers<[1], [0], [0], [1], [0, 0, 1, 1], [], []>} : vector<256x96xbf16>, vector<96x32xbf16>, vector<256x32xf32> -> vector<256x32xf32>
    %88 = arith.addf %83, %87 : vector<256x32xf32>
    %89 = vector.extract_strided_slice %62 {offsets = [80, 0], sizes = [256, 96], strides = [1, 1]} : vector<352x96xbf16> to vector<256x96xbf16>
    %c1_87 = arith.constant 1 : index
    %c5_88 = arith.constant 5 : index
    %c0_89 = arith.constant 0 : index
    %c0_90 = arith.constant 0 : index
    %90 = vector.load %arg2[%c1_87, %c5_88, %c0_89, %c0_90] : memref<5x7x96x32xbf16, #tpu.memory_space<vmem>>, vector<1x1x96x32xbf16>
    %91 = vector.shape_cast %90 : vector<1x1x96x32xbf16> to vector<96x32xbf16>
    %cst_91 = arith.constant dense<0.000000e+00> : vector<256x32xf32>
    %92 = tpu.matmul %89, %91, %cst_91 {dimension_numbers = #tpu.dot_dimension_numbers<[1], [0], [0], [1], [0, 0, 1, 1], [], []>} : vector<256x96xbf16>, vector<96x32xbf16>, vector<256x32xf32> -> vector<256x32xf32>
    %93 = arith.addf %88, %92 : vector<256x32xf32>
    %94 = vector.extract_strided_slice %62 {offsets = [96, 0], sizes = [256, 96], strides = [1, 1]} : vector<352x96xbf16> to vector<256x96xbf16>
    %c1_92 = arith.constant 1 : index
    %c6_93 = arith.constant 6 : index
    %c0_94 = arith.constant 0 : index
    %c0_95 = arith.constant 0 : index
    %95 = vector.load %arg2[%c1_92, %c6_93, %c0_94, %c0_95] : memref<5x7x96x32xbf16, #tpu.memory_space<vmem>>, vector<1x1x96x32xbf16>
    %96 = vector.shape_cast %95 : vector<1x1x96x32xbf16> to vector<96x32xbf16>
    %cst_96 = arith.constant dense<0.000000e+00> : vector<256x32xf32>
    %97 = tpu.matmul %94, %96, %cst_96 {dimension_numbers = #tpu.dot_dimension_numbers<[1], [0], [0], [1], [0, 0, 1, 1], [], []>} : vector<256x96xbf16>, vector<96x32xbf16>, vector<256x32xf32> -> vector<256x32xf32>
    %98 = arith.addf %93, %97 : vector<256x32xf32>
    %c1_97 = arith.constant 1 : index
    %c0_98 = arith.constant 0 : index
    %c0_99 = arith.constant 0 : index
    %99 = vector.load %arg3[%c1_97, %c0_98, %c0_99] : memref<5x1x32xf32, #tpu.memory_space<vmem>>, vector<1x1x32xf32>
    %100 = vector.shape_cast %99 : vector<1x1x32xf32> to vector<1x32xf32>
    %101 = vector.broadcast %100 : vector<1x32xf32> to vector<256x32xf32>
    %102 = arith.addf %98, %101 : vector<256x32xf32>
    %cst_100 = arith.constant 0.000000e+00 : f32
    %103 = vector.broadcast %cst_100 : f32 to vector<256x32xf32>
    %104 = arith.maximumf %102, %103 : vector<256x32xf32>
    %105 = vector.shape_cast %104 : vector<256x32xf32> to vector<16x16x32xf32>
    %c3_101 = arith.constant 3 : index
    %c8_102 = arith.constant 8 : index
    %c0_103 = arith.constant 0 : index
    %106 = vector.load %arg6[%c3_101, %c8_102, %c0_103] : memref<22x25x32xf32, #tpu.memory_space<vmem>>, vector<16x16x32xf32>
    tpu.vector_store %arg6[%c3_101, %c8_102, %c0_103], %105 {strides = array<i32>} : memref<22x25x32xf32, #tpu.memory_space<vmem>>, vector<16x16x32xf32>,
    %c0_104 = arith.constant 0 : index
    %c7_105 = arith.constant 7 : index
    %c0_106 = arith.constant 0 : index
    %107 = vector.load %arg6[%c0_104, %c7_105, %c0_106] : memref<22x25x32xf32, #tpu.memory_space<vmem>>, vector<22x16x32xf32>
    %c0_107 = arith.constant 0 : index
    %c8_108 = arith.constant 8 : index
    %c0_109 = arith.constant 0 : index
    %108 = vector.load %arg6[%c0_107, %c8_108, %c0_109] : memref<22x25x32xf32, #tpu.memory_space<vmem>>, vector<22x16x32xf32>
    %c0_110 = arith.constant 0 : index
    %c9_111 = arith.constant 9 : index
    %c0_112 = arith.constant 0 : index
    %109 = vector.load %arg6[%c0_110, %c9_111, %c0_112] : memref<22x25x32xf32, #tpu.memory_space<vmem>>, vector<22x16x32xf32>
    %110 = tpu.concatenate %107, %108, %109 in 2 : vector<22x16x32xf32>, vector<22x16x32xf32>, vector<22x16x32xf32> -> vector<22x16x96xf32>
    %111 = vector.shape_cast %110 : vector<22x16x96xf32> to vector<352x96xf32>
    %112 = arith.truncf %111 : vector<352x96xf32> to vector<352x96xbf16>
    %cst_113 = arith.constant 0.000000e+00 : f32
    %113 = vector.broadcast %cst_113 : f32 to vector<256x32xf32>
    %114 = vector.extract_strided_slice %112 {offsets = [0, 0], sizes = [256, 96], strides = [1, 1]} : vector<352x96xbf16> to vector<256x96xbf16>
    %c2_114 = arith.constant 2 : index
    %c0_115 = arith.constant 0 : index
    %c0_116 = arith.constant 0 : index
    %c0_117 = arith.constant 0 : index
    %115 = vector.load %arg2[%c2_114, %c0_115, %c0_116, %c0_117] : memref<5x7x96x32xbf16, #tpu.memory_space<vmem>>, vector<1x1x96x32xbf16>
    %116 = vector.shape_cast %115 : vector<1x1x96x32xbf16> to vector<96x32xbf16>
    %cst_118 = arith.constant dense<0.000000e+00> : vector<256x32xf32>
    %117 = tpu.matmul %114, %116, %cst_118 {dimension_numbers = #tpu.dot_dimension_numbers<[1], [0], [0], [1], [0, 0, 1, 1], [], []>} : vector<256x96xbf16>, vector<96x32xbf16>, vector<256x32xf32> -> vector<256x32xf32>
    %118 = arith.addf %113, %117 : vector<256x32xf32>
    %119 = vector.extract_strided_slice %112 {offsets = [16, 0], sizes = [256, 96], strides = [1, 1]} : vector<352x96xbf16> to vector<256x96xbf16>
    %c2_119 = arith.constant 2 : index
    %c1_120 = arith.constant 1 : index
    %c0_121 = arith.constant 0 : index
    %c0_122 = arith.constant 0 : index
    %120 = vector.load %arg2[%c2_119, %c1_120, %c0_121, %c0_122] : memref<5x7x96x32xbf16, #tpu.memory_space<vmem>>, vector<1x1x96x32xbf16>
    %121 = vector.shape_cast %120 : vector<1x1x96x32xbf16> to vector<96x32xbf16>
    %cst_123 = arith.constant dense<0.000000e+00> : vector<256x32xf32>
    %122 = tpu.matmul %119, %121, %cst_123 {dimension_numbers = #tpu.dot_dimension_numbers<[1], [0], [0], [1], [0, 0, 1, 1], [], []>} : vector<256x96xbf16>, vector<96x32xbf16>, vector<256x32xf32> -> vector<256x32xf32>
    %123 = arith.addf %118, %122 : vector<256x32xf32>
    %124 = vector.extract_strided_slice %112 {offsets = [32, 0], sizes = [256, 96], strides = [1, 1]} : vector<352x96xbf16> to vector<256x96xbf16>
    %c2_124 = arith.constant 2 : index
    %c2_125 = arith.constant 2 : index
    %c0_126 = arith.constant 0 : index
    %c0_127 = arith.constant 0 : index
    %125 = vector.load %arg2[%c2_124, %c2_125, %c0_126, %c0_127] : memref<5x7x96x32xbf16, #tpu.memory_space<vmem>>, vector<1x1x96x32xbf16>
    %126 = vector.shape_cast %125 : vector<1x1x96x32xbf16> to vector<96x32xbf16>
    %cst_128 = arith.constant dense<0.000000e+00> : vector<256x32xf32>
    %127 = tpu.matmul %124, %126, %cst_128 {dimension_numbers = #tpu.dot_dimension_numbers<[1], [0], [0], [1], [0, 0, 1, 1], [], []>} : vector<256x96xbf16>, vector<96x32xbf16>, vector<256x32xf32> -> vector<256x32xf32>
    %128 = arith.addf %123, %127 : vector<256x32xf32>
    %129 = vector.extract_strided_slice %112 {offsets = [48, 0], sizes = [256, 96], strides = [1, 1]} : vector<352x96xbf16> to vector<256x96xbf16>
    %c2_129 = arith.constant 2 : index
    %c3_130 = arith.constant 3 : index
    %c0_131 = arith.constant 0 : index
    %c0_132 = arith.constant 0 : index
    %130 = vector.load %arg2[%c2_129, %c3_130, %c0_131, %c0_132] : memref<5x7x96x32xbf16, #tpu.memory_space<vmem>>, vector<1x1x96x32xbf16>
    %131 = vector.shape_cast %130 : vector<1x1x96x32xbf16> to vector<96x32xbf16>
    %cst_133 = arith.constant dense<0.000000e+00> : vector<256x32xf32>
    %132 = tpu.matmul %129, %131, %cst_133 {dimension_numbers = #tpu.dot_dimension_numbers<[1], [0], [0], [1], [0, 0, 1, 1], [], []>} : vector<256x96xbf16>, vector<96x32xbf16>, vector<256x32xf32> -> vector<256x32xf32>
    %133 = arith.addf %128, %132 : vector<256x32xf32>
    %134 = vector.extract_strided_slice %112 {offsets = [64, 0], sizes = [256, 96], strides = [1, 1]} : vector<352x96xbf16> to vector<256x96xbf16>
    %c2_134 = arith.constant 2 : index
    %c4_135 = arith.constant 4 : index
    %c0_136 = arith.constant 0 : index
    %c0_137 = arith.constant 0 : index
    %135 = vector.load %arg2[%c2_134, %c4_135, %c0_136, %c0_137] : memref<5x7x96x32xbf16, #tpu.memory_space<vmem>>, vector<1x1x96x32xbf16>
    %136 = vector.shape_cast %135 : vector<1x1x96x32xbf16> to vector<96x32xbf16>
    %cst_138 = arith.constant dense<0.000000e+00> : vector<256x32xf32>
    %137 = tpu.matmul %134, %136, %cst_138 {dimension_numbers = #tpu.dot_dimension_numbers<[1], [0], [0], [1], [0, 0, 1, 1], [], []>} : vector<256x96xbf16>, vector<96x32xbf16>, vector<256x32xf32> -> vector<256x32xf32>
    %138 = arith.addf %133, %137 : vector<256x32xf32>
    %139 = vector.extract_strided_slice %112 {offsets = [80, 0], sizes = [256, 96], strides = [1, 1]} : vector<352x96xbf16> to vector<256x96xbf16>
    %c2_139 = arith.constant 2 : index
    %c5_140 = arith.constant 5 : index
    %c0_141 = arith.constant 0 : index
    %c0_142 = arith.constant 0 : index
    %140 = vector.load %arg2[%c2_139, %c5_140, %c0_141, %c0_142] : memref<5x7x96x32xbf16, #tpu.memory_space<vmem>>, vector<1x1x96x32xbf16>
    %141 = vector.shape_cast %140 : vector<1x1x96x32xbf16> to vector<96x32xbf16>
    %cst_143 = arith.constant dense<0.000000e+00> : vector<256x32xf32>
    %142 = tpu.matmul %139, %141, %cst_143 {dimension_numbers = #tpu.dot_dimension_numbers<[1], [0], [0], [1], [0, 0, 1, 1], [], []>} : vector<256x96xbf16>, vector<96x32xbf16>, vector<256x32xf32> -> vector<256x32xf32>
    %143 = arith.addf %138, %142 : vector<256x32xf32>
    %144 = vector.extract_strided_slice %112 {offsets = [96, 0], sizes = [256, 96], strides = [1, 1]} : vector<352x96xbf16> to vector<256x96xbf16>
    %c2_144 = arith.constant 2 : index
    %c6_145 = arith.constant 6 : index
    %c0_146 = arith.constant 0 : index
    %c0_147 = arith.constant 0 : index
    %145 = vector.load %arg2[%c2_144, %c6_145, %c0_146, %c0_147] : memref<5x7x96x32xbf16, #tpu.memory_space<vmem>>, vector<1x1x96x32xbf16>
    %146 = vector.shape_cast %145 : vector<1x1x96x32xbf16> to vector<96x32xbf16>
    %cst_148 = arith.constant dense<0.000000e+00> : vector<256x32xf32>
    %147 = tpu.matmul %144, %146, %cst_148 {dimension_numbers = #tpu.dot_dimension_numbers<[1], [0], [0], [1], [0, 0, 1, 1], [], []>} : vector<256x96xbf16>, vector<96x32xbf16>, vector<256x32xf32> -> vector<256x32xf32>
    %148 = arith.addf %143, %147 : vector<256x32xf32>
    %c2_149 = arith.constant 2 : index
    %c0_150 = arith.constant 0 : index
    %c0_151 = arith.constant 0 : index
    %149 = vector.load %arg3[%c2_149, %c0_150, %c0_151] : memref<5x1x32xf32, #tpu.memory_space<vmem>>, vector<1x1x32xf32>
    %150 = vector.shape_cast %149 : vector<1x1x32xf32> to vector<1x32xf32>
    %151 = vector.broadcast %150 : vector<1x32xf32> to vector<256x32xf32>
    %152 = arith.addf %148, %151 : vector<256x32xf32>
    %cst_152 = arith.constant 0.000000e+00 : f32
    %153 = vector.broadcast %cst_152 : f32 to vector<256x32xf32>
    %154 = arith.maximumf %152, %153 : vector<256x32xf32>
    %155 = vector.shape_cast %154 : vector<256x32xf32> to vector<16x16x32xf32>
    %c3_153 = arith.constant 3 : index
    %c8_154 = arith.constant 8 : index
    %c0_155 = arith.constant 0 : index
    %156 = vector.load %arg5[%c3_153, %c8_154, %c0_155] : memref<22x25x32xf32, #tpu.memory_space<vmem>>, vector<16x16x32xf32>
    tpu.vector_store %arg5[%c3_153, %c8_154, %c0_155], %155 {strides = array<i32>} : memref<22x25x32xf32, #tpu.memory_space<vmem>>, vector<16x16x32xf32>,
    %c0_156 = arith.constant 0 : index
    %c7_157 = arith.constant 7 : index
    %c0_158 = arith.constant 0 : index
    %157 = vector.load %arg5[%c0_156, %c7_157, %c0_158] : memref<22x25x32xf32, #tpu.memory_space<vmem>>, vector<22x16x32xf32>
    %c0_159 = arith.constant 0 : index
    %c8_160 = arith.constant 8 : index
    %c0_161 = arith.constant 0 : index
    %158 = vector.load %arg5[%c0_159, %c8_160, %c0_161] : memref<22x25x32xf32, #tpu.memory_space<vmem>>, vector<22x16x32xf32>
    %c0_162 = arith.constant 0 : index
    %c9_163 = arith.constant 9 : index
    %c0_164 = arith.constant 0 : index
    %159 = vector.load %arg5[%c0_162, %c9_163, %c0_164] : memref<22x25x32xf32, #tpu.memory_space<vmem>>, vector<22x16x32xf32>
    %160 = tpu.concatenate %157, %158, %159 in 2 : vector<22x16x32xf32>, vector<22x16x32xf32>, vector<22x16x32xf32> -> vector<22x16x96xf32>
    %161 = vector.shape_cast %160 : vector<22x16x96xf32> to vector<352x96xf32>
    %162 = arith.truncf %161 : vector<352x96xf32> to vector<352x96xbf16>
    %cst_165 = arith.constant 0.000000e+00 : f32
    %163 = vector.broadcast %cst_165 : f32 to vector<256x32xf32>
    %164 = vector.extract_strided_slice %162 {offsets = [0, 0], sizes = [256, 96], strides = [1, 1]} : vector<352x96xbf16> to vector<256x96xbf16>
    %c3_166 = arith.constant 3 : index
    %c0_167 = arith.constant 0 : index
    %c0_168 = arith.constant 0 : index
    %c0_169 = arith.constant 0 : index
    %165 = vector.load %arg2[%c3_166, %c0_167, %c0_168, %c0_169] : memref<5x7x96x32xbf16, #tpu.memory_space<vmem>>, vector<1x1x96x32xbf16>
    %166 = vector.shape_cast %165 : vector<1x1x96x32xbf16> to vector<96x32xbf16>
    %cst_170 = arith.constant dense<0.000000e+00> : vector<256x32xf32>
    %167 = tpu.matmul %164, %166, %cst_170 {dimension_numbers = #tpu.dot_dimension_numbers<[1], [0], [0], [1], [0, 0, 1, 1], [], []>} : vector<256x96xbf16>, vector<96x32xbf16>, vector<256x32xf32> -> vector<256x32xf32>
    %168 = arith.addf %163, %167 : vector<256x32xf32>
    %169 = vector.extract_strided_slice %162 {offsets = [16, 0], sizes = [256, 96], strides = [1, 1]} : vector<352x96xbf16> to vector<256x96xbf16>
    %c3_171 = arith.constant 3 : index
    %c1_172 = arith.constant 1 : index
    %c0_173 = arith.constant 0 : index
    %c0_174 = arith.constant 0 : index
    %170 = vector.load %arg2[%c3_171, %c1_172, %c0_173, %c0_174] : memref<5x7x96x32xbf16, #tpu.memory_space<vmem>>, vector<1x1x96x32xbf16>
    %171 = vector.shape_cast %170 : vector<1x1x96x32xbf16> to vector<96x32xbf16>
    %cst_175 = arith.constant dense<0.000000e+00> : vector<256x32xf32>
    %172 = tpu.matmul %169, %171, %cst_175 {dimension_numbers = #tpu.dot_dimension_numbers<[1], [0], [0], [1], [0, 0, 1, 1], [], []>} : vector<256x96xbf16>, vector<96x32xbf16>, vector<256x32xf32> -> vector<256x32xf32>
    %173 = arith.addf %168, %172 : vector<256x32xf32>
    %174 = vector.extract_strided_slice %162 {offsets = [32, 0], sizes = [256, 96], strides = [1, 1]} : vector<352x96xbf16> to vector<256x96xbf16>
    %c3_176 = arith.constant 3 : index
    %c2_177 = arith.constant 2 : index
    %c0_178 = arith.constant 0 : index
    %c0_179 = arith.constant 0 : index
    %175 = vector.load %arg2[%c3_176, %c2_177, %c0_178, %c0_179] : memref<5x7x96x32xbf16, #tpu.memory_space<vmem>>, vector<1x1x96x32xbf16>
    %176 = vector.shape_cast %175 : vector<1x1x96x32xbf16> to vector<96x32xbf16>
    %cst_180 = arith.constant dense<0.000000e+00> : vector<256x32xf32>
    %177 = tpu.matmul %174, %176, %cst_180 {dimension_numbers = #tpu.dot_dimension_numbers<[1], [0], [0], [1], [0, 0, 1, 1], [], []>} : vector<256x96xbf16>, vector<96x32xbf16>, vector<256x32xf32> -> vector<256x32xf32>
    %178 = arith.addf %173, %177 : vector<256x32xf32>
    %179 = vector.extract_strided_slice %162 {offsets = [48, 0], sizes = [256, 96], strides = [1, 1]} : vector<352x96xbf16> to vector<256x96xbf16>
    %c3_181 = arith.constant 3 : index
    %c3_182 = arith.constant 3 : index
    %c0_183 = arith.constant 0 : index
    %c0_184 = arith.constant 0 : index
    %180 = vector.load %arg2[%c3_181, %c3_182, %c0_183, %c0_184] : memref<5x7x96x32xbf16, #tpu.memory_space<vmem>>, vector<1x1x96x32xbf16>
    %181 = vector.shape_cast %180 : vector<1x1x96x32xbf16> to vector<96x32xbf16>
    %cst_185 = arith.constant dense<0.000000e+00> : vector<256x32xf32>
    %182 = tpu.matmul %179, %181, %cst_185 {dimension_numbers = #tpu.dot_dimension_numbers<[1], [0], [0], [1], [0, 0, 1, 1], [], []>} : vector<256x96xbf16>, vector<96x32xbf16>, vector<256x32xf32> -> vector<256x32xf32>
    %183 = arith.addf %178, %182 : vector<256x32xf32>
    %184 = vector.extract_strided_slice %162 {offsets = [64, 0], sizes = [256, 96], strides = [1, 1]} : vector<352x96xbf16> to vector<256x96xbf16>
    %c3_186 = arith.constant 3 : index
    %c4_187 = arith.constant 4 : index
    %c0_188 = arith.constant 0 : index
    %c0_189 = arith.constant 0 : index
    %185 = vector.load %arg2[%c3_186, %c4_187, %c0_188, %c0_189] : memref<5x7x96x32xbf16, #tpu.memory_space<vmem>>, vector<1x1x96x32xbf16>
    %186 = vector.shape_cast %185 : vector<1x1x96x32xbf16> to vector<96x32xbf16>
    %cst_190 = arith.constant dense<0.000000e+00> : vector<256x32xf32>
    %187 = tpu.matmul %184, %186, %cst_190 {dimension_numbers = #tpu.dot_dimension_numbers<[1], [0], [0], [1], [0, 0, 1, 1], [], []>} : vector<256x96xbf16>, vector<96x32xbf16>, vector<256x32xf32> -> vector<256x32xf32>
    %188 = arith.addf %183, %187 : vector<256x32xf32>
    %189 = vector.extract_strided_slice %162 {offsets = [80, 0], sizes = [256, 96], strides = [1, 1]} : vector<352x96xbf16> to vector<256x96xbf16>
    %c3_191 = arith.constant 3 : index
    %c5_192 = arith.constant 5 : index
    %c0_193 = arith.constant 0 : index
    %c0_194 = arith.constant 0 : index
    %190 = vector.load %arg2[%c3_191, %c5_192, %c0_193, %c0_194] : memref<5x7x96x32xbf16, #tpu.memory_space<vmem>>, vector<1x1x96x32xbf16>
    %191 = vector.shape_cast %190 : vector<1x1x96x32xbf16> to vector<96x32xbf16>
    %cst_195 = arith.constant dense<0.000000e+00> : vector<256x32xf32>
    %192 = tpu.matmul %189, %191, %cst_195 {dimension_numbers = #tpu.dot_dimension_numbers<[1], [0], [0], [1], [0, 0, 1, 1], [], []>} : vector<256x96xbf16>, vector<96x32xbf16>, vector<256x32xf32> -> vector<256x32xf32>
    %193 = arith.addf %188, %192 : vector<256x32xf32>
    %194 = vector.extract_strided_slice %162 {offsets = [96, 0], sizes = [256, 96], strides = [1, 1]} : vector<352x96xbf16> to vector<256x96xbf16>
    %c3_196 = arith.constant 3 : index
    %c6_197 = arith.constant 6 : index
    %c0_198 = arith.constant 0 : index
    %c0_199 = arith.constant 0 : index
    %195 = vector.load %arg2[%c3_196, %c6_197, %c0_198, %c0_199] : memref<5x7x96x32xbf16, #tpu.memory_space<vmem>>, vector<1x1x96x32xbf16>
    %196 = vector.shape_cast %195 : vector<1x1x96x32xbf16> to vector<96x32xbf16>
    %cst_200 = arith.constant dense<0.000000e+00> : vector<256x32xf32>
    %197 = tpu.matmul %194, %196, %cst_200 {dimension_numbers = #tpu.dot_dimension_numbers<[1], [0], [0], [1], [0, 0, 1, 1], [], []>} : vector<256x96xbf16>, vector<96x32xbf16>, vector<256x32xf32> -> vector<256x32xf32>
    %198 = arith.addf %193, %197 : vector<256x32xf32>
    %c3_201 = arith.constant 3 : index
    %c0_202 = arith.constant 0 : index
    %c0_203 = arith.constant 0 : index
    %199 = vector.load %arg3[%c3_201, %c0_202, %c0_203] : memref<5x1x32xf32, #tpu.memory_space<vmem>>, vector<1x1x32xf32>
    %200 = vector.shape_cast %199 : vector<1x1x32xf32> to vector<1x32xf32>
    %201 = vector.broadcast %200 : vector<1x32xf32> to vector<256x32xf32>
    %202 = arith.addf %198, %201 : vector<256x32xf32>
    %cst_204 = arith.constant 0.000000e+00 : f32
    %203 = vector.broadcast %cst_204 : f32 to vector<256x32xf32>
    %204 = arith.maximumf %202, %203 : vector<256x32xf32>
    %205 = vector.shape_cast %204 : vector<256x32xf32> to vector<16x16x32xf32>
    %c3_205 = arith.constant 3 : index
    %c8_206 = arith.constant 8 : index
    %c0_207 = arith.constant 0 : index
    %206 = vector.load %arg6[%c3_205, %c8_206, %c0_207] : memref<22x25x32xf32, #tpu.memory_space<vmem>>, vector<16x16x32xf32>
    tpu.vector_store %arg6[%c3_205, %c8_206, %c0_207], %205 {strides = array<i32>} : memref<22x25x32xf32, #tpu.memory_space<vmem>>, vector<16x16x32xf32>,
    %c0_208 = arith.constant 0 : index
    %c7_209 = arith.constant 7 : index
    %c0_210 = arith.constant 0 : index
    %207 = vector.load %arg6[%c0_208, %c7_209, %c0_210] : memref<22x25x32xf32, #tpu.memory_space<vmem>>, vector<22x16x32xf32>
    %c0_211 = arith.constant 0 : index
    %c8_212 = arith.constant 8 : index
    %c0_213 = arith.constant 0 : index
    %208 = vector.load %arg6[%c0_211, %c8_212, %c0_213] : memref<22x25x32xf32, #tpu.memory_space<vmem>>, vector<22x16x32xf32>
    %c0_214 = arith.constant 0 : index
    %c9_215 = arith.constant 9 : index
    %c0_216 = arith.constant 0 : index
    %209 = vector.load %arg6[%c0_214, %c9_215, %c0_216] : memref<22x25x32xf32, #tpu.memory_space<vmem>>, vector<22x16x32xf32>
    %210 = tpu.concatenate %207, %208, %209 in 2 : vector<22x16x32xf32>, vector<22x16x32xf32>, vector<22x16x32xf32> -> vector<22x16x96xf32>
    %211 = vector.shape_cast %210 : vector<22x16x96xf32> to vector<352x96xf32>
    %212 = arith.truncf %211 : vector<352x96xf32> to vector<352x96xbf16>
    %cst_217 = arith.constant 0.000000e+00 : f32
    %213 = vector.broadcast %cst_217 : f32 to vector<256x32xf32>
    %214 = vector.extract_strided_slice %212 {offsets = [0, 0], sizes = [256, 96], strides = [1, 1]} : vector<352x96xbf16> to vector<256x96xbf16>
    %c4_218 = arith.constant 4 : index
    %c0_219 = arith.constant 0 : index
    %c0_220 = arith.constant 0 : index
    %c0_221 = arith.constant 0 : index
    %215 = vector.load %arg2[%c4_218, %c0_219, %c0_220, %c0_221] : memref<5x7x96x32xbf16, #tpu.memory_space<vmem>>, vector<1x1x96x32xbf16>
    %216 = vector.shape_cast %215 : vector<1x1x96x32xbf16> to vector<96x32xbf16>
    %cst_222 = arith.constant dense<0.000000e+00> : vector<256x32xf32>
    %217 = tpu.matmul %214, %216, %cst_222 {dimension_numbers = #tpu.dot_dimension_numbers<[1], [0], [0], [1], [0, 0, 1, 1], [], []>} : vector<256x96xbf16>, vector<96x32xbf16>, vector<256x32xf32> -> vector<256x32xf32>
    %218 = arith.addf %213, %217 : vector<256x32xf32>
    %219 = vector.extract_strided_slice %212 {offsets = [16, 0], sizes = [256, 96], strides = [1, 1]} : vector<352x96xbf16> to vector<256x96xbf16>
    %c4_223 = arith.constant 4 : index
    %c1_224 = arith.constant 1 : index
    %c0_225 = arith.constant 0 : index
    %c0_226 = arith.constant 0 : index
    %220 = vector.load %arg2[%c4_223, %c1_224, %c0_225, %c0_226] : memref<5x7x96x32xbf16, #tpu.memory_space<vmem>>, vector<1x1x96x32xbf16>
    %221 = vector.shape_cast %220 : vector<1x1x96x32xbf16> to vector<96x32xbf16>
    %cst_227 = arith.constant dense<0.000000e+00> : vector<256x32xf32>
    %222 = tpu.matmul %219, %221, %cst_227 {dimension_numbers = #tpu.dot_dimension_numbers<[1], [0], [0], [1], [0, 0, 1, 1], [], []>} : vector<256x96xbf16>, vector<96x32xbf16>, vector<256x32xf32> -> vector<256x32xf32>
    %223 = arith.addf %218, %222 : vector<256x32xf32>
    %224 = vector.extract_strided_slice %212 {offsets = [32, 0], sizes = [256, 96], strides = [1, 1]} : vector<352x96xbf16> to vector<256x96xbf16>
    %c4_228 = arith.constant 4 : index
    %c2_229 = arith.constant 2 : index
    %c0_230 = arith.constant 0 : index
    %c0_231 = arith.constant 0 : index
    %225 = vector.load %arg2[%c4_228, %c2_229, %c0_230, %c0_231] : memref<5x7x96x32xbf16, #tpu.memory_space<vmem>>, vector<1x1x96x32xbf16>
    %226 = vector.shape_cast %225 : vector<1x1x96x32xbf16> to vector<96x32xbf16>
    %cst_232 = arith.constant dense<0.000000e+00> : vector<256x32xf32>
    %227 = tpu.matmul %224, %226, %cst_232 {dimension_numbers = #tpu.dot_dimension_numbers<[1], [0], [0], [1], [0, 0, 1, 1], [], []>} : vector<256x96xbf16>, vector<96x32xbf16>, vector<256x32xf32> -> vector<256x32xf32>
    %228 = arith.addf %223, %227 : vector<256x32xf32>
    %229 = vector.extract_strided_slice %212 {offsets = [48, 0], sizes = [256, 96], strides = [1, 1]} : vector<352x96xbf16> to vector<256x96xbf16>
    %c4_233 = arith.constant 4 : index
    %c3_234 = arith.constant 3 : index
    %c0_235 = arith.constant 0 : index
    %c0_236 = arith.constant 0 : index
    %230 = vector.load %arg2[%c4_233, %c3_234, %c0_235, %c0_236] : memref<5x7x96x32xbf16, #tpu.memory_space<vmem>>, vector<1x1x96x32xbf16>
    %231 = vector.shape_cast %230 : vector<1x1x96x32xbf16> to vector<96x32xbf16>
    %cst_237 = arith.constant dense<0.000000e+00> : vector<256x32xf32>
    %232 = tpu.matmul %229, %231, %cst_237 {dimension_numbers = #tpu.dot_dimension_numbers<[1], [0], [0], [1], [0, 0, 1, 1], [], []>} : vector<256x96xbf16>, vector<96x32xbf16>, vector<256x32xf32> -> vector<256x32xf32>
    %233 = arith.addf %228, %232 : vector<256x32xf32>
    %234 = vector.extract_strided_slice %212 {offsets = [64, 0], sizes = [256, 96], strides = [1, 1]} : vector<352x96xbf16> to vector<256x96xbf16>
    %c4_238 = arith.constant 4 : index
    %c4_239 = arith.constant 4 : index
    %c0_240 = arith.constant 0 : index
    %c0_241 = arith.constant 0 : index
    %235 = vector.load %arg2[%c4_238, %c4_239, %c0_240, %c0_241] : memref<5x7x96x32xbf16, #tpu.memory_space<vmem>>, vector<1x1x96x32xbf16>
    %236 = vector.shape_cast %235 : vector<1x1x96x32xbf16> to vector<96x32xbf16>
    %cst_242 = arith.constant dense<0.000000e+00> : vector<256x32xf32>
    %237 = tpu.matmul %234, %236, %cst_242 {dimension_numbers = #tpu.dot_dimension_numbers<[1], [0], [0], [1], [0, 0, 1, 1], [], []>} : vector<256x96xbf16>, vector<96x32xbf16>, vector<256x32xf32> -> vector<256x32xf32>
    %238 = arith.addf %233, %237 : vector<256x32xf32>
    %239 = vector.extract_strided_slice %212 {offsets = [80, 0], sizes = [256, 96], strides = [1, 1]} : vector<352x96xbf16> to vector<256x96xbf16>
    %c4_243 = arith.constant 4 : index
    %c5_244 = arith.constant 5 : index
    %c0_245 = arith.constant 0 : index
    %c0_246 = arith.constant 0 : index
    %240 = vector.load %arg2[%c4_243, %c5_244, %c0_245, %c0_246] : memref<5x7x96x32xbf16, #tpu.memory_space<vmem>>, vector<1x1x96x32xbf16>
    %241 = vector.shape_cast %240 : vector<1x1x96x32xbf16> to vector<96x32xbf16>
    %cst_247 = arith.constant dense<0.000000e+00> : vector<256x32xf32>
    %242 = tpu.matmul %239, %241, %cst_247 {dimension_numbers = #tpu.dot_dimension_numbers<[1], [0], [0], [1], [0, 0, 1, 1], [], []>} : vector<256x96xbf16>, vector<96x32xbf16>, vector<256x32xf32> -> vector<256x32xf32>
    %243 = arith.addf %238, %242 : vector<256x32xf32>
    %244 = vector.extract_strided_slice %212 {offsets = [96, 0], sizes = [256, 96], strides = [1, 1]} : vector<352x96xbf16> to vector<256x96xbf16>
    %c4_248 = arith.constant 4 : index
    %c6_249 = arith.constant 6 : index
    %c0_250 = arith.constant 0 : index
    %c0_251 = arith.constant 0 : index
    %245 = vector.load %arg2[%c4_248, %c6_249, %c0_250, %c0_251] : memref<5x7x96x32xbf16, #tpu.memory_space<vmem>>, vector<1x1x96x32xbf16>
    %246 = vector.shape_cast %245 : vector<1x1x96x32xbf16> to vector<96x32xbf16>
    %cst_252 = arith.constant dense<0.000000e+00> : vector<256x32xf32>
    %247 = tpu.matmul %244, %246, %cst_252 {dimension_numbers = #tpu.dot_dimension_numbers<[1], [0], [0], [1], [0, 0, 1, 1], [], []>} : vector<256x96xbf16>, vector<96x32xbf16>, vector<256x32xf32> -> vector<256x32xf32>
    %248 = arith.addf %243, %247 : vector<256x32xf32>
    %c4_253 = arith.constant 4 : index
    %c0_254 = arith.constant 0 : index
    %c0_255 = arith.constant 0 : index
    %249 = vector.load %arg3[%c4_253, %c0_254, %c0_255] : memref<5x1x32xf32, #tpu.memory_space<vmem>>, vector<1x1x32xf32>
    %250 = vector.shape_cast %249 : vector<1x1x32xf32> to vector<1x32xf32>
    %251 = vector.broadcast %250 : vector<1x32xf32> to vector<256x32xf32>
    %252 = arith.addf %248, %251 : vector<256x32xf32>
    %253 = vector.extract_strided_slice %252 {offsets = [0, 0], sizes = [256, 4], strides = [1, 1]} : vector<256x32xf32> to vector<256x4xf32>
    %254 = vector.shape_cast %253 : vector<256x4xf32> to vector<16x16x4xf32>
    %c0_256 = arith.constant 0 : index
    %c0_257 = arith.constant 0 : index
    %c0_258 = arith.constant 0 : index
    %c0_259 = arith.constant 0 : index
    %255 = vector.load %arg4[%c0_256, %c0_257, %c0_258, %c0_259] : memref<1x16x16x4xf32, #tpu.memory_space<vmem>>, vector<1x16x16x4xf32>
    %256 = vector.shape_cast %255 : vector<1x16x16x4xf32> to vector<16x16x4xf32>
    %257 = vector.shape_cast %254 : vector<16x16x4xf32> to vector<1x16x16x4xf32>
    tpu.vector_store %arg4[%c0_256, %c0_257, %c0_258, %c0_259], %257 {strides = array<i32>} : memref<1x16x16x4xf32, #tpu.memory_space<vmem>>, vector<1x16x16x4xf32>,
    return
  }
  func.func @transform_0(%arg0: i32) -> (i32, i32, i32, i32) {
    %c0_i32 = arith.constant 0 : i32
    %c0_i32_0 = arith.constant 0 : i32
    %c0_i32_1 = arith.constant 0 : i32
    %c0_i32_2 = arith.constant 0 : i32
    return %arg0, %c0_i32, %c0_i32_0, %c0_i32_1 : i32, i32, i32, i32
  }
  func.func @transform_1(%arg0: i32) -> (i32, i32, i32, i32) {
    %c0_i32 = arith.constant 0 : i32
    %c0_i32_0 = arith.constant 0 : i32
    %c0_i32_1 = arith.constant 0 : i32
    %c0_i32_2 = arith.constant 0 : i32
    %c0_i32_3 = arith.constant 0 : i32
    return %c0_i32, %c0_i32_0, %c0_i32_1, %c0_i32_2 : i32, i32, i32, i32
  }
  func.func @transform_2(%arg0: i32) -> (i32, i32, i32) {
    %c0_i32 = arith.constant 0 : i32
    %c0_i32_0 = arith.constant 0 : i32
    %c0_i32_1 = arith.constant 0 : i32
    %c0_i32_2 = arith.constant 0 : i32
    return %c0_i32, %c0_i32_0, %c0_i32_1 : i32, i32, i32
  }
  func.func @transform_3(%arg0: i32) -> (i32, i32, i32, i32) {
    %c0_i32 = arith.constant 0 : i32
    %c0_i32_0 = arith.constant 0 : i32
    %c0_i32_1 = arith.constant 0 : i32
    %c0_i32_2 = arith.constant 0 : i32
    return %arg0, %c0_i32, %c0_i32_0, %c0_i32_1 : i32, i32, i32, i32
  }
}

</mosaic_0001>

<llo_original>
// kernel: dna_sequencer_forward.1
$region0: #{dna_sequencer_forward.1}
  #allocation0 [shape = 'u32[]', space=smem, size = 0x4, offset = 0x4, fixed_abs, tag = 'smem constant byte address 0x4 - core index']
  #allocation1 [shape = 'u32[144,128]{1,0:T(1,128)}', space=vmem, size = 0x12000, scoped, tag = 'internal scratch']
  #allocation2 [shape = 'f32[22,25,32]{2,1,0:T(8,128)}', space=vmem, size = 0x58000, scoped, tag = 'scratch operand']
  #allocation3 [shape = 'f32[22,25,32]{2,1,0:T(8,128)}', space=vmem, size = 0x58000, scoped, tag = 'scratch operand']
  %s0 = inlined_call_operand.vmem [shape: f32[2,22,25,32], index: 0, kind: input, shape index: {}]
  %s1 = inlined_call_operand.vmem [shape: bf16[5,7,96,32], index: 1, kind: input, shape index: {}]
  %s2 = inlined_call_operand.vmem [shape: f32[5,1,32], index: 2, kind: input, shape index: {}]
  %s3 = inlined_call_operand.vmem [shape: f32[2,16,16,4], index: 3, kind: output, shape index: {}]
  %s4 = sld [smem:[#allocation0]]
  $region45: #{dna_sequencer_forward.1} parent=0
    _
  %s6 = ssub.s32 1, %s4
  %s7 = scalar_select 0, %s6, %s4
  loop: start=0, step=1, limit=4
  $region2: #{dna_sequencer_forward.1} parent=0 // loop_pre_header
    _
  $region3: #{dna_sequencer_forward.1} parent=0 // loop_header
    %s9 = sphi 0, %s13
    %p10 = scmp.ge.s32.totalorder %s9, 4
    %s19 = sphi 0, %s21
    %s22 = sphi 0, %s19
    %s23 = sphi 0, %s22
    %s39 = sphi 0, %s23
    %s43 = sphi 0, %s43
    %s45 = sphi 0, %s43
    %s46 = sphi 0, %s45
    %s60 = sphi 0, %s46
    %s64 = sphi 0, %s64
    %s66 = sphi 0, %s64
    %s67 = sphi 0, %s66
    %s81 = sphi 0, %s67
    %s87 = sphi 0, %s89
    %s90 = sphi 0, %s87
    %s91 = sphi 0, %s90
    %s107 = sphi 0, %s91
  $region4: #{dna_sequencer_forward.1} parent=0 // loop_header_branch
    %12 = sbr.rel (%p10) target = $region8
  $region5: #{dna_sequencer_forward.1} parent=0 // loop_body
    %s14 = ssub.s32 %s9, 1
    %s15 = ssub.s32 %s9, 2
    %s16 = sadd.s32 %s9, 1
    %s17 = ssub.s32 %s9, %s16
    %p18 = scmp.eq.s32.totalorder %s17, 0
    %s20 = sadd.s32 %s19, 1
    %s21 = scalar_select %p18, %s19, %s20
    %p24 = pneg %p18
    %p25 = scmp.eq.s32.totalorder %s9, 1
    %p26 = por %p24, %p25
    %p27 = scmp.ne.s32.totalorder %s19, %s22
    %p28 = scmp.eq.s32.totalorder %s9, 0
    %p29 = por %p27, %p28
    %p30 = scmp.ne.s32.totalorder %s19, %s22
    %p31 = scmp.eq.s32.totalorder %s14, 1
    %p32 = por %p30, %p31
    %p33 = scmp.ne.s32.totalorder %s22, %s23
    %p34 = scmp.eq.s32.totalorder %s14, 0
    %p35 = por %p33, %p34
    %p36 = scmp.ne.s32.totalorder %s22, %s23
    %p37 = scmp.eq.s32.totalorder %s15, 1
    %p38 = por %p36, %p37
    %p40 = scmp.ne.s32.totalorder %s23, %s39
    %p41 = scmp.eq.s32.totalorder %s15, 0
    %p42 = por %p40, %p41
    %s44 = sadd.s32 %s43, 1
    %p47 = scmp.eq.s32.totalorder %s9, 1
    %p48 = scmp.ne.s32.totalorder %s43, %s45
    %p49 = scmp.eq.s32.totalorder %s9, 0
    %p50 = por %p48, %p49
    %p51 = scmp.ne.s32.totalorder %s43, %s45
    %p52 = scmp.eq.s32.totalorder %s14, 1
    %p53 = por %p51, %p52
    %p54 = scmp.ne.s32.totalorder %s45, %s46
    %p55 = scmp.eq.s32.totalorder %s14, 0
    %p56 = por %p54, %p55
    %p57 = scmp.ne.s32.totalorder %s45, %s46
    %p58 = scmp.eq.s32.totalorder %s15, 1
    %p59 = por %p57, %p58
    %p61 = scmp.ne.s32.totalorder %s46, %s60
    %p62 = scmp.eq.s32.totalorder %s15, 0
    %p63 = por %p61, %p62
    %s65 = sadd.s32 %s64, 1
    %p68 = scmp.eq.s32.totalorder %s9, 1
    %p69 = scmp.ne.s32.totalorder %s64, %s66
    %p70 = scmp.eq.s32.totalorder %s9, 0
    %p71 = por %p69, %p70
    %p72 = scmp.ne.s32.totalorder %s64, %s66
    %p73 = scmp.eq.s32.totalorder %s14, 1
    %p74 = por %p72, %p73
    %p75 = scmp.ne.s32.totalorder %s66, %s67
    %p76 = scmp.eq.s32.totalorder %s14, 0
    %p77 = por %p75, %p76
    %p78 = scmp.ne.s32.totalorder %s66, %s67
    %p79 = scmp.eq.s32.totalorder %s15, 1
    %p80 = por %p78, %p79
    %p82 = scmp.ne.s32.totalorder %s67, %s81
    %p83 = scmp.eq.s32.totalorder %s15, 0
    %p84 = por %p82, %p83
    %s85 = ssub.s32 %s9, %s16
    %p86 = scmp.eq.s32.totalorder %s85, 0
    %s88 = sadd.s32 %s87, 1
    %s89 = scalar_select %p86, %s87, %s88
    %p92 = pneg %p86
    %p93 = scmp.eq.s32.totalorder %s9, 1
    %p94 = por %p92, %p93
    %p95 = scmp.ne.s32.totalorder %s87, %s90
    %p96 = scmp.eq.s32.totalorder %s9, 0
    %p97 = por %p95, %p96
    %p98 = scmp.ne.s32.totalorder %s87, %s90
    %p99 = scmp.eq.s32.totalorder %s14, 1
    %p100 = por %p98, %p99
    %p101 = scmp.ne.s32.totalorder %s90, %s91
    %p102 = scmp.eq.s32.totalorder %s14, 0
    %p103 = por %p101, %p102
    %p104 = scmp.ne.s32.totalorder %s90, %s91
    %p105 = scmp.eq.s32.totalorder %s15, 1
    %p106 = por %p104, %p105
    %p108 = scmp.ne.s32.totalorder %s91, %s107
    %p109 = scmp.eq.s32.totalorder %s15, 0
    %p110 = por %p108, %p109
    %p111 = scmp.le.s32.totalorder 1, %s9
    %p112 = scmp.lt.s32.totalorder %s9, 3
    %p113 = pnand %p111, %p112
    %p114 = pneg %p113
    // Predicated region
    $region9: #{dna_sequencer_forward.1} parent=5 // pred_check
      _
    $region10: #{dna_sequencer_forward.1} parent=5 // pred_check_branch
      %116 = sbr.rel (%p113) target = $region12
    $region11: #{dna_sequencer_forward.1} parent=5 // pred_region
      %s117 = ssub.s32 %s9, 1
      // Predicated region
      $region13: #{dna_sequencer_forward.1} parent=11 // pred_check
        %p118 = pneg %p56
      $region14: #{dna_sequencer_forward.1} parent=11 // pred_check_branch
        %120 = sbr.rel (%p118) target = $region16
      $region15: #{dna_sequencer_forward.1} parent=11 // pred_region
        _
      $region16: #{dna_sequencer_forward.1} parent=11 // pred_fallthru
        _
      // Predicated region
      $region17: #{dna_sequencer_forward.1} parent=11 // pred_check
        %p121 = pneg %p77
      $region18: #{dna_sequencer_forward.1} parent=11 // pred_check_branch
        %123 = sbr.rel (%p121) target = $region20
      $region19: #{dna_sequencer_forward.1} parent=11 // pred_region
        _
      $region20: #{dna_sequencer_forward.1} parent=11 // pred_fallthru
        _
    $region12: #{dna_sequencer_forward.1} parent=5 // pred_fallthru
      _
    %p124 = scmp.lt.s32.totalorder %s9, 2
    // Predicated region
    $region21: #{dna_sequencer_forward.1} parent=5 // pred_check
      %p125 = pneg %p124
    $region22: #{dna_sequencer_forward.1} parent=5 // pred_check_branch
      %127 = sbr.rel (%p125) target = $region24
    $region23: #{dna_sequencer_forward.1} parent=5 // pred_region
      // Predicated region
      $region25: #{dna_sequencer_forward.1} parent=23 // pred_check
        %p128 = pneg %p29
      $region26: #{dna_sequencer_forward.1} parent=23 // pred_check_branch
        %130 = sbr.rel (%p128) target = $region28
      $region27: #{dna_sequencer_forward.1} parent=23 // pred_region
        %p131 = scmp.lt.s32.totalorder %s9, 1
        %s132 = scalar_select %p131, %s9, 1
        %s133 = smul.addr %s132, 88
        %s134 = smul.addr %s133, 8
        %s135 = scalar_lea.vmem %s0, %s134
      $region28: #{dna_sequencer_forward.1} parent=23 // pred_fallthru
        _
    $region24: #{dna_sequencer_forward.1} parent=5 // pred_fallthru
      _
    %p136 = scmp.le.s32.totalorder 1, %s9
    %p137 = scmp.lt.s32.totalorder %s9, 3
    %p138 = pnand %p136, %p137
    %p139 = pneg %p138
    // Predicated region
    $region29: #{dna_sequencer_forward.1} parent=5 // pred_check
      _
    $region30: #{dna_sequencer_forward.1} parent=5 // pred_check_branch
      %141 = sbr.rel (%p138) target = $region32
    $region31: #{dna_sequencer_forward.1} parent=5 // pred_region
      %s142 = ssub.s32 %s9, 1
      %p143 = scmp.lt.s32.totalorder %s14, 1
      %s144 = scalar_select %p143, %s14, 1
      %s145 = smul.addr %s144, 88
      %s146 = smul.addr %s145, 8
      %s147 = scalar_lea.vmem %s0, %s146
      %p148 = pneg %p35
      %p149 = pneg %p32
      %p150 = pneg %p56
      %p151 = pneg %p53
      %p152 = pneg %p77
      %p153 = pneg %p74
      %p154 = pneg %p103
      %p155 = pneg %p100
      %p156 = scmp.lt.s32.totalorder %s14, 1
      %s157 = scalar_select %p156, %s14, 1
      %s158 = smul.addr %s157, 32
      %s159 = smul.addr %s158, 8
      %s160 = scalar_lea.vmem %s3, %s159
      %p161 = scmp.lt.s32.totalorder %s14, 1
      %s162 = scalar_select %p161, %s14, 1
      %s163 = smul.addr %s162, 88
      %s164 = smul.addr %s163, 8
      %s165 = scalar_lea.vmem %s0, %s164
      %p166 = scmp.lt.s32.totalorder %s14, 1
      %s167 = scalar_select %p166, %s14, 1
      %s168 = smul.addr %s167, 32
      %s169 = smul.addr %s168, 8
      %s170 = scalar_lea.vmem %s3, %s169
      %vm172 = vcmask 261120
      %173 = vst.msk [vmem:[#allocation2] sm:$0xff] %vm172, 0.0
      %174 = vst.msk [vmem:[#allocation2 + $0x8] sm:$0xff] %vm172, 0.0
      %175 = vst.msk [vmem:[#allocation2 + $0x10] sm:$0xff] %vm172, 0.0
      %vm176 = vcmask 253952
      %177 = vst.msk [vmem:[#allocation2 + $0x18] sm:$0x1] %vm176, 0.0
      %178 = vst.msk [vmem:[#allocation2 + $0x20] sm:$0xff] %vm172, 0.0
      %179 = vst.msk [vmem:[#allocation2 + $0x28] sm:$0xff] %vm172, 0.0
      %180 = vst.msk [vmem:[#allocation2 + $0x30] sm:$0xff] %vm172, 0.0
      %181 = vst.msk [vmem:[#allocation2 + $0x38] sm:$0x1] %vm176, 0.0
      %182 = vst.msk [vmem:[#allocation2 + $0x40] sm:$0xff] %vm172, 0.0
      %183 = vst.msk [vmem:[#allocation2 + $0x48] sm:$0xff] %vm172, 0.0
      %184 = vst.msk [vmem:[#allocation2 + $0x50] sm:$0xff] %vm172, 0.0
      %185 = vst.msk [vmem:[#allocation2 + $0x58] sm:$0x1] %vm176, 0.0
      %186 = vst.msk [vmem:[#allocation2 + $0x60] sm:$0xff] %vm172, 0.0
      %187 = vst.msk [vmem:[#allocation2 + $0x68] sm:$0xff] %vm172, 0.0
      %188 = vst.msk [vmem:[#allocation2 + $0x70] sm:$0xff] %vm172, 0.0
      %189 = vst.msk [vmem:[#allocation2 + $0x78] sm:$0x1] %vm176, 0.0
      %190 = vst.msk [vmem:[#allocation2 + $0x80] sm:$0xff] %vm172, 0.0
      %191 = vst.msk [vmem:[#allocation2 + $0x88] sm:$0xff] %vm172, 0.0
      %192 = vst.msk [vmem:[#allocation2 + $0x90] sm:$0xff] %vm172, 0.0
      %193 = vst.msk [vmem:[#allocation2 + $0x98] sm:$0x1] %vm176, 0.0
      %194 = vst.msk [vmem:[#allocation2 + $0xa0] sm:$0xff] %vm172, 0.0
      %195 = vst.msk [vmem:[#allocation2 + $0xa8] sm:$0xff] %vm172, 0.0
      %196 = vst.msk [vmem:[#allocation2 + $0xb0] sm:$0xff] %vm172, 0.0
      %197 = vst.msk [vmem:[#allocation2 + $0xb8] sm:$0x1] %vm176, 0.0
      %198 = vst.msk [vmem:[#allocation2 + $0xc0] sm:$0xff] %vm172, 0.0
      %199 = vst.msk [vmem:[#allocation2 + $0xc8] sm:$0xff] %vm172, 0.0
      %200 = vst.msk [vmem:[#allocation2 + $0xd0] sm:$0xff] %vm172, 0.0
      %201 = vst.msk [vmem:[#allocation2 + $0xd8] sm:$0x1] %vm176, 0.0
      %202 = vst.msk [vmem:[#allocation2 + $0xe0] sm:$0xff] %vm172, 0.0
      %203 = vst.msk [vmem:[#allocation2 + $0xe8] sm:$0xff] %vm172, 0.0
      %204 = vst.msk [vmem:[#allocation2 + $0xf0] sm:$0xff] %vm172, 0.0
      %205 = vst.msk [vmem:[#allocation2 + $0xf8] sm:$0x1] %vm176, 0.0
      %206 = vst.msk [vmem:[#allocation2 + $0x100] sm:$0xff] %vm172, 0.0
      %207 = vst.msk [vmem:[#allocation2 + $0x108] sm:$0xff] %vm172, 0.0
      %208 = vst.msk [vmem:[#allocation2 + $0x110] sm:$0xff] %vm172, 0.0
      %209 = vst.msk [vmem:[#allocation2 + $0x118] sm:$0x1] %vm176, 0.0
      %210 = vst.msk [vmem:[#allocation2 + $0x120] sm:$0xff] %vm172, 0.0
      %211 = vst.msk [vmem:[#allocation2 + $0x128] sm:$0xff] %vm172, 0.0
      %212 = vst.msk [vmem:[#allocation2 + $0x130] sm:$0xff] %vm172, 0.0
      %213 = vst.msk [vmem:[#allocation2 + $0x138] sm:$0x1] %vm176, 0.0
      %214 = vst.msk [vmem:[#allocation2 + $0x140] sm:$0xff] %vm172, 0.0
      %215 = vst.msk [vmem:[#allocation2 + $0x148] sm:$0xff] %vm172, 0.0
      %216 = vst.msk [vmem:[#allocation2 + $0x150] sm:$0xff] %vm172, 0.0
      %217 = vst.msk [vmem:[#allocation2 + $0x158] sm:$0x1] %vm176, 0.0
      %218 = vst.msk [vmem:[#allocation2 + $0x160] sm:$0xff] %vm172, 0.0
      %219 = vst.msk [vmem:[#allocation2 + $0x168] sm:$0xff] %vm172, 0.0
      %220 = vst.msk [vmem:[#allocation2 + $0x170] sm:$0xff] %vm172, 0.0
      %221 = vst.msk [vmem:[#allocation2 + $0x178] sm:$0x1] %vm176, 0.0
      %222 = vst.msk [vmem:[#allocation2 + $0x180] sm:$0xff] %vm172, 0.0
      %223 = vst.msk [vmem:[#allocation2 + $0x188] sm:$0xff] %vm172, 0.0
      %224 = vst.msk [vmem:[#allocation2 + $0x190] sm:$0xff] %vm172, 0.0
      %225 = vst.msk [vmem:[#allocation2 + $0x198] sm:$0x1] %vm176, 0.0
      %226 = vst.msk [vmem:[#allocation2 + $0x1a0] sm:$0xff] %vm172, 0.0
      %227 = vst.msk [vmem:[#allocation2 + $0x1a8] sm:$0xff] %vm172, 0.0
      %228 = vst.msk [vmem:[#allocation2 + $0x1b0] sm:$0xff] %vm172, 0.0
      %229 = vst.msk [vmem:[#allocation2 + $0x1b8] sm:$0x1] %vm176, 0.0
      %230 = vst.msk [vmem:[#allocation2 + $0x1c0] sm:$0xff] %vm172, 0.0
      %231 = vst.msk [vmem:[#allocation2 + $0x1c8] sm:$0xff] %vm172, 0.0
      %232 = vst.msk [vmem:[#allocation2 + $0x1d0] sm:$0xff] %vm172, 0.0
      %233 = vst.msk [vmem:[#allocation2 + $0x1d8] sm:$0x1] %vm176, 0.0
      %234 = vst.msk [vmem:[#allocation2 + $0x1e0] sm:$0xff] %vm172, 0.0
      %235 = vst.msk [vmem:[#allocation2 + $0x1e8] sm:$0xff] %vm172, 0.0
      %236 = vst.msk [vmem:[#allocation2 + $0x1f0] sm:$0xff] %vm172, 0.0
      %237 = vst.msk [vmem:[#allocation2 + $0x1f8] sm:$0x1] %vm176, 0.0
      %238 = vst.msk [vmem:[#allocation2 + $0x200] sm:$0xff] %vm172, 0.0
      %239 = vst.msk [vmem:[#allocation2 + $0x208] sm:$0xff] %vm172, 0.0
      %240 = vst.msk [vmem:[#allocation2 + $0x210] sm:$0xff] %vm172, 0.0
      %241 = vst.msk [vmem:[#allocation2 + $0x218] sm:$0x1] %vm176, 0.0
      %242 = vst.msk [vmem:[#allocation2 + $0x220] sm:$0xff] %vm172, 0.0
      %243 = vst.msk [vmem:[#allocation2 + $0x228] sm:$0xff] %vm172, 0.0
      %244 = vst.msk [vmem:[#allocation2 + $0x230] sm:$0xff] %vm172, 0.0
      %245 = vst.msk [vmem:[#allocation2 + $0x238] sm:$0x1] %vm176, 0.0
      %246 = vst.msk [vmem:[#allocation2 + $0x240] sm:$0xff] %vm172, 0.0
      %247 = vst.msk [vmem:[#allocation2 + $0x248] sm:$0xff] %vm172, 0.0
      %248 = vst.msk [vmem:[#allocation2 + $0x250] sm:$0xff] %vm172, 0.0
      %249 = vst.msk [vmem:[#allocation2 + $0x258] sm:$0x1] %vm176, 0.0
      %250 = vst.msk [vmem:[#allocation2 + $0x260] sm:$0xff] %vm172, 0.0
      %251 = vst.msk [vmem:[#allocation2 + $0x268] sm:$0xff] %vm172, 0.0
      %252 = vst.msk [vmem:[#allocation2 + $0x270] sm:$0xff] %vm172, 0.0
      %253 = vst.msk [vmem:[#allocation2 + $0x278] sm:$0x1] %vm176, 0.0
      %254 = vst.msk [vmem:[#allocation2 + $0x280] sm:$0xff] %vm172, 0.0
      %255 = vst.msk [vmem:[#allocation2 + $0x288] sm:$0xff] %vm172, 0.0
      %256 = vst.msk [vmem:[#allocation2 + $0x290] sm:$0xff] %vm172, 0.0
      %257 = vst.msk [vmem:[#allocation2 + $0x298] sm:$0x1] %vm176, 0.0
      %258 = vst.msk [vmem:[#allocation2 + $0x2a0] sm:$0xff] %vm172, 0.0
      %259 = vst.msk [vmem:[#allocation2 + $0x2a8] sm:$0xff] %vm172, 0.0
      %260 = vst.msk [vmem:[#allocation2 + $0x2b0] sm:$0xff] %vm172, 0.0
      %261 = vst.msk [vmem:[#allocation2 + $0x2b8] sm:$0x1] %vm176, 0.0
      %262 = vst.msk [vmem:[#allocation3] sm:$0xff] %vm172, 0.0
      %263 = vst.msk [vmem:[#allocation3 + $0x8] sm:$0xff] %vm172, 0.0
      %264 = vst.msk [vmem:[#allocation3 + $0x10] sm:$0xff] %vm172, 0.0
      %265 = vst.msk [vmem:[#allocation3 + $0x18] sm:$0x1] %vm176, 0.0
      %266 = vst.msk [vmem:[#allocation3 + $0x20] sm:$0xff] %vm172, 0.0
      %267 = vst.msk [vmem:[#allocation3 + $0x28] sm:$0xff] %vm172, 0.0
      %268 = vst.msk [vmem:[#allocation3 + $0x30] sm:$0xff] %vm172, 0.0
      %269 = vst.msk [vmem:[#allocation3 + $0x38] sm:$0x1] %vm176, 0.0
      %270 = vst.msk [vmem:[#allocation3 + $0x40] sm:$0xff] %vm172, 0.0
      %271 = vst.msk [vmem:[#allocation3 + $0x48] sm:$0xff] %vm172, 0.0
      %272 = vst.msk [vmem:[#allocation3 + $0x50] sm:$0xff] %vm172, 0.0
      %273 = vst.msk [vmem:[#allocation3 + $0x58] sm:$0x1] %vm176, 0.0
      %274 = vst.msk [vmem:[#allocation3 + $0x60] sm:$0xff] %vm172, 0.0
      %275 = vst.msk [vmem:[#allocation3 + $0x68] sm:$0xff] %vm172, 0.0
      %276 = vst.msk [vmem:[#allocation3 + $0x70] sm:$0xff] %vm172, 0.0
      %277 = vst.msk [vmem:[#allocation3 + $0x78] sm:$0x1] %vm176, 0.0
      %278 = vst.msk [vmem:[#allocation3 + $0x80] sm:$0xff] %vm172, 0.0
      %279 = vst.msk [vmem:[#allocation3 + $0x88] sm:$0xff] %vm172, 0.0
      %280 = vst.msk [vmem:[#allocation3 + $0x90] sm:$0xff] %vm172, 0.0
      %281 = vst.msk [vmem:[#allocation3 + $0x98] sm:$0x1] %vm176, 0.0
      %282 = vst.msk [vmem:[#allocation3 + $0xa0] sm:$0xff] %vm172, 0.0
      %283 = vst.msk [vmem:[#allocation3 + $0xa8] sm:$0xff] %vm172, 0.0
      %284 = vst.msk [vmem:[#allocation3 + $0xb0] sm:$0xff] %vm172, 0.0
      %285 = vst.msk [vmem:[#allocation3 + $0xb8] sm:$0x1] %vm176, 0.0
      %286 = vst.msk [vmem:[#allocation3 + $0xc0] sm:$0xff] %vm172, 0.0
      %287 = vst.msk [vmem:[#allocation3 + $0xc8] sm:$0xff] %vm172, 0.0
      %288 = vst.msk [vmem:[#allocation3 + $0xd0] sm:$0xff] %vm172, 0.0
      %289 = vst.msk [vmem:[#allocation3 + $0xd8] sm:$0x1] %vm176, 0.0
      %290 = vst.msk [vmem:[#allocation3 + $0xe0] sm:$0xff] %vm172, 0.0
      %291 = vst.msk [vmem:[#allocation3 + $0xe8] sm:$0xff] %vm172, 0.0
      %292 = vst.msk [vmem:[#allocation3 + $0xf0] sm:$0xff] %vm172, 0.0
      %293 = vst.msk [vmem:[#allocation3 + $0xf8] sm:$0x1] %vm176, 0.0
      %294 = vst.msk [vmem:[#allocation3 + $0x100] sm:$0xff] %vm172, 0.0
      %295 = vst.msk [vmem:[#allocation3 + $0x108] sm:$0xff] %vm172, 0.0
      %296 = vst.msk [vmem:[#allocation3 + $0x110] sm:$0xff] %vm172, 0.0
      %297 = vst.msk [vmem:[#allocation3 + $0x118] sm:$0x1] %vm176, 0.0
      %298 = vst.msk [vmem:[#allocation3 + $0x120] sm:$0xff] %vm172, 0.0
      %299 = vst.msk [vmem:[#allocation3 + $0x128] sm:$0xff] %vm172, 0.0
      %300 = vst.msk [vmem:[#allocation3 + $0x130] sm:$0xff] %vm172, 0.0
      %301 = vst.msk [vmem:[#allocation3 + $0x138] sm:$0x1] %vm176, 0.0
      %302 = vst.msk [vmem:[#allocation3 + $0x140] sm:$0xff] %vm172, 0.0
      %303 = vst.msk [vmem:[#allocation3 + $0x148] sm:$0xff] %vm172, 0.0
      %304 = vst.msk [vmem:[#allocation3 + $0x150] sm:$0xff] %vm172, 0.0
      %305 = vst.msk [vmem:[#allocation3 + $0x158] sm:$0x1] %vm176, 0.0
      %306 = vst.msk [vmem:[#allocation3 + $0x160] sm:$0xff] %vm172, 0.0
      %307 = vst.msk [vmem:[#allocation3 + $0x168] sm:$0xff] %vm172, 0.0
      %308 = vst.msk [vmem:[#allocation3 + $0x170] sm:$0xff] %vm172, 0.0
      %309 = vst.msk [vmem:[#allocation3 + $0x178] sm:$0x1] %vm176, 0.0
      %310 = vst.msk [vmem:[#allocation3 + $0x180] sm:$0xff] %vm172, 0.0
      %311 = vst.msk [vmem:[#allocation3 + $0x188] sm:$0xff] %vm172, 0.0
      %312 = vst.msk [vmem:[#allocation3 + $0x190] sm:$0xff] %vm172, 0.0
      %313 = vst.msk [vmem:[#allocation3 + $0x198] sm:$0x1] %vm176, 0.0
      %314 = vst.msk [vmem:[#allocation3 + $0x1a0] sm:$0xff] %vm172, 0.0
      %315 = vst.msk [vmem:[#allocation3 + $0x1a8] sm:$0xff] %vm172, 0.0
      %316 = vst.msk [vmem:[#allocation3 + $0x1b0] sm:$0xff] %vm172, 0.0
      %317 = vst.msk [vmem:[#allocation3 + $0x1b8] sm:$0x1] %vm176, 0.0
      %318 = vst.msk [vmem:[#allocation3 + $0x1c0] sm:$0xff] %vm172, 0.0
      %319 = vst.msk [vmem:[#allocation3 + $0x1c8] sm:$0xff] %vm172, 0.0
      %320 = vst.msk [vmem:[#allocation3 + $0x1d0] sm:$0xff] %vm172, 0.0
      %321 = vst.msk [vmem:[#allocation3 + $0x1d8] sm:$0x1] %vm176, 0.0
      %322 = vst.msk [vmem:[#allocation3 + $0x1e0] sm:$0xff] %vm172, 0.0
      %323 = vst.msk [vmem:[#allocation3 + $0x1e8] sm:$0xff] %vm172, 0.0
      %324 = vst.msk [vmem:[#allocation3 + $0x1f0] sm:$0xff] %vm172, 0.0
      %325 = vst.msk [vmem:[#allocation3 + $0x1f8] sm:$0x1] %vm176, 0.0
      %326 = vst.msk [vmem:[#allocation3 + $0x200] sm:$0xff] %vm172, 0.0
      %327 = vst.msk [vmem:[#allocation3 + $0x208] sm:$0xff] %vm172, 0.0
      %328 = vst.msk [vmem:[#allocation3 + $0x210] sm:$0xff] %vm172, 0.0
      %329 = vst.msk [vmem:[#allocation3 + $0x218] sm:$0x1] %vm176, 0.0
      %330 = vst.msk [vmem:[#allocation3 + $0x220] sm:$0xff] %vm172, 0.0
      %331 = vst.msk [vmem:[#allocation3 + $0x228] sm:$0xff] %vm172, 0.0
      %332 = vst.msk [vmem:[#allocation3 + $0x230] sm:$0xff] %vm172, 0.0
      %333 = vst.msk [vmem:[#allocation3 + $0x238] sm:$0x1] %vm176, 0.0
      %334 = vst.msk [vmem:[#allocation3 + $0x240] sm:$0xff] %vm172, 0.0
      %335 = vst.msk [vmem:[#allocation3 + $0x248] sm:$0xff] %vm172, 0.0
      %336 = vst.msk [vmem:[#allocation3 + $0x250] sm:$0xff] %vm172, 0.0
      %337 = vst.msk [vmem:[#allocation3 + $0x258] sm:$0x1] %vm176, 0.0
      %338 = vst.msk [vmem:[#allocation3 + $0x260] sm:$0xff] %vm172, 0.0
      %339 = vst.msk [vmem:[#allocation3 + $0x268] sm:$0xff] %vm172, 0.0
      %340 = vst.msk [vmem:[#allocation3 + $0x270] sm:$0xff] %vm172, 0.0
      %341 = vst.msk [vmem:[#allocation3 + $0x278] sm:$0x1] %vm176, 0.0
      %342 = vst.msk [vmem:[#allocation3 + $0x280] sm:$0xff] %vm172, 0.0
      %343 = vst.msk [vmem:[#allocation3 + $0x288] sm:$0xff] %vm172, 0.0
      %344 = vst.msk [vmem:[#allocation3 + $0x290] sm:$0xff] %vm172, 0.0
      %345 = vst.msk [vmem:[#allocation3 + $0x298] sm:$0x1] %vm176, 0.0
      %346 = vst.msk [vmem:[#allocation3 + $0x2a0] sm:$0xff] %vm172, 0.0
      %347 = vst.msk [vmem:[#allocation3 + $0x2a8] sm:$0xff] %vm172, 0.0
      %348 = vst.msk [vmem:[#allocation3 + $0x2b0] sm:$0xff] %vm172, 0.0
      %349 = vst.msk [vmem:[#allocation3 + $0x2b8] sm:$0x1] %vm176, 0.0
      %v350 = vld [vmem:[%s165 + $0x7] sm:$0xff]
      %v351 = vld [vmem:[%s165 + $0xf] sm:$0xff]
      %v352 = vld [vmem:[%s165 + $0x27] sm:$0xff]
      %v353 = vld [vmem:[%s165 + $0x2f] sm:$0xff]
      %v354 = vld [vmem:[%s165 + $0x47] sm:$0xff]
      %v355 = vld [vmem:[%s165 + $0x4f] sm:$0xff]
      %v356 = vld [vmem:[%s165 + $0x67] sm:$0xff]
      %v357 = vld [vmem:[%s165 + $0x6f] sm:$0xff]
      %v358 = vld [vmem:[%s165 + $0x87] sm:$0xff]
      %v359 = vld [vmem:[%s165 + $0x8f] sm:$0xff]
      %v360 = vld [vmem:[%s165 + $0xa7] sm:$0xff]
      %v361 = vld [vmem:[%s165 + $0xaf] sm:$0xff]
      %v362 = vld [vmem:[%s165 + $0xc7] sm:$0xff]
      %v363 = vld [vmem:[%s165 + $0xcf] sm:$0xff]
      %v364 = vld [vmem:[%s165 + $0xe7] sm:$0xff]
      %v365 = vld [vmem:[%s165 + $0xef] sm:$0xff]
      %v366 = vld [vmem:[%s165 + $0x107] sm:$0xff]
      %v367 = vld [vmem:[%s165 + $0x10f] sm:$0xff]
      %v368 = vld [vmem:[%s165 + $0x127] sm:$0xff]
      %v369 = vld [vmem:[%s165 + $0x12f] sm:$0xff]
      %v370 = vld [vmem:[%s165 + $0x147] sm:$0xff]
      %v371 = vld [vmem:[%s165 + $0x14f] sm:$0xff]
      %v372 = vld [vmem:[%s165 + $0x167] sm:$0xff]
      %v373 = vld [vmem:[%s165 + $0x16f] sm:$0xff]
      %v374 = vld [vmem:[%s165 + $0x187] sm:$0xff]
      %v375 = vld [vmem:[%s165 + $0x18f] sm:$0xff]
      %v376 = vld [vmem:[%s165 + $0x1a7] sm:$0xff]
      %v377 = vld [vmem:[%s165 + $0x1af] sm:$0xff]
      %v378 = vld [vmem:[%s165 + $0x1c7] sm:$0xff]
      %v379 = vld [vmem:[%s165 + $0x1cf] sm:$0xff]
      %v380 = vld [vmem:[%s165 + $0x1e7] sm:$0xff]
      %v381 = vld [vmem:[%s165 + $0x1ef] sm:$0xff]
      %v382 = vld [vmem:[%s165 + $0x207] sm:$0xff]
      %v383 = vld [vmem:[%s165 + $0x20f] sm:$0xff]
      %v384 = vld [vmem:[%s165 + $0x227] sm:$0xff]
      %v385 = vld [vmem:[%s165 + $0x22f] sm:$0xff]
      %v386 = vld [vmem:[%s165 + $0x247] sm:$0xff]
      %v387 = vld [vmem:[%s165 + $0x24f] sm:$0xff]
      %v388 = vld [vmem:[%s165 + $0x267] sm:$0xff]
      %v389 = vld [vmem:[%s165 + $0x26f] sm:$0xff]
      %v390 = vld [vmem:[%s165 + $0x287] sm:$0xff]
      %v391 = vld [vmem:[%s165 + $0x28f] sm:$0xff]
      %v392 = vld [vmem:[%s165 + $0x2a7] sm:$0xff]
      %v393 = vld [vmem:[%s165 + $0x2af] sm:$0xff]
      %v394 = vld [vmem:[%s165 + $0x8] sm:$0xff]
      %v395 = vld [vmem:[%s165 + $0x10] sm:$0xff]
      %v396 = vld [vmem:[%s165 + $0x28] sm:$0xff]
      %v397 = vld [vmem:[%s165 + $0x30] sm:$0xff]
      %v398 = vld [vmem:[%s165 + $0x48] sm:$0xff]
      %v399 = vld [vmem:[%s165 + $0x50] sm:$0xff]
      %v400 = vld [vmem:[%s165 + $0x68] sm:$0xff]
      %v401 = vld [vmem:[%s165 + $0x70] sm:$0xff]
      %v402 = vld [vmem:[%s165 + $0x88] sm:$0xff]
      %v403 = vld [vmem:[%s165 + $0x90] sm:$0xff]
      %v404 = vld [vmem:[%s165 + $0xa8] sm:$0xff]
      %v405 = vld [vmem:[%s165 + $0xb0] sm:$0xff]
      %v406 = vld [vmem:[%s165 + $0xc8] sm:$0xff]
      %v407 = vld [vmem:[%s165 + $0xd0] sm:$0xff]
      %v408 = vld [vmem:[%s165 + $0xe8] sm:$0xff]
      %v409 = vld [vmem:[%s165 + $0xf0] sm:$0xff]
      %v410 = vld [vmem:[%s165 + $0x108] sm:$0xff]
      %v411 = vld [vmem:[%s165 + $0x110] sm:$0xff]
      %v412 = vld [vmem:[%s165 + $0x128] sm:$0xff]
      %v413 = vld [vmem:[%s165 + $0x130] sm:$0xff]
      %v414 = vld [vmem:[%s165 + $0x148] sm:$0xff]
      %v415 = vld [vmem:[%s165 + $0x150] sm:$0xff]
      %v416 = vld [vmem:[%s165 + $0x168] sm:$0xff]
      %v417 = vld [vmem:[%s165 + $0x170] sm:$0xff]
      %v418 = vld [vmem:[%s165 + $0x188] sm:$0xff]
      %v419 = vld [vmem:[%s165 + $0x190] sm:$0xff]
      %v420 = vld [vmem:[%s165 + $0x1a8] sm:$0xff]
      %v421 = vld [vmem:[%s165 + $0x1b0] sm:$0xff]
      %v422 = vld [vmem:[%s165 + $0x1c8] sm:$0xff]
      %v423 = vld [vmem:[%s165 + $0x1d0] sm:$0xff]
      %v424 = vld [vmem:[%s165 + $0x1e8] sm:$0xff]
      %v425 = vld [vmem:[%s165 + $0x1f0] sm:$0xff]
      %v426 = vld [vmem:[%s165 + $0x208] sm:$0xff]
      %v427 = vld [vmem:[%s165 + $0x210] sm:$0xff]
      %v428 = vld [vmem:[%s165 + $0x228] sm:$0xff]
      %v429 = vld [vmem:[%s165 + $0x230] sm:$0xff]
      %v430 = vld [vmem:[%s165 + $0x248] sm:$0xff]
      %v431 = vld [vmem:[%s165 + $0x250] sm:$0xff]
      %v432 = vld [vmem:[%s165 + $0x268] sm:$0xff]
      %v433 = vld [vmem:[%s165 + $0x270] sm:$0xff]
      %v434 = vld [vmem:[%s165 + $0x288] sm:$0xff]
      %v435 = vld [vmem:[%s165 + $0x290] sm:$0xff]
      %v436 = vld [vmem:[%s165 + $0x2a8] sm:$0xff]
      %v437 = vld [vmem:[%s165 + $0x2b0] sm:$0xff]
      %v438 = vld [vmem:[%s165 + $0x9] sm:$0xff]
      %v439 = vld [vmem:[%s165 + $0x11] sm:$0xff]
      %v440 = vld [vmem:[%s165 + $0x29] sm:$0xff]
      %v441 = vld [vmem:[%s165 + $0x31] sm:$0xff]
      %v442 = vld [vmem:[%s165 + $0x49] sm:$0xff]
      %v443 = vld [vmem:[%s165 + $0x51] sm:$0xff]
      %v444 = vld [vmem:[%s165 + $0x69] sm:$0xff]
      %v445 = vld [vmem:[%s165 + $0x71] sm:$0xff]
      %v446 = vld [vmem:[%s165 + $0x89] sm:$0xff]
      %v447 = vld [vmem:[%s165 + $0x91] sm:$0xff]
      %v448 = vld [vmem:[%s165 + $0xa9] sm:$0xff]
      %v449 = vld [vmem:[%s165 + $0xb1] sm:$0xff]
      %v450 = vld [vmem:[%s165 + $0xc9] sm:$0xff]
      %v451 = vld [vmem:[%s165 + $0xd1] sm:$0xff]
      %v452 = vld [vmem:[%s165 + $0xe9] sm:$0xff]
      %v453 = vld [vmem:[%s165 + $0xf1] sm:$0xff]
      %v454 = vld [vmem:[%s165 + $0x109] sm:$0xff]
      %v455 = vld [vmem:[%s165 + $0x111] sm:$0xff]
      %v456 = vld [vmem:[%s165 + $0x129] sm:$0xff]
      %v457 = vld [vmem:[%s165 + $0x131] sm:$0xff]
      %v458 = vld [vmem:[%s165 + $0x149] sm:$0xff]
      %v459 = vld [vmem:[%s165 + $0x151] sm:$0xff]
      %v460 = vld [vmem:[%s165 + $0x169] sm:$0xff]
      %v461 = vld [vmem:[%s165 + $0x171] sm:$0xff]
      %v462 = vld [vmem:[%s165 + $0x189] sm:$0xff]
      %v463 = vld [vmem:[%s165 + $0x191] sm:$0xff]
      %v464 = vld [vmem:[%s165 + $0x1a9] sm:$0xff]
      %v465 = vld [vmem:[%s165 + $0x1b1] sm:$0xff]
      %v466 = vld [vmem:[%s165 + $0x1c9] sm:$0xff]
      %v467 = vld [vmem:[%s165 + $0x1d1] sm:$0xff]
      %v468 = vld [vmem:[%s165 + $0x1e9] sm:$0xff]
      %v469 = vld [vmem:[%s165 + $0x1f1] sm:$0xff]
      %v470 = vld [vmem:[%s165 + $0x209] sm:$0xff]
      %v471 = vld [vmem:[%s165 + $0x211] sm:$0xff]
      %v472 = vld [vmem:[%s165 + $0x229] sm:$0xff]
      %v473 = vld [vmem:[%s165 + $0x231] sm:$0xff]
      %v474 = vld [vmem:[%s165 + $0x249] sm:$0xff]
      %v475 = vld [vmem:[%s165 + $0x251] sm:$0xff]
      %v476 = vld [vmem:[%s165 + $0x269] sm:$0xff]
      %v477 = vld [vmem:[%s165 + $0x271] sm:$0xff]
      %v478 = vld [vmem:[%s165 + $0x289] sm:$0xff]
      %v479 = vld [vmem:[%s165 + $0x291] sm:$0xff]
      %v480 = vld [vmem:[%s165 + $0x2a9] sm:$0xff]
      %v481 = vld [vmem:[%s165 + $0x2b1] sm:$0xff]
      %526 = vrot.lane.b32.xlu0 %v394, 32
      %v527 = vpop.permute.xlu0 %526
      %528 = vrot.lane.b32.xlu0 %v395, 32
      %v529 = vpop.permute.xlu0 %528
      %530 = vrot.lane.b32.xlu0 %v396, 32
      %v531 = vpop.permute.xlu0 %530
      %532 = vrot.lane.b32.xlu0 %v397, 32
      %v533 = vpop.permute.xlu0 %532
      %534 = vrot.lane.b32.xlu0 %v398, 32
      %v535 = vpop.permute.xlu0 %534
      %536 = vrot.lane.b32.xlu0 %v399, 32
      %v537 = vpop.permute.xlu0 %536
      %538 = vrot.lane.b32.xlu0 %v400, 32
      %v539 = vpop.permute.xlu0 %538
      %540 = vrot.lane.b32.xlu0 %v401, 32
      %v541 = vpop.permute.xlu0 %540
      %542 = vrot.lane.b32.xlu0 %v402, 32
      %v543 = vpop.permute.xlu0 %542
      %544 = vrot.lane.b32.xlu0 %v403, 32
      %v545 = vpop.permute.xlu0 %544
      %546 = vrot.lane.b32.xlu0 %v404, 32
      %v547 = vpop.permute.xlu0 %546
      %548 = vrot.lane.b32.xlu0 %v405, 32
      %v549 = vpop.permute.xlu0 %548
      %550 = vrot.lane.b32.xlu0 %v406, 32
      %v551 = vpop.permute.xlu0 %550
      %552 = vrot.lane.b32.xlu0 %v407, 32
      %v553 = vpop.permute.xlu0 %552
      %554 = vrot.lane.b32.xlu0 %v408, 32
      %v555 = vpop.permute.xlu0 %554
      %556 = vrot.lane.b32.xlu0 %v409, 32
      %v557 = vpop.permute.xlu0 %556
      %558 = vrot.lane.b32.xlu0 %v410, 32
      %v559 = vpop.permute.xlu0 %558
      %560 = vrot.lane.b32.xlu0 %v411, 32
      %v561 = vpop.permute.xlu0 %560
      %562 = vrot.lane.b32.xlu0 %v412, 32
      %v563 = vpop.permute.xlu0 %562
      %564 = vrot.lane.b32.xlu0 %v413, 32
      %v565 = vpop.permute.xlu0 %564
      %566 = vrot.lane.b32.xlu0 %v414, 32
      %v567 = vpop.permute.xlu0 %566
      %568 = vrot.lane.b32.xlu0 %v415, 32
      %v569 = vpop.permute.xlu0 %568
      %570 = vrot.lane.b32.xlu0 %v416, 32
      %v571 = vpop.permute.xlu0 %570
      %572 = vrot.lane.b32.xlu0 %v417, 32
      %v573 = vpop.permute.xlu0 %572
      %574 = vrot.lane.b32.xlu0 %v418, 32
      %v575 = vpop.permute.xlu0 %574
      %576 = vrot.lane.b32.xlu0 %v419, 32
      %v577 = vpop.permute.xlu0 %576
      %578 = vrot.lane.b32.xlu0 %v420, 32
      %v579 = vpop.permute.xlu0 %578
      %580 = vrot.lane.b32.xlu0 %v421, 32
      %v581 = vpop.permute.xlu0 %580
      %582 = vrot.lane.b32.xlu0 %v422, 32
      %v583 = vpop.permute.xlu0 %582
      %584 = vrot.lane.b32.xlu0 %v423, 32
      %v585 = vpop.permute.xlu0 %584
      %586 = vrot.lane.b32.xlu0 %v424, 32
      %v587 = vpop.permute.xlu0 %586
      %588 = vrot.lane.b32.xlu0 %v425, 32
      %v589 = vpop.permute.xlu0 %588
      %590 = vrot.lane.b32.xlu0 %v426, 32
      %v591 = vpop.permute.xlu0 %590
      %592 = vrot.lane.b32.xlu0 %v427, 32
      %v593 = vpop.permute.xlu0 %592
      %594 = vrot.lane.b32.xlu0 %v428, 32
      %v595 = vpop.permute.xlu0 %594
      %596 = vrot.lane.b32.xlu0 %v429, 32
      %v597 = vpop.permute.xlu0 %596
      %598 = vrot.lane.b32.xlu0 %v430, 32
      %v599 = vpop.permute.xlu0 %598
      %600 = vrot.lane.b32.xlu0 %v431, 32
      %v601 = vpop.permute.xlu0 %600
      %602 = vrot.lane.b32.xlu0 %v432, 32
      %v603 = vpop.permute.xlu0 %602
      %604 = vrot.lane.b32.xlu0 %v433, 32
      %v605 = vpop.permute.xlu0 %604
      %606 = vrot.lane.b32.xlu0 %v434, 32
      %v607 = vpop.permute.xlu0 %606
      %608 = vrot.lane.b32.xlu0 %v435, 32
      %v609 = vpop.permute.xlu0 %608
      %610 = vrot.lane.b32.xlu0 %v436, 32
      %v611 = vpop.permute.xlu0 %610
      %612 = vrot.lane.b32.xlu0 %v437, 32
      %v613 = vpop.permute.xlu0 %612
      %702 = vrot.lane.b32.xlu0 %v438, 64
      %v703 = vpop.permute.xlu0 %702
      %704 = vrot.lane.b32.xlu0 %v439, 64
      %v705 = vpop.permute.xlu0 %704
      %706 = vrot.lane.b32.xlu0 %v440, 64
      %v707 = vpop.permute.xlu0 %706
      %708 = vrot.lane.b32.xlu0 %v441, 64
      %v709 = vpop.permute.xlu0 %708
      %710 = vrot.lane.b32.xlu0 %v442, 64
      %v711 = vpop.permute.xlu0 %710
      %712 = vrot.lane.b32.xlu0 %v443, 64
      %v713 = vpop.permute.xlu0 %712
      %714 = vrot.lane.b32.xlu0 %v444, 64
      %v715 = vpop.permute.xlu0 %714
      %716 = vrot.lane.b32.xlu0 %v445, 64
      %v717 = vpop.permute.xlu0 %716
      %718 = vrot.lane.b32.xlu0 %v446, 64
      %v719 = vpop.permute.xlu0 %718
      %720 = vrot.lane.b32.xlu0 %v447, 64
      %v721 = vpop.permute.xlu0 %720
      %722 = vrot.lane.b32.xlu0 %v448, 64
      %v723 = vpop.permute.xlu0 %722
      %724 = vrot.lane.b32.xlu0 %v449, 64
      %v725 = vpop.permute.xlu0 %724
      %726 = vrot.lane.b32.xlu0 %v450, 64
      %v727 = vpop.permute.xlu0 %726
      %728 = vrot.lane.b32.xlu0 %v451, 64
      %v729 = vpop.permute.xlu0 %728
      %730 = vrot.lane.b32.xlu0 %v452, 64
      %v731 = vpop.permute.xlu0 %730
      %732 = vrot.lane.b32.xlu0 %v453, 64
      %v733 = vpop.permute.xlu0 %732
      %734 = vrot.lane.b32.xlu0 %v454, 64
      %v735 = vpop.permute.xlu0 %734
      %736 = vrot.lane.b32.xlu0 %v455, 64
      %v737 = vpop.permute.xlu0 %736
      %738 = vrot.lane.b32.xlu0 %v456, 64
      %v739 = vpop.permute.xlu0 %738
      %740 = vrot.lane.b32.xlu0 %v457, 64
      %v741 = vpop.permute.xlu0 %740
      %742 = vrot.lane.b32.xlu0 %v458, 64
      %v743 = vpop.permute.xlu0 %742
      %744 = vrot.lane.b32.xlu0 %v459, 64
      %v745 = vpop.permute.xlu0 %744
      %746 = vrot.lane.b32.xlu0 %v460, 64
      %v747 = vpop.permute.xlu0 %746
      %748 = vrot.lane.b32.xlu0 %v461, 64
      %v749 = vpop.permute.xlu0 %748
      %750 = vrot.lane.b32.xlu0 %v462, 64
      %v751 = vpop.permute.xlu0 %750
      %752 = vrot.lane.b32.xlu0 %v463, 64
      %v753 = vpop.permute.xlu0 %752
      %754 = vrot.lane.b32.xlu0 %v464, 64
      %v755 = vpop.permute.xlu0 %754
      %756 = vrot.lane.b32.xlu0 %v465, 64
      %v757 = vpop.permute.xlu0 %756
      %758 = vrot.lane.b32.xlu0 %v466, 64
      %v759 = vpop.permute.xlu0 %758
      %760 = vrot.lane.b32.xlu0 %v467, 64
      %v761 = vpop.permute.xlu0 %760
      %762 = vrot.lane.b32.xlu0 %v468, 64
      %v763 = vpop.permute.xlu0 %762
      %764 = vrot.lane.b32.xlu0 %v469, 64
      %v765 = vpop.permute.xlu0 %764
      %766 = vrot.lane.b32.xlu0 %v470, 64
      %v767 = vpop.permute.xlu0 %766
      %768 = vrot.lane.b32.xlu0 %v471, 64
      %v769 = vpop.permute.xlu0 %768
      %770 = vrot.lane.b32.xlu0 %v472, 64
      %v771 = vpop.permute.xlu0 %770
      %772 = vrot.lane.b32.xlu0 %v473, 64
      %v773 = vpop.permute.xlu0 %772
      %774 = vrot.lane.b32.xlu0 %v474, 64
      %v775 = vpop.permute.xlu0 %774
      %776 = vrot.lane.b32.xlu0 %v475, 64
      %v777 = vpop.permute.xlu0 %776
      %778 = vrot.lane.b32.xlu0 %v476, 64
      %v779 = vpop.permute.xlu0 %778
      %780 = vrot.lane.b32.xlu0 %v477, 64
      %v781 = vpop.permute.xlu0 %780
      %782 = vrot.lane.b32.xlu0 %v478, 64
      %v783 = vpop.permute.xlu0 %782
      %784 = vrot.lane.b32.xlu0 %v479, 64
      %v785 = vpop.permute.xlu0 %784
      %786 = vrot.lane.b32.xlu0 %v480, 64
      %v787 = vpop.permute.xlu0 %786
      %788 = vrot.lane.b32.xlu0 %v481, 64
      %v789 = vpop.permute.xlu0 %788
      %v834 = vsel %vm172, %v350, %v527
      %v835 = vsel %vm172, %v351, %v529
      %v836 = vsel %vm172, %v352, %v531
      %v837 = vsel %vm172, %v353, %v533
      %v838 = vsel %vm172, %v354, %v535
      %v839 = vsel %vm172, %v355, %v537
      %v840 = vsel %vm172, %v356, %v539
      %v841 = vsel %vm172, %v357, %v541
      %v842 = vsel %vm172, %v358, %v543
      %v843 = vsel %vm172, %v359, %v545
      %v844 = vsel %vm172, %v360, %v547
      %v845 = vsel %vm172, %v361, %v549
      %v846 = vsel %vm172, %v362, %v551
      %v847 = vsel %vm172, %v363, %v553
      %v848 = vsel %vm172, %v364, %v555
      %v849 = vsel %vm172, %v365, %v557
      %v850 = vsel %vm172, %v366, %v559
      %v851 = vsel %vm172, %v367, %v561
      %v852 = vsel %vm172, %v368, %v563
      %v853 = vsel %vm172, %v369, %v565
      %v854 = vsel %vm172, %v370, %v567
      %v855 = vsel %vm172, %v371, %v569
      %v856 = vsel %vm172, %v372, %v571
      %v857 = vsel %vm172, %v373, %v573
      %v858 = vsel %vm172, %v374, %v575
      %v859 = vsel %vm172, %v375, %v577
      %v860 = vsel %vm172, %v376, %v579
      %v861 = vsel %vm172, %v377, %v581
      %v862 = vsel %vm172, %v378, %v583
      %v863 = vsel %vm172, %v379, %v585
      %v864 = vsel %vm172, %v380, %v587
      %v865 = vsel %vm172, %v381, %v589
      %v866 = vsel %vm172, %v382, %v591
      %v867 = vsel %vm172, %v383, %v593
      %v868 = vsel %vm172, %v384, %v595
      %v869 = vsel %vm172, %v385, %v597
      %v870 = vsel %vm172, %v386, %v599
      %v871 = vsel %vm172, %v387, %v601
      %v872 = vsel %vm172, %v388, %v603
      %v873 = vsel %vm172, %v389, %v605
      %v874 = vsel %vm172, %v390, %v607
      %v875 = vsel %vm172, %v391, %v609
      %v876 = vsel %vm172, %v392, %v611
      %v877 = vsel %vm172, %v393, %v613
      %vm878 = vcmask 523264
      %v879 = vsel %vm878, %v834, %v703
      %v880 = vsel %vm878, %v835, %v705
      %v881 = vsel %vm878, %v836, %v707
      %v882 = vsel %vm878, %v837, %v709
      %v883 = vsel %vm878, %v838, %v711
      %v884 = vsel %vm878, %v839, %v713
      %v885 = vsel %vm878, %v840, %v715
      %v886 = vsel %vm878, %v841, %v717
      %v887 = vsel %vm878, %v842, %v719
      %v888 = vsel %vm878, %v843, %v721
      %v889 = vsel %vm878, %v844, %v723
      %v890 = vsel %vm878, %v845, %v725
      %v891 = vsel %vm878, %v846, %v727
      %v892 = vsel %vm878, %v847, %v729
      %v893 = vsel %vm878, %v848, %v731
      %v894 = vsel %vm878, %v849, %v733
      %v895 = vsel %vm878, %v850, %v735
      %v896 = vsel %vm878, %v851, %v737
      %v897 = vsel %vm878, %v852, %v739
      %v898 = vsel %vm878, %v853, %v741
      %v899 = vsel %vm878, %v854, %v743
      %v900 = vsel %vm878, %v855, %v745
      %v901 = vsel %vm878, %v856, %v747
      %v902 = vsel %vm878, %v857, %v749
      %v903 = vsel %vm878, %v858, %v751
      %v904 = vsel %vm878, %v859, %v753
      %v905 = vsel %vm878, %v860, %v755
      %v906 = vsel %vm878, %v861, %v757
      %v907 = vsel %vm878, %v862, %v759
      %v908 = vsel %vm878, %v863, %v761
      %v909 = vsel %vm878, %v864, %v763
      %v910 = vsel %vm878, %v865, %v765
      %v911 = vsel %vm878, %v866, %v767
      %v912 = vsel %vm878, %v867, %v769
      %v913 = vsel %vm878, %v868, %v771
      %v914 = vsel %vm878, %v869, %v773
      %v915 = vsel %vm878, %v870, %v775
      %v916 = vsel %vm878, %v871, %v777
      %v917 = vsel %vm878, %v872, %v779
      %v918 = vsel %vm878, %v873, %v781
      %v919 = vsel %vm878, %v874, %v783
      %v920 = vsel %vm878, %v875, %v785
      %v921 = vsel %vm878, %v876, %v787
      %v922 = vsel %vm878, %v877, %v789
      %v923 = vpack.c.bf16 %v880, %v879
      %v924 = vpack.c.bf16 %v882, %v881
      %v925 = vpack.c.bf16 %v884, %v883
      %v926 = vpack.c.bf16 %v886, %v885
      %v927 = vpack.c.bf16 %v888, %v887
      %v928 = vpack.c.bf16 %v890, %v889
      %v929 = vpack.c.bf16 %v892, %v891
      %v930 = vpack.c.bf16 %v894, %v893
      %v931 = vpack.c.bf16 %v896, %v895
      %v932 = vpack.c.bf16 %v898, %v897
      %v933 = vpack.c.bf16 %v900, %v899
      %v934 = vpack.c.bf16 %v902, %v901
      %v935 = vpack.c.bf16 %v904, %v903
      %v936 = vpack.c.bf16 %v906, %v905
      %v937 = vpack.c.bf16 %v908, %v907
      %v938 = vpack.c.bf16 %v910, %v909
      %v939 = vpack.c.bf16 %v912, %v911
      %v940 = vpack.c.bf16 %v914, %v913
      %v941 = vpack.c.bf16 %v916, %v915
      %v942 = vpack.c.bf16 %v918, %v917
      %v943 = vpack.c.bf16 %v920, %v919
      %v944 = vpack.c.bf16 %v922, %v921
      %v945 = vld [vmem:[%s1] sm:$0xf]
      %v946 = vld [vmem:[%s1 + $0x4] sm:$0xf]
      %v947 = vld [vmem:[%s1 + $0x8] sm:$0xf]
      %v948 = vld [vmem:[%s1 + $0xc] sm:$0xf]
      %v949 = vld [vmem:[%s1 + $0x10] sm:$0xf]
      %v950 = vld [vmem:[%s1 + $0x14] sm:$0xf]
      %v951 = vld [vmem:[%s1 + $0x18] sm:$0xf]
      %v952 = vld [vmem:[%s1 + $0x1c] sm:$0xf]
      %v953 = vld [vmem:[%s1 + $0x20] sm:$0xf]
      %v954 = vld [vmem:[%s1 + $0x24] sm:$0xf]
      %v955 = vld [vmem:[%s1 + $0x28] sm:$0xf]
      %v956 = vld [vmem:[%s1 + $0x2c] sm:$0xf]
      %s957 = scalar_lea.vmem %s1, 48
      %v958 = vld [vmem:[%s957] sm:$0xf]
      %v959 = vld [vmem:[%s957 + $0x4] sm:$0xf]
      %v960 = vld [vmem:[%s957 + $0x8] sm:$0xf]
      %v961 = vld [vmem:[%s957 + $0xc] sm:$0xf]
      %v962 = vld [vmem:[%s957 + $0x10] sm:$0xf]
      %v963 = vld [vmem:[%s957 + $0x14] sm:$0xf]
      %v964 = vld [vmem:[%s957 + $0x18] sm:$0xf]
      %v965 = vld [vmem:[%s957 + $0x1c] sm:$0xf]
      %v966 = vld [vmem:[%s957 + $0x20] sm:$0xf]
      %v967 = vld [vmem:[%s957 + $0x24] sm:$0xf]
      %v968 = vld [vmem:[%s957 + $0x28] sm:$0xf]
      %v969 = vld [vmem:[%s957 + $0x2c] sm:$0xf]
      %v982 = vunpack.c.l.b16 %v958
      %v983 = vunpack.c.l.b16 %v959
      %v984 = vunpack.c.l.b16 %v960
      %v985 = vunpack.c.l.b16 %v961
      %v986 = vunpack.c.l.b16 %v962
      %v987 = vunpack.c.l.b16 %v963
      %v988 = vunpack.c.l.b16 %v964
      %v989 = vunpack.c.l.b16 %v965
      %v990 = vunpack.c.l.b16 %v966
      %v991 = vunpack.c.l.b16 %v967
      %v992 = vunpack.c.l.b16 %v968
      %v993 = vunpack.c.l.b16 %v969
      %v994 = vpack.c.b16 %v983, %v982
      %v995 = vpack.c.b16 %v985, %v984
      %v996 = vpack.c.b16 %v987, %v986
      %v997 = vpack.c.b16 %v989, %v988
      %v998 = vpack.c.b16 %v991, %v990
      %v999 = vpack.c.b16 %v993, %v992
      %vm1006 = vcmask 785408
      %v1008 = vsel %vm1006, %v924, 0
      %v1011 = vsel %vm1006, %v925, 0
      %v1014 = vsel %vm1006, %v926, 0
      %v1017 = vsel %vm1006, %v927, 0
      %v1020 = vsel %vm1006, %v928, 0
      %v1023 = vsel %vm1006, %v929, 0
      %v1026 = vsel %vm1006, %v930, 0
      %v1029 = vsel %vm1006, %v931, 0
      %v1032 = vsel %vm1006, %v932, 0
      %v1035 = vsel %vm1006, %v933, 0
      %v1038 = vsel %vm1006, %v934, 0
      %v1041 = vsel %vm1006, %v935, 0
      %v1044 = vsel %vm1006, %v936, 0
      %v1047 = vsel %vm1006, %v937, 0
      %v1050 = vsel %vm1006, %v938, 0
      %v1053 = vsel %vm1006, %v939, 0
      %1055 = vmatprep.subr.bf16.mxu0 0
      %1056 = vmatpush1.bf16.msra.mxu0 0
      %1057 = vmatprep.subr.bf16.mxu0 0
      %1058 = vmatpush1.bf16.msra.mxu0 0
      %1059 = vmatprep.subr.bf16.mxu0 0
      %1060 = vmatpush1.bf16.msra.mxu0 %v999
      %1061 = vmatprep.subr.bf16.mxu0 0
      %1062 = vmatpush1.bf16.msra.mxu0 %v998
      %1063 = vmatprep.subr.bf16.mxu0 0
      %1064 = vmatpush1.bf16.msra.mxu0 %v997
      %1065 = vmatprep.subr.bf16.mxu0 0
      %1066 = vmatpush1.bf16.msra.mxu0 %v996
      %1067 = vmatprep.subr.bf16.mxu0 0
      %1068 = vmatpush1.bf16.msra.mxu0 %v995
      %1069 = vmatprep.subr.bf16.mxu0 0
      %1070 = vmatpush1.bf16.msra.mxu0 %v994
      %1071 = vmatprep.subr.bf16.mxu0 0
      %1072 = vmatpush2.bf16.msra.mxu0 0
      %1073 = vmatprep.subr.bf16.mxu0 0
      %1074 = vmatpush2.bf16.msra.mxu0 0
      %1075 = vmatprep.subr.bf16.mxu0 0
      %1076 = vmatpush2.bf16.msra.mxu0 0
      %1077 = vmatprep.subr.bf16.mxu0 0
      %1078 = vmatpush2.bf16.msra.mxu0 0
      %1079 = vmatprep.subr.bf16.mxu0 0
      %1080 = vmatpush2.bf16.msra.mxu0 0
      %1081 = vmatprep.subr.bf16.mxu0 0
      %1082 = vmatpush2.bf16.msra.mxu0 0
      %1083 = vmatprep.subr.bf16.mxu0 0
      %1084 = vmatpush2.bf16.msra.mxu0 0
      %1085 = vmatprep.subr.bf16.mxu0 0
      %1086 = vmatpush2.bf16.msra.mxu0 0
      %1087 = vmatprep.mubr.bf16.mxu0 0
      %1088 = vmatmul.mubr.bf16.gmra.mxu0 %v1008
      %v1089 = vpop.f32.mrf.mxu0
      %v1090 = vadd.f32 0.0, %v1089
      %v1091 = vpop.f32.mrf.mxu0
      %v1092 = vpop.f32.mrf.mxu0
      %v1093 = vadd.f32 0.0, %v1092
      %v1094 = vpop.f32.mrf.mxu0
      %1095 = vmatprep.mubr.bf16.mxu0 0
      %1096 = vmatmul.mubr.bf16.gmra.mxu0 %v1011
      %v1097 = vpop.f32.mrf.mxu0
      %v1098 = vadd.f32 0.0, %v1097
      %v1099 = vpop.f32.mrf.mxu0
      %v1100 = vpop.f32.mrf.mxu0
      %v1101 = vadd.f32 0.0, %v1100
      %v1102 = vpop.f32.mrf.mxu0
      %1103 = vmatprep.mubr.bf16.mxu0 0
      %1104 = vmatmul.mubr.bf16.gmra.mxu0 %v1014
      %v1105 = vpop.f32.mrf.mxu0
      %v1106 = vadd.f32 0.0, %v1105
      %v1107 = vpop.f32.mrf.mxu0
      %v1108 = vpop.f32.mrf.mxu0
      %v1109 = vadd.f32 0.0, %v1108
      %v1110 = vpop.f32.mrf.mxu0
      %1111 = vmatprep.mubr.bf16.mxu0 0
      %1112 = vmatmul.mubr.bf16.gmra.mxu0 %v1017
      %v1113 = vpop.f32.mrf.mxu0
      %v1114 = vadd.f32 0.0, %v1113
      %v1115 = vpop.f32.mrf.mxu0
      %v1116 = vpop.f32.mrf.mxu0
      %v1117 = vadd.f32 0.0, %v1116
      %v1118 = vpop.f32.mrf.mxu0
      %1119 = vmatprep.mubr.bf16.mxu0 0
      %1120 = vmatmul.mubr.bf16.gmra.mxu0 %v1020
      %v1121 = vpop.f32.mrf.mxu0
      %v1122 = vadd.f32 0.0, %v1121
      %v1123 = vpop.f32.mrf.mxu0
      %v1124 = vpop.f32.mrf.mxu0
      %v1125 = vadd.f32 0.0, %v1124
      %v1126 = vpop.f32.mrf.mxu0
      %1127 = vmatprep.mubr.bf16.mxu0 0
      %1128 = vmatmul.mubr.bf16.gmra.mxu0 %v1023
      %v1129 = vpop.f32.mrf.mxu0
      %v1130 = vadd.f32 0.0, %v1129
      %v1131 = vpop.f32.mrf.mxu0
      %v1132 = vpop.f32.mrf.mxu0
      %v1133 = vadd.f32 0.0, %v1132
      %v1134 = vpop.f32.mrf.mxu0
      %1135 = vmatprep.mubr.bf16.mxu0 0
      %1136 = vmatmul.mubr.bf16.gmra.mxu0 %v1026
      %v1137 = vpop.f32.mrf.mxu0
      %v1138 = vadd.f32 0.0, %v1137
      %v1139 = vpop.f32.mrf.mxu0
      %v1140 = vpop.f32.mrf.mxu0
      %v1141 = vadd.f32 0.0, %v1140
      %v1142 = vpop.f32.mrf.mxu0
      %1143 = vmatprep.mubr.bf16.mxu0 0
      %1144 = vmatmul.mubr.bf16.gmra.mxu0 %v1029
      %v1145 = vpop.f32.mrf.mxu0
      %v1146 = vadd.f32 0.0, %v1145
      %v1147 = vpop.f32.mrf.mxu0
      %v1148 = vpop.f32.mrf.mxu0
      %v1149 = vadd.f32 0.0, %v1148
      %v1150 = vpop.f32.mrf.mxu0
      %1151 = vmatprep.mubr.bf16.mxu0 0
      %1152 = vmatmul.mubr.bf16.gmra.mxu0 %v1032
      %v1153 = vpop.f32.mrf.mxu0
      %v1154 = vadd.f32 0.0, %v1153
      %v1155 = vpop.f32.mrf.mxu0
      %v1156 = vpop.f32.mrf.mxu0
      %v1157 = vadd.f32 0.0, %v1156
      %v1158 = vpop.f32.mrf.mxu0
      %1159 = vmatprep.mubr.bf16.mxu0 0
      %1160 = vmatmul.mubr.bf16.gmra.mxu0 %v1035
      %v1161 = vpop.f32.mrf.mxu0
      %v1162 = vadd.f32 0.0, %v1161
      %v1163 = vpop.f32.mrf.mxu0
      %v1164 = vpop.f32.mrf.mxu0
      %v1165 = vadd.f32 0.0, %v1164
      %v1166 = vpop.f32.mrf.mxu0
      %1167 = vmatprep.mubr.bf16.mxu0 0
      %1168 = vmatmul.mubr.bf16.gmra.mxu0 %v1038
      %v1169 = vpop.f32.mrf.mxu0
      %v1170 = vadd.f32 0.0, %v1169
      %v1171 = vpop.f32.mrf.mxu0
      %v1172 = vpop.f32.mrf.mxu0
      %v1173 = vadd.f32 0.0, %v1172
      %v1174 = vpop.f32.mrf.mxu0
      %1175 = vmatprep.mubr.bf16.mxu0 0
      %1176 = vmatmul.mubr.bf16.gmra.mxu0 %v1041
      %v1177 = vpop.f32.mrf.mxu0
      %v1178 = vadd.f32 0.0, %v1177
      %v1179 = vpop.f32.mrf.mxu0
      %v1180 = vpop.f32.mrf.mxu0
      %v1181 = vadd.f32 0.0, %v1180
      %v1182 = vpop.f32.mrf.mxu0
      %1183 = vmatprep.mubr.bf16.mxu0 0
      %1184 = vmatmul.mubr.bf16.gmra.mxu0 %v1044
      %v1185 = vpop.f32.mrf.mxu0
      %v1186 = vadd.f32 0.0, %v1185
      %v1187 = vpop.f32.mrf.mxu0
      %v1188 = vpop.f32.mrf.mxu0
      %v1189 = vadd.f32 0.0, %v1188
      %v1190 = vpop.f32.mrf.mxu0
      %1191 = vmatprep.mubr.bf16.mxu0 0
      %1192 = vmatmul.mubr.bf16.gmra.mxu0 %v1047
      %v1193 = vpop.f32.mrf.mxu0
      %v1194 = vadd.f32 0.0, %v1193
      %v1195 = vpop.f32.mrf.mxu0
      %v1196 = vpop.f32.mrf.mxu0
      %v1197 = vadd.f32 0.0, %v1196
      %v1198 = vpop.f32.mrf.mxu0
      %1199 = vmatprep.mubr.bf16.mxu0 0
      %1200 = vmatmul.mubr.bf16.gmra.mxu0 %v1050
      %v1201 = vpop.f32.mrf.mxu0
      %v1202 = vadd.f32 0.0, %v1201
      %v1203 = vpop.f32.mrf.mxu0
      %v1204 = vpop.f32.mrf.mxu0
      %v1205 = vadd.f32 0.0, %v1204
      %v1206 = vpop.f32.mrf.mxu0
      %1207 = vmatprep.mubr.bf16.mxu0 0
      %1208 = vmatmul.mubr.bf16.gmra.mxu0 %v1053
      %v1209 = vpop.f32.mrf.mxu0
      %v1210 = vadd.f32 0.0, %v1209
      %v1211 = vpop.f32.mrf.mxu0
      %v1212 = vpop.f32.mrf.mxu0
      %v1213 = vadd.f32 0.0, %v1212
      %v1214 = vpop.f32.mrf.mxu0
      %1215 = vdwg.mxu0
      %v1228 = vunpack.c.l.b16 %v945
      %v1229 = vunpack.c.l.b16 %v946
      %v1230 = vunpack.c.l.b16 %v947
      %v1231 = vunpack.c.l.b16 %v948
      %v1232 = vunpack.c.l.b16 %v949
      %v1233 = vunpack.c.l.b16 %v950
      %v1234 = vunpack.c.l.b16 %v951
      %v1235 = vunpack.c.l.b16 %v952
      %v1236 = vunpack.c.l.b16 %v953
      %v1237 = vunpack.c.l.b16 %v954
      %v1238 = vunpack.c.l.b16 %v955
      %v1239 = vunpack.c.l.b16 %v956
      %v1240 = vpack.c.b16 %v1229, %v1228
      %v1241 = vpack.c.b16 %v1231, %v1230
      %v1242 = vpack.c.b16 %v1233, %v1232
      %v1243 = vpack.c.b16 %v1235, %v1234
      %v1244 = vpack.c.b16 %v1237, %v1236
      %v1245 = vpack.c.b16 %v1239, %v1238
      %v1253 = vsel %vm1006, %v923, 0
      %1255 = vmatprep.subr.bf16.mxu0 0
      %1256 = vmatpush1.bf16.msra.mxu0 0
      %1257 = vmatprep.subr.bf16.mxu0 0
      %1258 = vmatpush1.bf16.msra.mxu0 0
      %1259 = vmatprep.subr.bf16.mxu0 0
      %1260 = vmatpush1.bf16.msra.mxu0 %v1245
      %1261 = vmatprep.subr.bf16.mxu0 0
      %1262 = vmatpush1.bf16.msra.mxu0 %v1244
      %1263 = vmatprep.subr.bf16.mxu0 0
      %1264 = vmatpush1.bf16.msra.mxu0 %v1243
      %1265 = vmatprep.subr.bf16.mxu0 0
      %1266 = vmatpush1.bf16.msra.mxu0 %v1242
      %1267 = vmatprep.subr.bf16.mxu0 0
      %1268 = vmatpush1.bf16.msra.mxu0 %v1241
      %1269 = vmatprep.subr.bf16.mxu0 0
      %1270 = vmatpush1.bf16.msra.mxu0 %v1240
      %1271 = vmatprep.subr.bf16.mxu0 0
      %1272 = vmatpush2.bf16.msra.mxu0 0
      %1273 = vmatprep.subr.bf16.mxu0 0
      %1274 = vmatpush2.bf16.msra.mxu0 0
      %1275 = vmatprep.subr.bf16.mxu0 0
      %1276 = vmatpush2.bf16.msra.mxu0 0
      %1277 = vmatprep.subr.bf16.mxu0 0
      %1278 = vmatpush2.bf16.msra.mxu0 0
      %1279 = vmatprep.subr.bf16.mxu0 0
      %1280 = vmatpush2.bf16.msra.mxu0 0
      %1281 = vmatprep.subr.bf16.mxu0 0
      %1282 = vmatpush2.bf16.msra.mxu0 0
      %1283 = vmatprep.subr.bf16.mxu0 0
      %1284 = vmatpush2.bf16.msra.mxu0 0
      %1285 = vmatprep.subr.bf16.mxu0 0
      %1286 = vmatpush2.bf16.msra.mxu0 0
      %1287 = vmatprep.mubr.bf16.mxu0 0
      %1288 = vmatmul.mubr.bf16.gmra.mxu0 %v1253
      %v1289 = vpop.f32.mrf.mxu0
      %v1290 = vadd.f32 %v1090, %v1289
      %v1291 = vpop.f32.mrf.mxu0
      %v1292 = vpop.f32.mrf.mxu0
      %v1293 = vadd.f32 %v1093, %v1292
      %v1294 = vpop.f32.mrf.mxu0
      %1295 = vmatprep.mubr.bf16.mxu0 0
      %1296 = vmatmul.mubr.bf16.gmra.mxu0 %v1008
      %v1297 = vpop.f32.mrf.mxu0
      %v1298 = vadd.f32 %v1098, %v1297
      %v1299 = vpop.f32.mrf.mxu0
      %v1300 = vpop.f32.mrf.mxu0
      %v1301 = vadd.f32 %v1101, %v1300
      %v1302 = vpop.f32.mrf.mxu0
      %1303 = vmatprep.mubr.bf16.mxu0 0
      %1304 = vmatmul.mubr.bf16.gmra.mxu0 %v1011
      %v1305 = vpop.f32.mrf.mxu0
      %v1306 = vadd.f32 %v1106, %v1305
      %v1307 = vpop.f32.mrf.mxu0
      %v1308 = vpop.f32.mrf.mxu0
      %v1309 = vadd.f32 %v1109, %v1308
      %v1310 = vpop.f32.mrf.mxu0
      %1311 = vmatprep.mubr.bf16.mxu0 0
      %1312 = vmatmul.mubr.bf16.gmra.mxu0 %v1014
      %v1313 = vpop.f32.mrf.mxu0
      %v1314 = vadd.f32 %v1114, %v1313
      %v1315 = vpop.f32.mrf.mxu0
      %v1316 = vpop.f32.mrf.mxu0
      %v1317 = vadd.f32 %v1117, %v1316
      %v1318 = vpop.f32.mrf.mxu0
      %1319 = vmatprep.mubr.bf16.mxu0 0
      %1320 = vmatmul.mubr.bf16.gmra.mxu0 %v1017
      %v1321 = vpop.f32.mrf.mxu0
      %v1322 = vadd.f32 %v1122, %v1321
      %v1323 = vpop.f32.mrf.mxu0
      %v1324 = vpop.f32.mrf.mxu0
      %v1325 = vadd.f32 %v1125, %v1324
      %v1326 = vpop.f32.mrf.mxu0
      %1327 = vmatprep.mubr.bf16.mxu0 0
      %1328 = vmatmul.mubr.bf16.gmra.mxu0 %v1020
      %v1329 = vpop.f32.mrf.mxu0
      %v1330 = vadd.f32 %v1130, %v1329
      %v1331 = vpop.f32.mrf.mxu0
      %v1332 = vpop.f32.mrf.mxu0
      %v1333 = vadd.f32 %v1133, %v1332
      %v1334 = vpop.f32.mrf.mxu0
      %1335 = vmatprep.mubr.bf16.mxu0 0
      %1336 = vmatmul.mubr.bf16.gmra.mxu0 %v1023
      %v1337 = vpop.f32.mrf.mxu0
      %v1338 = vadd.f32 %v1138, %v1337
      %v1339 = vpop.f32.mrf.mxu0
      %v1340 = vpop.f32.mrf.mxu0
      %v1341 = vadd.f32 %v1141, %v1340
      %v1342 = vpop.f32.mrf.mxu0
      %1343 = vmatprep.mubr.bf16.mxu0 0
      %1344 = vmatmul.mubr.bf16.gmra.mxu0 %v1026
      %v1345 = vpop.f32.mrf.mxu0
      %v1346 = vadd.f32 %v1146, %v1345
      %v1347 = vpop.f32.mrf.mxu0
      %v1348 = vpop.f32.mrf.mxu0
      %v1349 = vadd.f32 %v1149, %v1348
      %v1350 = vpop.f32.mrf.mxu0
      %1351 = vmatprep.mubr.bf16.mxu0 0
      %1352 = vmatmul.mubr.bf16.gmra.mxu0 %v1029
      %v1353 = vpop.f32.mrf.mxu0
      %v1354 = vadd.f32 %v1154, %v1353
      %v1355 = vpop.f32.mrf.mxu0
      %v1356 = vpop.f32.mrf.mxu0
      %v1357 = vadd.f32 %v1157, %v1356
      %v1358 = vpop.f32.mrf.mxu0
      %1359 = vmatprep.mubr.bf16.mxu0 0
      %1360 = vmatmul.mubr.bf16.gmra.mxu0 %v1032
      %v1361 = vpop.f32.mrf.mxu0
      %v1362 = vadd.f32 %v1162, %v1361
      %v1363 = vpop.f32.mrf.mxu0
      %v1364 = vpop.f32.mrf.mxu0
      %v1365 = vadd.f32 %v1165, %v1364
      %v1366 = vpop.f32.mrf.mxu0
      %1367 = vmatprep.mubr.bf16.mxu0 0
      %1368 = vmatmul.mubr.bf16.gmra.mxu0 %v1035
      %v1369 = vpop.f32.mrf.mxu0
      %v1370 = vadd.f32 %v1170, %v1369
      %v1371 = vpop.f32.mrf.mxu0
      %v1372 = vpop.f32.mrf.mxu0
      %v1373 = vadd.f32 %v1173, %v1372
      %v1374 = vpop.f32.mrf.mxu0
      %1375 = vmatprep.mubr.bf16.mxu0 0
      %1376 = vmatmul.mubr.bf16.gmra.mxu0 %v1038
      %v1377 = vpop.f32.mrf.mxu0
      %v1378 = vadd.f32 %v1178, %v1377
      %v1379 = vpop.f32.mrf.mxu0
      %v1380 = vpop.f32.mrf.mxu0
      %v1381 = vadd.f32 %v1181, %v1380
      %v1382 = vpop.f32.mrf.mxu0
      %1383 = vmatprep.mubr.bf16.mxu0 0
      %1384 = vmatmul.mubr.bf16.gmra.mxu0 %v1041
      %v1385 = vpop.f32.mrf.mxu0
      %v1386 = vadd.f32 %v1186, %v1385
      %v1387 = vpop.f32.mrf.mxu0
      %v1388 = vpop.f32.mrf.mxu0
      %v1389 = vadd.f32 %v1189, %v1388
      %v1390 = vpop.f32.mrf.mxu0
      %1391 = vmatprep.mubr.bf16.mxu0 0
      %1392 = vmatmul.mubr.bf16.gmra.mxu0 %v1044
      %v1393 = vpop.f32.mrf.mxu0
      %v1394 = vadd.f32 %v1194, %v1393
      %v1395 = vpop.f32.mrf.mxu0
      %v1396 = vpop.f32.mrf.mxu0
      %v1397 = vadd.f32 %v1197, %v1396
      %v1398 = vpop.f32.mrf.mxu0
      %1399 = vmatprep.mubr.bf16.mxu0 0
      %1400 = vmatmul.mubr.bf16.gmra.mxu0 %v1047
      %v1401 = vpop.f32.mrf.mxu0
      %v1402 = vadd.f32 %v1202, %v1401
      %v1403 = vpop.f32.mrf.mxu0
      %v1404 = vpop.f32.mrf.mxu0
      %v1405 = vadd.f32 %v1205, %v1404
      %v1406 = vpop.f32.mrf.mxu0
      %1407 = vmatprep.mubr.bf16.mxu0 0
      %1408 = vmatmul.mubr.bf16.gmra.mxu0 %v1050
      %v1409 = vpop.f32.mrf.mxu0
      %v1410 = vadd.f32 %v1210, %v1409
      %v1411 = vpop.f32.mrf.mxu0
      %v1412 = vpop.f32.mrf.mxu0
      %v1413 = vadd.f32 %v1213, %v1412
      %v1414 = vpop.f32.mrf.mxu0
      %1415 = vdwg.mxu0
      %s1416 = scalar_lea.vmem %s1, 96
      %v1417 = vld [vmem:[%s1416] sm:$0xf]
      %v1418 = vld [vmem:[%s1416 + $0x4] sm:$0xf]
      %v1419 = vld [vmem:[%s1416 + $0x8] sm:$0xf]
      %v1420 = vld [vmem:[%s1416 + $0xc] sm:$0xf]
      %v1421 = vld [vmem:[%s1416 + $0x10] sm:$0xf]
      %v1422 = vld [vmem:[%s1416 + $0x14] sm:$0xf]
      %v1423 = vld [vmem:[%s1416 + $0x18] sm:$0xf]
      %v1424 = vld [vmem:[%s1416 + $0x1c] sm:$0xf]
      %v1425 = vld [vmem:[%s1416 + $0x20] sm:$0xf]
      %v1426 = vld [vmem:[%s1416 + $0x24] sm:$0xf]
      %v1427 = vld [vmem:[%s1416 + $0x28] sm:$0xf]
      %v1428 = vld [vmem:[%s1416 + $0x2c] sm:$0xf]
      %v1441 = vunpack.c.l.b16 %v1417
      %v1442 = vunpack.c.l.b16 %v1418
      %v1443 = vunpack.c.l.b16 %v1419
      %v1444 = vunpack.c.l.b16 %v1420
      %v1445 = vunpack.c.l.b16 %v1421
      %v1446 = vunpack.c.l.b16 %v1422
      %v1447 = vunpack.c.l.b16 %v1423
      %v1448 = vunpack.c.l.b16 %v1424
      %v1449 = vunpack.c.l.b16 %v1425
      %v1450 = vunpack.c.l.b16 %v1426
      %v1451 = vunpack.c.l.b16 %v1427
      %v1452 = vunpack.c.l.b16 %v1428
      %v1453 = vpack.c.b16 %v1442, %v1441
      %v1454 = vpack.c.b16 %v1444, %v1443
      %v1455 = vpack.c.b16 %v1446, %v1445
      %v1456 = vpack.c.b16 %v1448, %v1447
      %v1457 = vpack.c.b16 %v1450, %v1449
      %v1458 = vpack.c.b16 %v1452, %v1451
      %v1466 = vsel %vm1006, %v940, 0
      %1468 = vmatprep.subr.bf16.mxu0 0
      %1469 = vmatpush1.bf16.msra.mxu0 0
      %1470 = vmatprep.subr.bf16.mxu0 0
      %1471 = vmatpush1.bf16.msra.mxu0 0
      %1472 = vmatprep.subr.bf16.mxu0 0
      %1473 = vmatpush1.bf16.msra.mxu0 %v1458
      %1474 = vmatprep.subr.bf16.mxu0 0
      %1475 = vmatpush1.bf16.msra.mxu0 %v1457
      %1476 = vmatprep.subr.bf16.mxu0 0
      %1477 = vmatpush1.bf16.msra.mxu0 %v1456
      %1478 = vmatprep.subr.bf16.mxu0 0
      %1479 = vmatpush1.bf16.msra.mxu0 %v1455
      %1480 = vmatprep.subr.bf16.mxu0 0
      %1481 = vmatpush1.bf16.msra.mxu0 %v1454
      %1482 = vmatprep.subr.bf16.mxu0 0
      %1483 = vmatpush1.bf16.msra.mxu0 %v1453
      %1484 = vmatprep.subr.bf16.mxu0 0
      %1485 = vmatpush2.bf16.msra.mxu0 0
      %1486 = vmatprep.subr.bf16.mxu0 0
      %1487 = vmatpush2.bf16.msra.mxu0 0
      %1488 = vmatprep.subr.bf16.mxu0 0
      %1489 = vmatpush2.bf16.msra.mxu0 0
      %1490 = vmatprep.subr.bf16.mxu0 0
      %1491 = vmatpush2.bf16.msra.mxu0 0
      %1492 = vmatprep.subr.bf16.mxu0 0
      %1493 = vmatpush2.bf16.msra.mxu0 0
      %1494 = vmatprep.subr.bf16.mxu0 0
      %1495 = vmatpush2.bf16.msra.mxu0 0
      %1496 = vmatprep.subr.bf16.mxu0 0
      %1497 = vmatpush2.bf16.msra.mxu0 0
      %1498 = vmatprep.subr.bf16.mxu0 0
      %1499 = vmatpush2.bf16.msra.mxu0 0
      %1500 = vmatprep.mubr.bf16.mxu0 0
      %1501 = vmatmul.mubr.bf16.gmra.mxu0 %v1011
      %v1502 = vpop.f32.mrf.mxu0
      %v1503 = vadd.f32 0.0, %v1502
      %v1504 = vpop.f32.mrf.mxu0
      %v1505 = vpop.f32.mrf.mxu0
      %v1506 = vadd.f32 0.0, %v1505
      %v1507 = vpop.f32.mrf.mxu0
      %1508 = vmatprep.mubr.bf16.mxu0 0
      %1509 = vmatmul.mubr.bf16.gmra.mxu0 %v1014
      %v1510 = vpop.f32.mrf.mxu0
      %v1511 = vadd.f32 0.0, %v1510
      %v1512 = vpop.f32.mrf.mxu0
      %v1513 = vpop.f32.mrf.mxu0
      %v1514 = vadd.f32 0.0, %v1513
      %v1515 = vpop.f32.mrf.mxu0
      %1516 = vmatprep.mubr.bf16.mxu0 0
      %1517 = vmatmul.mubr.bf16.gmra.mxu0 %v1017
      %v1518 = vpop.f32.mrf.mxu0
      %v1519 = vadd.f32 0.0, %v1518
      %v1520 = vpop.f32.mrf.mxu0
      %v1521 = vpop.f32.mrf.mxu0
      %v1522 = vadd.f32 0.0, %v1521
      %v1523 = vpop.f32.mrf.mxu0
      %1524 = vmatprep.mubr.bf16.mxu0 0
      %1525 = vmatmul.mubr.bf16.gmra.mxu0 %v1020
      %v1526 = vpop.f32.mrf.mxu0
      %v1527 = vadd.f32 0.0, %v1526
      %v1528 = vpop.f32.mrf.mxu0
      %v1529 = vpop.f32.mrf.mxu0
      %v1530 = vadd.f32 0.0, %v1529
      %v1531 = vpop.f32.mrf.mxu0
      %1532 = vmatprep.mubr.bf16.mxu0 0
      %1533 = vmatmul.mubr.bf16.gmra.mxu0 %v1023
      %v1534 = vpop.f32.mrf.mxu0
      %v1535 = vadd.f32 0.0, %v1534
      %v1536 = vpop.f32.mrf.mxu0
      %v1537 = vpop.f32.mrf.mxu0
      %v1538 = vadd.f32 0.0, %v1537
      %v1539 = vpop.f32.mrf.mxu0
      %1540 = vmatprep.mubr.bf16.mxu0 0
      %1541 = vmatmul.mubr.bf16.gmra.mxu0 %v1026
      %v1542 = vpop.f32.mrf.mxu0
      %v1543 = vadd.f32 0.0, %v1542
      %v1544 = vpop.f32.mrf.mxu0
      %v1545 = vpop.f32.mrf.mxu0
      %v1546 = vadd.f32 0.0, %v1545
      %v1547 = vpop.f32.mrf.mxu0
      %1548 = vmatprep.mubr.bf16.mxu0 0
      %1549 = vmatmul.mubr.bf16.gmra.mxu0 %v1029
      %v1550 = vpop.f32.mrf.mxu0
      %v1551 = vadd.f32 0.0, %v1550
      %v1552 = vpop.f32.mrf.mxu0
      %v1553 = vpop.f32.mrf.mxu0
      %v1554 = vadd.f32 0.0, %v1553
      %v1555 = vpop.f32.mrf.mxu0
      %1556 = vmatprep.mubr.bf16.mxu0 0
      %1557 = vmatmul.mubr.bf16.gmra.mxu0 %v1032
      %v1558 = vpop.f32.mrf.mxu0
      %v1559 = vadd.f32 0.0, %v1558
      %v1560 = vpop.f32.mrf.mxu0
      %v1561 = vpop.f32.mrf.mxu0
      %v1562 = vadd.f32 0.0, %v1561
      %v1563 = vpop.f32.mrf.mxu0
      %1564 = vmatprep.mubr.bf16.mxu0 0
      %1565 = vmatmul.mubr.bf16.gmra.mxu0 %v1035
      %v1566 = vpop.f32.mrf.mxu0
      %v1567 = vadd.f32 0.0, %v1566
      %v1568 = vpop.f32.mrf.mxu0
      %v1569 = vpop.f32.mrf.mxu0
      %v1570 = vadd.f32 0.0, %v1569
      %v1571 = vpop.f32.mrf.mxu0
      %1572 = vmatprep.mubr.bf16.mxu0 0
      %1573 = vmatmul.mubr.bf16.gmra.mxu0 %v1038
      %v1574 = vpop.f32.mrf.mxu0
      %v1575 = vadd.f32 0.0, %v1574
      %v1576 = vpop.f32.mrf.mxu0
      %v1577 = vpop.f32.mrf.mxu0
      %v1578 = vadd.f32 0.0, %v1577
      %v1579 = vpop.f32.mrf.mxu0
      %1580 = vmatprep.mubr.bf16.mxu0 0
      %1581 = vmatmul.mubr.bf16.gmra.mxu0 %v1041
      %v1582 = vpop.f32.mrf.mxu0
      %v1583 = vadd.f32 0.0, %v1582
      %v1584 = vpop.f32.mrf.mxu0
      %v1585 = vpop.f32.mrf.mxu0
      %v1586 = vadd.f32 0.0, %v1585
      %v1587 = vpop.f32.mrf.mxu0
      %1588 = vmatprep.mubr.bf16.mxu0 0
      %1589 = vmatmul.mubr.bf16.gmra.mxu0 %v1044
      %v1590 = vpop.f32.mrf.mxu0
      %v1591 = vadd.f32 0.0, %v1590
      %v1592 = vpop.f32.mrf.mxu0
      %v1593 = vpop.f32.mrf.mxu0
      %v1594 = vadd.f32 0.0, %v1593
      %v1595 = vpop.f32.mrf.mxu0
      %1596 = vmatprep.mubr.bf16.mxu0 0
      %1597 = vmatmul.mubr.bf16.gmra.mxu0 %v1047
      %v1598 = vpop.f32.mrf.mxu0
      %v1599 = vadd.f32 0.0, %v1598
      %v1600 = vpop.f32.mrf.mxu0
      %v1601 = vpop.f32.mrf.mxu0
      %v1602 = vadd.f32 0.0, %v1601
      %v1603 = vpop.f32.mrf.mxu0
      %1604 = vmatprep.mubr.bf16.mxu0 0
      %1605 = vmatmul.mubr.bf16.gmra.mxu0 %v1050
      %v1606 = vpop.f32.mrf.mxu0
      %v1607 = vadd.f32 0.0, %v1606
      %v1608 = vpop.f32.mrf.mxu0
      %v1609 = vpop.f32.mrf.mxu0
      %v1610 = vadd.f32 0.0, %v1609
      %v1611 = vpop.f32.mrf.mxu0
      %1612 = vmatprep.mubr.bf16.mxu0 0
      %1613 = vmatmul.mubr.bf16.gmra.mxu0 %v1053
      %v1614 = vpop.f32.mrf.mxu0
      %v1615 = vadd.f32 0.0, %v1614
      %v1616 = vpop.f32.mrf.mxu0
      %v1617 = vpop.f32.mrf.mxu0
      %v1618 = vadd.f32 0.0, %v1617
      %v1619 = vpop.f32.mrf.mxu0
      %1620 = vmatprep.mubr.bf16.mxu0 0
      %1621 = vmatmul.mubr.bf16.gmra.mxu0 %v1466
      %v1622 = vpop.f32.mrf.mxu0
      %v1623 = vadd.f32 0.0, %v1622
      %v1624 = vpop.f32.mrf.mxu0
      %v1625 = vpop.f32.mrf.mxu0
      %v1626 = vadd.f32 0.0, %v1625
      %v1627 = vpop.f32.mrf.mxu0
      %1628 = vdwg.mxu0
      %v1629 = vadd.f32 %v1290, %v1503
      %v1630 = vadd.f32 %v1293, %v1506
      %v1631 = vadd.f32 %v1298, %v1511
      %v1632 = vadd.f32 %v1301, %v1514
      %v1633 = vadd.f32 %v1306, %v1519
      %v1634 = vadd.f32 %v1309, %v1522
      %v1635 = vadd.f32 %v1314, %v1527
      %v1636 = vadd.f32 %v1317, %v1530
      %v1637 = vadd.f32 %v1322, %v1535
      %v1638 = vadd.f32 %v1325, %v1538
      %v1639 = vadd.f32 %v1330, %v1543
      %v1640 = vadd.f32 %v1333, %v1546
      %v1641 = vadd.f32 %v1338, %v1551
      %v1642 = vadd.f32 %v1341, %v1554
      %v1643 = vadd.f32 %v1346, %v1559
      %v1644 = vadd.f32 %v1349, %v1562
      %v1645 = vadd.f32 %v1354, %v1567
      %v1646 = vadd.f32 %v1357, %v1570
      %v1647 = vadd.f32 %v1362, %v1575
      %v1648 = vadd.f32 %v1365, %v1578
      %v1649 = vadd.f32 %v1370, %v1583
      %v1650 = vadd.f32 %v1373, %v1586
      %v1651 = vadd.f32 %v1378, %v1591
      %v1652 = vadd.f32 %v1381, %v1594
      %v1653 = vadd.f32 %v1386, %v1599
      %v1654 = vadd.f32 %v1389, %v1602
      %v1655 = vadd.f32 %v1394, %v1607
      %v1656 = vadd.f32 %v1397, %v1610
      %v1657 = vadd.f32 %v1402, %v1615
      %v1658 = vadd.f32 %v1405, %v1618
      %v1659 = vadd.f32 %v1410, %v1623
      %v1660 = vadd.f32 %v1413, %v1626
      %s1661 = scalar_lea.vmem %s1, 144
      %v1662 = vld [vmem:[%s1661] sm:$0xf]
      %v1663 = vld [vmem:[%s1661 + $0x4] sm:$0xf]
      %v1664 = vld [vmem:[%s1661 + $0x8] sm:$0xf]
      %v1665 = vld [vmem:[%s1661 + $0xc] sm:$0xf]
      %v1666 = vld [vmem:[%s1661 + $0x10] sm:$0xf]
      %v1667 = vld [vmem:[%s1661 + $0x14] sm:$0xf]
      %v1668 = vld [vmem:[%s1661 + $0x18] sm:$0xf]
      %v1669 = vld [vmem:[%s1661 + $0x1c] sm:$0xf]
      %v1670 = vld [vmem:[%s1661 + $0x20] sm:$0xf]
      %v1671 = vld [vmem:[%s1661 + $0x24] sm:$0xf]
      %v1672 = vld [vmem:[%s1661 + $0x28] sm:$0xf]
      %v1673 = vld [vmem:[%s1661 + $0x2c] sm:$0xf]
      %v1686 = vunpack.c.l.b16 %v1662
      %v1687 = vunpack.c.l.b16 %v1663
      %v1688 = vunpack.c.l.b16 %v1664
      %v1689 = vunpack.c.l.b16 %v1665
      %v1690 = vunpack.c.l.b16 %v1666
      %v1691 = vunpack.c.l.b16 %v1667
      %v1692 = vunpack.c.l.b16 %v1668
      %v1693 = vunpack.c.l.b16 %v1669
      %v1694 = vunpack.c.l.b16 %v1670
      %v1695 = vunpack.c.l.b16 %v1671
      %v1696 = vunpack.c.l.b16 %v1672
      %v1697 = vunpack.c.l.b16 %v1673
      %v1698 = vpack.c.b16 %v1687, %v1686
      %v1699 = vpack.c.b16 %v1689, %v1688
      %v1700 = vpack.c.b16 %v1691, %v1690
      %v1701 = vpack.c.b16 %v1693, %v1692
      %v1702 = vpack.c.b16 %v1695, %v1694
      %v1703 = vpack.c.b16 %v1697, %v1696
      %v1711 = vsel %vm1006, %v941, 0
      %1713 = vmatprep.subr.bf16.mxu0 0
      %1714 = vmatpush1.bf16.msra.mxu0 0
      %1715 = vmatprep.subr.bf16.mxu0 0
      %1716 = vmatpush1.bf16.msra.mxu0 0
      %1717 = vmatprep.subr.bf16.mxu0 0
      %1718 = vmatpush1.bf16.msra.mxu0 %v1703
      %1719 = vmatprep.subr.bf16.mxu0 0
      %1720 = vmatpush1.bf16.msra.mxu0 %v1702
      %1721 = vmatprep.subr.bf16.mxu0 0
      %1722 = vmatpush1.bf16.msra.mxu0 %v1701
      %1723 = vmatprep.subr.bf16.mxu0 0
      %1724 = vmatpush1.bf16.msra.mxu0 %v1700
      %1725 = vmatprep.subr.bf16.mxu0 0
      %1726 = vmatpush1.bf16.msra.mxu0 %v1699
      %1727 = vmatprep.subr.bf16.mxu0 0
      %1728 = vmatpush1.bf16.msra.mxu0 %v1698
      %1729 = vmatprep.subr.bf16.mxu0 0
      %1730 = vmatpush2.bf16.msra.mxu0 0
      %1731 = vmatprep.subr.bf16.mxu0 0
      %1732 = vmatpush2.bf16.msra.mxu0 0
      %1733 = vmatprep.subr.bf16.mxu0 0
      %1734 = vmatpush2.bf16.msra.mxu0 0
      %1735 = vmatprep.subr.bf16.mxu0 0
      %1736 = vmatpush2.bf16.msra.mxu0 0
      %1737 = vmatprep.subr.bf16.mxu0 0
      %1738 = vmatpush2.bf16.msra.mxu0 0
      %1739 = vmatprep.subr.bf16.mxu0 0
      %1740 = vmatpush2.bf16.msra.mxu0 0
      %1741 = vmatprep.subr.bf16.mxu0 0
      %1742 = vmatpush2.bf16.msra.mxu0 0
      %1743 = vmatprep.subr.bf16.mxu0 0
      %1744 = vmatpush2.bf16.msra.mxu0 0
      %1745 = vmatprep.mubr.bf16.mxu0 0
      %1746 = vmatmul.mubr.bf16.gmra.mxu0 %v1014
      %v1747 = vpop.f32.mrf.mxu0
      %v1748 = vadd.f32 0.0, %v1747
      %v1749 = vpop.f32.mrf.mxu0
      %v1750 = vpop.f32.mrf.mxu0
      %v1751 = vadd.f32 0.0, %v1750
      %v1752 = vpop.f32.mrf.mxu0
      %1753 = vmatprep.mubr.bf16.mxu0 0
      %1754 = vmatmul.mubr.bf16.gmra.mxu0 %v1017
      %v1755 = vpop.f32.mrf.mxu0
      %v1756 = vadd.f32 0.0, %v1755
      %v1757 = vpop.f32.mrf.mxu0
      %v1758 = vpop.f32.mrf.mxu0
      %v1759 = vadd.f32 0.0, %v1758
      %v1760 = vpop.f32.mrf.mxu0
      %1761 = vmatprep.mubr.bf16.mxu0 0
      %1762 = vmatmul.mubr.bf16.gmra.mxu0 %v1020
      %v1763 = vpop.f32.mrf.mxu0
      %v1764 = vadd.f32 0.0, %v1763
      %v1765 = vpop.f32.mrf.mxu0
      %v1766 = vpop.f32.mrf.mxu0
      %v1767 = vadd.f32 0.0, %v1766
      %v1768 = vpop.f32.mrf.mxu0
      %1769 = vmatprep.mubr.bf16.mxu0 0
      %1770 = vmatmul.mubr.bf16.gmra.mxu0 %v1023
      %v1771 = vpop.f32.mrf.mxu0
      %v1772 = vadd.f32 0.0, %v1771
      %v1773 = vpop.f32.mrf.mxu0
      %v1774 = vpop.f32.mrf.mxu0
      %v1775 = vadd.f32 0.0, %v1774
      %v1776 = vpop.f32.mrf.mxu0
      %1777 = vmatprep.mubr.bf16.mxu0 0
      %1778 = vmatmul.mubr.bf16.gmra.mxu0 %v1026
      %v1779 = vpop.f32.mrf.mxu0
      %v1780 = vadd.f32 0.0, %v1779
      %v1781 = vpop.f32.mrf.mxu0
      %v1782 = vpop.f32.mrf.mxu0
      %v1783 = vadd.f32 0.0, %v1782
      %v1784 = vpop.f32.mrf.mxu0
      %1785 = vmatprep.mubr.bf16.mxu0 0
      %1786 = vmatmul.mubr.bf16.gmra.mxu0 %v1029
      %v1787 = vpop.f32.mrf.mxu0
      %v1788 = vadd.f32 0.0, %v1787
      %v1789 = vpop.f32.mrf.mxu0
      %v1790 = vpop.f32.mrf.mxu0
      %v1791 = vadd.f32 0.0, %v1790
      %v1792 = vpop.f32.mrf.mxu0
      %1793 = vmatprep.mubr.bf16.mxu0 0
      %1794 = vmatmul.mubr.bf16.gmra.mxu0 %v1032
      %v1795 = vpop.f32.mrf.mxu0
      %v1796 = vadd.f32 0.0, %v1795
      %v1797 = vpop.f32.mrf.mxu0
      %v1798 = vpop.f32.mrf.mxu0
      %v1799 = vadd.f32 0.0, %v1798
      %v1800 = vpop.f32.mrf.mxu0
      %1801 = vmatprep.mubr.bf16.mxu0 0
      %1802 = vmatmul.mubr.bf16.gmra.mxu0 %v1035
      %v1803 = vpop.f32.mrf.mxu0
      %v1804 = vadd.f32 0.0, %v1803
      %v1805 = vpop.f32.mrf.mxu0
      %v1806 = vpop.f32.mrf.mxu0
      %v1807 = vadd.f32 0.0, %v1806
      %v1808 = vpop.f32.mrf.mxu0
      %1809 = vmatprep.mubr.bf16.mxu0 0
      %1810 = vmatmul.mubr.bf16.gmra.mxu0 %v1038
      %v1811 = vpop.f32.mrf.mxu0
      %v1812 = vadd.f32 0.0, %v1811
      %v1813 = vpop.f32.mrf.mxu0
      %v1814 = vpop.f32.mrf.mxu0
      %v1815 = vadd.f32 0.0, %v1814
      %v1816 = vpop.f32.mrf.mxu0
      %1817 = vmatprep.mubr.bf16.mxu0 0
      %1818 = vmatmul.mubr.bf16.gmra.mxu0 %v1041
      %v1819 = vpop.f32.mrf.mxu0
      %v1820 = vadd.f32 0.0, %v1819
      %v1821 = vpop.f32.mrf.mxu0
      %v1822 = vpop.f32.mrf.mxu0
      %v1823 = vadd.f32 0.0, %v1822
      %v1824 = vpop.f32.mrf.mxu0
      %1825 = vmatprep.mubr.bf16.mxu0 0
      %1826 = vmatmul.mubr.bf16.gmra.mxu0 %v1044
      %v1827 = vpop.f32.mrf.mxu0
      %v1828 = vadd.f32 0.0, %v1827
      %v1829 = vpop.f32.mrf.mxu0
      %v1830 = vpop.f32.mrf.mxu0
      %v1831 = vadd.f32 0.0, %v1830
      %v1832 = vpop.f32.mrf.mxu0
      %1833 = vmatprep.mubr.bf16.mxu0 0
      %1834 = vmatmul.mubr.bf16.gmra.mxu0 %v1047
      %v1835 = vpop.f32.mrf.mxu0
      %v1836 = vadd.f32 0.0, %v1835
      %v1837 = vpop.f32.mrf.mxu0
      %v1838 = vpop.f32.mrf.mxu0
      %v1839 = vadd.f32 0.0, %v1838
      %v1840 = vpop.f32.mrf.mxu0
      %1841 = vmatprep.mubr.bf16.mxu0 0
      %1842 = vmatmul.mubr.bf16.gmra.mxu0 %v1050
      %v1843 = vpop.f32.mrf.mxu0
      %v1844 = vadd.f32 0.0, %v1843
      %v1845 = vpop.f32.mrf.mxu0
      %v1846 = vpop.f32.mrf.mxu0
      %v1847 = vadd.f32 0.0, %v1846
      %v1848 = vpop.f32.mrf.mxu0
      %1849 = vmatprep.mubr.bf16.mxu0 0
      %1850 = vmatmul.mubr.bf16.gmra.mxu0 %v1053
      %v1851 = vpop.f32.mrf.mxu0
      %v1852 = vadd.f32 0.0, %v1851
      %v1853 = vpop.f32.mrf.mxu0
      %v1854 = vpop.f32.mrf.mxu0
      %v1855 = vadd.f32 0.0, %v1854
      %v1856 = vpop.f32.mrf.mxu0
      %1857 = vmatprep.mubr.bf16.mxu0 0
      %1858 = vmatmul.mubr.bf16.gmra.mxu0 %v1466
      %v1859 = vpop.f32.mrf.mxu0
      %v1860 = vadd.f32 0.0, %v1859
      %v1861 = vpop.f32.mrf.mxu0
      %v1862 = vpop.f32.mrf.mxu0
      %v1863 = vadd.f32 0.0, %v1862
      %v1864 = vpop.f32.mrf.mxu0
      %1865 = vmatprep.mubr.bf16.mxu0 0
      %1866 = vmatmul.mubr.bf16.gmra.mxu0 %v1711
      %v1867 = vpop.f32.mrf.mxu0
      %v1868 = vadd.f32 0.0, %v1867
      %v1869 = vpop.f32.mrf.mxu0
      %v1870 = vpop.f32.mrf.mxu0
      %v1871 = vadd.f32 0.0, %v1870
      %v1872 = vpop.f32.mrf.mxu0
      %1873 = vdwg.mxu0
      %v1874 = vadd.f32 %v1629, %v1748
      %v1875 = vadd.f32 %v1630, %v1751
      %v1876 = vadd.f32 %v1631, %v1756
      %v1877 = vadd.f32 %v1632, %v1759
      %v1878 = vadd.f32 %v1633, %v1764
      %v1879 = vadd.f32 %v1634, %v1767
      %v1880 = vadd.f32 %v1635, %v1772
      %v1881 = vadd.f32 %v1636, %v1775
      %v1882 = vadd.f32 %v1637, %v1780
      %v1883 = vadd.f32 %v1638, %v1783
      %v1884 = vadd.f32 %v1639, %v1788
      %v1885 = vadd.f32 %v1640, %v1791
      %v1886 = vadd.f32 %v1641, %v1796
      %v1887 = vadd.f32 %v1642, %v1799
      %v1888 = vadd.f32 %v1643, %v1804
      %v1889 = vadd.f32 %v1644, %v1807
      %v1890 = vadd.f32 %v1645, %v1812
      %v1891 = vadd.f32 %v1646, %v1815
      %v1892 = vadd.f32 %v1647, %v1820
      %v1893 = vadd.f32 %v1648, %v1823
      %v1894 = vadd.f32 %v1649, %v1828
      %v1895 = vadd.f32 %v1650, %v1831
      %v1896 = vadd.f32 %v1651, %v1836
      %v1897 = vadd.f32 %v1652, %v1839
      %v1898 = vadd.f32 %v1653, %v1844
      %v1899 = vadd.f32 %v1654, %v1847
      %v1900 = vadd.f32 %v1655, %v1852
      %v1901 = vadd.f32 %v1656, %v1855
      %v1902 = vadd.f32 %v1657, %v1860
      %v1903 = vadd.f32 %v1658, %v1863
      %v1904 = vadd.f32 %v1659, %v1868
      %v1905 = vadd.f32 %v1660, %v1871
      %s1906 = scalar_lea.vmem %s1, 192
      %v1907 = vld [vmem:[%s1906] sm:$0xf]
      %v1908 = vld [vmem:[%s1906 + $0x4] sm:$0xf]
      %v1909 = vld [vmem:[%s1906 + $0x8] sm:$0xf]
      %v1910 = vld [vmem:[%s1906 + $0xc] sm:$0xf]
      %v1911 = vld [vmem:[%s1906 + $0x10] sm:$0xf]
      %v1912 = vld [vmem:[%s1906 + $0x14] sm:$0xf]
      %v1913 = vld [vmem:[%s1906 + $0x18] sm:$0xf]
      %v1914 = vld [vmem:[%s1906 + $0x1c] sm:$0xf]
      %v1915 = vld [vmem:[%s1906 + $0x20] sm:$0xf]
      %v1916 = vld [vmem:[%s1906 + $0x24] sm:$0xf]
      %v1917 = vld [vmem:[%s1906 + $0x28] sm:$0xf]
      %v1918 = vld [vmem:[%s1906 + $0x2c] sm:$0xf]
      %v1931 = vunpack.c.l.b16 %v1907
      %v1932 = vunpack.c.l.b16 %v1908
      %v1933 = vunpack.c.l.b16 %v1909
      %v1934 = vunpack.c.l.b16 %v1910
      %v1935 = vunpack.c.l.b16 %v1911
      %v1936 = vunpack.c.l.b16 %v1912
      %v1937 = vunpack.c.l.b16 %v1913
      %v1938 = vunpack.c.l.b16 %v1914
      %v1939 = vunpack.c.l.b16 %v1915
      %v1940 = vunpack.c.l.b16 %v1916
      %v1941 = vunpack.c.l.b16 %v1917
      %v1942 = vunpack.c.l.b16 %v1918
      %v1943 = vpack.c.b16 %v1932, %v1931
      %v1944 = vpack.c.b16 %v1934, %v1933
      %v1945 = vpack.c.b16 %v1936, %v1935
      %v1946 = vpack.c.b16 %v1938, %v1937
      %v1947 = vpack.c.b16 %v1940, %v1939
      %v1948 = vpack.c.b16 %v1942, %v1941
      %v1956 = vsel %vm1006, %v942, 0
      %1958 = vmatprep.subr.bf16.mxu0 0
      %1959 = vmatpush1.bf16.msra.mxu0 0
      %1960 = vmatprep.subr.bf16.mxu0 0
      %1961 = vmatpush1.bf16.msra.mxu0 0
      %1962 = vmatprep.subr.bf16.mxu0 0
      %1963 = vmatpush1.bf16.msra.mxu0 %v1948
      %1964 = vmatprep.subr.bf16.mxu0 0
      %1965 = vmatpush1.bf16.msra.mxu0 %v1947
      %1966 = vmatprep.subr.bf16.mxu0 0
      %1967 = vmatpush1.bf16.msra.mxu0 %v1946
      %1968 = vmatprep.subr.bf16.mxu0 0
      %1969 = vmatpush1.bf16.msra.mxu0 %v1945
      %1970 = vmatprep.subr.bf16.mxu0 0
      %1971 = vmatpush1.bf16.msra.mxu0 %v1944
      %1972 = vmatprep.subr.bf16.mxu0 0
      %1973 = vmatpush1.bf16.msra.mxu0 %v1943
      %1974 = vmatprep.subr.bf16.mxu0 0
      %1975 = vmatpush2.bf16.msra.mxu0 0
      %1976 = vmatprep.subr.bf16.mxu0 0
      %1977 = vmatpush2.bf16.msra.mxu0 0
      %1978 = vmatprep.subr.bf16.mxu0 0
      %1979 = vmatpush2.bf16.msra.mxu0 0
      %1980 = vmatprep.subr.bf16.mxu0 0
      %1981 = vmatpush2.bf16.msra.mxu0 0
      %1982 = vmatprep.subr.bf16.mxu0 0
      %1983 = vmatpush2.bf16.msra.mxu0 0
      %1984 = vmatprep.subr.bf16.mxu0 0
      %1985 = vmatpush2.bf16.msra.mxu0 0
      %1986 = vmatprep.subr.bf16.mxu0 0
      %1987 = vmatpush2.bf16.msra.mxu0 0
      %1988 = vmatprep.subr.bf16.mxu0 0
      %1989 = vmatpush2.bf16.msra.mxu0 0
      %1990 = vmatprep.mubr.bf16.mxu0 0
      %1991 = vmatmul.mubr.bf16.gmra.mxu0 %v1017
      %v1992 = vpop.f32.mrf.mxu0
      %v1993 = vadd.f32 0.0, %v1992
      %v1994 = vpop.f32.mrf.mxu0
      %v1995 = vpop.f32.mrf.mxu0
      %v1996 = vadd.f32 0.0, %v1995
      %v1997 = vpop.f32.mrf.mxu0
      %1998 = vmatprep.mubr.bf16.mxu0 0
      %1999 = vmatmul.mubr.bf16.gmra.mxu0 %v1020
      %v2000 = vpop.f32.mrf.mxu0
      %v2001 = vadd.f32 0.0, %v2000
      %v2002 = vpop.f32.mrf.mxu0
      %v2003 = vpop.f32.mrf.mxu0
      %v2004 = vadd.f32 0.0, %v2003
      %v2005 = vpop.f32.mrf.mxu0
      %2006 = vmatprep.mubr.bf16.mxu0 0
      %2007 = vmatmul.mubr.bf16.gmra.mxu0 %v1023
      %v2008 = vpop.f32.mrf.mxu0
      %v2009 = vadd.f32 0.0, %v2008
      %v2010 = vpop.f32.mrf.mxu0
      %v2011 = vpop.f32.mrf.mxu0
      %v2012 = vadd.f32 0.0, %v2011
      %v2013 = vpop.f32.mrf.mxu0
      %2014 = vmatprep.mubr.bf16.mxu0 0
      %2015 = vmatmul.mubr.bf16.gmra.mxu0 %v1026
      %v2016 = vpop.f32.mrf.mxu0
      %v2017 = vadd.f32 0.0, %v2016
      %v2018 = vpop.f32.mrf.mxu0
      %v2019 = vpop.f32.mrf.mxu0
      %v2020 = vadd.f32 0.0, %v2019
      %v2021 = vpop.f32.mrf.mxu0
      %2022 = vmatprep.mubr.bf16.mxu0 0
      %2023 = vmatmul.mubr.bf16.gmra.mxu0 %v1029
      %v2024 = vpop.f32.mrf.mxu0
      %v2025 = vadd.f32 0.0, %v2024
      %v2026 = vpop.f32.mrf.mxu0
      %v2027 = vpop.f32.mrf.mxu0
      %v2028 = vadd.f32 0.0, %v2027
      %v2029 = vpop.f32.mrf.mxu0
      %2030 = vmatprep.mubr.bf16.mxu0 0
      %2031 = vmatmul.mubr.bf16.gmra.mxu0 %v1032
      %v2032 = vpop.f32.mrf.mxu0
      %v2033 = vadd.f32 0.0, %v2032
      %v2034 = vpop.f32.mrf.mxu0
      %v2035 = vpop.f32.mrf.mxu0
      %v2036 = vadd.f32 0.0, %v2035
      %v2037 = vpop.f32.mrf.mxu0
      %2038 = vmatprep.mubr.bf16.mxu0 0
      %2039 = vmatmul.mubr.bf16.gmra.mxu0 %v1035
      %v2040 = vpop.f32.mrf.mxu0
      %v2041 = vadd.f32 0.0, %v2040
      %v2042 = vpop.f32.mrf.mxu0
      %v2043 = vpop.f32.mrf.mxu0
      %v2044 = vadd.f32 0.0, %v2043
      %v2045 = vpop.f32.mrf.mxu0
      %2046 = vmatprep.mubr.bf16.mxu0 0
      %2047 = vmatmul.mubr.bf16.gmra.mxu0 %v1038
      %v2048 = vpop.f32.mrf.mxu0
      %v2049 = vadd.f32 0.0, %v2048
      %v2050 = vpop.f32.mrf.mxu0
      %v2051 = vpop.f32.mrf.mxu0
      %v2052 = vadd.f32 0.0, %v2051
      %v2053 = vpop.f32.mrf.mxu0
      %2054 = vmatprep.mubr.bf16.mxu0 0
      %2055 = vmatmul.mubr.bf16.gmra.mxu0 %v1041
      %v2056 = vpop.f32.mrf.mxu0
      %v2057 = vadd.f32 0.0, %v2056
      %v2058 = vpop.f32.mrf.mxu0
      %v2059 = vpop.f32.mrf.mxu0
      %v2060 = vadd.f32 0.0, %v2059
      %v2061 = vpop.f32.mrf.mxu0
      %2062 = vmatprep.mubr.bf16.mxu0 0
      %2063 = vmatmul.mubr.bf16.gmra.mxu0 %v1044
      %v2064 = vpop.f32.mrf.mxu0
      %v2065 = vadd.f32 0.0, %v2064
      %v2066 = vpop.f32.mrf.mxu0
      %v2067 = vpop.f32.mrf.mxu0
      %v2068 = vadd.f32 0.0, %v2067
      %v2069 = vpop.f32.mrf.mxu0
      %2070 = vmatprep.mubr.bf16.mxu0 0
      %2071 = vmatmul.mubr.bf16.gmra.mxu0 %v1047
      %v2072 = vpop.f32.mrf.mxu0
      %v2073 = vadd.f32 0.0, %v2072
      %v2074 = vpop.f32.mrf.mxu0
      %v2075 = vpop.f32.mrf.mxu0
      %v2076 = vadd.f32 0.0, %v2075
      %v2077 = vpop.f32.mrf.mxu0
      %2078 = vmatprep.mubr.bf16.mxu0 0
      %2079 = vmatmul.mubr.bf16.gmra.mxu0 %v1050
      %v2080 = vpop.f32.mrf.mxu0
      %v2081 = vadd.f32 0.0, %v2080
      %v2082 = vpop.f32.mrf.mxu0
      %v2083 = vpop.f32.mrf.mxu0
      %v2084 = vadd.f32 0.0, %v2083
      %v2085 = vpop.f32.mrf.mxu0
      %2086 = vmatprep.mubr.bf16.mxu0 0
      %2087 = vmatmul.mubr.bf16.gmra.mxu0 %v1053
      %v2088 = vpop.f32.mrf.mxu0
      %v2089 = vadd.f32 0.0, %v2088
      %v2090 = vpop.f32.mrf.mxu0
      %v2091 = vpop.f32.mrf.mxu0
      %v2092 = vadd.f32 0.0, %v2091
      %v2093 = vpop.f32.mrf.mxu0
      %2094 = vmatprep.mubr.bf16.mxu0 0
      %2095 = vmatmul.mubr.bf16.gmra.mxu0 %v1466
      %v2096 = vpop.f32.mrf.mxu0
      %v2097 = vadd.f32 0.0, %v2096
      %v2098 = vpop.f32.mrf.mxu0
      %v2099 = vpop.f32.mrf.mxu0
      %v2100 = vadd.f32 0.0, %v2099
      %v2101 = vpop.f32.mrf.mxu0
      %2102 = vmatprep.mubr.bf16.mxu0 0
      %2103 = vmatmul.mubr.bf16.gmra.mxu0 %v1711
      %v2104 = vpop.f32.mrf.mxu0
      %v2105 = vadd.f32 0.0, %v2104
      %v2106 = vpop.f32.mrf.mxu0
      %v2107 = vpop.f32.mrf.mxu0
      %v2108 = vadd.f32 0.0, %v2107
      %v2109 = vpop.f32.mrf.mxu0
      %2110 = vmatprep.mubr.bf16.mxu0 0
      %2111 = vmatmul.mubr.bf16.gmra.mxu0 %v1956
      %v2112 = vpop.f32.mrf.mxu0
      %v2113 = vadd.f32 0.0, %v2112
      %v2114 = vpop.f32.mrf.mxu0
      %v2115 = vpop.f32.mrf.mxu0
      %v2116 = vadd.f32 0.0, %v2115
      %v2117 = vpop.f32.mrf.mxu0
      %2118 = vdwg.mxu0
      %v2119 = vadd.f32 %v1874, %v1993
      %v2120 = vadd.f32 %v1875, %v1996
      %v2121 = vadd.f32 %v1876, %v2001
      %v2122 = vadd.f32 %v1877, %v2004
      %v2123 = vadd.f32 %v1878, %v2009
      %v2124 = vadd.f32 %v1879, %v2012
      %v2125 = vadd.f32 %v1880, %v2017
      %v2126 = vadd.f32 %v1881, %v2020
      %v2127 = vadd.f32 %v1882, %v2025
      %v2128 = vadd.f32 %v1883, %v2028
      %v2129 = vadd.f32 %v1884, %v2033
      %v2130 = vadd.f32 %v1885, %v2036
      %v2131 = vadd.f32 %v1886, %v2041
      %v2132 = vadd.f32 %v1887, %v2044
      %v2133 = vadd.f32 %v1888, %v2049
      %v2134 = vadd.f32 %v1889, %v2052
      %v2135 = vadd.f32 %v1890, %v2057
      %v2136 = vadd.f32 %v1891, %v2060
      %v2137 = vadd.f32 %v1892, %v2065
      %v2138 = vadd.f32 %v1893, %v2068
      %v2139 = vadd.f32 %v1894, %v2073
      %v2140 = vadd.f32 %v1895, %v2076
      %v2141 = vadd.f32 %v1896, %v2081
      %v2142 = vadd.f32 %v1897, %v2084
      %v2143 = vadd.f32 %v1898, %v2089
      %v2144 = vadd.f32 %v1899, %v2092
      %v2145 = vadd.f32 %v1900, %v2097
      %v2146 = vadd.f32 %v1901, %v2100
      %v2147 = vadd.f32 %v1902, %v2105
      %v2148 = vadd.f32 %v1903, %v2108
      %v2149 = vadd.f32 %v1904, %v2113
      %v2150 = vadd.f32 %v1905, %v2116
      %s2151 = scalar_lea.vmem %s1, 240
      %v2152 = vld [vmem:[%s2151] sm:$0xf]
      %v2153 = vld [vmem:[%s2151 + $0x4] sm:$0xf]
      %v2154 = vld [vmem:[%s2151 + $0x8] sm:$0xf]
      %v2155 = vld [vmem:[%s2151 + $0xc] sm:$0xf]
      %v2156 = vld [vmem:[%s2151 + $0x10] sm:$0xf]
      %v2157 = vld [vmem:[%s2151 + $0x14] sm:$0xf]
      %v2158 = vld [vmem:[%s2151 + $0x18] sm:$0xf]
      %v2159 = vld [vmem:[%s2151 + $0x1c] sm:$0xf]
      %v2160 = vld [vmem:[%s2151 + $0x20] sm:$0xf]
      %v2161 = vld [vmem:[%s2151 + $0x24] sm:$0xf]
      %v2162 = vld [vmem:[%s2151 + $0x28] sm:$0xf]
      %v2163 = vld [vmem:[%s2151 + $0x2c] sm:$0xf]
      %v2176 = vunpack.c.l.b16 %v2152
      %v2177 = vunpack.c.l.b16 %v2153
      %v2178 = vunpack.c.l.b16 %v2154
      %v2179 = vunpack.c.l.b16 %v2155
      %v2180 = vunpack.c.l.b16 %v2156
      %v2181 = vunpack.c.l.b16 %v2157
      %v2182 = vunpack.c.l.b16 %v2158
      %v2183 = vunpack.c.l.b16 %v2159
      %v2184 = vunpack.c.l.b16 %v2160
      %v2185 = vunpack.c.l.b16 %v2161
      %v2186 = vunpack.c.l.b16 %v2162
      %v2187 = vunpack.c.l.b16 %v2163
      %v2188 = vpack.c.b16 %v2177, %v2176
      %v2189 = vpack.c.b16 %v2179, %v2178
      %v2190 = vpack.c.b16 %v2181, %v2180
      %v2191 = vpack.c.b16 %v2183, %v2182
      %v2192 = vpack.c.b16 %v2185, %v2184
      %v2193 = vpack.c.b16 %v2187, %v2186
      %v2201 = vsel %vm1006, %v943, 0
      %2203 = vmatprep.subr.bf16.mxu0 0
      %2204 = vmatpush1.bf16.msra.mxu0 0
      %2205 = vmatprep.subr.bf16.mxu0 0
      %2206 = vmatpush1.bf16.msra.mxu0 0
      %2207 = vmatprep.subr.bf16.mxu0 0
      %2208 = vmatpush1.bf16.msra.mxu0 %v2193
      %2209 = vmatprep.subr.bf16.mxu0 0
      %2210 = vmatpush1.bf16.msra.mxu0 %v2192
      %2211 = vmatprep.subr.bf16.mxu0 0
      %2212 = vmatpush1.bf16.msra.mxu0 %v2191
      %2213 = vmatprep.subr.bf16.mxu0 0
      %2214 = vmatpush1.bf16.msra.mxu0 %v2190
      %2215 = vmatprep.subr.bf16.mxu0 0
      %2216 = vmatpush1.bf16.msra.mxu0 %v2189
      %2217 = vmatprep.subr.bf16.mxu0 0
      %2218 = vmatpush1.bf16.msra.mxu0 %v2188
      %2219 = vmatprep.subr.bf16.mxu0 0
      %2220 = vmatpush2.bf16.msra.mxu0 0
      %2221 = vmatprep.subr.bf16.mxu0 0
      %2222 = vmatpush2.bf16.msra.mxu0 0
      %2223 = vmatprep.subr.bf16.mxu0 0
      %2224 = vmatpush2.bf16.msra.mxu0 0
      %2225 = vmatprep.subr.bf16.mxu0 0
      %2226 = vmatpush2.bf16.msra.mxu0 0
      %2227 = vmatprep.subr.bf16.mxu0 0
      %2228 = vmatpush2.bf16.msra.mxu0 0
      %2229 = vmatprep.subr.bf16.mxu0 0
      %2230 = vmatpush2.bf16.msra.mxu0 0
      %2231 = vmatprep.subr.bf16.mxu0 0
      %2232 = vmatpush2.bf16.msra.mxu0 0
      %2233 = vmatprep.subr.bf16.mxu0 0
      %2234 = vmatpush2.bf16.msra.mxu0 0
      %2235 = vmatprep.mubr.bf16.mxu0 0
      %2236 = vmatmul.mubr.bf16.gmra.mxu0 %v1020
      %v2237 = vpop.f32.mrf.mxu0
      %v2238 = vadd.f32 0.0, %v2237
      %v2239 = vpop.f32.mrf.mxu0
      %v2240 = vpop.f32.mrf.mxu0
      %v2241 = vadd.f32 0.0, %v2240
      %v2242 = vpop.f32.mrf.mxu0
      %2243 = vmatprep.mubr.bf16.mxu0 0
      %2244 = vmatmul.mubr.bf16.gmra.mxu0 %v1023
      %v2245 = vpop.f32.mrf.mxu0
      %v2246 = vadd.f32 0.0, %v2245
      %v2247 = vpop.f32.mrf.mxu0
      %v2248 = vpop.f32.mrf.mxu0
      %v2249 = vadd.f32 0.0, %v2248
      %v2250 = vpop.f32.mrf.mxu0
      %2251 = vmatprep.mubr.bf16.mxu0 0
      %2252 = vmatmul.mubr.bf16.gmra.mxu0 %v1026
      %v2253 = vpop.f32.mrf.mxu0
      %v2254 = vadd.f32 0.0, %v2253
      %v2255 = vpop.f32.mrf.mxu0
      %v2256 = vpop.f32.mrf.mxu0
      %v2257 = vadd.f32 0.0, %v2256
      %v2258 = vpop.f32.mrf.mxu0
      %2259 = vmatprep.mubr.bf16.mxu0 0
      %2260 = vmatmul.mubr.bf16.gmra.mxu0 %v1029
      %v2261 = vpop.f32.mrf.mxu0
      %v2262 = vadd.f32 0.0, %v2261
      %v2263 = vpop.f32.mrf.mxu0
      %v2264 = vpop.f32.mrf.mxu0
      %v2265 = vadd.f32 0.0, %v2264
      %v2266 = vpop.f32.mrf.mxu0
      %2267 = vmatprep.mubr.bf16.mxu0 0
      %2268 = vmatmul.mubr.bf16.gmra.mxu0 %v1032
      %v2269 = vpop.f32.mrf.mxu0
      %v2270 = vadd.f32 0.0, %v2269
      %v2271 = vpop.f32.mrf.mxu0
      %v2272 = vpop.f32.mrf.mxu0
      %v2273 = vadd.f32 0.0, %v2272
      %v2274 = vpop.f32.mrf.mxu0
      %2275 = vmatprep.mubr.bf16.mxu0 0
      %2276 = vmatmul.mubr.bf16.gmra.mxu0 %v1035
      %v2277 = vpop.f32.mrf.mxu0
      %v2278 = vadd.f32 0.0, %v2277
      %v2279 = vpop.f32.mrf.mxu0
      %v2280 = vpop.f32.mrf.mxu0
      %v2281 = vadd.f32 0.0, %v2280
      %v2282 = vpop.f32.mrf.mxu0
      %2283 = vmatprep.mubr.bf16.mxu0 0
      %2284 = vmatmul.mubr.bf16.gmra.mxu0 %v1038
      %v2285 = vpop.f32.mrf.mxu0
      %v2286 = vadd.f32 0.0, %v2285
      %v2287 = vpop.f32.mrf.mxu0
      %v2288 = vpop.f32.mrf.mxu0
      %v2289 = vadd.f32 0.0, %v2288
      %v2290 = vpop.f32.mrf.mxu0
      %2291 = vmatprep.mubr.bf16.mxu0 0
      %2292 = vmatmul.mubr.bf16.gmra.mxu0 %v1041
      %v2293 = vpop.f32.mrf.mxu0
      %v2294 = vadd.f32 0.0, %v2293
      %v2295 = vpop.f32.mrf.mxu0
      %v2296 = vpop.f32.mrf.mxu0
      %v2297 = vadd.f32 0.0, %v2296
      %v2298 = vpop.f32.mrf.mxu0
      %2299 = vmatprep.mubr.bf16.mxu0 0
      %2300 = vmatmul.mubr.bf16.gmra.mxu0 %v1044
      %v2301 = vpop.f32.mrf.mxu0
      %v2302 = vadd.f32 0.0, %v2301
      %v2303 = vpop.f32.mrf.mxu0
      %v2304 = vpop.f32.mrf.mxu0
      %v2305 = vadd.f32 0.0, %v2304
      %v2306 = vpop.f32.mrf.mxu0
      %2307 = vmatprep.mubr.bf16.mxu0 0
      %2308 = vmatmul.mubr.bf16.gmra.mxu0 %v1047
      %v2309 = vpop.f32.mrf.mxu0
      %v2310 = vadd.f32 0.0, %v2309
      %v2311 = vpop.f32.mrf.mxu0
      %v2312 = vpop.f32.mrf.mxu0
      %v2313 = vadd.f32 0.0, %v2312
      %v2314 = vpop.f32.mrf.mxu0
      %2315 = vmatprep.mubr.bf16.mxu0 0
      %2316 = vmatmul.mubr.bf16.gmra.mxu0 %v1050
      %v2317 = vpop.f32.mrf.mxu0
      %v2318 = vadd.f32 0.0, %v2317
      %v2319 = vpop.f32.mrf.mxu0
      %v2320 = vpop.f32.mrf.mxu0
      %v2321 = vadd.f32 0.0, %v2320
      %v2322 = vpop.f32.mrf.mxu0
      %2323 = vmatprep.mubr.bf16.mxu0 0
      %2324 = vmatmul.mubr.bf16.gmra.mxu0 %v1053
      %v2325 = vpop.f32.mrf.mxu0
      %v2326 = vadd.f32 0.0, %v2325
      %v2327 = vpop.f32.mrf.mxu0
      %v2328 = vpop.f32.mrf.mxu0
      %v2329 = vadd.f32 0.0, %v2328
      %v2330 = vpop.f32.mrf.mxu0
      %2331 = vmatprep.mubr.bf16.mxu0 0
      %2332 = vmatmul.mubr.bf16.gmra.mxu0 %v1466
      %v2333 = vpop.f32.mrf.mxu0
      %v2334 = vadd.f32 0.0, %v2333
      %v2335 = vpop.f32.mrf.mxu0
      %v2336 = vpop.f32.mrf.mxu0
      %v2337 = vadd.f32 0.0, %v2336
      %v2338 = vpop.f32.mrf.mxu0
      %2339 = vmatprep.mubr.bf16.mxu0 0
      %2340 = vmatmul.mubr.bf16.gmra.mxu0 %v1711
      %v2341 = vpop.f32.mrf.mxu0
      %v2342 = vadd.f32 0.0, %v2341
      %v2343 = vpop.f32.mrf.mxu0
      %v2344 = vpop.f32.mrf.mxu0
      %v2345 = vadd.f32 0.0, %v2344
      %v2346 = vpop.f32.mrf.mxu0
      %2347 = vmatprep.mubr.bf16.mxu0 0
      %2348 = vmatmul.mubr.bf16.gmra.mxu0 %v1956
      %v2349 = vpop.f32.mrf.mxu0
      %v2350 = vadd.f32 0.0, %v2349
      %v2351 = vpop.f32.mrf.mxu0
      %v2352 = vpop.f32.mrf.mxu0
      %v2353 = vadd.f32 0.0, %v2352
      %v2354 = vpop.f32.mrf.mxu0
      %2355 = vmatprep.mubr.bf16.mxu0 0
      %2356 = vmatmul.mubr.bf16.gmra.mxu0 %v2201
      %v2357 = vpop.f32.mrf.mxu0
      %v2358 = vadd.f32 0.0, %v2357
      %v2359 = vpop.f32.mrf.mxu0
      %v2360 = vpop.f32.mrf.mxu0
      %v2361 = vadd.f32 0.0, %v2360
      %v2362 = vpop.f32.mrf.mxu0
      %2363 = vdwg.mxu0
      %v2364 = vadd.f32 %v2119, %v2238
      %v2365 = vadd.f32 %v2120, %v2241
      %v2366 = vadd.f32 %v2121, %v2246
      %v2367 = vadd.f32 %v2122, %v2249
      %v2368 = vadd.f32 %v2123, %v2254
      %v2369 = vadd.f32 %v2124, %v2257
      %v2370 = vadd.f32 %v2125, %v2262
      %v2371 = vadd.f32 %v2126, %v2265
      %v2372 = vadd.f32 %v2127, %v2270
      %v2373 = vadd.f32 %v2128, %v2273
      %v2374 = vadd.f32 %v2129, %v2278
      %v2375 = vadd.f32 %v2130, %v2281
      %v2376 = vadd.f32 %v2131, %v2286
      %v2377 = vadd.f32 %v2132, %v2289
      %v2378 = vadd.f32 %v2133, %v2294
      %v2379 = vadd.f32 %v2134, %v2297
      %v2380 = vadd.f32 %v2135, %v2302
      %v2381 = vadd.f32 %v2136, %v2305
      %v2382 = vadd.f32 %v2137, %v2310
      %v2383 = vadd.f32 %v2138, %v2313
      %v2384 = vadd.f32 %v2139, %v2318
      %v2385 = vadd.f32 %v2140, %v2321
      %v2386 = vadd.f32 %v2141, %v2326
      %v2387 = vadd.f32 %v2142, %v2329
      %v2388 = vadd.f32 %v2143, %v2334
      %v2389 = vadd.f32 %v2144, %v2337
      %v2390 = vadd.f32 %v2145, %v2342
      %v2391 = vadd.f32 %v2146, %v2345
      %v2392 = vadd.f32 %v2147, %v2350
      %v2393 = vadd.f32 %v2148, %v2353
      %v2394 = vadd.f32 %v2149, %v2358
      %v2395 = vadd.f32 %v2150, %v2361
      %s2396 = scalar_lea.vmem %s1, 288
      %v2397 = vld [vmem:[%s2396] sm:$0xf]
      %v2398 = vld [vmem:[%s2396 + $0x4] sm:$0xf]
      %v2399 = vld [vmem:[%s2396 + $0x8] sm:$0xf]
      %v2400 = vld [vmem:[%s2396 + $0xc] sm:$0xf]
      %v2401 = vld [vmem:[%s2396 + $0x10] sm:$0xf]
      %v2402 = vld [vmem:[%s2396 + $0x14] sm:$0xf]
      %v2403 = vld [vmem:[%s2396 + $0x18] sm:$0xf]
      %v2404 = vld [vmem:[%s2396 + $0x1c] sm:$0xf]
      %v2405 = vld [vmem:[%s2396 + $0x20] sm:$0xf]
      %v2406 = vld [vmem:[%s2396 + $0x24] sm:$0xf]
      %v2407 = vld [vmem:[%s2396 + $0x28] sm:$0xf]
      %v2408 = vld [vmem:[%s2396 + $0x2c] sm:$0xf]
      %v2421 = vunpack.c.l.b16 %v2397
      %v2422 = vunpack.c.l.b16 %v2398
      %v2423 = vunpack.c.l.b16 %v2399
      %v2424 = vunpack.c.l.b16 %v2400
      %v2425 = vunpack.c.l.b16 %v2401
      %v2426 = vunpack.c.l.b16 %v2402
      %v2427 = vunpack.c.l.b16 %v2403
      %v2428 = vunpack.c.l.b16 %v2404
      %v2429 = vunpack.c.l.b16 %v2405
      %v2430 = vunpack.c.l.b16 %v2406
      %v2431 = vunpack.c.l.b16 %v2407
      %v2432 = vunpack.c.l.b16 %v2408
      %v2433 = vpack.c.b16 %v2422, %v2421
      %v2434 = vpack.c.b16 %v2424, %v2423
      %v2435 = vpack.c.b16 %v2426, %v2425
      %v2436 = vpack.c.b16 %v2428, %v2427
      %v2437 = vpack.c.b16 %v2430, %v2429
      %v2438 = vpack.c.b16 %v2432, %v2431
      %v2446 = vsel %vm1006, %v944, 0
      %2448 = vmatprep.subr.bf16.mxu0 0
      %2449 = vmatpush1.bf16.msra.mxu0 0
      %2450 = vmatprep.subr.bf16.mxu0 0
      %2451 = vmatpush1.bf16.msra.mxu0 0
      %2452 = vmatprep.subr.bf16.mxu0 0
      %2453 = vmatpush1.bf16.msra.mxu0 %v2438
      %2454 = vmatprep.subr.bf16.mxu0 0
      %2455 = vmatpush1.bf16.msra.mxu0 %v2437
      %2456 = vmatprep.subr.bf16.mxu0 0
      %2457 = vmatpush1.bf16.msra.mxu0 %v2436
      %2458 = vmatprep.subr.bf16.mxu0 0
      %2459 = vmatpush1.bf16.msra.mxu0 %v2435
      %2460 = vmatprep.subr.bf16.mxu0 0
      %2461 = vmatpush1.bf16.msra.mxu0 %v2434
      %2462 = vmatprep.subr.bf16.mxu0 0
      %2463 = vmatpush1.bf16.msra.mxu0 %v2433
      %2464 = vmatprep.subr.bf16.mxu0 0
      %2465 = vmatpush2.bf16.msra.mxu0 0
      %2466 = vmatprep.subr.bf16.mxu0 0
      %2467 = vmatpush2.bf16.msra.mxu0 0
      %2468 = vmatprep.subr.bf16.mxu0 0
      %2469 = vmatpush2.bf16.msra.mxu0 0
      %2470 = vmatprep.subr.bf16.mxu0 0
      %2471 = vmatpush2.bf16.msra.mxu0 0
      %2472 = vmatprep.subr.bf16.mxu0 0
      %2473 = vmatpush2.bf16.msra.mxu0 0
      %2474 = vmatprep.subr.bf16.mxu0 0
      %2475 = vmatpush2.bf16.msra.mxu0 0
      %2476 = vmatprep.subr.bf16.mxu0 0
      %2477 = vmatpush2.bf16.msra.mxu0 0
      %2478 = vmatprep.subr.bf16.mxu0 0
      %2479 = vmatpush2.bf16.msra.mxu0 0
      %2480 = vmatprep.mubr.bf16.mxu0 0
      %2481 = vmatmul.mubr.bf16.gmra.mxu0 %v1023
      %v2482 = vpop.f32.mrf.mxu0
      %v2483 = vadd.f32 0.0, %v2482
      %v2484 = vpop.f32.mrf.mxu0
      %v2485 = vpop.f32.mrf.mxu0
      %v2486 = vadd.f32 0.0, %v2485
      %v2487 = vpop.f32.mrf.mxu0
      %2488 = vmatprep.mubr.bf16.mxu0 0
      %2489 = vmatmul.mubr.bf16.gmra.mxu0 %v1026
      %v2490 = vpop.f32.mrf.mxu0
      %v2491 = vadd.f32 0.0, %v2490
      %v2492 = vpop.f32.mrf.mxu0
      %v2493 = vpop.f32.mrf.mxu0
      %v2494 = vadd.f32 0.0, %v2493
      %v2495 = vpop.f32.mrf.mxu0
      %2496 = vmatprep.mubr.bf16.mxu0 0
      %2497 = vmatmul.mubr.bf16.gmra.mxu0 %v1029
      %v2498 = vpop.f32.mrf.mxu0
      %v2499 = vadd.f32 0.0, %v2498
      %v2500 = vpop.f32.mrf.mxu0
      %v2501 = vpop.f32.mrf.mxu0
      %v2502 = vadd.f32 0.0, %v2501
      %v2503 = vpop.f32.mrf.mxu0
      %2504 = vmatprep.mubr.bf16.mxu0 0
      %2505 = vmatmul.mubr.bf16.gmra.mxu0 %v1032
      %v2506 = vpop.f32.mrf.mxu0
      %v2507 = vadd.f32 0.0, %v2506
      %v2508 = vpop.f32.mrf.mxu0
      %v2509 = vpop.f32.mrf.mxu0
      %v2510 = vadd.f32 0.0, %v2509
      %v2511 = vpop.f32.mrf.mxu0
      %2512 = vmatprep.mubr.bf16.mxu0 0
      %2513 = vmatmul.mubr.bf16.gmra.mxu0 %v1035
      %v2514 = vpop.f32.mrf.mxu0
      %v2515 = vadd.f32 0.0, %v2514
      %v2516 = vpop.f32.mrf.mxu0
      %v2517 = vpop.f32.mrf.mxu0
      %v2518 = vadd.f32 0.0, %v2517
      %v2519 = vpop.f32.mrf.mxu0
      %2520 = vmatprep.mubr.bf16.mxu0 0
      %2521 = vmatmul.mubr.bf16.gmra.mxu0 %v1038
      %v2522 = vpop.f32.mrf.mxu0
      %v2523 = vadd.f32 0.0, %v2522
      %v2524 = vpop.f32.mrf.mxu0
      %v2525 = vpop.f32.mrf.mxu0
      %v2526 = vadd.f32 0.0, %v2525
      %v2527 = vpop.f32.mrf.mxu0
      %2528 = vmatprep.mubr.bf16.mxu0 0
      %2529 = vmatmul.mubr.bf16.gmra.mxu0 %v1041
      %v2530 = vpop.f32.mrf.mxu0
      %v2531 = vadd.f32 0.0, %v2530
      %v2532 = vpop.f32.mrf.mxu0
      %v2533 = vpop.f32.mrf.mxu0
      %v2534 = vadd.f32 0.0, %v2533
      %v2535 = vpop.f32.mrf.mxu0
      %2536 = vmatprep.mubr.bf16.mxu0 0
      %2537 = vmatmul.mubr.bf16.gmra.mxu0 %v1044
      %v2538 = vpop.f32.mrf.mxu0
      %v2539 = vadd.f32 0.0, %v2538
      %v2540 = vpop.f32.mrf.mxu0
      %v2541 = vpop.f32.mrf.mxu0
      %v2542 = vadd.f32 0.0, %v2541
      %v2543 = vpop.f32.mrf.mxu0
      %2544 = vmatprep.mubr.bf16.mxu0 0
      %2545 = vmatmul.mubr.bf16.gmra.mxu0 %v1047
      %v2546 = vpop.f32.mrf.mxu0
      %v2547 = vadd.f32 0.0, %v2546
      %v2548 = vpop.f32.mrf.mxu0
      %v2549 = vpop.f32.mrf.mxu0
      %v2550 = vadd.f32 0.0, %v2549
      %v2551 = vpop.f32.mrf.mxu0
      %2552 = vmatprep.mubr.bf16.mxu0 0
      %2553 = vmatmul.mubr.bf16.gmra.mxu0 %v1050
      %v2554 = vpop.f32.mrf.mxu0
      %v2555 = vadd.f32 0.0, %v2554
      %v2556 = vpop.f32.mrf.mxu0
      %v2557 = vpop.f32.mrf.mxu0
      %v2558 = vadd.f32 0.0, %v2557
      %v2559 = vpop.f32.mrf.mxu0
      %2560 = vmatprep.mubr.bf16.mxu0 0
      %2561 = vmatmul.mubr.bf16.gmra.mxu0 %v1053
      %v2562 = vpop.f32.mrf.mxu0
      %v2563 = vadd.f32 0.0, %v2562
      %v2564 = vpop.f32.mrf.mxu0
      %v2565 = vpop.f32.mrf.mxu0
      %v2566 = vadd.f32 0.0, %v2565
      %v2567 = vpop.f32.mrf.mxu0
      %2568 = vmatprep.mubr.bf16.mxu0 0
      %2569 = vmatmul.mubr.bf16.gmra.mxu0 %v1466
      %v2570 = vpop.f32.mrf.mxu0
      %v2571 = vadd.f32 0.0, %v2570
      %v2572 = vpop.f32.mrf.mxu0
      %v2573 = vpop.f32.mrf.mxu0
      %v2574 = vadd.f32 0.0, %v2573
      %v2575 = vpop.f32.mrf.mxu0
      %2576 = vmatprep.mubr.bf16.mxu0 0
      %2577 = vmatmul.mubr.bf16.gmra.mxu0 %v1711
      %v2578 = vpop.f32.mrf.mxu0
      %v2579 = vadd.f32 0.0, %v2578
      %v2580 = vpop.f32.mrf.mxu0
      %v2581 = vpop.f32.mrf.mxu0
      %v2582 = vadd.f32 0.0, %v2581
      %v2583 = vpop.f32.mrf.mxu0
      %2584 = vmatprep.mubr.bf16.mxu0 0
      %2585 = vmatmul.mubr.bf16.gmra.mxu0 %v1956
      %v2586 = vpop.f32.mrf.mxu0
      %v2587 = vadd.f32 0.0, %v2586
      %v2588 = vpop.f32.mrf.mxu0
      %v2589 = vpop.f32.mrf.mxu0
      %v2590 = vadd.f32 0.0, %v2589
      %v2591 = vpop.f32.mrf.mxu0
      %2592 = vmatprep.mubr.bf16.mxu0 0
      %2593 = vmatmul.mubr.bf16.gmra.mxu0 %v2201
      %v2594 = vpop.f32.mrf.mxu0
      %v2595 = vadd.f32 0.0, %v2594
      %v2596 = vpop.f32.mrf.mxu0
      %v2597 = vpop.f32.mrf.mxu0
      %v2598 = vadd.f32 0.0, %v2597
      %v2599 = vpop.f32.mrf.mxu0
      %2600 = vmatprep.mubr.bf16.mxu0 0
      %2601 = vmatmul.mubr.bf16.gmra.mxu0 %v2446
      %v2602 = vpop.f32.mrf.mxu0
      %v2603 = vadd.f32 0.0, %v2602
      %v2604 = vpop.f32.mrf.mxu0
      %v2605 = vpop.f32.mrf.mxu0
      %v2606 = vadd.f32 0.0, %v2605
      %v2607 = vpop.f32.mrf.mxu0
      %2608 = vdwg.mxu0
      %v2609 = vadd.f32 %v2364, %v2483
      %v2610 = vadd.f32 %v2365, %v2486
      %v2611 = vadd.f32 %v2366, %v2491
      %v2612 = vadd.f32 %v2367, %v2494
      %v2613 = vadd.f32 %v2368, %v2499
      %v2614 = vadd.f32 %v2369, %v2502
      %v2615 = vadd.f32 %v2370, %v2507
      %v2616 = vadd.f32 %v2371, %v2510
      %v2617 = vadd.f32 %v2372, %v2515
      %v2618 = vadd.f32 %v2373, %v2518
      %v2619 = vadd.f32 %v2374, %v2523
      %v2620 = vadd.f32 %v2375, %v2526
      %v2621 = vadd.f32 %v2376, %v2531
      %v2622 = vadd.f32 %v2377, %v2534
      %v2623 = vadd.f32 %v2378, %v2539
      %v2624 = vadd.f32 %v2379, %v2542
      %v2625 = vadd.f32 %v2380, %v2547
      %v2626 = vadd.f32 %v2381, %v2550
      %v2627 = vadd.f32 %v2382, %v2555
      %v2628 = vadd.f32 %v2383, %v2558
      %v2629 = vadd.f32 %v2384, %v2563
      %v2630 = vadd.f32 %v2385, %v2566
      %v2631 = vadd.f32 %v2386, %v2571
      %v2632 = vadd.f32 %v2387, %v2574
      %v2633 = vadd.f32 %v2388, %v2579
      %v2634 = vadd.f32 %v2389, %v2582
      %v2635 = vadd.f32 %v2390, %v2587
      %v2636 = vadd.f32 %v2391, %v2590
      %v2637 = vadd.f32 %v2392, %v2595
      %v2638 = vadd.f32 %v2393, %v2598
      %v2639 = vadd.f32 %v2394, %v2603
      %v2640 = vadd.f32 %v2395, %v2606
      %v2641 = vld [vmem:[%s2] sm:$0x1]
      %v2643 = vlaneseq
      %v2644 = vshrl.u32 %v2643, 7
      %v2645 = vsub.s32 0, %v2644
      %v2646 = vrot.slane %v2641, %v2645
      %v2648 = vadd.f32 %v2609, %v2646
      %v2649 = vadd.f32 %v2610, %v2646
      %v2650 = vadd.f32 %v2611, %v2646
      %v2651 = vadd.f32 %v2612, %v2646
      %v2652 = vadd.f32 %v2613, %v2646
      %v2653 = vadd.f32 %v2614, %v2646
      %v2654 = vadd.f32 %v2615, %v2646
      %v2655 = vadd.f32 %v2616, %v2646
      %v2656 = vadd.f32 %v2617, %v2646
      %v2657 = vadd.f32 %v2618, %v2646
      %v2658 = vadd.f32 %v2619, %v2646
      %v2659 = vadd.f32 %v2620, %v2646
      %v2660 = vadd.f32 %v2621, %v2646
      %v2661 = vadd.f32 %v2622, %v2646
      %v2662 = vadd.f32 %v2623, %v2646
      %v2663 = vadd.f32 %v2624, %v2646
      %v2664 = vadd.f32 %v2625, %v2646
      %v2665 = vadd.f32 %v2626, %v2646
      %v2666 = vadd.f32 %v2627, %v2646
      %v2667 = vadd.f32 %v2628, %v2646
      %v2668 = vadd.f32 %v2629, %v2646
      %v2669 = vadd.f32 %v2630, %v2646
      %v2670 = vadd.f32 %v2631, %v2646
      %v2671 = vadd.f32 %v2632, %v2646
      %v2672 = vadd.f32 %v2633, %v2646
      %v2673 = vadd.f32 %v2634, %v2646
      %v2674 = vadd.f32 %v2635, %v2646
      %v2675 = vadd.f32 %v2636, %v2646
      %v2676 = vadd.f32 %v2637, %v2646
      %v2677 = vadd.f32 %v2638, %v2646
      %v2678 = vadd.f32 %v2639, %v2646
      %v2679 = vadd.f32 %v2640, %v2646
      %v2680 = vmax.f32 %v2648, 0.0
      %v2681 = vmax.f32 %v2649, 0.0
      %v2682 = vmax.f32 %v2650, 0.0
      %v2683 = vmax.f32 %v2651, 0.0
      %v2684 = vmax.f32 %v2652, 0.0
      %v2685 = vmax.f32 %v2653, 0.0
      %v2686 = vmax.f32 %v2654, 0.0
      %v2687 = vmax.f32 %v2655, 0.0
      %v2688 = vmax.f32 %v2656, 0.0
      %v2689 = vmax.f32 %v2657, 0.0
      %v2690 = vmax.f32 %v2658, 0.0
      %v2691 = vmax.f32 %v2659, 0.0
      %v2692 = vmax.f32 %v2660, 0.0
      %v2693 = vmax.f32 %v2661, 0.0
      %v2694 = vmax.f32 %v2662, 0.0
      %v2695 = vmax.f32 %v2663, 0.0
      %v2696 = vmax.f32 %v2664, 0.0
      %v2697 = vmax.f32 %v2665, 0.0
      %v2698 = vmax.f32 %v2666, 0.0
      %v2699 = vmax.f32 %v2667, 0.0
      %v2700 = vmax.f32 %v2668, 0.0
      %v2701 = vmax.f32 %v2669, 0.0
      %v2702 = vmax.f32 %v2670, 0.0
      %v2703 = vmax.f32 %v2671, 0.0
      %v2704 = vmax.f32 %v2672, 0.0
      %v2705 = vmax.f32 %v2673, 0.0
      %v2706 = vmax.f32 %v2674, 0.0
      %v2707 = vmax.f32 %v2675, 0.0
      %v2708 = vmax.f32 %v2676, 0.0
      %v2709 = vmax.f32 %v2677, 0.0
      %v2710 = vmax.f32 %v2678, 0.0
      %v2711 = vmax.f32 %v2679, 0.0
      %s2712 = scalar_lea.vmem [#allocation2], 96
      %2713 = vst.msk [vmem:[%s2712 + $0x8] sm:$0xff] %vm172, %v2680
      %2714 = vst.msk [vmem:[%s2712 + $0x10] sm:$0xff] %vm172, %v2681
      %2715 = vst.msk [vmem:[%s2712 + $0x28] sm:$0xff] %vm172, %v2682
      %2716 = vst.msk [vmem:[%s2712 + $0x30] sm:$0xff] %vm172, %v2683
      %2717 = vst.msk [vmem:[%s2712 + $0x48] sm:$0xff] %vm172, %v2684
      %2718 = vst.msk [vmem:[%s2712 + $0x50] sm:$0xff] %vm172, %v2685
      %2719 = vst.msk [vmem:[%s2712 + $0x68] sm:$0xff] %vm172, %v2686
      %2720 = vst.msk [vmem:[%s2712 + $0x70] sm:$0xff] %vm172, %v2687
      %2721 = vst.msk [vmem:[%s2712 + $0x88] sm:$0xff] %vm172, %v2688
      %2722 = vst.msk [vmem:[%s2712 + $0x90] sm:$0xff] %vm172, %v2689
      %2723 = vst.msk [vmem:[%s2712 + $0xa8] sm:$0xff] %vm172, %v2690
      %2724 = vst.msk [vmem:[%s2712 + $0xb0] sm:$0xff] %vm172, %v2691
      %2725 = vst.msk [vmem:[%s2712 + $0xc8] sm:$0xff] %vm172, %v2692
      %2726 = vst.msk [vmem:[%s2712 + $0xd0] sm:$0xff] %vm172, %v2693
      %2727 = vst.msk [vmem:[%s2712 + $0xe8] sm:$0xff] %vm172, %v2694
      %2728 = vst.msk [vmem:[%s2712 + $0xf0] sm:$0xff] %vm172, %v2695
      %2729 = vst.msk [vmem:[%s2712 + $0x108] sm:$0xff] %vm172, %v2696
      %2730 = vst.msk [vmem:[%s2712 + $0x110] sm:$0xff] %vm172, %v2697
      %2731 = vst.msk [vmem:[%s2712 + $0x128] sm:$0xff] %vm172, %v2698
      %2732 = vst.msk [vmem:[%s2712 + $0x130] sm:$0xff] %vm172, %v2699
      %2733 = vst.msk [vmem:[%s2712 + $0x148] sm:$0xff] %vm172, %v2700
      %2734 = vst.msk [vmem:[%s2712 + $0x150] sm:$0xff] %vm172, %v2701
      %2735 = vst.msk [vmem:[%s2712 + $0x168] sm:$0xff] %vm172, %v2702
      %2736 = vst.msk [vmem:[%s2712 + $0x170] sm:$0xff] %vm172, %v2703
      %2737 = vst.msk [vmem:[%s2712 + $0x188] sm:$0xff] %vm172, %v2704
      %2738 = vst.msk [vmem:[%s2712 + $0x190] sm:$0xff] %vm172, %v2705
      %2739 = vst.msk [vmem:[%s2712 + $0x1a8] sm:$0xff] %vm172, %v2706
      %2740 = vst.msk [vmem:[%s2712 + $0x1b0] sm:$0xff] %vm172, %v2707
      %2741 = vst.msk [vmem:[%s2712 + $0x1c8] sm:$0xff] %vm172, %v2708
      %2742 = vst.msk [vmem:[%s2712 + $0x1d0] sm:$0xff] %vm172, %v2709
      %2743 = vst.msk [vmem:[%s2712 + $0x1e8] sm:$0xff] %vm172, %v2710
      %2744 = vst.msk [vmem:[%s2712 + $0x1f0] sm:$0xff] %vm172, %v2711
      %v2745 = vld [vmem:[#allocation2 + $0x7] sm:$0xff]
      %v2746 = vld [vmem:[#allocation2 + $0xf] sm:$0xff]
      %v2747 = vld [vmem:[#allocation2 + $0x27] sm:$0xff]
      %v2748 = vld [vmem:[#allocation2 + $0x2f] sm:$0xff]
      %v2749 = vld [vmem:[#allocation2 + $0x47] sm:$0xff]
      %v2750 = vld [vmem:[#allocation2 + $0x4f] sm:$0xff]
      %v2751 = vld [vmem:[#allocation2 + $0x67] sm:$0xff]
      %v2752 = vld [vmem:[#allocation2 + $0x6f] sm:$0xff]
      %v2753 = vld [vmem:[#allocation2 + $0x87] sm:$0xff]
      %v2754 = vld [vmem:[#allocation2 + $0x8f] sm:$0xff]
      %v2755 = vld [vmem:[#allocation2 + $0xa7] sm:$0xff]
      %v2756 = vld [vmem:[#allocation2 + $0xaf] sm:$0xff]
      %v2757 = vld [vmem:[#allocation2 + $0xc7] sm:$0xff]
      %v2758 = vld [vmem:[#allocation2 + $0xcf] sm:$0xff]
      %v2759 = vld [vmem:[#allocation2 + $0xe7] sm:$0xff]
      %v2760 = vld [vmem:[#allocation2 + $0xef] sm:$0xff]
      %v2761 = vld [vmem:[#allocation2 + $0x107] sm:$0xff]
      %v2762 = vld [vmem:[#allocation2 + $0x10f] sm:$0xff]
      %v2763 = vld [vmem:[#allocation2 + $0x127] sm:$0xff]
      %v2764 = vld [vmem:[#allocation2 + $0x12f] sm:$0xff]
      %v2765 = vld [vmem:[#allocation2 + $0x147] sm:$0xff]
      %v2766 = vld [vmem:[#allocation2 + $0x14f] sm:$0xff]
      %v2767 = vld [vmem:[#allocation2 + $0x167] sm:$0xff]
      %v2768 = vld [vmem:[#allocation2 + $0x16f] sm:$0xff]
      %v2769 = vld [vmem:[#allocation2 + $0x187] sm:$0xff]
      %v2770 = vld [vmem:[#allocation2 + $0x18f] sm:$0xff]
      %v2771 = vld [vmem:[#allocation2 + $0x1a7] sm:$0xff]
      %v2772 = vld [vmem:[#allocation2 + $0x1af] sm:$0xff]
      %v2773 = vld [vmem:[#allocation2 + $0x1c7] sm:$0xff]
      %v2774 = vld [vmem:[#allocation2 + $0x1cf] sm:$0xff]
      %v2775 = vld [vmem:[#allocation2 + $0x1e7] sm:$0xff]
      %v2776 = vld [vmem:[#allocation2 + $0x1ef] sm:$0xff]
      %v2777 = vld [vmem:[#allocation2 + $0x207] sm:$0xff]
      %v2778 = vld [vmem:[#allocation2 + $0x20f] sm:$0xff]
      %v2779 = vld [vmem:[#allocation2 + $0x227] sm:$0xff]
      %v2780 = vld [vmem:[#allocation2 + $0x22f] sm:$0xff]
      %v2781 = vld [vmem:[#allocation2 + $0x247] sm:$0xff]
      %v2782 = vld [vmem:[#allocation2 + $0x24f] sm:$0xff]
      %v2783 = vld [vmem:[#allocation2 + $0x267] sm:$0xff]
      %v2784 = vld [vmem:[#allocation2 + $0x26f] sm:$0xff]
      %v2785 = vld [vmem:[#allocation2 + $0x287] sm:$0xff]
      %v2786 = vld [vmem:[#allocation2 + $0x28f] sm:$0xff]
      %v2787 = vld [vmem:[#allocation2 + $0x2a7] sm:$0xff]
      %v2788 = vld [vmem:[#allocation2 + $0x2af] sm:$0xff]
      %v2789 = vld [vmem:[#allocation2 + $0x8] sm:$0xff]
      %v2790 = vld [vmem:[#allocation2 + $0x10] sm:$0xff]
      %v2791 = vld [vmem:[#allocation2 + $0x28] sm:$0xff]
      %v2792 = vld [vmem:[#allocation2 + $0x30] sm:$0xff]
      %v2793 = vld [vmem:[#allocation2 + $0x48] sm:$0xff]
      %v2794 = vld [vmem:[#allocation2 + $0x50] sm:$0xff]
      %v2795 = vld [vmem:[#allocation2 + $0x68] sm:$0xff]
      %v2796 = vld [vmem:[#allocation2 + $0x70] sm:$0xff]
      %v2797 = vld [vmem:[#allocation2 + $0x88] sm:$0xff]
      %v2798 = vld [vmem:[#allocation2 + $0x90] sm:$0xff]
      %v2799 = vld [vmem:[#allocation2 + $0xa8] sm:$0xff]
      %v2800 = vld [vmem:[#allocation2 + $0xb0] sm:$0xff]
      %v2801 = vld [vmem:[#allocation2 + $0xc8] sm:$0xff]
      %v2802 = vld [vmem:[#allocation2 + $0xd0] sm:$0xff]
      %v2803 = vld [vmem:[#allocation2 + $0xe8] sm:$0xff]
      %v2804 = vld [vmem:[#allocation2 + $0xf0] sm:$0xff]
      %v2805 = vld [vmem:[#allocation2 + $0x108] sm:$0xff]
      %v2806 = vld [vmem:[#allocation2 + $0x110] sm:$0xff]
      %v2807 = vld [vmem:[#allocation2 + $0x128] sm:$0xff]
      %v2808 = vld [vmem:[#allocation2 + $0x130] sm:$0xff]
      %v2809 = vld [vmem:[#allocation2 + $0x148] sm:$0xff]
      %v2810 = vld [vmem:[#allocation2 + $0x150] sm:$0xff]
      %v2811 = vld [vmem:[#allocation2 + $0x168] sm:$0xff]
      %v2812 = vld [vmem:[#allocation2 + $0x170] sm:$0xff]
      %v2813 = vld [vmem:[#allocation2 + $0x188] sm:$0xff]
      %v2814 = vld [vmem:[#allocation2 + $0x190] sm:$0xff]
      %v2815 = vld [vmem:[#allocation2 + $0x1a8] sm:$0xff]
      %v2816 = vld [vmem:[#allocation2 + $0x1b0] sm:$0xff]
      %v2817 = vld [vmem:[#allocation2 + $0x1c8] sm:$0xff]
      %v2818 = vld [vmem:[#allocation2 + $0x1d0] sm:$0xff]
      %v2819 = vld [vmem:[#allocation2 + $0x1e8] sm:$0xff]
      %v2820 = vld [vmem:[#allocation2 + $0x1f0] sm:$0xff]
      %v2821 = vld [vmem:[#allocation2 + $0x208] sm:$0xff]
      %v2822 = vld [vmem:[#allocation2 + $0x210] sm:$0xff]
      %v2823 = vld [vmem:[#allocation2 + $0x228] sm:$0xff]
      %v2824 = vld [vmem:[#allocation2 + $0x230] sm:$0xff]
      %v2825 = vld [vmem:[#allocation2 + $0x248] sm:$0xff]
      %v2826 = vld [vmem:[#allocation2 + $0x250] sm:$0xff]
      %v2827 = vld [vmem:[#allocation2 + $0x268] sm:$0xff]
      %v2828 = vld [vmem:[#allocation2 + $0x270] sm:$0xff]
      %v2829 = vld [vmem:[#allocation2 + $0x288] sm:$0xff]
      %v2830 = vld [vmem:[#allocation2 + $0x290] sm:$0xff]
      %v2831 = vld [vmem:[#allocation2 + $0x2a8] sm:$0xff]
      %v2832 = vld [vmem:[#allocation2 + $0x2b0] sm:$0xff]
      %v2833 = vld [vmem:[#allocation2 + $0x9] sm:$0xff]
      %v2834 = vld [vmem:[#allocation2 + $0x11] sm:$0xff]
      %v2835 = vld [vmem:[#allocation2 + $0x29] sm:$0xff]
      %v2836 = vld [vmem:[#allocation2 + $0x31] sm:$0xff]
      %v2837 = vld [vmem:[#allocation2 + $0x49] sm:$0xff]
      %v2838 = vld [vmem:[#allocation2 + $0x51] sm:$0xff]
      %v2839 = vld [vmem:[#allocation2 + $0x69] sm:$0xff]
      %v2840 = vld [vmem:[#allocation2 + $0x71] sm:$0xff]
      %v2841 = vld [vmem:[#allocation2 + $0x89] sm:$0xff]
      %v2842 = vld [vmem:[#allocation2 + $0x91] sm:$0xff]
      %v2843 = vld [vmem:[#allocation2 + $0xa9] sm:$0xff]
      %v2844 = vld [vmem:[#allocation2 + $0xb1] sm:$0xff]
      %v2845 = vld [vmem:[#allocation2 + $0xc9] sm:$0xff]
      %v2846 = vld [vmem:[#allocation2 + $0xd1] sm:$0xff]
      %v2847 = vld [vmem:[#allocation2 + $0xe9] sm:$0xff]
      %v2848 = vld [vmem:[#allocation2 + $0xf1] sm:$0xff]
      %v2849 = vld [vmem:[#allocation2 + $0x109] sm:$0xff]
      %v2850 = vld [vmem:[#allocation2 + $0x111] sm:$0xff]
      %v2851 = vld [vmem:[#allocation2 + $0x129] sm:$0xff]
      %v2852 = vld [vmem:[#allocation2 + $0x131] sm:$0xff]
      %v2853 = vld [vmem:[#allocation2 + $0x149] sm:$0xff]
      %v2854 = vld [vmem:[#allocation2 + $0x151] sm:$0xff]
      %v2855 = vld [vmem:[#allocation2 + $0x169] sm:$0xff]
      %v2856 = vld [vmem:[#allocation2 + $0x171] sm:$0xff]
      %v2857 = vld [vmem:[#allocation2 + $0x189] sm:$0xff]
      %v2858 = vld [vmem:[#allocation2 + $0x191] sm:$0xff]
      %v2859 = vld [vmem:[#allocation2 + $0x1a9] sm:$0xff]
      %v2860 = vld [vmem:[#allocation2 + $0x1b1] sm:$0xff]
      %v2861 = vld [vmem:[#allocation2 + $0x1c9] sm:$0xff]
      %v2862 = vld [vmem:[#allocation2 + $0x1d1] sm:$0xff]
      %v2863 = vld [vmem:[#allocation2 + $0x1e9] sm:$0xff]
      %v2864 = vld [vmem:[#allocation2 + $0x1f1] sm:$0xff]
      %v2865 = vld [vmem:[#allocation2 + $0x209] sm:$0xff]
      %v2866 = vld [vmem:[#allocation2 + $0x211] sm:$0xff]
      %v2867 = vld [vmem:[#allocation2 + $0x229] sm:$0xff]
      %v2868 = vld [vmem:[#allocation2 + $0x231] sm:$0xff]
      %v2869 = vld [vmem:[#allocation2 + $0x249] sm:$0xff]
      %v2870 = vld [vmem:[#allocation2 + $0x251] sm:$0xff]
      %v2871 = vld [vmem:[#allocation2 + $0x269] sm:$0xff]
      %v2872 = vld [vmem:[#allocation2 + $0x271] sm:$0xff]
      %v2873 = vld [vmem:[#allocation2 + $0x289] sm:$0xff]
      %v2874 = vld [vmem:[#allocation2 + $0x291] sm:$0xff]
      %v2875 = vld [vmem:[#allocation2 + $0x2a9] sm:$0xff]
      %v2876 = vld [vmem:[#allocation2 + $0x2b1] sm:$0xff]
      %2921 = vrot.lane.b32.xlu0 %v2789, 32
      %v2922 = vpop.permute.xlu0 %2921
      %2923 = vrot.lane.b32.xlu0 %v2790, 32
      %v2924 = vpop.permute.xlu0 %2923
      %2925 = vrot.lane.b32.xlu0 %v2791, 32
      %v2926 = vpop.permute.xlu0 %2925
      %2927 = vrot.lane.b32.xlu0 %v2792, 32
      %v2928 = vpop.permute.xlu0 %2927
      %2929 = vrot.lane.b32.xlu0 %v2793, 32
      %v2930 = vpop.permute.xlu0 %2929
      %2931 = vrot.lane.b32.xlu0 %v2794, 32
      %v2932 = vpop.permute.xlu0 %2931
      %2933 = vrot.lane.b32.xlu0 %v2795, 32
      %v2934 = vpop.permute.xlu0 %2933
      %2935 = vrot.lane.b32.xlu0 %v2796, 32
      %v2936 = vpop.permute.xlu0 %2935
      %2937 = vrot.lane.b32.xlu0 %v2797, 32
      %v2938 = vpop.permute.xlu0 %2937
      %2939 = vrot.lane.b32.xlu0 %v2798, 32
      %v2940 = vpop.permute.xlu0 %2939
      %2941 = vrot.lane.b32.xlu0 %v2799, 32
      %v2942 = vpop.permute.xlu0 %2941
      %2943 = vrot.lane.b32.xlu0 %v2800, 32
      %v2944 = vpop.permute.xlu0 %2943
      %2945 = vrot.lane.b32.xlu0 %v2801, 32
      %v2946 = vpop.permute.xlu0 %2945
      %2947 = vrot.lane.b32.xlu0 %v2802, 32
      %v2948 = vpop.permute.xlu0 %2947
      %2949 = vrot.lane.b32.xlu0 %v2803, 32
      %v2950 = vpop.permute.xlu0 %2949
      %2951 = vrot.lane.b32.xlu0 %v2804, 32
      %v2952 = vpop.permute.xlu0 %2951
      %2953 = vrot.lane.b32.xlu0 %v2805, 32
      %v2954 = vpop.permute.xlu0 %2953
      %2955 = vrot.lane.b32.xlu0 %v2806, 32
      %v2956 = vpop.permute.xlu0 %2955
      %2957 = vrot.lane.b32.xlu0 %v2807, 32
      %v2958 = vpop.permute.xlu0 %2957
      %2959 = vrot.lane.b32.xlu0 %v2808, 32
      %v2960 = vpop.permute.xlu0 %2959
      %2961 = vrot.lane.b32.xlu0 %v2809, 32
      %v2962 = vpop.permute.xlu0 %2961
      %2963 = vrot.lane.b32.xlu0 %v2810, 32
      %v2964 = vpop.permute.xlu0 %2963
      %2965 = vrot.lane.b32.xlu0 %v2811, 32
      %v2966 = vpop.permute.xlu0 %2965
      %2967 = vrot.lane.b32.xlu0 %v2812, 32
      %v2968 = vpop.permute.xlu0 %2967
      %2969 = vrot.lane.b32.xlu0 %v2813, 32
      %v2970 = vpop.permute.xlu0 %2969
      %2971 = vrot.lane.b32.xlu0 %v2814, 32
      %v2972 = vpop.permute.xlu0 %2971
      %2973 = vrot.lane.b32.xlu0 %v2815, 32
      %v2974 = vpop.permute.xlu0 %2973
      %2975 = vrot.lane.b32.xlu0 %v2816, 32
      %v2976 = vpop.permute.xlu0 %2975
      %2977 = vrot.lane.b32.xlu0 %v2817, 32
      %v2978 = vpop.permute.xlu0 %2977
      %2979 = vrot.lane.b32.xlu0 %v2818, 32
      %v2980 = vpop.permute.xlu0 %2979
      %2981 = vrot.lane.b32.xlu0 %v2819, 32
      %v2982 = vpop.permute.xlu0 %2981
      %2983 = vrot.lane.b32.xlu0 %v2820, 32
      %v2984 = vpop.permute.xlu0 %2983
      %2985 = vrot.lane.b32.xlu0 %v2821, 32
      %v2986 = vpop.permute.xlu0 %2985
      %2987 = vrot.lane.b32.xlu0 %v2822, 32
      %v2988 = vpop.permute.xlu0 %2987
      %2989 = vrot.lane.b32.xlu0 %v2823, 32
      %v2990 = vpop.permute.xlu0 %2989
      %2991 = vrot.lane.b32.xlu0 %v2824, 32
      %v2992 = vpop.permute.xlu0 %2991
      %2993 = vrot.lane.b32.xlu0 %v2825, 32
      %v2994 = vpop.permute.xlu0 %2993
      %2995 = vrot.lane.b32.xlu0 %v2826, 32
      %v2996 = vpop.permute.xlu0 %2995
      %2997 = vrot.lane.b32.xlu0 %v2827, 32
      %v2998 = vpop.permute.xlu0 %2997
      %2999 = vrot.lane.b32.xlu0 %v2828, 32
      %v3000 = vpop.permute.xlu0 %2999
      %3001 = vrot.lane.b32.xlu0 %v2829, 32
      %v3002 = vpop.permute.xlu0 %3001
      %3003 = vrot.lane.b32.xlu0 %v2830, 32
      %v3004 = vpop.permute.xlu0 %3003
      %3005 = vrot.lane.b32.xlu0 %v2831, 32
      %v3006 = vpop.permute.xlu0 %3005
      %3007 = vrot.lane.b32.xlu0 %v2832, 32
      %v3008 = vpop.permute.xlu0 %3007
      %3097 = vrot.lane.b32.xlu0 %v2833, 64
      %v3098 = vpop.permute.xlu0 %3097
      %3099 = vrot.lane.b32.xlu0 %v2834, 64
      %v3100 = vpop.permute.xlu0 %3099
      %3101 = vrot.lane.b32.xlu0 %v2835, 64
      %v3102 = vpop.permute.xlu0 %3101
      %3103 = vrot.lane.b32.xlu0 %v2836, 64
      %v3104 = vpop.permute.xlu0 %3103
      %3105 = vrot.lane.b32.xlu0 %v2837, 64
      %v3106 = vpop.permute.xlu0 %3105
      %3107 = vrot.lane.b32.xlu0 %v2838, 64
      %v3108 = vpop.permute.xlu0 %3107
      %3109 = vrot.lane.b32.xlu0 %v2839, 64
      %v3110 = vpop.permute.xlu0 %3109
      %3111 = vrot.lane.b32.xlu0 %v2840, 64
      %v3112 = vpop.permute.xlu0 %3111
      %3113 = vrot.lane.b32.xlu0 %v2841, 64
      %v3114 = vpop.permute.xlu0 %3113
      %3115 = vrot.lane.b32.xlu0 %v2842, 64
      %v3116 = vpop.permute.xlu0 %3115
      %3117 = vrot.lane.b32.xlu0 %v2843, 64
      %v3118 = vpop.permute.xlu0 %3117
      %3119 = vrot.lane.b32.xlu0 %v2844, 64
      %v3120 = vpop.permute.xlu0 %3119
      %3121 = vrot.lane.b32.xlu0 %v2845, 64
      %v3122 = vpop.permute.xlu0 %3121
      %3123 = vrot.lane.b32.xlu0 %v2846, 64
      %v3124 = vpop.permute.xlu0 %3123
      %3125 = vrot.lane.b32.xlu0 %v2847, 64
      %v3126 = vpop.permute.xlu0 %3125
      %3127 = vrot.lane.b32.xlu0 %v2848, 64
      %v3128 = vpop.permute.xlu0 %3127
      %3129 = vrot.lane.b32.xlu0 %v2849, 64
      %v3130 = vpop.permute.xlu0 %3129
      %3131 = vrot.lane.b32.xlu0 %v2850, 64
      %v3132 = vpop.permute.xlu0 %3131
      %3133 = vrot.lane.b32.xlu0 %v2851, 64
      %v3134 = vpop.permute.xlu0 %3133
      %3135 = vrot.lane.b32.xlu0 %v2852, 64
      %v3136 = vpop.permute.xlu0 %3135
      %3137 = vrot.lane.b32.xlu0 %v2853, 64
      %v3138 = vpop.permute.xlu0 %3137
      %3139 = vrot.lane.b32.xlu0 %v2854, 64
      %v3140 = vpop.permute.xlu0 %3139
      %3141 = vrot.lane.b32.xlu0 %v2855, 64
      %v3142 = vpop.permute.xlu0 %3141
      %3143 = vrot.lane.b32.xlu0 %v2856, 64
      %v3144 = vpop.permute.xlu0 %3143
      %3145 = vrot.lane.b32.xlu0 %v2857, 64
      %v3146 = vpop.permute.xlu0 %3145
      %3147 = vrot.lane.b32.xlu0 %v2858, 64
      %v3148 = vpop.permute.xlu0 %3147
      %3149 = vrot.lane.b32.xlu0 %v2859, 64
      %v3150 = vpop.permute.xlu0 %3149
      %3151 = vrot.lane.b32.xlu0 %v2860, 64
      %v3152 = vpop.permute.xlu0 %3151
      %3153 = vrot.lane.b32.xlu0 %v2861, 64
      %v3154 = vpop.permute.xlu0 %3153
      %3155 = vrot.lane.b32.xlu0 %v2862, 64
      %v3156 = vpop.permute.xlu0 %3155
      %3157 = vrot.lane.b32.xlu0 %v2863, 64
      %v3158 = vpop.permute.xlu0 %3157
      %3159 = vrot.lane.b32.xlu0 %v2864, 64
      %v3160 = vpop.permute.xlu0 %3159
      %3161 = vrot.lane.b32.xlu0 %v2865, 64
      %v3162 = vpop.permute.xlu0 %3161
      %3163 = vrot.lane.b32.xlu0 %v2866, 64
      %v3164 = vpop.permute.xlu0 %3163
      %3165 = vrot.lane.b32.xlu0 %v2867, 64
      %v3166 = vpop.permute.xlu0 %3165
      %3167 = vrot.lane.b32.xlu0 %v2868, 64
      %v3168 = vpop.permute.xlu0 %3167
      %3169 = vrot.lane.b32.xlu0 %v2869, 64
      %v3170 = vpop.permute.xlu0 %3169
      %3171 = vrot.lane.b32.xlu0 %v2870, 64
      %v3172 = vpop.permute.xlu0 %3171
      %3173 = vrot.lane.b32.xlu0 %v2871, 64
      %v3174 = vpop.permute.xlu0 %3173
      %3175 = vrot.lane.b32.xlu0 %v2872, 64
      %v3176 = vpop.permute.xlu0 %3175
      %3177 = vrot.lane.b32.xlu0 %v2873, 64
      %v3178 = vpop.permute.xlu0 %3177
      %3179 = vrot.lane.b32.xlu0 %v2874, 64
      %v3180 = vpop.permute.xlu0 %3179
      %3181 = vrot.lane.b32.xlu0 %v2875, 64
      %v3182 = vpop.permute.xlu0 %3181
      %3183 = vrot.lane.b32.xlu0 %v2876, 64
      %v3184 = vpop.permute.xlu0 %3183
      %v3229 = vsel %vm172, %v2745, %v2922
      %v3230 = vsel %vm172, %v2746, %v2924
      %v3231 = vsel %vm172, %v2747, %v2926
      %v3232 = vsel %vm172, %v2748, %v2928
      %v3233 = vsel %vm172, %v2749, %v2930
      %v3234 = vsel %vm172, %v2750, %v2932
      %v3235 = vsel %vm172, %v2751, %v2934
      %v3236 = vsel %vm172, %v2752, %v2936
      %v3237 = vsel %vm172, %v2753, %v2938
      %v3238 = vsel %vm172, %v2754, %v2940
      %v3239 = vsel %vm172, %v2755, %v2942
      %v3240 = vsel %vm172, %v2756, %v2944
      %v3241 = vsel %vm172, %v2757, %v2946
      %v3242 = vsel %vm172, %v2758, %v2948
      %v3243 = vsel %vm172, %v2759, %v2950
      %v3244 = vsel %vm172, %v2760, %v2952
      %v3245 = vsel %vm172, %v2761, %v2954
      %v3246 = vsel %vm172, %v2762, %v2956
      %v3247 = vsel %vm172, %v2763, %v2958
      %v3248 = vsel %vm172, %v2764, %v2960
      %v3249 = vsel %vm172, %v2765, %v2962
      %v3250 = vsel %vm172, %v2766, %v2964
      %v3251 = vsel %vm172, %v2767, %v2966
      %v3252 = vsel %vm172, %v2768, %v2968
      %v3253 = vsel %vm172, %v2769, %v2970
      %v3254 = vsel %vm172, %v2770, %v2972
      %v3255 = vsel %vm172, %v2771, %v2974
      %v3256 = vsel %vm172, %v2772, %v2976
      %v3257 = vsel %vm172, %v2773, %v2978
      %v3258 = vsel %vm172, %v2774, %v2980
      %v3259 = vsel %vm172, %v2775, %v2982
      %v3260 = vsel %vm172, %v2776, %v2984
      %v3261 = vsel %vm172, %v2777, %v2986
      %v3262 = vsel %vm172, %v2778, %v2988
      %v3263 = vsel %vm172, %v2779, %v2990
      %v3264 = vsel %vm172, %v2780, %v2992
      %v3265 = vsel %vm172, %v2781, %v2994
      %v3266 = vsel %vm172, %v2782, %v2996
      %v3267 = vsel %vm172, %v2783, %v2998
      %v3268 = vsel %vm172, %v2784, %v3000
      %v3269 = vsel %vm172, %v2785, %v3002
      %v3270 = vsel %vm172, %v2786, %v3004
      %v3271 = vsel %vm172, %v2787, %v3006
      %v3272 = vsel %vm172, %v2788, %v3008
      %v3273 = vsel %vm878, %v3229, %v3098
      %v3274 = vsel %vm878, %v3230, %v3100
      %v3275 = vsel %vm878, %v3231, %v3102
      %v3276 = vsel %vm878, %v3232, %v3104
      %v3277 = vsel %vm878, %v3233, %v3106
      %v3278 = vsel %vm878, %v3234, %v3108
      %v3279 = vsel %vm878, %v3235, %v3110
      %v3280 = vsel %vm878, %v3236, %v3112
      %v3281 = vsel %vm878, %v3237, %v3114
      %v3282 = vsel %vm878, %v3238, %v3116
      %v3283 = vsel %vm878, %v3239, %v3118
      %v3284 = vsel %vm878, %v3240, %v3120
      %v3285 = vsel %vm878, %v3241, %v3122
      %v3286 = vsel %vm878, %v3242, %v3124
      %v3287 = vsel %vm878, %v3243, %v3126
      %v3288 = vsel %vm878, %v3244, %v3128
      %v3289 = vsel %vm878, %v3245, %v3130
      %v3290 = vsel %vm878, %v3246, %v3132
      %v3291 = vsel %vm878, %v3247, %v3134
      %v3292 = vsel %vm878, %v3248, %v3136
      %v3293 = vsel %vm878, %v3249, %v3138
      %v3294 = vsel %vm878, %v3250, %v3140
      %v3295 = vsel %vm878, %v3251, %v3142
      %v3296 = vsel %vm878, %v3252, %v3144
      %v3297 = vsel %vm878, %v3253, %v3146
      %v3298 = vsel %vm878, %v3254, %v3148
      %v3299 = vsel %vm878, %v3255, %v3150
      %v3300 = vsel %vm878, %v3256, %v3152
      %v3301 = vsel %vm878, %v3257, %v3154
      %v3302 = vsel %vm878, %v3258, %v3156
      %v3303 = vsel %vm878, %v3259, %v3158
      %v3304 = vsel %vm878, %v3260, %v3160
      %v3305 = vsel %vm878, %v3261, %v3162
      %v3306 = vsel %vm878, %v3262, %v3164
      %v3307 = vsel %vm878, %v3263, %v3166
      %v3308 = vsel %vm878, %v3264, %v3168
      %v3309 = vsel %vm878, %v3265, %v3170
      %v3310 = vsel %vm878, %v3266, %v3172
      %v3311 = vsel %vm878, %v3267, %v3174
      %v3312 = vsel %vm878, %v3268, %v3176
      %v3313 = vsel %vm878, %v3269, %v3178
      %v3314 = vsel %vm878, %v3270, %v3180
      %v3315 = vsel %vm878, %v3271, %v3182
      %v3316 = vsel %vm878, %v3272, %v3184
      %v3317 = vpack.c.bf16 %v3274, %v3273
      %v3318 = vpack.c.bf16 %v3276, %v3275
      %v3319 = vpack.c.bf16 %v3278, %v3277
      %v3320 = vpack.c.bf16 %v3280, %v3279
      %v3321 = vpack.c.bf16 %v3282, %v3281
      %v3322 = vpack.c.bf16 %v3284, %v3283
      %v3323 = vpack.c.bf16 %v3286, %v3285
      %v3324 = vpack.c.bf16 %v3288, %v3287
      %v3325 = vpack.c.bf16 %v3290, %v3289
      %v3326 = vpack.c.bf16 %v3292, %v3291
      %v3327 = vpack.c.bf16 %v3294, %v3293
      %v3328 = vpack.c.bf16 %v3296, %v3295
      %v3329 = vpack.c.bf16 %v3298, %v3297
      %v3330 = vpack.c.bf16 %v3300, %v3299
      %v3331 = vpack.c.bf16 %v3302, %v3301
      %v3332 = vpack.c.bf16 %v3304, %v3303
      %v3333 = vpack.c.bf16 %v3306, %v3305
      %v3334 = vpack.c.bf16 %v3308, %v3307
      %v3335 = vpack.c.bf16 %v3310, %v3309
      %v3336 = vpack.c.bf16 %v3312, %v3311
      %v3337 = vpack.c.bf16 %v3314, %v3313
      %v3338 = vpack.c.bf16 %v3316, %v3315
      %s3339 = scalar_lea.vmem %s1, 336
      %v3340 = vld [vmem:[%s3339] sm:$0xf]
      %v3341 = vld [vmem:[%s3339 + $0x4] sm:$0xf]
      %v3342 = vld [vmem:[%s3339 + $0x8] sm:$0xf]
      %v3343 = vld [vmem:[%s3339 + $0xc] sm:$0xf]
      %v3344 = vld [vmem:[%s3339 + $0x10] sm:$0xf]
      %v3345 = vld [vmem:[%s3339 + $0x14] sm:$0xf]
      %v3346 = vld [vmem:[%s3339 + $0x18] sm:$0xf]
      %v3347 = vld [vmem:[%s3339 + $0x1c] sm:$0xf]
      %v3348 = vld [vmem:[%s3339 + $0x20] sm:$0xf]
      %v3349 = vld [vmem:[%s3339 + $0x24] sm:$0xf]
      %v3350 = vld [vmem:[%s3339 + $0x28] sm:$0xf]
      %v3351 = vld [vmem:[%s3339 + $0x2c] sm:$0xf]
      %s3352 = scalar_lea.vmem %s1, 384
      %v3353 = vld [vmem:[%s3352] sm:$0xf]
      %v3354 = vld [vmem:[%s3352 + $0x4] sm:$0xf]
      %v3355 = vld [vmem:[%s3352 + $0x8] sm:$0xf]
      %v3356 = vld [vmem:[%s3352 + $0xc] sm:$0xf]
      %v3357 = vld [vmem:[%s3352 + $0x10] sm:$0xf]
      %v3358 = vld [vmem:[%s3352 + $0x14] sm:$0xf]
      %v3359 = vld [vmem:[%s3352 + $0x18] sm:$0xf]
      %v3360 = vld [vmem:[%s3352 + $0x1c] sm:$0xf]
      %v3361 = vld [vmem:[%s3352 + $0x20] sm:$0xf]
      %v3362 = vld [vmem:[%s3352 + $0x24] sm:$0xf]
      %v3363 = vld [vmem:[%s3352 + $0x28] sm:$0xf]
      %v3364 = vld [vmem:[%s3352 + $0x2c] sm:$0xf]
      %v3377 = vunpack.c.l.b16 %v3353
      %v3378 = vunpack.c.l.b16 %v3354
      %v3379 = vunpack.c.l.b16 %v3355
      %v3380 = vunpack.c.l.b16 %v3356
      %v3381 = vunpack.c.l.b16 %v3357
      %v3382 = vunpack.c.l.b16 %v3358
      %v3383 = vunpack.c.l.b16 %v3359
      %v3384 = vunpack.c.l.b16 %v3360
      %v3385 = vunpack.c.l.b16 %v3361
      %v3386 = vunpack.c.l.b16 %v3362
      %v3387 = vunpack.c.l.b16 %v3363
      %v3388 = vunpack.c.l.b16 %v3364
      %v3389 = vpack.c.b16 %v3378, %v3377
      %v3390 = vpack.c.b16 %v3380, %v3379
      %v3391 = vpack.c.b16 %v3382, %v3381
      %v3392 = vpack.c.b16 %v3384, %v3383
      %v3393 = vpack.c.b16 %v3386, %v3385
      %v3394 = vpack.c.b16 %v3388, %v3387
      %v3402 = vsel %vm1006, %v3318, 0
      %v3405 = vsel %vm1006, %v3319, 0
      %v3408 = vsel %vm1006, %v3320, 0
      %v3411 = vsel %vm1006, %v3321, 0
      %v3414 = vsel %vm1006, %v3322, 0
      %v3417 = vsel %vm1006, %v3323, 0
      %v3420 = vsel %vm1006, %v3324, 0
      %v3423 = vsel %vm1006, %v3325, 0
      %v3426 = vsel %vm1006, %v3326, 0
      %v3429 = vsel %vm1006, %v3327, 0
      %v3432 = vsel %vm1006, %v3328, 0
      %v3435 = vsel %vm1006, %v3329, 0
      %v3438 = vsel %vm1006, %v3330, 0
      %v3441 = vsel %vm1006, %v3331, 0
      %v3444 = vsel %vm1006, %v3332, 0
      %v3447 = vsel %vm1006, %v3333, 0
      %3449 = vmatprep.subr.bf16.mxu0 0
      %3450 = vmatpush1.bf16.msra.mxu0 0
      %3451 = vmatprep.subr.bf16.mxu0 0
      %3452 = vmatpush1.bf16.msra.mxu0 0
      %3453 = vmatprep.subr.bf16.mxu0 0
      %3454 = vmatpush1.bf16.msra.mxu0 %v3394
      %3455 = vmatprep.subr.bf16.mxu0 0
      %3456 = vmatpush1.bf16.msra.mxu0 %v3393
      %3457 = vmatprep.subr.bf16.mxu0 0
      %3458 = vmatpush1.bf16.msra.mxu0 %v3392
      %3459 = vmatprep.subr.bf16.mxu0 0
      %3460 = vmatpush1.bf16.msra.mxu0 %v3391
      %3461 = vmatprep.subr.bf16.mxu0 0
      %3462 = vmatpush1.bf16.msra.mxu0 %v3390
      %3463 = vmatprep.subr.bf16.mxu0 0
      %3464 = vmatpush1.bf16.msra.mxu0 %v3389
      %3465 = vmatprep.subr.bf16.mxu0 0
      %3466 = vmatpush2.bf16.msra.mxu0 0
      %3467 = vmatprep.subr.bf16.mxu0 0
      %3468 = vmatpush2.bf16.msra.mxu0 0
      %3469 = vmatprep.subr.bf16.mxu0 0
      %3470 = vmatpush2.bf16.msra.mxu0 0
      %3471 = vmatprep.subr.bf16.mxu0 0
      %3472 = vmatpush2.bf16.msra.mxu0 0
      %3473 = vmatprep.subr.bf16.mxu0 0
      %3474 = vmatpush2.bf16.msra.mxu0 0
      %3475 = vmatprep.subr.bf16.mxu0 0
      %3476 = vmatpush2.bf16.msra.mxu0 0
      %3477 = vmatprep.subr.bf16.mxu0 0
      %3478 = vmatpush2.bf16.msra.mxu0 0
      %3479 = vmatprep.subr.bf16.mxu0 0
      %3480 = vmatpush2.bf16.msra.mxu0 0
      %3481 = vmatprep.mubr.bf16.mxu0 0
      %3482 = vmatmul.mubr.bf16.gmra.mxu0 %v3402
      %v3483 = vpop.f32.mrf.mxu0
      %v3484 = vadd.f32 0.0, %v3483
      %v3485 = vpop.f32.mrf.mxu0
      %v3486 = vpop.f32.mrf.mxu0
      %v3487 = vadd.f32 0.0, %v3486
      %v3488 = vpop.f32.mrf.mxu0
      %3489 = vmatprep.mubr.bf16.mxu0 0
      %3490 = vmatmul.mubr.bf16.gmra.mxu0 %v3405
      %v3491 = vpop.f32.mrf.mxu0
      %v3492 = vadd.f32 0.0, %v3491
      %v3493 = vpop.f32.mrf.mxu0
      %v3494 = vpop.f32.mrf.mxu0
      %v3495 = vadd.f32 0.0, %v3494
      %v3496 = vpop.f32.mrf.mxu0
      %3497 = vmatprep.mubr.bf16.mxu0 0
      %3498 = vmatmul.mubr.bf16.gmra.mxu0 %v3408
      %v3499 = vpop.f32.mrf.mxu0
      %v3500 = vadd.f32 0.0, %v3499
      %v3501 = vpop.f32.mrf.mxu0
      %v3502 = vpop.f32.mrf.mxu0
      %v3503 = vadd.f32 0.0, %v3502
      %v3504 = vpop.f32.mrf.mxu0
      %3505 = vmatprep.mubr.bf16.mxu0 0
      %3506 = vmatmul.mubr.bf16.gmra.mxu0 %v3411
      %v3507 = vpop.f32.mrf.mxu0
      %v3508 = vadd.f32 0.0, %v3507
      %v3509 = vpop.f32.mrf.mxu0
      %v3510 = vpop.f32.mrf.mxu0
      %v3511 = vadd.f32 0.0, %v3510
      %v3512 = vpop.f32.mrf.mxu0
      %3513 = vmatprep.mubr.bf16.mxu0 0
      %3514 = vmatmul.mubr.bf16.gmra.mxu0 %v3414
      %v3515 = vpop.f32.mrf.mxu0
      %v3516 = vadd.f32 0.0, %v3515
      %v3517 = vpop.f32.mrf.mxu0
      %v3518 = vpop.f32.mrf.mxu0
      %v3519 = vadd.f32 0.0, %v3518
      %v3520 = vpop.f32.mrf.mxu0
      %3521 = vmatprep.mubr.bf16.mxu0 0
      %3522 = vmatmul.mubr.bf16.gmra.mxu0 %v3417
      %v3523 = vpop.f32.mrf.mxu0
      %v3524 = vadd.f32 0.0, %v3523
      %v3525 = vpop.f32.mrf.mxu0
      %v3526 = vpop.f32.mrf.mxu0
      %v3527 = vadd.f32 0.0, %v3526
      %v3528 = vpop.f32.mrf.mxu0
      %3529 = vmatprep.mubr.bf16.mxu0 0
      %3530 = vmatmul.mubr.bf16.gmra.mxu0 %v3420
      %v3531 = vpop.f32.mrf.mxu0
      %v3532 = vadd.f32 0.0, %v3531
      %v3533 = vpop.f32.mrf.mxu0
      %v3534 = vpop.f32.mrf.mxu0
      %v3535 = vadd.f32 0.0, %v3534
      %v3536 = vpop.f32.mrf.mxu0
      %3537 = vmatprep.mubr.bf16.mxu0 0
      %3538 = vmatmul.mubr.bf16.gmra.mxu0 %v3423
      %v3539 = vpop.f32.mrf.mxu0
      %v3540 = vadd.f32 0.0, %v3539
      %v3541 = vpop.f32.mrf.mxu0
      %v3542 = vpop.f32.mrf.mxu0
      %v3543 = vadd.f32 0.0, %v3542
      %v3544 = vpop.f32.mrf.mxu0
      %3545 = vmatprep.mubr.bf16.mxu0 0
      %3546 = vmatmul.mubr.bf16.gmra.mxu0 %v3426
      %v3547 = vpop.f32.mrf.mxu0
      %v3548 = vadd.f32 0.0, %v3547
      %v3549 = vpop.f32.mrf.mxu0
      %v3550 = vpop.f32.mrf.mxu0
      %v3551 = vadd.f32 0.0, %v3550
      %v3552 = vpop.f32.mrf.mxu0
      %3553 = vmatprep.mubr.bf16.mxu0 0
      %3554 = vmatmul.mubr.bf16.gmra.mxu0 %v3429
      %v3555 = vpop.f32.mrf.mxu0
      %v3556 = vadd.f32 0.0, %v3555
      %v3557 = vpop.f32.mrf.mxu0
      %v3558 = vpop.f32.mrf.mxu0
      %v3559 = vadd.f32 0.0, %v3558
      %v3560 = vpop.f32.mrf.mxu0
      %3561 = vmatprep.mubr.bf16.mxu0 0
      %3562 = vmatmul.mubr.bf16.gmra.mxu0 %v3432
      %v3563 = vpop.f32.mrf.mxu0
      %v3564 = vadd.f32 0.0, %v3563
      %v3565 = vpop.f32.mrf.mxu0
      %v3566 = vpop.f32.mrf.mxu0
      %v3567 = vadd.f32 0.0, %v3566
      %v3568 = vpop.f32.mrf.mxu0
      %3569 = vmatprep.mubr.bf16.mxu0 0
      %3570 = vmatmul.mubr.bf16.gmra.mxu0 %v3435
      %v3571 = vpop.f32.mrf.mxu0
      %v3572 = vadd.f32 0.0, %v3571
      %v3573 = vpop.f32.mrf.mxu0
      %v3574 = vpop.f32.mrf.mxu0
      %v3575 = vadd.f32 0.0, %v3574
      %v3576 = vpop.f32.mrf.mxu0
      %3577 = vmatprep.mubr.bf16.mxu0 0
      %3578 = vmatmul.mubr.bf16.gmra.mxu0 %v3438
      %v3579 = vpop.f32.mrf.mxu0
      %v3580 = vadd.f32 0.0, %v3579
      %v3581 = vpop.f32.mrf.mxu0
      %v3582 = vpop.f32.mrf.mxu0
      %v3583 = vadd.f32 0.0, %v3582
      %v3584 = vpop.f32.mrf.mxu0
      %3585 = vmatprep.mubr.bf16.mxu0 0
      %3586 = vmatmul.mubr.bf16.gmra.mxu0 %v3441
      %v3587 = vpop.f32.mrf.mxu0
      %v3588 = vadd.f32 0.0, %v3587
      %v3589 = vpop.f32.mrf.mxu0
      %v3590 = vpop.f32.mrf.mxu0
      %v3591 = vadd.f32 0.0, %v3590
      %v3592 = vpop.f32.mrf.mxu0
      %3593 = vmatprep.mubr.bf16.mxu0 0
      %3594 = vmatmul.mubr.bf16.gmra.mxu0 %v3444
      %v3595 = vpop.f32.mrf.mxu0
      %v3596 = vadd.f32 0.0, %v3595
      %v3597 = vpop.f32.mrf.mxu0
      %v3598 = vpop.f32.mrf.mxu0
      %v3599 = vadd.f32 0.0, %v3598
      %v3600 = vpop.f32.mrf.mxu0
      %3601 = vmatprep.mubr.bf16.mxu0 0
      %3602 = vmatmul.mubr.bf16.gmra.mxu0 %v3447
      %v3603 = vpop.f32.mrf.mxu0
      %v3604 = vadd.f32 0.0, %v3603
      %v3605 = vpop.f32.mrf.mxu0
      %v3606 = vpop.f32.mrf.mxu0
      %v3607 = vadd.f32 0.0, %v3606
      %v3608 = vpop.f32.mrf.mxu0
      %3609 = vdwg.mxu0
      %v3622 = vunpack.c.l.b16 %v3340
      %v3623 = vunpack.c.l.b16 %v3341
      %v3624 = vunpack.c.l.b16 %v3342
      %v3625 = vunpack.c.l.b16 %v3343
      %v3626 = vunpack.c.l.b16 %v3344
      %v3627 = vunpack.c.l.b16 %v3345
      %v3628 = vunpack.c.l.b16 %v3346
      %v3629 = vunpack.c.l.b16 %v3347
      %v3630 = vunpack.c.l.b16 %v3348
      %v3631 = vunpack.c.l.b16 %v3349
      %v3632 = vunpack.c.l.b16 %v3350
      %v3633 = vunpack.c.l.b16 %v3351
      %v3634 = vpack.c.b16 %v3623, %v3622
      %v3635 = vpack.c.b16 %v3625, %v3624
      %v3636 = vpack.c.b16 %v3627, %v3626
      %v3637 = vpack.c.b16 %v3629, %v3628
      %v3638 = vpack.c.b16 %v3631, %v3630
      %v3639 = vpack.c.b16 %v3633, %v3632
      %v3647 = vsel %vm1006, %v3317, 0
      %3649 = vmatprep.subr.bf16.mxu0 0
      %3650 = vmatpush1.bf16.msra.mxu0 0
      %3651 = vmatprep.subr.bf16.mxu0 0
      %3652 = vmatpush1.bf16.msra.mxu0 0
      %3653 = vmatprep.subr.bf16.mxu0 0
      %3654 = vmatpush1.bf16.msra.mxu0 %v3639
      %3655 = vmatprep.subr.bf16.mxu0 0
      %3656 = vmatpush1.bf16.msra.mxu0 %v3638
      %3657 = vmatprep.subr.bf16.mxu0 0
      %3658 = vmatpush1.bf16.msra.mxu0 %v3637
      %3659 = vmatprep.subr.bf16.mxu0 0
      %3660 = vmatpush1.bf16.msra.mxu0 %v3636
      %3661 = vmatprep.subr.bf16.mxu0 0
      %3662 = vmatpush1.bf16.msra.mxu0 %v3635
      %3663 = vmatprep.subr.bf16.mxu0 0
      %3664 = vmatpush1.bf16.msra.mxu0 %v3634
      %3665 = vmatprep.subr.bf16.mxu0 0
      %3666 = vmatpush2.bf16.msra.mxu0 0
      %3667 = vmatprep.subr.bf16.mxu0 0
      %3668 = vmatpush2.bf16.msra.mxu0 0
      %3669 = vmatprep.subr.bf16.mxu0 0
      %3670 = vmatpush2.bf16.msra.mxu0 0
      %3671 = vmatprep.subr.bf16.mxu0 0
      %3672 = vmatpush2.bf16.msra.mxu0 0
      %3673 = vmatprep.subr.bf16.mxu0 0
      %3674 = vmatpush2.bf16.msra.mxu0 0
      %3675 = vmatprep.subr.bf16.mxu0 0
      %3676 = vmatpush2.bf16.msra.mxu0 0
      %3677 = vmatprep.subr.bf16.mxu0 0
      %3678 = vmatpush2.bf16.msra.mxu0 0
      %3679 = vmatprep.subr.bf16.mxu0 0
      %3680 = vmatpush2.bf16.msra.mxu0 0
      %3681 = vmatprep.mubr.bf16.mxu0 0
      %3682 = vmatmul.mubr.bf16.gmra.mxu0 %v3647
      %v3683 = vpop.f32.mrf.mxu0
      %v3684 = vadd.f32 %v3484, %v3683
      %v3685 = vpop.f32.mrf.mxu0
      %v3686 = vpop.f32.mrf.mxu0
      %v3687 = vadd.f32 %v3487, %v3686
      %v3688 = vpop.f32.mrf.mxu0
      %3689 = vmatprep.mubr.bf16.mxu0 0
      %3690 = vmatmul.mubr.bf16.gmra.mxu0 %v3402
      %v3691 = vpop.f32.mrf.mxu0
      %v3692 = vadd.f32 %v3492, %v3691
      %v3693 = vpop.f32.mrf.mxu0
      %v3694 = vpop.f32.mrf.mxu0
      %v3695 = vadd.f32 %v3495, %v3694
      %v3696 = vpop.f32.mrf.mxu0
      %3697 = vmatprep.mubr.bf16.mxu0 0
      %3698 = vmatmul.mubr.bf16.gmra.mxu0 %v3405
      %v3699 = vpop.f32.mrf.mxu0
      %v3700 = vadd.f32 %v3500, %v3699
      %v3701 = vpop.f32.mrf.mxu0
      %v3702 = vpop.f32.mrf.mxu0
      %v3703 = vadd.f32 %v3503, %v3702
      %v3704 = vpop.f32.mrf.mxu0
      %3705 = vmatprep.mubr.bf16.mxu0 0
      %3706 = vmatmul.mubr.bf16.gmra.mxu0 %v3408
      %v3707 = vpop.f32.mrf.mxu0
      %v3708 = vadd.f32 %v3508, %v3707
      %v3709 = vpop.f32.mrf.mxu0
      %v3710 = vpop.f32.mrf.mxu0
      %v3711 = vadd.f32 %v3511, %v3710
      %v3712 = vpop.f32.mrf.mxu0
      %3713 = vmatprep.mubr.bf16.mxu0 0
      %3714 = vmatmul.mubr.bf16.gmra.mxu0 %v3411
      %v3715 = vpop.f32.mrf.mxu0
      %v3716 = vadd.f32 %v3516, %v3715
      %v3717 = vpop.f32.mrf.mxu0
      %v3718 = vpop.f32.mrf.mxu0
      %v3719 = vadd.f32 %v3519, %v3718
      %v3720 = vpop.f32.mrf.mxu0
      %3721 = vmatprep.mubr.bf16.mxu0 0
      %3722 = vmatmul.mubr.bf16.gmra.mxu0 %v3414
      %v3723 = vpop.f32.mrf.mxu0
      %v3724 = vadd.f32 %v3524, %v3723
      %v3725 = vpop.f32.mrf.mxu0
      %v3726 = vpop.f32.mrf.mxu0
      %v3727 = vadd.f32 %v3527, %v3726
      %v3728 = vpop.f32.mrf.mxu0
      %3729 = vmatprep.mubr.bf16.mxu0 0
      %3730 = vmatmul.mubr.bf16.gmra.mxu0 %v3417
      %v3731 = vpop.f32.mrf.mxu0
      %v3732 = vadd.f32 %v3532, %v3731
      %v3733 = vpop.f32.mrf.mxu0
      %v3734 = vpop.f32.mrf.mxu0
      %v3735 = vadd.f32 %v3535, %v3734
      %v3736 = vpop.f32.mrf.mxu0
      %3737 = vmatprep.mubr.bf16.mxu0 0
      %3738 = vmatmul.mubr.bf16.gmra.mxu0 %v3420
      %v3739 = vpop.f32.mrf.mxu0
      %v3740 = vadd.f32 %v3540, %v3739
      %v3741 = vpop.f32.mrf.mxu0
      %v3742 = vpop.f32.mrf.mxu0
      %v3743 = vadd.f32 %v3543, %v3742
      %v3744 = vpop.f32.mrf.mxu0
      %3745 = vmatprep.mubr.bf16.mxu0 0
      %3746 = vmatmul.mubr.bf16.gmra.mxu0 %v3423
      %v3747 = vpop.f32.mrf.mxu0
      %v3748 = vadd.f32 %v3548, %v3747
      %v3749 = vpop.f32.mrf.mxu0
      %v3750 = vpop.f32.mrf.mxu0
      %v3751 = vadd.f32 %v3551, %v3750
      %v3752 = vpop.f32.mrf.mxu0
      %3753 = vmatprep.mubr.bf16.mxu0 0
      %3754 = vmatmul.mubr.bf16.gmra.mxu0 %v3426
      %v3755 = vpop.f32.mrf.mxu0
      %v3756 = vadd.f32 %v3556, %v3755
      %v3757 = vpop.f32.mrf.mxu0
      %v3758 = vpop.f32.mrf.mxu0
      %v3759 = vadd.f32 %v3559, %v3758
      %v3760 = vpop.f32.mrf.mxu0
      %3761 = vmatprep.mubr.bf16.mxu0 0
      %3762 = vmatmul.mubr.bf16.gmra.mxu0 %v3429
      %v3763 = vpop.f32.mrf.mxu0
      %v3764 = vadd.f32 %v3564, %v3763
      %v3765 = vpop.f32.mrf.mxu0
      %v3766 = vpop.f32.mrf.mxu0
      %v3767 = vadd.f32 %v3567, %v3766
      %v3768 = vpop.f32.mrf.mxu0
      %3769 = vmatprep.mubr.bf16.mxu0 0
      %3770 = vmatmul.mubr.bf16.gmra.mxu0 %v3432
      %v3771 = vpop.f32.mrf.mxu0
      %v3772 = vadd.f32 %v3572, %v3771
      %v3773 = vpop.f32.mrf.mxu0
      %v3774 = vpop.f32.mrf.mxu0
      %v3775 = vadd.f32 %v3575, %v3774
      %v3776 = vpop.f32.mrf.mxu0
      %3777 = vmatprep.mubr.bf16.mxu0 0
      %3778 = vmatmul.mubr.bf16.gmra.mxu0 %v3435
      %v3779 = vpop.f32.mrf.mxu0
      %v3780 = vadd.f32 %v3580, %v3779
      %v3781 = vpop.f32.mrf.mxu0
      %v3782 = vpop.f32.mrf.mxu0
      %v3783 = vadd.f32 %v3583, %v3782
      %v3784 = vpop.f32.mrf.mxu0
      %3785 = vmatprep.mubr.bf16.mxu0 0
      %3786 = vmatmul.mubr.bf16.gmra.mxu0 %v3438
      %v3787 = vpop.f32.mrf.mxu0
      %v3788 = vadd.f32 %v3588, %v3787
      %v3789 = vpop.f32.mrf.mxu0
      %v3790 = vpop.f32.mrf.mxu0
      %v3791 = vadd.f32 %v3591, %v3790
      %v3792 = vpop.f32.mrf.mxu0
      %3793 = vmatprep.mubr.bf16.mxu0 0
      %3794 = vmatmul.mubr.bf16.gmra.mxu0 %v3441
      %v3795 = vpop.f32.mrf.mxu0
      %v3796 = vadd.f32 %v3596, %v3795
      %v3797 = vpop.f32.mrf.mxu0
      %v3798 = vpop.f32.mrf.mxu0
      %v3799 = vadd.f32 %v3599, %v3798
      %v3800 = vpop.f32.mrf.mxu0
      %3801 = vmatprep.mubr.bf16.mxu0 0
      %3802 = vmatmul.mubr.bf16.gmra.mxu0 %v3444
      %v3803 = vpop.f32.mrf.mxu0
      %v3804 = vadd.f32 %v3604, %v3803
      %v3805 = vpop.f32.mrf.mxu0
      %v3806 = vpop.f32.mrf.mxu0
      %v3807 = vadd.f32 %v3607, %v3806
      %v3808 = vpop.f32.mrf.mxu0
      %3809 = vdwg.mxu0
      %s3810 = scalar_lea.vmem %s1, 432
      %v3811 = vld [vmem:[%s3810] sm:$0xf]
      %v3812 = vld [vmem:[%s3810 + $0x4] sm:$0xf]
      %v3813 = vld [vmem:[%s3810 + $0x8] sm:$0xf]
      %v3814 = vld [vmem:[%s3810 + $0xc] sm:$0xf]
      %v3815 = vld [vmem:[%s3810 + $0x10] sm:$0xf]
      %v3816 = vld [vmem:[%s3810 + $0x14] sm:$0xf]
      %v3817 = vld [vmem:[%s3810 + $0x18] sm:$0xf]
      %v3818 = vld [vmem:[%s3810 + $0x1c] sm:$0xf]
      %v3819 = vld [vmem:[%s3810 + $0x20] sm:$0xf]
      %v3820 = vld [vmem:[%s3810 + $0x24] sm:$0xf]
      %v3821 = vld [vmem:[%s3810 + $0x28] sm:$0xf]
      %v3822 = vld [vmem:[%s3810 + $0x2c] sm:$0xf]
      %v3835 = vunpack.c.l.b16 %v3811
      %v3836 = vunpack.c.l.b16 %v3812
      %v3837 = vunpack.c.l.b16 %v3813
      %v3838 = vunpack.c.l.b16 %v3814
      %v3839 = vunpack.c.l.b16 %v3815
      %v3840 = vunpack.c.l.b16 %v3816
      %v3841 = vunpack.c.l.b16 %v3817
      %v3842 = vunpack.c.l.b16 %v3818
      %v3843 = vunpack.c.l.b16 %v3819
      %v3844 = vunpack.c.l.b16 %v3820
      %v3845 = vunpack.c.l.b16 %v3821
      %v3846 = vunpack.c.l.b16 %v3822
      %v3847 = vpack.c.b16 %v3836, %v3835
      %v3848 = vpack.c.b16 %v3838, %v3837
      %v3849 = vpack.c.b16 %v3840, %v3839
      %v3850 = vpack.c.b16 %v3842, %v3841
      %v3851 = vpack.c.b16 %v3844, %v3843
      %v3852 = vpack.c.b16 %v3846, %v3845
      %v3860 = vsel %vm1006, %v3334, 0
      %3862 = vmatprep.subr.bf16.mxu0 0
      %3863 = vmatpush1.bf16.msra.mxu0 0
      %3864 = vmatprep.subr.bf16.mxu0 0
      %3865 = vmatpush1.bf16.msra.mxu0 0
      %3866 = vmatprep.subr.bf16.mxu0 0
      %3867 = vmatpush1.bf16.msra.mxu0 %v3852
      %3868 = vmatprep.subr.bf16.mxu0 0
      %3869 = vmatpush1.bf16.msra.mxu0 %v3851
      %3870 = vmatprep.subr.bf16.mxu0 0
      %3871 = vmatpush1.bf16.msra.mxu0 %v3850
      %3872 = vmatprep.subr.bf16.mxu0 0
      %3873 = vmatpush1.bf16.msra.mxu0 %v3849
      %3874 = vmatprep.subr.bf16.mxu0 0
      %3875 = vmatpush1.bf16.msra.mxu0 %v3848
      %3876 = vmatprep.subr.bf16.mxu0 0
      %3877 = vmatpush1.bf16.msra.mxu0 %v3847
      %3878 = vmatprep.subr.bf16.mxu0 0
      %3879 = vmatpush2.bf16.msra.mxu0 0
      %3880 = vmatprep.subr.bf16.mxu0 0
      %3881 = vmatpush2.bf16.msra.mxu0 0
      %3882 = vmatprep.subr.bf16.mxu0 0
      %3883 = vmatpush2.bf16.msra.mxu0 0
      %3884 = vmatprep.subr.bf16.mxu0 0
      %3885 = vmatpush2.bf16.msra.mxu0 0
      %3886 = vmatprep.subr.bf16.mxu0 0
      %3887 = vmatpush2.bf16.msra.mxu0 0
      %3888 = vmatprep.subr.bf16.mxu0 0
      %3889 = vmatpush2.bf16.msra.mxu0 0
      %3890 = vmatprep.subr.bf16.mxu0 0
      %3891 = vmatpush2.bf16.msra.mxu0 0
      %3892 = vmatprep.subr.bf16.mxu0 0
      %3893 = vmatpush2.bf16.msra.mxu0 0
      %3894 = vmatprep.mubr.bf16.mxu0 0
      %3895 = vmatmul.mubr.bf16.gmra.mxu0 %v3405
      %v3896 = vpop.f32.mrf.mxu0
      %v3897 = vadd.f32 0.0, %v3896
      %v3898 = vpop.f32.mrf.mxu0
      %v3899 = vpop.f32.mrf.mxu0
      %v3900 = vadd.f32 0.0, %v3899
      %v3901 = vpop.f32.mrf.mxu0
      %3902 = vmatprep.mubr.bf16.mxu0 0
      %3903 = vmatmul.mubr.bf16.gmra.mxu0 %v3408
      %v3904 = vpop.f32.mrf.mxu0
      %v3905 = vadd.f32 0.0, %v3904
      %v3906 = vpop.f32.mrf.mxu0
      %v3907 = vpop.f32.mrf.mxu0
      %v3908 = vadd.f32 0.0, %v3907
      %v3909 = vpop.f32.mrf.mxu0
      %3910 = vmatprep.mubr.bf16.mxu0 0
      %3911 = vmatmul.mubr.bf16.gmra.mxu0 %v3411
      %v3912 = vpop.f32.mrf.mxu0
      %v3913 = vadd.f32 0.0, %v3912
      %v3914 = vpop.f32.mrf.mxu0
      %v3915 = vpop.f32.mrf.mxu0
      %v3916 = vadd.f32 0.0, %v3915
      %v3917 = vpop.f32.mrf.mxu0
      %3918 = vmatprep.mubr.bf16.mxu0 0
      %3919 = vmatmul.mubr.bf16.gmra.mxu0 %v3414
      %v3920 = vpop.f32.mrf.mxu0
      %v3921 = vadd.f32 0.0, %v3920
      %v3922 = vpop.f32.mrf.mxu0
      %v3923 = vpop.f32.mrf.mxu0
      %v3924 = vadd.f32 0.0, %v3923
      %v3925 = vpop.f32.mrf.mxu0
      %3926 = vmatprep.mubr.bf16.mxu0 0
      %3927 = vmatmul.mubr.bf16.gmra.mxu0 %v3417
      %v3928 = vpop.f32.mrf.mxu0
      %v3929 = vadd.f32 0.0, %v3928
      %v3930 = vpop.f32.mrf.mxu0
      %v3931 = vpop.f32.mrf.mxu0
      %v3932 = vadd.f32 0.0, %v3931
      %v3933 = vpop.f32.mrf.mxu0
      %3934 = vmatprep.mubr.bf16.mxu0 0
      %3935 = vmatmul.mubr.bf16.gmra.mxu0 %v3420
      %v3936 = vpop.f32.mrf.mxu0
      %v3937 = vadd.f32 0.0, %v3936
      %v3938 = vpop.f32.mrf.mxu0
      %v3939 = vpop.f32.mrf.mxu0
      %v3940 = vadd.f32 0.0, %v3939
      %v3941 = vpop.f32.mrf.mxu0
      %3942 = vmatprep.mubr.bf16.mxu0 0
      %3943 = vmatmul.mubr.bf16.gmra.mxu0 %v3423
      %v3944 = vpop.f32.mrf.mxu0
      %v3945 = vadd.f32 0.0, %v3944
      %v3946 = vpop.f32.mrf.mxu0
      %v3947 = vpop.f32.mrf.mxu0
      %v3948 = vadd.f32 0.0, %v3947
      %v3949 = vpop.f32.mrf.mxu0
      %3950 = vmatprep.mubr.bf16.mxu0 0
      %3951 = vmatmul.mubr.bf16.gmra.mxu0 %v3426
      %v3952 = vpop.f32.mrf.mxu0
      %v3953 = vadd.f32 0.0, %v3952
      %v3954 = vpop.f32.mrf.mxu0
      %v3955 = vpop.f32.mrf.mxu0
      %v3956 = vadd.f32 0.0, %v3955
      %v3957 = vpop.f32.mrf.mxu0
      %3958 = vmatprep.mubr.bf16.mxu0 0
      %3959 = vmatmul.mubr.bf16.gmra.mxu0 %v3429
      %v3960 = vpop.f32.mrf.mxu0
      %v3961 = vadd.f32 0.0, %v3960
      %v3962 = vpop.f32.mrf.mxu0
      %v3963 = vpop.f32.mrf.mxu0
      %v3964 = vadd.f32 0.0, %v3963
      %v3965 = vpop.f32.mrf.mxu0
      %3966 = vmatprep.mubr.bf16.mxu0 0
      %3967 = vmatmul.mubr.bf16.gmra.mxu0 %v3432
      %v3968 = vpop.f32.mrf.mxu0
      %v3969 = vadd.f32 0.0, %v3968
      %v3970 = vpop.f32.mrf.mxu0
      %v3971 = vpop.f32.mrf.mxu0
      %v3972 = vadd.f32 0.0, %v3971
      %v3973 = vpop.f32.mrf.mxu0
      %3974 = vmatprep.mubr.bf16.mxu0 0
      %3975 = vmatmul.mubr.bf16.gmra.mxu0 %v3435
      %v3976 = vpop.f32.mrf.mxu0
      %v3977 = vadd.f32 0.0, %v3976
      %v3978 = vpop.f32.mrf.mxu0
      %v3979 = vpop.f32.mrf.mxu0
      %v3980 = vadd.f32 0.0, %v3979
      %v3981 = vpop.f32.mrf.mxu0
      %3982 = vmatprep.mubr.bf16.mxu0 0
      %3983 = vmatmul.mubr.bf16.gmra.mxu0 %v3438
      %v3984 = vpop.f32.mrf.mxu0
      %v3985 = vadd.f32 0.0, %v3984
      %v3986 = vpop.f32.mrf.mxu0
      %v3987 = vpop.f32.mrf.mxu0
      %v3988 = vadd.f32 0.0, %v3987
      %v3989 = vpop.f32.mrf.mxu0
      %3990 = vmatprep.mubr.bf16.mxu0 0
      %3991 = vmatmul.mubr.bf16.gmra.mxu0 %v3441
      %v3992 = vpop.f32.mrf.mxu0
      %v3993 = vadd.f32 0.0, %v3992
      %v3994 = vpop.f32.mrf.mxu0
      %v3995 = vpop.f32.mrf.mxu0
      %v3996 = vadd.f32 0.0, %v3995
      %v3997 = vpop.f32.mrf.mxu0
      %3998 = vmatprep.mubr.bf16.mxu0 0
      %3999 = vmatmul.mubr.bf16.gmra.mxu0 %v3444
      %v4000 = vpop.f32.mrf.mxu0
      %v4001 = vadd.f32 0.0, %v4000
      %v4002 = vpop.f32.mrf.mxu0
      %v4003 = vpop.f32.mrf.mxu0
      %v4004 = vadd.f32 0.0, %v4003
      %v4005 = vpop.f32.mrf.mxu0
      %4006 = vmatprep.mubr.bf16.mxu0 0
      %4007 = vmatmul.mubr.bf16.gmra.mxu0 %v3447
      %v4008 = vpop.f32.mrf.mxu0
      %v4009 = vadd.f32 0.0, %v4008
      %v4010 = vpop.f32.mrf.mxu0
      %v4011 = vpop.f32.mrf.mxu0
      %v4012 = vadd.f32 0.0, %v4011
      %v4013 = vpop.f32.mrf.mxu0
      %4014 = vmatprep.mubr.bf16.mxu0 0
      %4015 = vmatmul.mubr.bf16.gmra.mxu0 %v3860
      %v4016 = vpop.f32.mrf.mxu0
      %v4017 = vadd.f32 0.0, %v4016
      %v4018 = vpop.f32.mrf.mxu0
      %v4019 = vpop.f32.mrf.mxu0
      %v4020 = vadd.f32 0.0, %v4019
      %v4021 = vpop.f32.mrf.mxu0
      %4022 = vdwg.mxu0
      %v4023 = vadd.f32 %v3684, %v3897
      %v4024 = vadd.f32 %v3687, %v3900
      %v4025 = vadd.f32 %v3692, %v3905
      %v4026 = vadd.f32 %v3695, %v3908
      %v4027 = vadd.f32 %v3700, %v3913
      %v4028 = vadd.f32 %v3703, %v3916
      %v4029 = vadd.f32 %v3708, %v3921
      %v4030 = vadd.f32 %v3711, %v3924
      %v4031 = vadd.f32 %v3716, %v3929
      %v4032 = vadd.f32 %v3719, %v3932
      %v4033 = vadd.f32 %v3724, %v3937
      %v4034 = vadd.f32 %v3727, %v3940
      %v4035 = vadd.f32 %v3732, %v3945
      %v4036 = vadd.f32 %v3735, %v3948
      %v4037 = vadd.f32 %v3740, %v3953
      %v4038 = vadd.f32 %v3743, %v3956
      %v4039 = vadd.f32 %v3748, %v3961
      %v4040 = vadd.f32 %v3751, %v3964
      %v4041 = vadd.f32 %v3756, %v3969
      %v4042 = vadd.f32 %v3759, %v3972
      %v4043 = vadd.f32 %v3764, %v3977
      %v4044 = vadd.f32 %v3767, %v3980
      %v4045 = vadd.f32 %v3772, %v3985
      %v4046 = vadd.f32 %v3775, %v3988
      %v4047 = vadd.f32 %v3780, %v3993
      %v4048 = vadd.f32 %v3783, %v3996
      %v4049 = vadd.f32 %v3788, %v4001
      %v4050 = vadd.f32 %v3791, %v4004
      %v4051 = vadd.f32 %v3796, %v4009
      %v4052 = vadd.f32 %v3799, %v4012
      %v4053 = vadd.f32 %v3804, %v4017
      %v4054 = vadd.f32 %v3807, %v4020
      %s4055 = scalar_lea.vmem %s1, 480
      %v4056 = vld [vmem:[%s4055] sm:$0xf]
      %v4057 = vld [vmem:[%s4055 + $0x4] sm:$0xf]
      %v4058 = vld [vmem:[%s4055 + $0x8] sm:$0xf]
      %v4059 = vld [vmem:[%s4055 + $0xc] sm:$0xf]
      %v4060 = vld [vmem:[%s4055 + $0x10] sm:$0xf]
      %v4061 = vld [vmem:[%s4055 + $0x14] sm:$0xf]
      %v4062 = vld [vmem:[%s4055 + $0x18] sm:$0xf]
      %v4063 = vld [vmem:[%s4055 + $0x1c] sm:$0xf]
      %v4064 = vld [vmem:[%s4055 + $0x20] sm:$0xf]
      %v4065 = vld [vmem:[%s4055 + $0x24] sm:$0xf]
      %v4066 = vld [vmem:[%s4055 + $0x28] sm:$0xf]
      %v4067 = vld [vmem:[%s4055 + $0x2c] sm:$0xf]
      %v4080 = vunpack.c.l.b16 %v4056
      %v4081 = vunpack.c.l.b16 %v4057
      %v4082 = vunpack.c.l.b16 %v4058
      %v4083 = vunpack.c.l.b16 %v4059
      %v4084 = vunpack.c.l.b16 %v4060
      %v4085 = vunpack.c.l.b16 %v4061
      %v4086 = vunpack.c.l.b16 %v4062
      %v4087 = vunpack.c.l.b16 %v4063
      %v4088 = vunpack.c.l.b16 %v4064
      %v4089 = vunpack.c.l.b16 %v4065
      %v4090 = vunpack.c.l.b16 %v4066
      %v4091 = vunpack.c.l.b16 %v4067
      %v4092 = vpack.c.b16 %v4081, %v4080
      %v4093 = vpack.c.b16 %v4083, %v4082
      %v4094 = vpack.c.b16 %v4085, %v4084
      %v4095 = vpack.c.b16 %v4087, %v4086
      %v4096 = vpack.c.b16 %v4089, %v4088
      %v4097 = vpack.c.b16 %v4091, %v4090
      %v4105 = vsel %vm1006, %v3335, 0
      %4107 = vmatprep.subr.bf16.mxu0 0
      %4108 = vmatpush1.bf16.msra.mxu0 0
      %4109 = vmatprep.subr.bf16.mxu0 0
      %4110 = vmatpush1.bf16.msra.mxu0 0
      %4111 = vmatprep.subr.bf16.mxu0 0
      %4112 = vmatpush1.bf16.msra.mxu0 %v4097
      %4113 = vmatprep.subr.bf16.mxu0 0
      %4114 = vmatpush1.bf16.msra.mxu0 %v4096
      %4115 = vmatprep.subr.bf16.mxu0 0
      %4116 = vmatpush1.bf16.msra.mxu0 %v4095
      %4117 = vmatprep.subr.bf16.mxu0 0
      %4118 = vmatpush1.bf16.msra.mxu0 %v4094
      %4119 = vmatprep.subr.bf16.mxu0 0
      %4120 = vmatpush1.bf16.msra.mxu0 %v4093
      %4121 = vmatprep.subr.bf16.mxu0 0
      %4122 = vmatpush1.bf16.msra.mxu0 %v4092
      %4123 = vmatprep.subr.bf16.mxu0 0
      %4124 = vmatpush2.bf16.msra.mxu0 0
      %4125 = vmatprep.subr.bf16.mxu0 0
      %4126 = vmatpush2.bf16.msra.mxu0 0
      %4127 = vmatprep.subr.bf16.mxu0 0
      %4128 = vmatpush2.bf16.msra.mxu0 0
      %4129 = vmatprep.subr.bf16.mxu0 0
      %4130 = vmatpush2.bf16.msra.mxu0 0
      %4131 = vmatprep.subr.bf16.mxu0 0
      %4132 = vmatpush2.bf16.msra.mxu0 0
      %4133 = vmatprep.subr.bf16.mxu0 0
      %4134 = vmatpush2.bf16.msra.mxu0 0
      %4135 = vmatprep.subr.bf16.mxu0 0
      %4136 = vmatpush2.bf16.msra.mxu0 0
      %4137 = vmatprep.subr.bf16.mxu0 0
      %4138 = vmatpush2.bf16.msra.mxu0 0
      %4139 = vmatprep.mubr.bf16.mxu0 0
      %4140 = vmatmul.mubr.bf16.gmra.mxu0 %v3408
      %v4141 = vpop.f32.mrf.mxu0
      %v4142 = vadd.f32 0.0, %v4141
      %v4143 = vpop.f32.mrf.mxu0
      %v4144 = vpop.f32.mrf.mxu0
      %v4145 = vadd.f32 0.0, %v4144
      %v4146 = vpop.f32.mrf.mxu0
      %4147 = vmatprep.mubr.bf16.mxu0 0
      %4148 = vmatmul.mubr.bf16.gmra.mxu0 %v3411
      %v4149 = vpop.f32.mrf.mxu0
      %v4150 = vadd.f32 0.0, %v4149
      %v4151 = vpop.f32.mrf.mxu0
      %v4152 = vpop.f32.mrf.mxu0
      %v4153 = vadd.f32 0.0, %v4152
      %v4154 = vpop.f32.mrf.mxu0
      %4155 = vmatprep.mubr.bf16.mxu0 0
      %4156 = vmatmul.mubr.bf16.gmra.mxu0 %v3414
      %v4157 = vpop.f32.mrf.mxu0
      %v4158 = vadd.f32 0.0, %v4157
      %v4159 = vpop.f32.mrf.mxu0
      %v4160 = vpop.f32.mrf.mxu0
      %v4161 = vadd.f32 0.0, %v4160
      %v4162 = vpop.f32.mrf.mxu0
      %4163 = vmatprep.mubr.bf16.mxu0 0
      %4164 = vmatmul.mubr.bf16.gmra.mxu0 %v3417
      %v4165 = vpop.f32.mrf.mxu0
      %v4166 = vadd.f32 0.0, %v4165
      %v4167 = vpop.f32.mrf.mxu0
      %v4168 = vpop.f32.mrf.mxu0
      %v4169 = vadd.f32 0.0, %v4168
      %v4170 = vpop.f32.mrf.mxu0
      %4171 = vmatprep.mubr.bf16.mxu0 0
      %4172 = vmatmul.mubr.bf16.gmra.mxu0 %v3420
      %v4173 = vpop.f32.mrf.mxu0
      %v4174 = vadd.f32 0.0, %v4173
      %v4175 = vpop.f32.mrf.mxu0
      %v4176 = vpop.f32.mrf.mxu0
      %v4177 = vadd.f32 0.0, %v4176
      %v4178 = vpop.f32.mrf.mxu0
      %4179 = vmatprep.mubr.bf16.mxu0 0
      %4180 = vmatmul.mubr.bf16.gmra.mxu0 %v3423
      %v4181 = vpop.f32.mrf.mxu0
      %v4182 = vadd.f32 0.0, %v4181
      %v4183 = vpop.f32.mrf.mxu0
      %v4184 = vpop.f32.mrf.mxu0
      %v4185 = vadd.f32 0.0, %v4184
      %v4186 = vpop.f32.mrf.mxu0
      %4187 = vmatprep.mubr.bf16.mxu0 0
      %4188 = vmatmul.mubr.bf16.gmra.mxu0 %v3426
      %v4189 = vpop.f32.mrf.mxu0
      %v4190 = vadd.f32 0.0, %v4189
      %v4191 = vpop.f32.mrf.mxu0
      %v4192 = vpop.f32.mrf.mxu0
      %v4193 = vadd.f32 0.0, %v4192
      %v4194 = vpop.f32.mrf.mxu0
      %4195 = vmatprep.mubr.bf16.mxu0 0
      %4196 = vmatmul.mubr.bf16.gmra.mxu0 %v3429
      %v4197 = vpop.f32.mrf.mxu0
      %v4198 = vadd.f32 0.0, %v4197
      %v4199 = vpop.f32.mrf.mxu0
      %v4200 = vpop.f32.mrf.mxu0
      %v4201 = vadd.f32 0.0, %v4200
      %v4202 = vpop.f32.mrf.mxu0
      %4203 = vmatprep.mubr.bf16.mxu0 0
      %4204 = vmatmul.mubr.bf16.gmra.mxu0 %v3432
      %v4205 = vpop.f32.mrf.mxu0
      %v4206 = vadd.f32 0.0, %v4205
      %v4207 = vpop.f32.mrf.mxu0
      %v4208 = vpop.f32.mrf.mxu0
      %v4209 = vadd.f32 0.0, %v4208
      %v4210 = vpop.f32.mrf.mxu0
      %4211 = vmatprep.mubr.bf16.mxu0 0
      %4212 = vmatmul.mubr.bf16.gmra.mxu0 %v3435
      %v4213 = vpop.f32.mrf.mxu0
      %v4214 = vadd.f32 0.0, %v4213
      %v4215 = vpop.f32.mrf.mxu0
      %v4216 = vpop.f32.mrf.mxu0
      %v4217 = vadd.f32 0.0, %v4216
      %v4218 = vpop.f32.mrf.mxu0
      %4219 = vmatprep.mubr.bf16.mxu0 0
      %4220 = vmatmul.mubr.bf16.gmra.mxu0 %v3438
      %v4221 = vpop.f32.mrf.mxu0
      %v4222 = vadd.f32 0.0, %v4221
      %v4223 = vpop.f32.mrf.mxu0
      %v4224 = vpop.f32.mrf.mxu0
      %v4225 = vadd.f32 0.0, %v4224
      %v4226 = vpop.f32.mrf.mxu0
      %4227 = vmatprep.mubr.bf16.mxu0 0
      %4228 = vmatmul.mubr.bf16.gmra.mxu0 %v3441
      %v4229 = vpop.f32.mrf.mxu0
      %v4230 = vadd.f32 0.0, %v4229
      %v4231 = vpop.f32.mrf.mxu0
      %v4232 = vpop.f32.mrf.mxu0
      %v4233 = vadd.f32 0.0, %v4232
      %v4234 = vpop.f32.mrf.mxu0
      %4235 = vmatprep.mubr.bf16.mxu0 0
      %4236 = vmatmul.mubr.bf16.gmra.mxu0 %v3444
      %v4237 = vpop.f32.mrf.mxu0
      %v4238 = vadd.f32 0.0, %v4237
      %v4239 = vpop.f32.mrf.mxu0
      %v4240 = vpop.f32.mrf.mxu0
      %v4241 = vadd.f32 0.0, %v4240
      %v4242 = vpop.f32.mrf.mxu0
      %4243 = vmatprep.mubr.bf16.mxu0 0
      %4244 = vmatmul.mubr.bf16.gmra.mxu0 %v3447
      %v4245 = vpop.f32.mrf.mxu0
      %v4246 = vadd.f32 0.0, %v4245
      %v4247 = vpop.f32.mrf.mxu0
      %v4248 = vpop.f32.mrf.mxu0
      %v4249 = vadd.f32 0.0, %v4248
      %v4250 = vpop.f32.mrf.mxu0
      %4251 = vmatprep.mubr.bf16.mxu0 0
      %4252 = vmatmul.mubr.bf16.gmra.mxu0 %v3860
      %v4253 = vpop.f32.mrf.mxu0
      %v4254 = vadd.f32 0.0, %v4253
      %v4255 = vpop.f32.mrf.mxu0
      %v4256 = vpop.f32.mrf.mxu0
      %v4257 = vadd.f32 0.0, %v4256
      %v4258 = vpop.f32.mrf.mxu0
      %4259 = vmatprep.mubr.bf16.mxu0 0
      %4260 = vmatmul.mubr.bf16.gmra.mxu0 %v4105
      %v4261 = vpop.f32.mrf.mxu0
      %v4262 = vadd.f32 0.0, %v4261
      %v4263 = vpop.f32.mrf.mxu0
      %v4264 = vpop.f32.mrf.mxu0
      %v4265 = vadd.f32 0.0, %v4264
      %v4266 = vpop.f32.mrf.mxu0
      %4267 = vdwg.mxu0
      %v4268 = vadd.f32 %v4023, %v4142
      %v4269 = vadd.f32 %v4024, %v4145
      %v4270 = vadd.f32 %v4025, %v4150
      %v4271 = vadd.f32 %v4026, %v4153
      %v4272 = vadd.f32 %v4027, %v4158
      %v4273 = vadd.f32 %v4028, %v4161
      %v4274 = vadd.f32 %v4029, %v4166
      %v4275 = vadd.f32 %v4030, %v4169
      %v4276 = vadd.f32 %v4031, %v4174
      %v4277 = vadd.f32 %v4032, %v4177
      %v4278 = vadd.f32 %v4033, %v4182
      %v4279 = vadd.f32 %v4034, %v4185
      %v4280 = vadd.f32 %v4035, %v4190
      %v4281 = vadd.f32 %v4036, %v4193
      %v4282 = vadd.f32 %v4037, %v4198
      %v4283 = vadd.f32 %v4038, %v4201
      %v4284 = vadd.f32 %v4039, %v4206
      %v4285 = vadd.f32 %v4040, %v4209
      %v4286 = vadd.f32 %v4041, %v4214
      %v4287 = vadd.f32 %v4042, %v4217
      %v4288 = vadd.f32 %v4043, %v4222
      %v4289 = vadd.f32 %v4044, %v4225
      %v4290 = vadd.f32 %v4045, %v4230
      %v4291 = vadd.f32 %v4046, %v4233
      %v4292 = vadd.f32 %v4047, %v4238
      %v4293 = vadd.f32 %v4048, %v4241
      %v4294 = vadd.f32 %v4049, %v4246
      %v4295 = vadd.f32 %v4050, %v4249
      %v4296 = vadd.f32 %v4051, %v4254
      %v4297 = vadd.f32 %v4052, %v4257
      %v4298 = vadd.f32 %v4053, %v4262
      %v4299 = vadd.f32 %v4054, %v4265
      %s4300 = scalar_lea.vmem %s1, 528
      %v4301 = vld [vmem:[%s4300] sm:$0xf]
      %v4302 = vld [vmem:[%s4300 + $0x4] sm:$0xf]
      %v4303 = vld [vmem:[%s4300 + $0x8] sm:$0xf]
      %v4304 = vld [vmem:[%s4300 + $0xc] sm:$0xf]
      %v4305 = vld [vmem:[%s4300 + $0x10] sm:$0xf]
      %v4306 = vld [vmem:[%s4300 + $0x14] sm:$0xf]
      %v4307 = vld [vmem:[%s4300 + $0x18] sm:$0xf]
      %v4308 = vld [vmem:[%s4300 + $0x1c] sm:$0xf]
      %v4309 = vld [vmem:[%s4300 + $0x20] sm:$0xf]
      %v4310 = vld [vmem:[%s4300 + $0x24] sm:$0xf]
      %v4311 = vld [vmem:[%s4300 + $0x28] sm:$0xf]
      %v4312 = vld [vmem:[%s4300 + $0x2c] sm:$0xf]
      %v4325 = vunpack.c.l.b16 %v4301
      %v4326 = vunpack.c.l.b16 %v4302
      %v4327 = vunpack.c.l.b16 %v4303
      %v4328 = vunpack.c.l.b16 %v4304
      %v4329 = vunpack.c.l.b16 %v4305
      %v4330 = vunpack.c.l.b16 %v4306
      %v4331 = vunpack.c.l.b16 %v4307
      %v4332 = vunpack.c.l.b16 %v4308
      %v4333 = vunpack.c.l.b16 %v4309
      %v4334 = vunpack.c.l.b16 %v4310
      %v4335 = vunpack.c.l.b16 %v4311
      %v4336 = vunpack.c.l.b16 %v4312
      %v4337 = vpack.c.b16 %v4326, %v4325
      %v4338 = vpack.c.b16 %v4328, %v4327
      %v4339 = vpack.c.b16 %v4330, %v4329
      %v4340 = vpack.c.b16 %v4332, %v4331
      %v4341 = vpack.c.b16 %v4334, %v4333
      %v4342 = vpack.c.b16 %v4336, %v4335
      %v4350 = vsel %vm1006, %v3336, 0
      %4352 = vmatprep.subr.bf16.mxu0 0
      %4353 = vmatpush1.bf16.msra.mxu0 0
      %4354 = vmatprep.subr.bf16.mxu0 0
      %4355 = vmatpush1.bf16.msra.mxu0 0
      %4356 = vmatprep.subr.bf16.mxu0 0
      %4357 = vmatpush1.bf16.msra.mxu0 %v4342
      %4358 = vmatprep.subr.bf16.mxu0 0
      %4359 = vmatpush1.bf16.msra.mxu0 %v4341
      %4360 = vmatprep.subr.bf16.mxu0 0
      %4361 = vmatpush1.bf16.msra.mxu0 %v4340
      %4362 = vmatprep.subr.bf16.mxu0 0
      %4363 = vmatpush1.bf16.msra.mxu0 %v4339
      %4364 = vmatprep.subr.bf16.mxu0 0
      %4365 = vmatpush1.bf16.msra.mxu0 %v4338
      %4366 = vmatprep.subr.bf16.mxu0 0
      %4367 = vmatpush1.bf16.msra.mxu0 %v4337
      %4368 = vmatprep.subr.bf16.mxu0 0
      %4369 = vmatpush2.bf16.msra.mxu0 0
      %4370 = vmatprep.subr.bf16.mxu0 0
      %4371 = vmatpush2.bf16.msra.mxu0 0
      %4372 = vmatprep.subr.bf16.mxu0 0
      %4373 = vmatpush2.bf16.msra.mxu0 0
      %4374 = vmatprep.subr.bf16.mxu0 0
      %4375 = vmatpush2.bf16.msra.mxu0 0
      %4376 = vmatprep.subr.bf16.mxu0 0
      %4377 = vmatpush2.bf16.msra.mxu0 0
      %4378 = vmatprep.subr.bf16.mxu0 0
      %4379 = vmatpush2.bf16.msra.mxu0 0
      %4380 = vmatprep.subr.bf16.mxu0 0
      %4381 = vmatpush2.bf16.msra.mxu0 0
      %4382 = vmatprep.subr.bf16.mxu0 0
      %4383 = vmatpush2.bf16.msra.mxu0 0
      %4384 = vmatprep.mubr.bf16.mxu0 0
      %4385 = vmatmul.mubr.bf16.gmra.mxu0 %v3411
      %v4386 = vpop.f32.mrf.mxu0
      %v4387 = vadd.f32 0.0, %v4386
      %v4388 = vpop.f32.mrf.mxu0
      %v4389 = vpop.f32.mrf.mxu0
      %v4390 = vadd.f32 0.0, %v4389
      %v4391 = vpop.f32.mrf.mxu0
      %4392 = vmatprep.mubr.bf16.mxu0 0
      %4393 = vmatmul.mubr.bf16.gmra.mxu0 %v3414
      %v4394 = vpop.f32.mrf.mxu0
      %v4395 = vadd.f32 0.0, %v4394
      %v4396 = vpop.f32.mrf.mxu0
      %v4397 = vpop.f32.mrf.mxu0
      %v4398 = vadd.f32 0.0, %v4397
      %v4399 = vpop.f32.mrf.mxu0
      %4400 = vmatprep.mubr.bf16.mxu0 0
      %4401 = vmatmul.mubr.bf16.gmra.mxu0 %v3417
      %v4402 = vpop.f32.mrf.mxu0
      %v4403 = vadd.f32 0.0, %v4402
      %v4404 = vpop.f32.mrf.mxu0
      %v4405 = vpop.f32.mrf.mxu0
      %v4406 = vadd.f32 0.0, %v4405
      %v4407 = vpop.f32.mrf.mxu0
      %4408 = vmatprep.mubr.bf16.mxu0 0
      %4409 = vmatmul.mubr.bf16.gmra.mxu0 %v3420
      %v4410 = vpop.f32.mrf.mxu0
      %v4411 = vadd.f32 0.0, %v4410
      %v4412 = vpop.f32.mrf.mxu0
      %v4413 = vpop.f32.mrf.mxu0
      %v4414 = vadd.f32 0.0, %v4413
      %v4415 = vpop.f32.mrf.mxu0
      %4416 = vmatprep.mubr.bf16.mxu0 0
      %4417 = vmatmul.mubr.bf16.gmra.mxu0 %v3423
      %v4418 = vpop.f32.mrf.mxu0
      %v4419 = vadd.f32 0.0, %v4418
      %v4420 = vpop.f32.mrf.mxu0
      %v4421 = vpop.f32.mrf.mxu0
      %v4422 = vadd.f32 0.0, %v4421
      %v4423 = vpop.f32.mrf.mxu0
      %4424 = vmatprep.mubr.bf16.mxu0 0
      %4425 = vmatmul.mubr.bf16.gmra.mxu0 %v3426
      %v4426 = vpop.f32.mrf.mxu0
      %v4427 = vadd.f32 0.0, %v4426
      %v4428 = vpop.f32.mrf.mxu0
      %v4429 = vpop.f32.mrf.mxu0
      %v4430 = vadd.f32 0.0, %v4429
      %v4431 = vpop.f32.mrf.mxu0
      %4432 = vmatprep.mubr.bf16.mxu0 0
      %4433 = vmatmul.mubr.bf16.gmra.mxu0 %v3429
      %v4434 = vpop.f32.mrf.mxu0
      %v4435 = vadd.f32 0.0, %v4434
      %v4436 = vpop.f32.mrf.mxu0
      %v4437 = vpop.f32.mrf.mxu0
      %v4438 = vadd.f32 0.0, %v4437
      %v4439 = vpop.f32.mrf.mxu0
      %4440 = vmatprep.mubr.bf16.mxu0 0
      %4441 = vmatmul.mubr.bf16.gmra.mxu0 %v3432
      %v4442 = vpop.f32.mrf.mxu0
      %v4443 = vadd.f32 0.0, %v4442
      %v4444 = vpop.f32.mrf.mxu0
      %v4445 = vpop.f32.mrf.mxu0
      %v4446 = vadd.f32 0.0, %v4445
      %v4447 = vpop.f32.mrf.mxu0
      %4448 = vmatprep.mubr.bf16.mxu0 0
      %4449 = vmatmul.mubr.bf16.gmra.mxu0 %v3435
      %v4450 = vpop.f32.mrf.mxu0
      %v4451 = vadd.f32 0.0, %v4450
      %v4452 = vpop.f32.mrf.mxu0
      %v4453 = vpop.f32.mrf.mxu0
      %v4454 = vadd.f32 0.0, %v4453
      %v4455 = vpop.f32.mrf.mxu0
      %4456 = vmatprep.mubr.bf16.mxu0 0
      %4457 = vmatmul.mubr.bf16.gmra.mxu0 %v3438
      %v4458 = vpop.f32.mrf.mxu0
      %v4459 = vadd.f32 0.0, %v4458
      %v4460 = vpop.f32.mrf.mxu0
      %v4461 = vpop.f32.mrf.mxu0
      %v4462 = vadd.f32 0.0, %v4461
      %v4463 = vpop.f32.mrf.mxu0
      %4464 = vmatprep.mubr.bf16.mxu0 0
      %4465 = vmatmul.mubr.bf16.gmra.mxu0 %v3441
      %v4466 = vpop.f32.mrf.mxu0
      %v4467 = vadd.f32 0.0, %v4466
      %v4468 = vpop.f32.mrf.mxu0
      %v4469 = vpop.f32.mrf.mxu0
      %v4470 = vadd.f32 0.0, %v4469
      %v4471 = vpop.f32.mrf.mxu0
      %4472 = vmatprep.mubr.bf16.mxu0 0
      %4473 = vmatmul.mubr.bf16.gmra.mxu0 %v3444
      %v4474 = vpop.f32.mrf.mxu0
      %v4475 = vadd.f32 0.0, %v4474
      %v4476 = vpop.f32.mrf.mxu0
      %v4477 = vpop.f32.mrf.mxu0
      %v4478 = vadd.f32 0.0, %v4477
      %v4479 = vpop.f32.mrf.mxu0
      %4480 = vmatprep.mubr.bf16.mxu0 0
      %4481 = vmatmul.mubr.bf16.gmra.mxu0 %v3447
      %v4482 = vpop.f32.mrf.mxu0
      %v4483 = vadd.f32 0.0, %v4482
      %v4484 = vpop.f32.mrf.mxu0
      %v4485 = vpop.f32.mrf.mxu0
      %v4486 = vadd.f32 0.0, %v4485
      %v4487 = vpop.f32.mrf.mxu0
      %4488 = vmatprep.mubr.bf16.mxu0 0
      %4489 = vmatmul.mubr.bf16.gmra.mxu0 %v3860
      %v4490 = vpop.f32.mrf.mxu0
      %v4491 = vadd.f32 0.0, %v4490
      %v4492 = vpop.f32.mrf.mxu0
      %v4493 = vpop.f32.mrf.mxu0
      %v4494 = vadd.f32 0.0, %v4493
      %v4495 = vpop.f32.mrf.mxu0
      %4496 = vmatprep.mubr.bf16.mxu0 0
      %4497 = vmatmul.mubr.bf16.gmra.mxu0 %v4105
      %v4498 = vpop.f32.mrf.mxu0
      %v4499 = vadd.f32 0.0, %v4498
      %v4500 = vpop.f32.mrf.mxu0
      %v4501 = vpop.f32.mrf.mxu0
      %v4502 = vadd.f32 0.0, %v4501
      %v4503 = vpop.f32.mrf.mxu0
      %4504 = vmatprep.mubr.bf16.mxu0 0
      %4505 = vmatmul.mubr.bf16.gmra.mxu0 %v4350
      %v4506 = vpop.f32.mrf.mxu0
      %v4507 = vadd.f32 0.0, %v4506
      %v4508 = vpop.f32.mrf.mxu0
      %v4509 = vpop.f32.mrf.mxu0
      %v4510 = vadd.f32 0.0, %v4509
      %v4511 = vpop.f32.mrf.mxu0
      %4512 = vdwg.mxu0
      %v4513 = vadd.f32 %v4268, %v4387
      %v4514 = vadd.f32 %v4269, %v4390
      %v4515 = vadd.f32 %v4270, %v4395
      %v4516 = vadd.f32 %v4271, %v4398
      %v4517 = vadd.f32 %v4272, %v4403
      %v4518 = vadd.f32 %v4273, %v4406
      %v4519 = vadd.f32 %v4274, %v4411
      %v4520 = vadd.f32 %v4275, %v4414
      %v4521 = vadd.f32 %v4276, %v4419
      %v4522 = vadd.f32 %v4277, %v4422
      %v4523 = vadd.f32 %v4278, %v4427
      %v4524 = vadd.f32 %v4279, %v4430
      %v4525 = vadd.f32 %v4280, %v4435
      %v4526 = vadd.f32 %v4281, %v4438
      %v4527 = vadd.f32 %v4282, %v4443
      %v4528 = vadd.f32 %v4283, %v4446
      %v4529 = vadd.f32 %v4284, %v4451
      %v4530 = vadd.f32 %v4285, %v4454
      %v4531 = vadd.f32 %v4286, %v4459
      %v4532 = vadd.f32 %v4287, %v4462
      %v4533 = vadd.f32 %v4288, %v4467
      %v4534 = vadd.f32 %v4289, %v4470
      %v4535 = vadd.f32 %v4290, %v4475
      %v4536 = vadd.f32 %v4291, %v4478
      %v4537 = vadd.f32 %v4292, %v4483
      %v4538 = vadd.f32 %v4293, %v4486
      %v4539 = vadd.f32 %v4294, %v4491
      %v4540 = vadd.f32 %v4295, %v4494
      %v4541 = vadd.f32 %v4296, %v4499
      %v4542 = vadd.f32 %v4297, %v4502
      %v4543 = vadd.f32 %v4298, %v4507
      %v4544 = vadd.f32 %v4299, %v4510
      %s4545 = scalar_lea.vmem %s1, 576
      %v4546 = vld [vmem:[%s4545] sm:$0xf]
      %v4547 = vld [vmem:[%s4545 + $0x4] sm:$0xf]
      %v4548 = vld [vmem:[%s4545 + $0x8] sm:$0xf]
      %v4549 = vld [vmem:[%s4545 + $0xc] sm:$0xf]
      %v4550 = vld [vmem:[%s4545 + $0x10] sm:$0xf]
      %v4551 = vld [vmem:[%s4545 + $0x14] sm:$0xf]
      %v4552 = vld [vmem:[%s4545 + $0x18] sm:$0xf]
      %v4553 = vld [vmem:[%s4545 + $0x1c] sm:$0xf]
      %v4554 = vld [vmem:[%s4545 + $0x20] sm:$0xf]
      %v4555 = vld [vmem:[%s4545 + $0x24] sm:$0xf]
      %v4556 = vld [vmem:[%s4545 + $0x28] sm:$0xf]
      %v4557 = vld [vmem:[%s4545 + $0x2c] sm:$0xf]
      %v4570 = vunpack.c.l.b16 %v4546
      %v4571 = vunpack.c.l.b16 %v4547
      %v4572 = vunpack.c.l.b16 %v4548
      %v4573 = vunpack.c.l.b16 %v4549
      %v4574 = vunpack.c.l.b16 %v4550
      %v4575 = vunpack.c.l.b16 %v4551
      %v4576 = vunpack.c.l.b16 %v4552
      %v4577 = vunpack.c.l.b16 %v4553
      %v4578 = vunpack.c.l.b16 %v4554
      %v4579 = vunpack.c.l.b16 %v4555
      %v4580 = vunpack.c.l.b16 %v4556
      %v4581 = vunpack.c.l.b16 %v4557
      %v4582 = vpack.c.b16 %v4571, %v4570
      %v4583 = vpack.c.b16 %v4573, %v4572
      %v4584 = vpack.c.b16 %v4575, %v4574
      %v4585 = vpack.c.b16 %v4577, %v4576
      %v4586 = vpack.c.b16 %v4579, %v4578
      %v4587 = vpack.c.b16 %v4581, %v4580
      %v4595 = vsel %vm1006, %v3337, 0
      %4597 = vmatprep.subr.bf16.mxu0 0
      %4598 = vmatpush1.bf16.msra.mxu0 0
      %4599 = vmatprep.subr.bf16.mxu0 0
      %4600 = vmatpush1.bf16.msra.mxu0 0
      %4601 = vmatprep.subr.bf16.mxu0 0
      %4602 = vmatpush1.bf16.msra.mxu0 %v4587
      %4603 = vmatprep.subr.bf16.mxu0 0
      %4604 = vmatpush1.bf16.msra.mxu0 %v4586
      %4605 = vmatprep.subr.bf16.mxu0 0
      %4606 = vmatpush1.bf16.msra.mxu0 %v4585
      %4607 = vmatprep.subr.bf16.mxu0 0
      %4608 = vmatpush1.bf16.msra.mxu0 %v4584
      %4609 = vmatprep.subr.bf16.mxu0 0
      %4610 = vmatpush1.bf16.msra.mxu0 %v4583
      %4611 = vmatprep.subr.bf16.mxu0 0
      %4612 = vmatpush1.bf16.msra.mxu0 %v4582
      %4613 = vmatprep.subr.bf16.mxu0 0
      %4614 = vmatpush2.bf16.msra.mxu0 0
      %4615 = vmatprep.subr.bf16.mxu0 0
      %4616 = vmatpush2.bf16.msra.mxu0 0
      %4617 = vmatprep.subr.bf16.mxu0 0
      %4618 = vmatpush2.bf16.msra.mxu0 0
      %4619 = vmatprep.subr.bf16.mxu0 0
      %4620 = vmatpush2.bf16.msra.mxu0 0
      %4621 = vmatprep.subr.bf16.mxu0 0
      %4622 = vmatpush2.bf16.msra.mxu0 0
      %4623 = vmatprep.subr.bf16.mxu0 0
      %4624 = vmatpush2.bf16.msra.mxu0 0
      %4625 = vmatprep.subr.bf16.mxu0 0
      %4626 = vmatpush2.bf16.msra.mxu0 0
      %4627 = vmatprep.subr.bf16.mxu0 0
      %4628 = vmatpush2.bf16.msra.mxu0 0
      %4629 = vmatprep.mubr.bf16.mxu0 0
      %4630 = vmatmul.mubr.bf16.gmra.mxu0 %v3414
      %v4631 = vpop.f32.mrf.mxu0
      %v4632 = vadd.f32 0.0, %v4631
      %v4633 = vpop.f32.mrf.mxu0
      %v4634 = vpop.f32.mrf.mxu0
      %v4635 = vadd.f32 0.0, %v4634
      %v4636 = vpop.f32.mrf.mxu0
      %4637 = vmatprep.mubr.bf16.mxu0 0
      %4638 = vmatmul.mubr.bf16.gmra.mxu0 %v3417
      %v4639 = vpop.f32.mrf.mxu0
      %v4640 = vadd.f32 0.0, %v4639
      %v4641 = vpop.f32.mrf.mxu0
      %v4642 = vpop.f32.mrf.mxu0
      %v4643 = vadd.f32 0.0, %v4642
      %v4644 = vpop.f32.mrf.mxu0
      %4645 = vmatprep.mubr.bf16.mxu0 0
      %4646 = vmatmul.mubr.bf16.gmra.mxu0 %v3420
      %v4647 = vpop.f32.mrf.mxu0
      %v4648 = vadd.f32 0.0, %v4647
      %v4649 = vpop.f32.mrf.mxu0
      %v4650 = vpop.f32.mrf.mxu0
      %v4651 = vadd.f32 0.0, %v4650
      %v4652 = vpop.f32.mrf.mxu0
      %4653 = vmatprep.mubr.bf16.mxu0 0
      %4654 = vmatmul.mubr.bf16.gmra.mxu0 %v3423
      %v4655 = vpop.f32.mrf.mxu0
      %v4656 = vadd.f32 0.0, %v4655
      %v4657 = vpop.f32.mrf.mxu0
      %v4658 = vpop.f32.mrf.mxu0
      %v4659 = vadd.f32 0.0, %v4658
      %v4660 = vpop.f32.mrf.mxu0
      %4661 = vmatprep.mubr.bf16.mxu0 0
      %4662 = vmatmul.mubr.bf16.gmra.mxu0 %v3426
      %v4663 = vpop.f32.mrf.mxu0
      %v4664 = vadd.f32 0.0, %v4663
      %v4665 = vpop.f32.mrf.mxu0
      %v4666 = vpop.f32.mrf.mxu0
      %v4667 = vadd.f32 0.0, %v4666
      %v4668 = vpop.f32.mrf.mxu0
      %4669 = vmatprep.mubr.bf16.mxu0 0
      %4670 = vmatmul.mubr.bf16.gmra.mxu0 %v3429
      %v4671 = vpop.f32.mrf.mxu0
      %v4672 = vadd.f32 0.0, %v4671
      %v4673 = vpop.f32.mrf.mxu0
      %v4674 = vpop.f32.mrf.mxu0
      %v4675 = vadd.f32 0.0, %v4674
      %v4676 = vpop.f32.mrf.mxu0
      %4677 = vmatprep.mubr.bf16.mxu0 0
      %4678 = vmatmul.mubr.bf16.gmra.mxu0 %v3432
      %v4679 = vpop.f32.mrf.mxu0
      %v4680 = vadd.f32 0.0, %v4679
      %v4681 = vpop.f32.mrf.mxu0
      %v4682 = vpop.f32.mrf.mxu0
      %v4683 = vadd.f32 0.0, %v4682
      %v4684 = vpop.f32.mrf.mxu0
      %4685 = vmatprep.mubr.bf16.mxu0 0
      %4686 = vmatmul.mubr.bf16.gmra.mxu0 %v3435
      %v4687 = vpop.f32.mrf.mxu0
      %v4688 = vadd.f32 0.0, %v4687
      %v4689 = vpop.f32.mrf.mxu0
      %v4690 = vpop.f32.mrf.mxu0
      %v4691 = vadd.f32 0.0, %v4690
      %v4692 = vpop.f32.mrf.mxu0
      %4693 = vmatprep.mubr.bf16.mxu0 0
      %4694 = vmatmul.mubr.bf16.gmra.mxu0 %v3438
      %v4695 = vpop.f32.mrf.mxu0
      %v4696 = vadd.f32 0.0, %v4695
      %v4697 = vpop.f32.mrf.mxu0
      %v4698 = vpop.f32.mrf.mxu0
      %v4699 = vadd.f32 0.0, %v4698
      %v4700 = vpop.f32.mrf.mxu0
      %4701 = vmatprep.mubr.bf16.mxu0 0
      %4702 = vmatmul.mubr.bf16.gmra.mxu0 %v3441
      %v4703 = vpop.f32.mrf.mxu0
      %v4704 = vadd.f32 0.0, %v4703
      %v4705 = vpop.f32.mrf.mxu0
      %v4706 = vpop.f32.mrf.mxu0
      %v4707 = vadd.f32 0.0, %v4706
      %v4708 = vpop.f32.mrf.mxu0
      %4709 = vmatprep.mubr.bf16.mxu0 0
      %4710 = vmatmul.mubr.bf16.gmra.mxu0 %v3444
      %v4711 = vpop.f32.mrf.mxu0
      %v4712 = vadd.f32 0.0, %v4711
      %v4713 = vpop.f32.mrf.mxu0
      %v4714 = vpop.f32.mrf.mxu0
      %v4715 = vadd.f32 0.0, %v4714
      %v4716 = vpop.f32.mrf.mxu0
      %4717 = vmatprep.mubr.bf16.mxu0 0
      %4718 = vmatmul.mubr.bf16.gmra.mxu0 %v3447
      %v4719 = vpop.f32.mrf.mxu0
      %v4720 = vadd.f32 0.0, %v4719
      %v4721 = vpop.f32.mrf.mxu0
      %v4722 = vpop.f32.mrf.mxu0
      %v4723 = vadd.f32 0.0, %v4722
      %v4724 = vpop.f32.mrf.mxu0
      %4725 = vmatprep.mubr.bf16.mxu0 0
      %4726 = vmatmul.mubr.bf16.gmra.mxu0 %v3860
      %v4727 = vpop.f32.mrf.mxu0
      %v4728 = vadd.f32 0.0, %v4727
      %v4729 = vpop.f32.mrf.mxu0
      %v4730 = vpop.f32.mrf.mxu0
      %v4731 = vadd.f32 0.0, %v4730
      %v4732 = vpop.f32.mrf.mxu0
      %4733 = vmatprep.mubr.bf16.mxu0 0
      %4734 = vmatmul.mubr.bf16.gmra.mxu0 %v4105
      %v4735 = vpop.f32.mrf.mxu0
      %v4736 = vadd.f32 0.0, %v4735
      %v4737 = vpop.f32.mrf.mxu0
      %v4738 = vpop.f32.mrf.mxu0
      %v4739 = vadd.f32 0.0, %v4738
      %v4740 = vpop.f32.mrf.mxu0
      %4741 = vmatprep.mubr.bf16.mxu0 0
      %4742 = vmatmul.mubr.bf16.gmra.mxu0 %v4350
      %v4743 = vpop.f32.mrf.mxu0
      %v4744 = vadd.f32 0.0, %v4743
      %v4745 = vpop.f32.mrf.mxu0
      %v4746 = vpop.f32.mrf.mxu0
      %v4747 = vadd.f32 0.0, %v4746
      %v4748 = vpop.f32.mrf.mxu0
      %4749 = vmatprep.mubr.bf16.mxu0 0
      %4750 = vmatmul.mubr.bf16.gmra.mxu0 %v4595
      %v4751 = vpop.f32.mrf.mxu0
      %v4752 = vadd.f32 0.0, %v4751
      %v4753 = vpop.f32.mrf.mxu0
      %v4754 = vpop.f32.mrf.mxu0
      %v4755 = vadd.f32 0.0, %v4754
      %v4756 = vpop.f32.mrf.mxu0
      %4757 = vdwg.mxu0
      %v4758 = vadd.f32 %v4513, %v4632
      %v4759 = vadd.f32 %v4514, %v4635
      %v4760 = vadd.f32 %v4515, %v4640
      %v4761 = vadd.f32 %v4516, %v4643
      %v4762 = vadd.f32 %v4517, %v4648
      %v4763 = vadd.f32 %v4518, %v4651
      %v4764 = vadd.f32 %v4519, %v4656
      %v4765 = vadd.f32 %v4520, %v4659
      %v4766 = vadd.f32 %v4521, %v4664
      %v4767 = vadd.f32 %v4522, %v4667
      %v4768 = vadd.f32 %v4523, %v4672
      %v4769 = vadd.f32 %v4524, %v4675
      %v4770 = vadd.f32 %v4525, %v4680
      %v4771 = vadd.f32 %v4526, %v4683
      %v4772 = vadd.f32 %v4527, %v4688
      %v4773 = vadd.f32 %v4528, %v4691
      %v4774 = vadd.f32 %v4529, %v4696
      %v4775 = vadd.f32 %v4530, %v4699
      %v4776 = vadd.f32 %v4531, %v4704
      %v4777 = vadd.f32 %v4532, %v4707
      %v4778 = vadd.f32 %v4533, %v4712
      %v4779 = vadd.f32 %v4534, %v4715
      %v4780 = vadd.f32 %v4535, %v4720
      %v4781 = vadd.f32 %v4536, %v4723
      %v4782 = vadd.f32 %v4537, %v4728
      %v4783 = vadd.f32 %v4538, %v4731
      %v4784 = vadd.f32 %v4539, %v4736
      %v4785 = vadd.f32 %v4540, %v4739
      %v4786 = vadd.f32 %v4541, %v4744
      %v4787 = vadd.f32 %v4542, %v4747
      %v4788 = vadd.f32 %v4543, %v4752
      %v4789 = vadd.f32 %v4544, %v4755
      %s4790 = scalar_lea.vmem %s1, 624
      %v4791 = vld [vmem:[%s4790] sm:$0xf]
      %v4792 = vld [vmem:[%s4790 + $0x4] sm:$0xf]
      %v4793 = vld [vmem:[%s4790 + $0x8] sm:$0xf]
      %v4794 = vld [vmem:[%s4790 + $0xc] sm:$0xf]
      %v4795 = vld [vmem:[%s4790 + $0x10] sm:$0xf]
      %v4796 = vld [vmem:[%s4790 + $0x14] sm:$0xf]
      %v4797 = vld [vmem:[%s4790 + $0x18] sm:$0xf]
      %v4798 = vld [vmem:[%s4790 + $0x1c] sm:$0xf]
      %v4799 = vld [vmem:[%s4790 + $0x20] sm:$0xf]
      %v4800 = vld [vmem:[%s4790 + $0x24] sm:$0xf]
      %v4801 = vld [vmem:[%s4790 + $0x28] sm:$0xf]
      %v4802 = vld [vmem:[%s4790 + $0x2c] sm:$0xf]
      %v4815 = vunpack.c.l.b16 %v4791
      %v4816 = vunpack.c.l.b16 %v4792
      %v4817 = vunpack.c.l.b16 %v4793
      %v4818 = vunpack.c.l.b16 %v4794
      %v4819 = vunpack.c.l.b16 %v4795
      %v4820 = vunpack.c.l.b16 %v4796
      %v4821 = vunpack.c.l.b16 %v4797
      %v4822 = vunpack.c.l.b16 %v4798
      %v4823 = vunpack.c.l.b16 %v4799
      %v4824 = vunpack.c.l.b16 %v4800
      %v4825 = vunpack.c.l.b16 %v4801
      %v4826 = vunpack.c.l.b16 %v4802
      %v4827 = vpack.c.b16 %v4816, %v4815
      %v4828 = vpack.c.b16 %v4818, %v4817
      %v4829 = vpack.c.b16 %v4820, %v4819
      %v4830 = vpack.c.b16 %v4822, %v4821
      %v4831 = vpack.c.b16 %v4824, %v4823
      %v4832 = vpack.c.b16 %v4826, %v4825
      %v4840 = vsel %vm1006, %v3338, 0
      %4842 = vmatprep.subr.bf16.mxu0 0
      %4843 = vmatpush1.bf16.msra.mxu0 0
      %4844 = vmatprep.subr.bf16.mxu0 0
      %4845 = vmatpush1.bf16.msra.mxu0 0
      %4846 = vmatprep.subr.bf16.mxu0 0
      %4847 = vmatpush1.bf16.msra.mxu0 %v4832
      %4848 = vmatprep.subr.bf16.mxu0 0
      %4849 = vmatpush1.bf16.msra.mxu0 %v4831
      %4850 = vmatprep.subr.bf16.mxu0 0
      %4851 = vmatpush1.bf16.msra.mxu0 %v4830
      %4852 = vmatprep.subr.bf16.mxu0 0
      %4853 = vmatpush1.bf16.msra.mxu0 %v4829
      %4854 = vmatprep.subr.bf16.mxu0 0
      %4855 = vmatpush1.bf16.msra.mxu0 %v4828
      %4856 = vmatprep.subr.bf16.mxu0 0
      %4857 = vmatpush1.bf16.msra.mxu0 %v4827
      %4858 = vmatprep.subr.bf16.mxu0 0
      %4859 = vmatpush2.bf16.msra.mxu0 0
      %4860 = vmatprep.subr.bf16.mxu0 0
      %4861 = vmatpush2.bf16.msra.mxu0 0
      %4862 = vmatprep.subr.bf16.mxu0 0
      %4863 = vmatpush2.bf16.msra.mxu0 0
      %4864 = vmatprep.subr.bf16.mxu0 0
      %4865 = vmatpush2.bf16.msra.mxu0 0
      %4866 = vmatprep.subr.bf16.mxu0 0
      %4867 = vmatpush2.bf16.msra.mxu0 0
      %4868 = vmatprep.subr.bf16.mxu0 0
      %4869 = vmatpush2.bf16.msra.mxu0 0
      %4870 = vmatprep.subr.bf16.mxu0 0
      %4871 = vmatpush2.bf16.msra.mxu0 0
      %4872 = vmatprep.subr.bf16.mxu0 0
      %4873 = vmatpush2.bf16.msra.mxu0 0
      %4874 = vmatprep.mubr.bf16.mxu0 0
      %4875 = vmatmul.mubr.bf16.gmra.mxu0 %v3417
      %v4876 = vpop.f32.mrf.mxu0
      %v4877 = vadd.f32 0.0, %v4876
      %v4878 = vpop.f32.mrf.mxu0
      %v4879 = vpop.f32.mrf.mxu0
      %v4880 = vadd.f32 0.0, %v4879
      %v4881 = vpop.f32.mrf.mxu0
      %4882 = vmatprep.mubr.bf16.mxu0 0
      %4883 = vmatmul.mubr.bf16.gmra.mxu0 %v3420
      %v4884 = vpop.f32.mrf.mxu0
      %v4885 = vadd.f32 0.0, %v4884
      %v4886 = vpop.f32.mrf.mxu0
      %v4887 = vpop.f32.mrf.mxu0
      %v4888 = vadd.f32 0.0, %v4887
      %v4889 = vpop.f32.mrf.mxu0
      %4890 = vmatprep.mubr.bf16.mxu0 0
      %4891 = vmatmul.mubr.bf16.gmra.mxu0 %v3423
      %v4892 = vpop.f32.mrf.mxu0
      %v4893 = vadd.f32 0.0, %v4892
      %v4894 = vpop.f32.mrf.mxu0
      %v4895 = vpop.f32.mrf.mxu0
      %v4896 = vadd.f32 0.0, %v4895
      %v4897 = vpop.f32.mrf.mxu0
      %4898 = vmatprep.mubr.bf16.mxu0 0
      %4899 = vmatmul.mubr.bf16.gmra.mxu0 %v3426
      %v4900 = vpop.f32.mrf.mxu0
      %v4901 = vadd.f32 0.0, %v4900
      %v4902 = vpop.f32.mrf.mxu0
      %v4903 = vpop.f32.mrf.mxu0
      %v4904 = vadd.f32 0.0, %v4903
      %v4905 = vpop.f32.mrf.mxu0
      %4906 = vmatprep.mubr.bf16.mxu0 0
      %4907 = vmatmul.mubr.bf16.gmra.mxu0 %v3429
      %v4908 = vpop.f32.mrf.mxu0
      %v4909 = vadd.f32 0.0, %v4908
      %v4910 = vpop.f32.mrf.mxu0
      %v4911 = vpop.f32.mrf.mxu0
      %v4912 = vadd.f32 0.0, %v4911
      %v4913 = vpop.f32.mrf.mxu0
      %4914 = vmatprep.mubr.bf16.mxu0 0
      %4915 = vmatmul.mubr.bf16.gmra.mxu0 %v3432
      %v4916 = vpop.f32.mrf.mxu0
      %v4917 = vadd.f32 0.0, %v4916
      %v4918 = vpop.f32.mrf.mxu0
      %v4919 = vpop.f32.mrf.mxu0
      %v4920 = vadd.f32 0.0, %v4919
      %v4921 = vpop.f32.mrf.mxu0
      %4922 = vmatprep.mubr.bf16.mxu0 0
      %4923 = vmatmul.mubr.bf16.gmra.mxu0 %v3435
      %v4924 = vpop.f32.mrf.mxu0
      %v4925 = vadd.f32 0.0, %v4924
      %v4926 = vpop.f32.mrf.mxu0
      %v4927 = vpop.f32.mrf.mxu0
      %v4928 = vadd.f32 0.0, %v4927
      %v4929 = vpop.f32.mrf.mxu0
      %4930 = vmatprep.mubr.bf16.mxu0 0
      %4931 = vmatmul.mubr.bf16.gmra.mxu0 %v3438
      %v4932 = vpop.f32.mrf.mxu0
      %v4933 = vadd.f32 0.0, %v4932
      %v4934 = vpop.f32.mrf.mxu0
      %v4935 = vpop.f32.mrf.mxu0
      %v4936 = vadd.f32 0.0, %v4935
      %v4937 = vpop.f32.mrf.mxu0
      %4938 = vmatprep.mubr.bf16.mxu0 0
      %4939 = vmatmul.mubr.bf16.gmra.mxu0 %v3441
      %v4940 = vpop.f32.mrf.mxu0
      %v4941 = vadd.f32 0.0, %v4940
      %v4942 = vpop.f32.mrf.mxu0
      %v4943 = vpop.f32.mrf.mxu0
      %v4944 = vadd.f32 0.0, %v4943
      %v4945 = vpop.f32.mrf.mxu0
      %4946 = vmatprep.mubr.bf16.mxu0 0
      %4947 = vmatmul.mubr.bf16.gmra.mxu0 %v3444
      %v4948 = vpop.f32.mrf.mxu0
      %v4949 = vadd.f32 0.0, %v4948
      %v4950 = vpop.f32.mrf.mxu0
      %v4951 = vpop.f32.mrf.mxu0
      %v4952 = vadd.f32 0.0, %v4951
      %v4953 = vpop.f32.mrf.mxu0
      %4954 = vmatprep.mubr.bf16.mxu0 0
      %4955 = vmatmul.mubr.bf16.gmra.mxu0 %v3447
      %v4956 = vpop.f32.mrf.mxu0
      %v4957 = vadd.f32 0.0, %v4956
      %v4958 = vpop.f32.mrf.mxu0
      %v4959 = vpop.f32.mrf.mxu0
      %v4960 = vadd.f32 0.0, %v4959
      %v4961 = vpop.f32.mrf.mxu0
      %4962 = vmatprep.mubr.bf16.mxu0 0
      %4963 = vmatmul.mubr.bf16.gmra.mxu0 %v3860
      %v4964 = vpop.f32.mrf.mxu0
      %v4965 = vadd.f32 0.0, %v4964
      %v4966 = vpop.f32.mrf.mxu0
      %v4967 = vpop.f32.mrf.mxu0
      %v4968 = vadd.f32 0.0, %v4967
      %v4969 = vpop.f32.mrf.mxu0
      %4970 = vmatprep.mubr.bf16.mxu0 0
      %4971 = vmatmul.mubr.bf16.gmra.mxu0 %v4105
      %v4972 = vpop.f32.mrf.mxu0
      %v4973 = vadd.f32 0.0, %v4972
      %v4974 = vpop.f32.mrf.mxu0
      %v4975 = vpop.f32.mrf.mxu0
      %v4976 = vadd.f32 0.0, %v4975
      %v4977 = vpop.f32.mrf.mxu0
      %4978 = vmatprep.mubr.bf16.mxu0 0
      %4979 = vmatmul.mubr.bf16.gmra.mxu0 %v4350
      %v4980 = vpop.f32.mrf.mxu0
      %v4981 = vadd.f32 0.0, %v4980
      %v4982 = vpop.f32.mrf.mxu0
      %v4983 = vpop.f32.mrf.mxu0
      %v4984 = vadd.f32 0.0, %v4983
      %v4985 = vpop.f32.mrf.mxu0
      %4986 = vmatprep.mubr.bf16.mxu0 0
      %4987 = vmatmul.mubr.bf16.gmra.mxu0 %v4595
      %v4988 = vpop.f32.mrf.mxu0
      %v4989 = vadd.f32 0.0, %v4988
      %v4990 = vpop.f32.mrf.mxu0
      %v4991 = vpop.f32.mrf.mxu0
      %v4992 = vadd.f32 0.0, %v4991
      %v4993 = vpop.f32.mrf.mxu0
      %4994 = vmatprep.mubr.bf16.mxu0 0
      %4995 = vmatmul.mubr.bf16.gmra.mxu0 %v4840
      %v4996 = vpop.f32.mrf.mxu0
      %v4997 = vadd.f32 0.0, %v4996
      %v4998 = vpop.f32.mrf.mxu0
      %v4999 = vpop.f32.mrf.mxu0
      %v5000 = vadd.f32 0.0, %v4999
      %v5001 = vpop.f32.mrf.mxu0
      %5002 = vdwg.mxu0
      %v5003 = vadd.f32 %v4758, %v4877
      %v5004 = vadd.f32 %v4759, %v4880
      %v5005 = vadd.f32 %v4760, %v4885
      %v5006 = vadd.f32 %v4761, %v4888
      %v5007 = vadd.f32 %v4762, %v4893
      %v5008 = vadd.f32 %v4763, %v4896
      %v5009 = vadd.f32 %v4764, %v4901
      %v5010 = vadd.f32 %v4765, %v4904
      %v5011 = vadd.f32 %v4766, %v4909
      %v5012 = vadd.f32 %v4767, %v4912
      %v5013 = vadd.f32 %v4768, %v4917
      %v5014 = vadd.f32 %v4769, %v4920
      %v5015 = vadd.f32 %v4770, %v4925
      %v5016 = vadd.f32 %v4771, %v4928
      %v5017 = vadd.f32 %v4772, %v4933
      %v5018 = vadd.f32 %v4773, %v4936
      %v5019 = vadd.f32 %v4774, %v4941
      %v5020 = vadd.f32 %v4775, %v4944
      %v5021 = vadd.f32 %v4776, %v4949
      %v5022 = vadd.f32 %v4777, %v4952
      %v5023 = vadd.f32 %v4778, %v4957
      %v5024 = vadd.f32 %v4779, %v4960
      %v5025 = vadd.f32 %v4780, %v4965
      %v5026 = vadd.f32 %v4781, %v4968
      %v5027 = vadd.f32 %v4782, %v4973
      %v5028 = vadd.f32 %v4783, %v4976
      %v5029 = vadd.f32 %v4784, %v4981
      %v5030 = vadd.f32 %v4785, %v4984
      %v5031 = vadd.f32 %v4786, %v4989
      %v5032 = vadd.f32 %v4787, %v4992
      %v5033 = vadd.f32 %v4788, %v4997
      %v5034 = vadd.f32 %v4789, %v5000
      %s5035 = scalar_lea.vmem %s2, 1
      %v5036 = vld [vmem:[%s5035] sm:$0x1]
      %v5038 = vlaneseq
      %v5039 = vshrl.u32 %v5038, 7
      %v5040 = vsub.s32 0, %v5039
      %v5041 = vrot.slane %v5036, %v5040
      %v5043 = vadd.f32 %v5003, %v5041
      %v5044 = vadd.f32 %v5004, %v5041
      %v5045 = vadd.f32 %v5005, %v5041
      %v5046 = vadd.f32 %v5006, %v5041
      %v5047 = vadd.f32 %v5007, %v5041
      %v5048 = vadd.f32 %v5008, %v5041
      %v5049 = vadd.f32 %v5009, %v5041
      %v5050 = vadd.f32 %v5010, %v5041
      %v5051 = vadd.f32 %v5011, %v5041
      %v5052 = vadd.f32 %v5012, %v5041
      %v5053 = vadd.f32 %v5013, %v5041
      %v5054 = vadd.f32 %v5014, %v5041
      %v5055 = vadd.f32 %v5015, %v5041
      %v5056 = vadd.f32 %v5016, %v5041
      %v5057 = vadd.f32 %v5017, %v5041
      %v5058 = vadd.f32 %v5018, %v5041
      %v5059 = vadd.f32 %v5019, %v5041
      %v5060 = vadd.f32 %v5020, %v5041
      %v5061 = vadd.f32 %v5021, %v5041
      %v5062 = vadd.f32 %v5022, %v5041
      %v5063 = vadd.f32 %v5023, %v5041
      %v5064 = vadd.f32 %v5024, %v5041
      %v5065 = vadd.f32 %v5025, %v5041
      %v5066 = vadd.f32 %v5026, %v5041
      %v5067 = vadd.f32 %v5027, %v5041
      %v5068 = vadd.f32 %v5028, %v5041
      %v5069 = vadd.f32 %v5029, %v5041
      %v5070 = vadd.f32 %v5030, %v5041
      %v5071 = vadd.f32 %v5031, %v5041
      %v5072 = vadd.f32 %v5032, %v5041
      %v5073 = vadd.f32 %v5033, %v5041
      %v5074 = vadd.f32 %v5034, %v5041
      %v5075 = vmax.f32 %v5043, 0.0
      %v5076 = vmax.f32 %v5044, 0.0
      %v5077 = vmax.f32 %v5045, 0.0
      %v5078 = vmax.f32 %v5046, 0.0
      %v5079 = vmax.f32 %v5047, 0.0
      %v5080 = vmax.f32 %v5048, 0.0
      %v5081 = vmax.f32 %v5049, 0.0
      %v5082 = vmax.f32 %v5050, 0.0
      %v5083 = vmax.f32 %v5051, 0.0
      %v5084 = vmax.f32 %v5052, 0.0
      %v5085 = vmax.f32 %v5053, 0.0
      %v5086 = vmax.f32 %v5054, 0.0
      %v5087 = vmax.f32 %v5055, 0.0
      %v5088 = vmax.f32 %v5056, 0.0
      %v5089 = vmax.f32 %v5057, 0.0
      %v5090 = vmax.f32 %v5058, 0.0
      %v5091 = vmax.f32 %v5059, 0.0
      %v5092 = vmax.f32 %v5060, 0.0
      %v5093 = vmax.f32 %v5061, 0.0
      %v5094 = vmax.f32 %v5062, 0.0
      %v5095 = vmax.f32 %v5063, 0.0
      %v5096 = vmax.f32 %v5064, 0.0
      %v5097 = vmax.f32 %v5065, 0.0
      %v5098 = vmax.f32 %v5066, 0.0
      %v5099 = vmax.f32 %v5067, 0.0
      %v5100 = vmax.f32 %v5068, 0.0
      %v5101 = vmax.f32 %v5069, 0.0
      %v5102 = vmax.f32 %v5070, 0.0
      %v5103 = vmax.f32 %v5071, 0.0
      %v5104 = vmax.f32 %v5072, 0.0
      %v5105 = vmax.f32 %v5073, 0.0
      %v5106 = vmax.f32 %v5074, 0.0
      %s5107 = scalar_lea.vmem [#allocation3], 96
      %5108 = vst.msk [vmem:[%s5107 + $0x8] sm:$0xff] %vm172, %v5075
      %5109 = vst.msk [vmem:[%s5107 + $0x10] sm:$0xff] %vm172, %v5076
      %5110 = vst.msk [vmem:[%s5107 + $0x28] sm:$0xff] %vm172, %v5077
      %5111 = vst.msk [vmem:[%s5107 + $0x30] sm:$0xff] %vm172, %v5078
      %5112 = vst.msk [vmem:[%s5107 + $0x48] sm:$0xff] %vm172, %v5079
      %5113 = vst.msk [vmem:[%s5107 + $0x50] sm:$0xff] %vm172, %v5080
      %5114 = vst.msk [vmem:[%s5107 + $0x68] sm:$0xff] %vm172, %v5081
      %5115 = vst.msk [vmem:[%s5107 + $0x70] sm:$0xff] %vm172, %v5082
      %5116 = vst.msk [vmem:[%s5107 + $0x88] sm:$0xff] %vm172, %v5083
      %5117 = vst.msk [vmem:[%s5107 + $0x90] sm:$0xff] %vm172, %v5084
      %5118 = vst.msk [vmem:[%s5107 + $0xa8] sm:$0xff] %vm172, %v5085
      %5119 = vst.msk [vmem:[%s5107 + $0xb0] sm:$0xff] %vm172, %v5086
      %5120 = vst.msk [vmem:[%s5107 + $0xc8] sm:$0xff] %vm172, %v5087
      %5121 = vst.msk [vmem:[%s5107 + $0xd0] sm:$0xff] %vm172, %v5088
      %5122 = vst.msk [vmem:[%s5107 + $0xe8] sm:$0xff] %vm172, %v5089
      %5123 = vst.msk [vmem:[%s5107 + $0xf0] sm:$0xff] %vm172, %v5090
      %5124 = vst.msk [vmem:[%s5107 + $0x108] sm:$0xff] %vm172, %v5091
      %5125 = vst.msk [vmem:[%s5107 + $0x110] sm:$0xff] %vm172, %v5092
      %5126 = vst.msk [vmem:[%s5107 + $0x128] sm:$0xff] %vm172, %v5093
      %5127 = vst.msk [vmem:[%s5107 + $0x130] sm:$0xff] %vm172, %v5094
      %5128 = vst.msk [vmem:[%s5107 + $0x148] sm:$0xff] %vm172, %v5095
      %5129 = vst.msk [vmem:[%s5107 + $0x150] sm:$0xff] %vm172, %v5096
      %5130 = vst.msk [vmem:[%s5107 + $0x168] sm:$0xff] %vm172, %v5097
      %5131 = vst.msk [vmem:[%s5107 + $0x170] sm:$0xff] %vm172, %v5098
      %5132 = vst.msk [vmem:[%s5107 + $0x188] sm:$0xff] %vm172, %v5099
      %5133 = vst.msk [vmem:[%s5107 + $0x190] sm:$0xff] %vm172, %v5100
      %5134 = vst.msk [vmem:[%s5107 + $0x1a8] sm:$0xff] %vm172, %v5101
      %5135 = vst.msk [vmem:[%s5107 + $0x1b0] sm:$0xff] %vm172, %v5102
      %5136 = vst.msk [vmem:[%s5107 + $0x1c8] sm:$0xff] %vm172, %v5103
      %5137 = vst.msk [vmem:[%s5107 + $0x1d0] sm:$0xff] %vm172, %v5104
      %5138 = vst.msk [vmem:[%s5107 + $0x1e8] sm:$0xff] %vm172, %v5105
      %5139 = vst.msk [vmem:[%s5107 + $0x1f0] sm:$0xff] %vm172, %v5106
      %v5140 = vld [vmem:[#allocation3 + $0x7] sm:$0xff]
      %v5141 = vld [vmem:[#allocation3 + $0xf] sm:$0xff]
      %v5142 = vld [vmem:[#allocation3 + $0x27] sm:$0xff]
      %v5143 = vld [vmem:[#allocation3 + $0x2f] sm:$0xff]
      %v5144 = vld [vmem:[#allocation3 + $0x47] sm:$0xff]
      %v5145 = vld [vmem:[#allocation3 + $0x4f] sm:$0xff]
      %v5146 = vld [vmem:[#allocation3 + $0x67] sm:$0xff]
      %v5147 = vld [vmem:[#allocation3 + $0x6f] sm:$0xff]
      %v5148 = vld [vmem:[#allocation3 + $0x87] sm:$0xff]
      %v5149 = vld [vmem:[#allocation3 + $0x8f] sm:$0xff]
      %v5150 = vld [vmem:[#allocation3 + $0xa7] sm:$0xff]
      %v5151 = vld [vmem:[#allocation3 + $0xaf] sm:$0xff]
      %v5152 = vld [vmem:[#allocation3 + $0xc7] sm:$0xff]
      %v5153 = vld [vmem:[#allocation3 + $0xcf] sm:$0xff]
      %v5154 = vld [vmem:[#allocation3 + $0xe7] sm:$0xff]
      %v5155 = vld [vmem:[#allocation3 + $0xef] sm:$0xff]
      %v5156 = vld [vmem:[#allocation3 + $0x107] sm:$0xff]
      %v5157 = vld [vmem:[#allocation3 + $0x10f] sm:$0xff]
      %v5158 = vld [vmem:[#allocation3 + $0x127] sm:$0xff]
      %v5159 = vld [vmem:[#allocation3 + $0x12f] sm:$0xff]
      %v5160 = vld [vmem:[#allocation3 + $0x147] sm:$0xff]
      %v5161 = vld [vmem:[#allocation3 + $0x14f] sm:$0xff]
      %v5162 = vld [vmem:[#allocation3 + $0x167] sm:$0xff]
      %v5163 = vld [vmem:[#allocation3 + $0x16f] sm:$0xff]
      %v5164 = vld [vmem:[#allocation3 + $0x187] sm:$0xff]
      %v5165 = vld [vmem:[#allocation3 + $0x18f] sm:$0xff]
      %v5166 = vld [vmem:[#allocation3 + $0x1a7] sm:$0xff]
      %v5167 = vld [vmem:[#allocation3 + $0x1af] sm:$0xff]
      %v5168 = vld [vmem:[#allocation3 + $0x1c7] sm:$0xff]
      %v5169 = vld [vmem:[#allocation3 + $0x1cf] sm:$0xff]
      %v5170 = vld [vmem:[#allocation3 + $0x1e7] sm:$0xff]
      %v5171 = vld [vmem:[#allocation3 + $0x1ef] sm:$0xff]
      %v5172 = vld [vmem:[#allocation3 + $0x207] sm:$0xff]
      %v5173 = vld [vmem:[#allocation3 + $0x20f] sm:$0xff]
      %v5174 = vld [vmem:[#allocation3 + $0x227] sm:$0xff]
      %v5175 = vld [vmem:[#allocation3 + $0x22f] sm:$0xff]
      %v5176 = vld [vmem:[#allocation3 + $0x247] sm:$0xff]
      %v5177 = vld [vmem:[#allocation3 + $0x24f] sm:$0xff]
      %v5178 = vld [vmem:[#allocation3 + $0x267] sm:$0xff]
      %v5179 = vld [vmem:[#allocation3 + $0x26f] sm:$0xff]
      %v5180 = vld [vmem:[#allocation3 + $0x287] sm:$0xff]
      %v5181 = vld [vmem:[#allocation3 + $0x28f] sm:$0xff]
      %v5182 = vld [vmem:[#allocation3 + $0x2a7] sm:$0xff]
      %v5183 = vld [vmem:[#allocation3 + $0x2af] sm:$0xff]
      %v5184 = vld [vmem:[#allocation3 + $0x8] sm:$0xff]
      %v5185 = vld [vmem:[#allocation3 + $0x10] sm:$0xff]
      %v5186 = vld [vmem:[#allocation3 + $0x28] sm:$0xff]
      %v5187 = vld [vmem:[#allocation3 + $0x30] sm:$0xff]
      %v5188 = vld [vmem:[#allocation3 + $0x48] sm:$0xff]
      %v5189 = vld [vmem:[#allocation3 + $0x50] sm:$0xff]
      %v5190 = vld [vmem:[#allocation3 + $0x68] sm:$0xff]
      %v5191 = vld [vmem:[#allocation3 + $0x70] sm:$0xff]
      %v5192 = vld [vmem:[#allocation3 + $0x88] sm:$0xff]
      %v5193 = vld [vmem:[#allocation3 + $0x90] sm:$0xff]
      %v5194 = vld [vmem:[#allocation3 + $0xa8] sm:$0xff]
      %v5195 = vld [vmem:[#allocation3 + $0xb0] sm:$0xff]
      %v5196 = vld [vmem:[#allocation3 + $0xc8] sm:$0xff]
      %v5197 = vld [vmem:[#allocation3 + $0xd0] sm:$0xff]
      %v5198 = vld [vmem:[#allocation3 + $0xe8] sm:$0xff]
      %v5199 = vld [vmem:[#allocation3 + $0xf0] sm:$0xff]
      %v5200 = vld [vmem:[#allocation3 + $0x108] sm:$0xff]
      %v5201 = vld [vmem:[#allocation3 + $0x110] sm:$0xff]
      %v5202 = vld [vmem:[#allocation3 + $0x128] sm:$0xff]
      %v5203 = vld [vmem:[#allocation3 + $0x130] sm:$0xff]
      %v5204 = vld [vmem:[#allocation3 + $0x148] sm:$0xff]
      %v5205 = vld [vmem:[#allocation3 + $0x150] sm:$0xff]
      %v5206 = vld [vmem:[#allocation3 + $0x168] sm:$0xff]
      %v5207 = vld [vmem:[#allocation3 + $0x170] sm:$0xff]
      %v5208 = vld [vmem:[#allocation3 + $0x188] sm:$0xff]
      %v5209 = vld [vmem:[#allocation3 + $0x190] sm:$0xff]
      %v5210 = vld [vmem:[#allocation3 + $0x1a8] sm:$0xff]
      %v5211 = vld [vmem:[#allocation3 + $0x1b0] sm:$0xff]
      %v5212 = vld [vmem:[#allocation3 + $0x1c8] sm:$0xff]
      %v5213 = vld [vmem:[#allocation3 + $0x1d0] sm:$0xff]
      %v5214 = vld [vmem:[#allocation3 + $0x1e8] sm:$0xff]
      %v5215 = vld [vmem:[#allocation3 + $0x1f0] sm:$0xff]
      %v5216 = vld [vmem:[#allocation3 + $0x208] sm:$0xff]
      %v5217 = vld [vmem:[#allocation3 + $0x210] sm:$0xff]
      %v5218 = vld [vmem:[#allocation3 + $0x228] sm:$0xff]
      %v5219 = vld [vmem:[#allocation3 + $0x230] sm:$0xff]
      %v5220 = vld [vmem:[#allocation3 + $0x248] sm:$0xff]
      %v5221 = vld [vmem:[#allocation3 + $0x250] sm:$0xff]
      %v5222 = vld [vmem:[#allocation3 + $0x268] sm:$0xff]
      %v5223 = vld [vmem:[#allocation3 + $0x270] sm:$0xff]
      %v5224 = vld [vmem:[#allocation3 + $0x288] sm:$0xff]
      %v5225 = vld [vmem:[#allocation3 + $0x290] sm:$0xff]
      %v5226 = vld [vmem:[#allocation3 + $0x2a8] sm:$0xff]
      %v5227 = vld [vmem:[#allocation3 + $0x2b0] sm:$0xff]
      %v5228 = vld [vmem:[#allocation3 + $0x9] sm:$0xff]
      %v5229 = vld [vmem:[#allocation3 + $0x11] sm:$0xff]
      %v5230 = vld [vmem:[#allocation3 + $0x29] sm:$0xff]
      %v5231 = vld [vmem:[#allocation3 + $0x31] sm:$0xff]
      %v5232 = vld [vmem:[#allocation3 + $0x49] sm:$0xff]
      %v5233 = vld [vmem:[#allocation3 + $0x51] sm:$0xff]
      %v5234 = vld [vmem:[#allocation3 + $0x69] sm:$0xff]
      %v5235 = vld [vmem:[#allocation3 + $0x71] sm:$0xff]
      %v5236 = vld [vmem:[#allocation3 + $0x89] sm:$0xff]
      %v5237 = vld [vmem:[#allocation3 + $0x91] sm:$0xff]
      %v5238 = vld [vmem:[#allocation3 + $0xa9] sm:$0xff]
      %v5239 = vld [vmem:[#allocation3 + $0xb1] sm:$0xff]
      %v5240 = vld [vmem:[#allocation3 + $0xc9] sm:$0xff]
      %v5241 = vld [vmem:[#allocation3 + $0xd1] sm:$0xff]
      %v5242 = vld [vmem:[#allocation3 + $0xe9] sm:$0xff]
      %v5243 = vld [vmem:[#allocation3 + $0xf1] sm:$0xff]
      %v5244 = vld [vmem:[#allocation3 + $0x109] sm:$0xff]
      %v5245 = vld [vmem:[#allocation3 + $0x111] sm:$0xff]
      %v5246 = vld [vmem:[#allocation3 + $0x129] sm:$0xff]
      %v5247 = vld [vmem:[#allocation3 + $0x131] sm:$0xff]
      %v5248 = vld [vmem:[#allocation3 + $0x149] sm:$0xff]
      %v5249 = vld [vmem:[#allocation3 + $0x151] sm:$0xff]
      %v5250 = vld [vmem:[#allocation3 + $0x169] sm:$0xff]
      %v5251 = vld [vmem:[#allocation3 + $0x171] sm:$0xff]
      %v5252 = vld [vmem:[#allocation3 + $0x189] sm:$0xff]
      %v5253 = vld [vmem:[#allocation3 + $0x191] sm:$0xff]
      %v5254 = vld [vmem:[#allocation3 + $0x1a9] sm:$0xff]
      %v5255 = vld [vmem:[#allocation3 + $0x1b1] sm:$0xff]
      %v5256 = vld [vmem:[#allocation3 + $0x1c9] sm:$0xff]
      %v5257 = vld [vmem:[#allocation3 + $0x1d1] sm:$0xff]
      %v5258 = vld [vmem:[#allocation3 + $0x1e9] sm:$0xff]
      %v5259 = vld [vmem:[#allocation3 + $0x1f1] sm:$0xff]
      %v5260 = vld [vmem:[#allocation3 + $0x209] sm:$0xff]
      %v5261 = vld [vmem:[#allocation3 + $0x211] sm:$0xff]
      %v5262 = vld [vmem:[#allocation3 + $0x229] sm:$0xff]
      %v5263 = vld [vmem:[#allocation3 + $0x231] sm:$0xff]
      %v5264 = vld [vmem:[#allocation3 + $0x249] sm:$0xff]
      %v5265 = vld [vmem:[#allocation3 + $0x251] sm:$0xff]
      %v5266 = vld [vmem:[#allocation3 + $0x269] sm:$0xff]
      %v5267 = vld [vmem:[#allocation3 + $0x271] sm:$0xff]
      %v5268 = vld [vmem:[#allocation3 + $0x289] sm:$0xff]
      %v5269 = vld [vmem:[#allocation3 + $0x291] sm:$0xff]
      %v5270 = vld [vmem:[#allocation3 + $0x2a9] sm:$0xff]
      %v5271 = vld [vmem:[#allocation3 + $0x2b1] sm:$0xff]
      %5316 = vrot.lane.b32.xlu0 %v5184, 32
      %v5317 = vpop.permute.xlu0 %5316
      %5318 = vrot.lane.b32.xlu0 %v5185, 32
      %v5319 = vpop.permute.xlu0 %5318
      %5320 = vrot.lane.b32.xlu0 %v5186, 32
      %v5321 = vpop.permute.xlu0 %5320
      %5322 = vrot.lane.b32.xlu0 %v5187, 32
      %v5323 = vpop.permute.xlu0 %5322
      %5324 = vrot.lane.b32.xlu0 %v5188, 32
      %v5325 = vpop.permute.xlu0 %5324
      %5326 = vrot.lane.b32.xlu0 %v5189, 32
      %v5327 = vpop.permute.xlu0 %5326
      %5328 = vrot.lane.b32.xlu0 %v5190, 32
      %v5329 = vpop.permute.xlu0 %5328
      %5330 = vrot.lane.b32.xlu0 %v5191, 32
      %v5331 = vpop.permute.xlu0 %5330
      %5332 = vrot.lane.b32.xlu0 %v5192, 32
      %v5333 = vpop.permute.xlu0 %5332
      %5334 = vrot.lane.b32.xlu0 %v5193, 32
      %v5335 = vpop.permute.xlu0 %5334
      %5336 = vrot.lane.b32.xlu0 %v5194, 32
      %v5337 = vpop.permute.xlu0 %5336
      %5338 = vrot.lane.b32.xlu0 %v5195, 32
      %v5339 = vpop.permute.xlu0 %5338
      %5340 = vrot.lane.b32.xlu0 %v5196, 32
      %v5341 = vpop.permute.xlu0 %5340
      %5342 = vrot.lane.b32.xlu0 %v5197, 32
      %v5343 = vpop.permute.xlu0 %5342
      %5344 = vrot.lane.b32.xlu0 %v5198, 32
      %v5345 = vpop.permute.xlu0 %5344
      %5346 = vrot.lane.b32.xlu0 %v5199, 32
      %v5347 = vpop.permute.xlu0 %5346
      %5348 = vrot.lane.b32.xlu0 %v5200, 32
      %v5349 = vpop.permute.xlu0 %5348
      %5350 = vrot.lane.b32.xlu0 %v5201, 32
      %v5351 = vpop.permute.xlu0 %5350
      %5352 = vrot.lane.b32.xlu0 %v5202, 32
      %v5353 = vpop.permute.xlu0 %5352
      %5354 = vrot.lane.b32.xlu0 %v5203, 32
      %v5355 = vpop.permute.xlu0 %5354
      %5356 = vrot.lane.b32.xlu0 %v5204, 32
      %v5357 = vpop.permute.xlu0 %5356
      %5358 = vrot.lane.b32.xlu0 %v5205, 32
      %v5359 = vpop.permute.xlu0 %5358
      %5360 = vrot.lane.b32.xlu0 %v5206, 32
      %v5361 = vpop.permute.xlu0 %5360
      %5362 = vrot.lane.b32.xlu0 %v5207, 32
      %v5363 = vpop.permute.xlu0 %5362
      %5364 = vrot.lane.b32.xlu0 %v5208, 32
      %v5365 = vpop.permute.xlu0 %5364
      %5366 = vrot.lane.b32.xlu0 %v5209, 32
      %v5367 = vpop.permute.xlu0 %5366
      %5368 = vrot.lane.b32.xlu0 %v5210, 32
      %v5369 = vpop.permute.xlu0 %5368
      %5370 = vrot.lane.b32.xlu0 %v5211, 32
      %v5371 = vpop.permute.xlu0 %5370
      %5372 = vrot.lane.b32.xlu0 %v5212, 32
      %v5373 = vpop.permute.xlu0 %5372
      %5374 = vrot.lane.b32.xlu0 %v5213, 32
      %v5375 = vpop.permute.xlu0 %5374
      %5376 = vrot.lane.b32.xlu0 %v5214, 32
      %v5377 = vpop.permute.xlu0 %5376
      %5378 = vrot.lane.b32.xlu0 %v5215, 32
      %v5379 = vpop.permute.xlu0 %5378
      %5380 = vrot.lane.b32.xlu0 %v5216, 32
      %v5381 = vpop.permute.xlu0 %5380
      %5382 = vrot.lane.b32.xlu0 %v5217, 32
      %v5383 = vpop.permute.xlu0 %5382
      %5384 = vrot.lane.b32.xlu0 %v5218, 32
      %v5385 = vpop.permute.xlu0 %5384
      %5386 = vrot.lane.b32.xlu0 %v5219, 32
      %v5387 = vpop.permute.xlu0 %5386
      %5388 = vrot.lane.b32.xlu0 %v5220, 32
      %v5389 = vpop.permute.xlu0 %5388
      %5390 = vrot.lane.b32.xlu0 %v5221, 32
      %v5391 = vpop.permute.xlu0 %5390
      %5392 = vrot.lane.b32.xlu0 %v5222, 32
      %v5393 = vpop.permute.xlu0 %5392
      %5394 = vrot.lane.b32.xlu0 %v5223, 32
      %v5395 = vpop.permute.xlu0 %5394
      %5396 = vrot.lane.b32.xlu0 %v5224, 32
      %v5397 = vpop.permute.xlu0 %5396
      %5398 = vrot.lane.b32.xlu0 %v5225, 32
      %v5399 = vpop.permute.xlu0 %5398
      %5400 = vrot.lane.b32.xlu0 %v5226, 32
      %v5401 = vpop.permute.xlu0 %5400
      %5402 = vrot.lane.b32.xlu0 %v5227, 32
      %v5403 = vpop.permute.xlu0 %5402
      %5492 = vrot.lane.b32.xlu0 %v5228, 64
      %v5493 = vpop.permute.xlu0 %5492
      %5494 = vrot.lane.b32.xlu0 %v5229, 64
      %v5495 = vpop.permute.xlu0 %5494
      %5496 = vrot.lane.b32.xlu0 %v5230, 64
      %v5497 = vpop.permute.xlu0 %5496
      %5498 = vrot.lane.b32.xlu0 %v5231, 64
      %v5499 = vpop.permute.xlu0 %5498
      %5500 = vrot.lane.b32.xlu0 %v5232, 64
      %v5501 = vpop.permute.xlu0 %5500
      %5502 = vrot.lane.b32.xlu0 %v5233, 64
      %v5503 = vpop.permute.xlu0 %5502
      %5504 = vrot.lane.b32.xlu0 %v5234, 64
      %v5505 = vpop.permute.xlu0 %5504
      %5506 = vrot.lane.b32.xlu0 %v5235, 64
      %v5507 = vpop.permute.xlu0 %5506
      %5508 = vrot.lane.b32.xlu0 %v5236, 64
      %v5509 = vpop.permute.xlu0 %5508
      %5510 = vrot.lane.b32.xlu0 %v5237, 64
      %v5511 = vpop.permute.xlu0 %5510
      %5512 = vrot.lane.b32.xlu0 %v5238, 64
      %v5513 = vpop.permute.xlu0 %5512
      %5514 = vrot.lane.b32.xlu0 %v5239, 64
      %v5515 = vpop.permute.xlu0 %5514
      %5516 = vrot.lane.b32.xlu0 %v5240, 64
      %v5517 = vpop.permute.xlu0 %5516
      %5518 = vrot.lane.b32.xlu0 %v5241, 64
      %v5519 = vpop.permute.xlu0 %5518
      %5520 = vrot.lane.b32.xlu0 %v5242, 64
      %v5521 = vpop.permute.xlu0 %5520
      %5522 = vrot.lane.b32.xlu0 %v5243, 64
      %v5523 = vpop.permute.xlu0 %5522
      %5524 = vrot.lane.b32.xlu0 %v5244, 64
      %v5525 = vpop.permute.xlu0 %5524
      %5526 = vrot.lane.b32.xlu0 %v5245, 64
      %v5527 = vpop.permute.xlu0 %5526
      %5528 = vrot.lane.b32.xlu0 %v5246, 64
      %v5529 = vpop.permute.xlu0 %5528
      %5530 = vrot.lane.b32.xlu0 %v5247, 64
      %v5531 = vpop.permute.xlu0 %5530
      %5532 = vrot.lane.b32.xlu0 %v5248, 64
      %v5533 = vpop.permute.xlu0 %5532
      %5534 = vrot.lane.b32.xlu0 %v5249, 64
      %v5535 = vpop.permute.xlu0 %5534
      %5536 = vrot.lane.b32.xlu0 %v5250, 64
      %v5537 = vpop.permute.xlu0 %5536
      %5538 = vrot.lane.b32.xlu0 %v5251, 64
      %v5539 = vpop.permute.xlu0 %5538
      %5540 = vrot.lane.b32.xlu0 %v5252, 64
      %v5541 = vpop.permute.xlu0 %5540
      %5542 = vrot.lane.b32.xlu0 %v5253, 64
      %v5543 = vpop.permute.xlu0 %5542
      %5544 = vrot.lane.b32.xlu0 %v5254, 64
      %v5545 = vpop.permute.xlu0 %5544
      %5546 = vrot.lane.b32.xlu0 %v5255, 64
      %v5547 = vpop.permute.xlu0 %5546
      %5548 = vrot.lane.b32.xlu0 %v5256, 64
      %v5549 = vpop.permute.xlu0 %5548
      %5550 = vrot.lane.b32.xlu0 %v5257, 64
      %v5551 = vpop.permute.xlu0 %5550
      %5552 = vrot.lane.b32.xlu0 %v5258, 64
      %v5553 = vpop.permute.xlu0 %5552
      %5554 = vrot.lane.b32.xlu0 %v5259, 64
      %v5555 = vpop.permute.xlu0 %5554
      %5556 = vrot.lane.b32.xlu0 %v5260, 64
      %v5557 = vpop.permute.xlu0 %5556
      %5558 = vrot.lane.b32.xlu0 %v5261, 64
      %v5559 = vpop.permute.xlu0 %5558
      %5560 = vrot.lane.b32.xlu0 %v5262, 64
      %v5561 = vpop.permute.xlu0 %5560
      %5562 = vrot.lane.b32.xlu0 %v5263, 64
      %v5563 = vpop.permute.xlu0 %5562
      %5564 = vrot.lane.b32.xlu0 %v5264, 64
      %v5565 = vpop.permute.xlu0 %5564
      %5566 = vrot.lane.b32.xlu0 %v5265, 64
      %v5567 = vpop.permute.xlu0 %5566
      %5568 = vrot.lane.b32.xlu0 %v5266, 64
      %v5569 = vpop.permute.xlu0 %5568
      %5570 = vrot.lane.b32.xlu0 %v5267, 64
      %v5571 = vpop.permute.xlu0 %5570
      %5572 = vrot.lane.b32.xlu0 %v5268, 64
      %v5573 = vpop.permute.xlu0 %5572
      %5574 = vrot.lane.b32.xlu0 %v5269, 64
      %v5575 = vpop.permute.xlu0 %5574
      %5576 = vrot.lane.b32.xlu0 %v5270, 64
      %v5577 = vpop.permute.xlu0 %5576
      %5578 = vrot.lane.b32.xlu0 %v5271, 64
      %v5579 = vpop.permute.xlu0 %5578
      %v5624 = vsel %vm172, %v5140, %v5317
      %v5625 = vsel %vm172, %v5141, %v5319
      %v5626 = vsel %vm172, %v5142, %v5321
      %v5627 = vsel %vm172, %v5143, %v5323
      %v5628 = vsel %vm172, %v5144, %v5325
      %v5629 = vsel %vm172, %v5145, %v5327
      %v5630 = vsel %vm172, %v5146, %v5329
      %v5631 = vsel %vm172, %v5147, %v5331
      %v5632 = vsel %vm172, %v5148, %v5333
      %v5633 = vsel %vm172, %v5149, %v5335
      %v5634 = vsel %vm172, %v5150, %v5337
      %v5635 = vsel %vm172, %v5151, %v5339
      %v5636 = vsel %vm172, %v5152, %v5341
      %v5637 = vsel %vm172, %v5153, %v5343
      %v5638 = vsel %vm172, %v5154, %v5345
      %v5639 = vsel %vm172, %v5155, %v5347
      %v5640 = vsel %vm172, %v5156, %v5349
      %v5641 = vsel %vm172, %v5157, %v5351
      %v5642 = vsel %vm172, %v5158, %v5353
      %v5643 = vsel %vm172, %v5159, %v5355
      %v5644 = vsel %vm172, %v5160, %v5357
      %v5645 = vsel %vm172, %v5161, %v5359
      %v5646 = vsel %vm172, %v5162, %v5361
      %v5647 = vsel %vm172, %v5163, %v5363
      %v5648 = vsel %vm172, %v5164, %v5365
      %v5649 = vsel %vm172, %v5165, %v5367
      %v5650 = vsel %vm172, %v5166, %v5369
      %v5651 = vsel %vm172, %v5167, %v5371
      %v5652 = vsel %vm172, %v5168, %v5373
      %v5653 = vsel %vm172, %v5169, %v5375
      %v5654 = vsel %vm172, %v5170, %v5377
      %v5655 = vsel %vm172, %v5171, %v5379
      %v5656 = vsel %vm172, %v5172, %v5381
      %v5657 = vsel %vm172, %v5173, %v5383
      %v5658 = vsel %vm172, %v5174, %v5385
      %v5659 = vsel %vm172, %v5175, %v5387
      %v5660 = vsel %vm172, %v5176, %v5389
      %v5661 = vsel %vm172, %v5177, %v5391
      %v5662 = vsel %vm172, %v5178, %v5393
      %v5663 = vsel %vm172, %v5179, %v5395
      %v5664 = vsel %vm172, %v5180, %v5397
      %v5665 = vsel %vm172, %v5181, %v5399
      %v5666 = vsel %vm172, %v5182, %v5401
      %v5667 = vsel %vm172, %v5183, %v5403
      %v5668 = vsel %vm878, %v5624, %v5493
      %v5669 = vsel %vm878, %v5625, %v5495
      %v5670 = vsel %vm878, %v5626, %v5497
      %v5671 = vsel %vm878, %v5627, %v5499
      %v5672 = vsel %vm878, %v5628, %v5501
      %v5673 = vsel %vm878, %v5629, %v5503
      %v5674 = vsel %vm878, %v5630, %v5505
      %v5675 = vsel %vm878, %v5631, %v5507
      %v5676 = vsel %vm878, %v5632, %v5509
      %v5677 = vsel %vm878, %v5633, %v5511
      %v5678 = vsel %vm878, %v5634, %v5513
      %v5679 = vsel %vm878, %v5635, %v5515
      %v5680 = vsel %vm878, %v5636, %v5517
      %v5681 = vsel %vm878, %v5637, %v5519
      %v5682 = vsel %vm878, %v5638, %v5521
      %v5683 = vsel %vm878, %v5639, %v5523
      %v5684 = vsel %vm878, %v5640, %v5525
      %v5685 = vsel %vm878, %v5641, %v5527
      %v5686 = vsel %vm878, %v5642, %v5529
      %v5687 = vsel %vm878, %v5643, %v5531
      %v5688 = vsel %vm878, %v5644, %v5533
      %v5689 = vsel %vm878, %v5645, %v5535
      %v5690 = vsel %vm878, %v5646, %v5537
      %v5691 = vsel %vm878, %v5647, %v5539
      %v5692 = vsel %vm878, %v5648, %v5541
      %v5693 = vsel %vm878, %v5649, %v5543
      %v5694 = vsel %vm878, %v5650, %v5545
      %v5695 = vsel %vm878, %v5651, %v5547
      %v5696 = vsel %vm878, %v5652, %v5549
      %v5697 = vsel %vm878, %v5653, %v5551
      %v5698 = vsel %vm878, %v5654, %v5553
      %v5699 = vsel %vm878, %v5655, %v5555
      %v5700 = vsel %vm878, %v5656, %v5557
      %v5701 = vsel %vm878, %v5657, %v5559
      %v5702 = vsel %vm878, %v5658, %v5561
      %v5703 = vsel %vm878, %v5659, %v5563
      %v5704 = vsel %vm878, %v5660, %v5565
      %v5705 = vsel %vm878, %v5661, %v5567
      %v5706 = vsel %vm878, %v5662, %v5569
      %v5707 = vsel %vm878, %v5663, %v5571
      %v5708 = vsel %vm878, %v5664, %v5573
      %v5709 = vsel %vm878, %v5665, %v5575
      %v5710 = vsel %vm878, %v5666, %v5577
      %v5711 = vsel %vm878, %v5667, %v5579
      %v5712 = vpack.c.bf16 %v5669, %v5668
      %v5713 = vpack.c.bf16 %v5671, %v5670
      %v5714 = vpack.c.bf16 %v5673, %v5672
      %v5715 = vpack.c.bf16 %v5675, %v5674
      %v5716 = vpack.c.bf16 %v5677, %v5676
      %v5717 = vpack.c.bf16 %v5679, %v5678
      %v5718 = vpack.c.bf16 %v5681, %v5680
      %v5719 = vpack.c.bf16 %v5683, %v5682
      %v5720 = vpack.c.bf16 %v5685, %v5684
      %v5721 = vpack.c.bf16 %v5687, %v5686
      %v5722 = vpack.c.bf16 %v5689, %v5688
      %v5723 = vpack.c.bf16 %v5691, %v5690
      %v5724 = vpack.c.bf16 %v5693, %v5692
      %v5725 = vpack.c.bf16 %v5695, %v5694
      %v5726 = vpack.c.bf16 %v5697, %v5696
      %v5727 = vpack.c.bf16 %v5699, %v5698
      %v5728 = vpack.c.bf16 %v5701, %v5700
      %v5729 = vpack.c.bf16 %v5703, %v5702
      %v5730 = vpack.c.bf16 %v5705, %v5704
      %v5731 = vpack.c.bf16 %v5707, %v5706
      %v5732 = vpack.c.bf16 %v5709, %v5708
      %v5733 = vpack.c.bf16 %v5711, %v5710
      %s5734 = scalar_lea.vmem %s1, 672
      %v5735 = vld [vmem:[%s5734] sm:$0xf]
      %v5736 = vld [vmem:[%s5734 + $0x4] sm:$0xf]
      %v5737 = vld [vmem:[%s5734 + $0x8] sm:$0xf]
      %v5738 = vld [vmem:[%s5734 + $0xc] sm:$0xf]
      %v5739 = vld [vmem:[%s5734 + $0x10] sm:$0xf]
      %v5740 = vld [vmem:[%s5734 + $0x14] sm:$0xf]
      %v5741 = vld [vmem:[%s5734 + $0x18] sm:$0xf]
      %v5742 = vld [vmem:[%s5734 + $0x1c] sm:$0xf]
      %v5743 = vld [vmem:[%s5734 + $0x20] sm:$0xf]
      %v5744 = vld [vmem:[%s5734 + $0x24] sm:$0xf]
      %v5745 = vld [vmem:[%s5734 + $0x28] sm:$0xf]
      %v5746 = vld [vmem:[%s5734 + $0x2c] sm:$0xf]
      %s5747 = scalar_lea.vmem %s1, 720
      %v5748 = vld [vmem:[%s5747] sm:$0xf]
      %v5749 = vld [vmem:[%s5747 + $0x4] sm:$0xf]
      %v5750 = vld [vmem:[%s5747 + $0x8] sm:$0xf]
      %v5751 = vld [vmem:[%s5747 + $0xc] sm:$0xf]
      %v5752 = vld [vmem:[%s5747 + $0x10] sm:$0xf]
      %v5753 = vld [vmem:[%s5747 + $0x14] sm:$0xf]
      %v5754 = vld [vmem:[%s5747 + $0x18] sm:$0xf]
      %v5755 = vld [vmem:[%s5747 + $0x1c] sm:$0xf]
      %v5756 = vld [vmem:[%s5747 + $0x20] sm:$0xf]
      %v5757 = vld [vmem:[%s5747 + $0x24] sm:$0xf]
      %v5758 = vld [vmem:[%s5747 + $0x28] sm:$0xf]
      %v5759 = vld [vmem:[%s5747 + $0x2c] sm:$0xf]
      %v5772 = vunpack.c.l.b16 %v5748
      %v5773 = vunpack.c.l.b16 %v5749
      %v5774 = vunpack.c.l.b16 %v5750
      %v5775 = vunpack.c.l.b16 %v5751
      %v5776 = vunpack.c.l.b16 %v5752
      %v5777 = vunpack.c.l.b16 %v5753
      %v5778 = vunpack.c.l.b16 %v5754
      %v5779 = vunpack.c.l.b16 %v5755
      %v5780 = vunpack.c.l.b16 %v5756
      %v5781 = vunpack.c.l.b16 %v5757
      %v5782 = vunpack.c.l.b16 %v5758
      %v5783 = vunpack.c.l.b16 %v5759
      %v5784 = vpack.c.b16 %v5773, %v5772
      %v5785 = vpack.c.b16 %v5775, %v5774
      %v5786 = vpack.c.b16 %v5777, %v5776
      %v5787 = vpack.c.b16 %v5779, %v5778
      %v5788 = vpack.c.b16 %v5781, %v5780
      %v5789 = vpack.c.b16 %v5783, %v5782
      %v5797 = vsel %vm1006, %v5713, 0
      %v5800 = vsel %vm1006, %v5714, 0
      %v5803 = vsel %vm1006, %v5715, 0
      %v5806 = vsel %vm1006, %v5716, 0
      %v5809 = vsel %vm1006, %v5717, 0
      %v5812 = vsel %vm1006, %v5718, 0
      %v5815 = vsel %vm1006, %v5719, 0
      %v5818 = vsel %vm1006, %v5720, 0
      %v5821 = vsel %vm1006, %v5721, 0
      %v5824 = vsel %vm1006, %v5722, 0
      %v5827 = vsel %vm1006, %v5723, 0
      %v5830 = vsel %vm1006, %v5724, 0
      %v5833 = vsel %vm1006, %v5725, 0
      %v5836 = vsel %vm1006, %v5726, 0
      %v5839 = vsel %vm1006, %v5727, 0
      %v5842 = vsel %vm1006, %v5728, 0
      %5844 = vmatprep.subr.bf16.mxu0 0
      %5845 = vmatpush1.bf16.msra.mxu0 0
      %5846 = vmatprep.subr.bf16.mxu0 0
      %5847 = vmatpush1.bf16.msra.mxu0 0
      %5848 = vmatprep.subr.bf16.mxu0 0
      %5849 = vmatpush1.bf16.msra.mxu0 %v5789
      %5850 = vmatprep.subr.bf16.mxu0 0
      %5851 = vmatpush1.bf16.msra.mxu0 %v5788
      %5852 = vmatprep.subr.bf16.mxu0 0
      %5853 = vmatpush1.bf16.msra.mxu0 %v5787
      %5854 = vmatprep.subr.bf16.mxu0 0
      %5855 = vmatpush1.bf16.msra.mxu0 %v5786
      %5856 = vmatprep.subr.bf16.mxu0 0
      %5857 = vmatpush1.bf16.msra.mxu0 %v5785
      %5858 = vmatprep.subr.bf16.mxu0 0
      %5859 = vmatpush1.bf16.msra.mxu0 %v5784
      %5860 = vmatprep.subr.bf16.mxu0 0
      %5861 = vmatpush2.bf16.msra.mxu0 0
      %5862 = vmatprep.subr.bf16.mxu0 0
      %5863 = vmatpush2.bf16.msra.mxu0 0
      %5864 = vmatprep.subr.bf16.mxu0 0
      %5865 = vmatpush2.bf16.msra.mxu0 0
      %5866 = vmatprep.subr.bf16.mxu0 0
      %5867 = vmatpush2.bf16.msra.mxu0 0
      %5868 = vmatprep.subr.bf16.mxu0 0
      %5869 = vmatpush2.bf16.msra.mxu0 0
      %5870 = vmatprep.subr.bf16.mxu0 0
      %5871 = vmatpush2.bf16.msra.mxu0 0
      %5872 = vmatprep.subr.bf16.mxu0 0
      %5873 = vmatpush2.bf16.msra.mxu0 0
      %5874 = vmatprep.subr.bf16.mxu0 0
      %5875 = vmatpush2.bf16.msra.mxu0 0
      %5876 = vmatprep.mubr.bf16.mxu0 0
      %5877 = vmatmul.mubr.bf16.gmra.mxu0 %v5797
      %v5878 = vpop.f32.mrf.mxu0
      %v5879 = vadd.f32 0.0, %v5878
      %v5880 = vpop.f32.mrf.mxu0
      %v5881 = vpop.f32.mrf.mxu0
      %v5882 = vadd.f32 0.0, %v5881
      %v5883 = vpop.f32.mrf.mxu0
      %5884 = vmatprep.mubr.bf16.mxu0 0
      %5885 = vmatmul.mubr.bf16.gmra.mxu0 %v5800
      %v5886 = vpop.f32.mrf.mxu0
      %v5887 = vadd.f32 0.0, %v5886
      %v5888 = vpop.f32.mrf.mxu0
      %v5889 = vpop.f32.mrf.mxu0
      %v5890 = vadd.f32 0.0, %v5889
      %v5891 = vpop.f32.mrf.mxu0
      %5892 = vmatprep.mubr.bf16.mxu0 0
      %5893 = vmatmul.mubr.bf16.gmra.mxu0 %v5803
      %v5894 = vpop.f32.mrf.mxu0
      %v5895 = vadd.f32 0.0, %v5894
      %v5896 = vpop.f32.mrf.mxu0
      %v5897 = vpop.f32.mrf.mxu0
      %v5898 = vadd.f32 0.0, %v5897
      %v5899 = vpop.f32.mrf.mxu0
      %5900 = vmatprep.mubr.bf16.mxu0 0
      %5901 = vmatmul.mubr.bf16.gmra.mxu0 %v5806
      %v5902 = vpop.f32.mrf.mxu0
      %v5903 = vadd.f32 0.0, %v5902
      %v5904 = vpop.f32.mrf.mxu0
      %v5905 = vpop.f32.mrf.mxu0
      %v5906 = vadd.f32 0.0, %v5905
      %v5907 = vpop.f32.mrf.mxu0
      %5908 = vmatprep.mubr.bf16.mxu0 0
      %5909 = vmatmul.mubr.bf16.gmra.mxu0 %v5809
      %v5910 = vpop.f32.mrf.mxu0
      %v5911 = vadd.f32 0.0, %v5910
      %v5912 = vpop.f32.mrf.mxu0
      %v5913 = vpop.f32.mrf.mxu0
      %v5914 = vadd.f32 0.0, %v5913
      %v5915 = vpop.f32.mrf.mxu0
      %5916 = vmatprep.mubr.bf16.mxu0 0
      %5917 = vmatmul.mubr.bf16.gmra.mxu0 %v5812
      %v5918 = vpop.f32.mrf.mxu0
      %v5919 = vadd.f32 0.0, %v5918
      %v5920 = vpop.f32.mrf.mxu0
      %v5921 = vpop.f32.mrf.mxu0
      %v5922 = vadd.f32 0.0, %v5921
      %v5923 = vpop.f32.mrf.mxu0
      %5924 = vmatprep.mubr.bf16.mxu0 0
      %5925 = vmatmul.mubr.bf16.gmra.mxu0 %v5815
      %v5926 = vpop.f32.mrf.mxu0
      %v5927 = vadd.f32 0.0, %v5926
      %v5928 = vpop.f32.mrf.mxu0
      %v5929 = vpop.f32.mrf.mxu0
      %v5930 = vadd.f32 0.0, %v5929
      %v5931 = vpop.f32.mrf.mxu0
      %5932 = vmatprep.mubr.bf16.mxu0 0
      %5933 = vmatmul.mubr.bf16.gmra.mxu0 %v5818
      %v5934 = vpop.f32.mrf.mxu0
      %v5935 = vadd.f32 0.0, %v5934
      %v5936 = vpop.f32.mrf.mxu0
      %v5937 = vpop.f32.mrf.mxu0
      %v5938 = vadd.f32 0.0, %v5937
      %v5939 = vpop.f32.mrf.mxu0
      %5940 = vmatprep.mubr.bf16.mxu0 0
      %5941 = vmatmul.mubr.bf16.gmra.mxu0 %v5821
      %v5942 = vpop.f32.mrf.mxu0
      %v5943 = vadd.f32 0.0, %v5942
      %v5944 = vpop.f32.mrf.mxu0
      %v5945 = vpop.f32.mrf.mxu0
      %v5946 = vadd.f32 0.0, %v5945
      %v5947 = vpop.f32.mrf.mxu0
      %5948 = vmatprep.mubr.bf16.mxu0 0
      %5949 = vmatmul.mubr.bf16.gmra.mxu0 %v5824
      %v5950 = vpop.f32.mrf.mxu0
      %v5951 = vadd.f32 0.0, %v5950
      %v5952 = vpop.f32.mrf.mxu0
      %v5953 = vpop.f32.mrf.mxu0
      %v5954 = vadd.f32 0.0, %v5953
      %v5955 = vpop.f32.mrf.mxu0
      %5956 = vmatprep.mubr.bf16.mxu0 0
      %5957 = vmatmul.mubr.bf16.gmra.mxu0 %v5827
      %v5958 = vpop.f32.mrf.mxu0
      %v5959 = vadd.f32 0.0, %v5958
      %v5960 = vpop.f32.mrf.mxu0
      %v5961 = vpop.f32.mrf.mxu0
      %v5962 = vadd.f32 0.0, %v5961
      %v5963 = vpop.f32.mrf.mxu0
      %5964 = vmatprep.mubr.bf16.mxu0 0
      %5965 = vmatmul.mubr.bf16.gmra.mxu0 %v5830
      %v5966 = vpop.f32.mrf.mxu0
      %v5967 = vadd.f32 0.0, %v5966
      %v5968 = vpop.f32.mrf.mxu0
      %v5969 = vpop.f32.mrf.mxu0
      %v5970 = vadd.f32 0.0, %v5969
      %v5971 = vpop.f32.mrf.mxu0
      %5972 = vmatprep.mubr.bf16.mxu0 0
      %5973 = vmatmul.mubr.bf16.gmra.mxu0 %v5833
      %v5974 = vpop.f32.mrf.mxu0
      %v5975 = vadd.f32 0.0, %v5974
      %v5976 = vpop.f32.mrf.mxu0
      %v5977 = vpop.f32.mrf.mxu0
      %v5978 = vadd.f32 0.0, %v5977
      %v5979 = vpop.f32.mrf.mxu0
      %5980 = vmatprep.mubr.bf16.mxu0 0
      %5981 = vmatmul.mubr.bf16.gmra.mxu0 %v5836
      %v5982 = vpop.f32.mrf.mxu0
      %v5983 = vadd.f32 0.0, %v5982
      %v5984 = vpop.f32.mrf.mxu0
      %v5985 = vpop.f32.mrf.mxu0
      %v5986 = vadd.f32 0.0, %v5985
      %v5987 = vpop.f32.mrf.mxu0
      %5988 = vmatprep.mubr.bf16.mxu0 0
      %5989 = vmatmul.mubr.bf16.gmra.mxu0 %v5839
      %v5990 = vpop.f32.mrf.mxu0
      %v5991 = vadd.f32 0.0, %v5990
      %v5992 = vpop.f32.mrf.mxu0
      %v5993 = vpop.f32.mrf.mxu0
      %v5994 = vadd.f32 0.0, %v5993
      %v5995 = vpop.f32.mrf.mxu0
      %5996 = vmatprep.mubr.bf16.mxu0 0
      %5997 = vmatmul.mubr.bf16.gmra.mxu0 %v5842
      %v5998 = vpop.f32.mrf.mxu0
      %v5999 = vadd.f32 0.0, %v5998
      %v6000 = vpop.f32.mrf.mxu0
      %v6001 = vpop.f32.mrf.mxu0
      %v6002 = vadd.f32 0.0, %v6001
      %v6003 = vpop.f32.mrf.mxu0
      %6004 = vdwg.mxu0
      %v6017 = vunpack.c.l.b16 %v5735
      %v6018 = vunpack.c.l.b16 %v5736
      %v6019 = vunpack.c.l.b16 %v5737
      %v6020 = vunpack.c.l.b16 %v5738
      %v6021 = vunpack.c.l.b16 %v5739
      %v6022 = vunpack.c.l.b16 %v5740
      %v6023 = vunpack.c.l.b16 %v5741
      %v6024 = vunpack.c.l.b16 %v5742
      %v6025 = vunpack.c.l.b16 %v5743
      %v6026 = vunpack.c.l.b16 %v5744
      %v6027 = vunpack.c.l.b16 %v5745
      %v6028 = vunpack.c.l.b16 %v5746
      %v6029 = vpack.c.b16 %v6018, %v6017
      %v6030 = vpack.c.b16 %v6020, %v6019
      %v6031 = vpack.c.b16 %v6022, %v6021
      %v6032 = vpack.c.b16 %v6024, %v6023
      %v6033 = vpack.c.b16 %v6026, %v6025
      %v6034 = vpack.c.b16 %v6028, %v6027
      %v6042 = vsel %vm1006, %v5712, 0
      %6044 = vmatprep.subr.bf16.mxu0 0
      %6045 = vmatpush1.bf16.msra.mxu0 0
      %6046 = vmatprep.subr.bf16.mxu0 0
      %6047 = vmatpush1.bf16.msra.mxu0 0
      %6048 = vmatprep.subr.bf16.mxu0 0
      %6049 = vmatpush1.bf16.msra.mxu0 %v6034
      %6050 = vmatprep.subr.bf16.mxu0 0
      %6051 = vmatpush1.bf16.msra.mxu0 %v6033
      %6052 = vmatprep.subr.bf16.mxu0 0
      %6053 = vmatpush1.bf16.msra.mxu0 %v6032
      %6054 = vmatprep.subr.bf16.mxu0 0
      %6055 = vmatpush1.bf16.msra.mxu0 %v6031
      %6056 = vmatprep.subr.bf16.mxu0 0
      %6057 = vmatpush1.bf16.msra.mxu0 %v6030
      %6058 = vmatprep.subr.bf16.mxu0 0
      %6059 = vmatpush1.bf16.msra.mxu0 %v6029
      %6060 = vmatprep.subr.bf16.mxu0 0
      %6061 = vmatpush2.bf16.msra.mxu0 0
      %6062 = vmatprep.subr.bf16.mxu0 0
      %6063 = vmatpush2.bf16.msra.mxu0 0
      %6064 = vmatprep.subr.bf16.mxu0 0
      %6065 = vmatpush2.bf16.msra.mxu0 0
      %6066 = vmatprep.subr.bf16.mxu0 0
      %6067 = vmatpush2.bf16.msra.mxu0 0
      %6068 = vmatprep.subr.bf16.mxu0 0
      %6069 = vmatpush2.bf16.msra.mxu0 0
      %6070 = vmatprep.subr.bf16.mxu0 0
      %6071 = vmatpush2.bf16.msra.mxu0 0
      %6072 = vmatprep.subr.bf16.mxu0 0
      %6073 = vmatpush2.bf16.msra.mxu0 0
      %6074 = vmatprep.subr.bf16.mxu0 0
      %6075 = vmatpush2.bf16.msra.mxu0 0
      %6076 = vmatprep.mubr.bf16.mxu0 0
      %6077 = vmatmul.mubr.bf16.gmra.mxu0 %v6042
      %v6078 = vpop.f32.mrf.mxu0
      %v6079 = vadd.f32 %v5879, %v6078
      %v6080 = vpop.f32.mrf.mxu0
      %v6081 = vpop.f32.mrf.mxu0
      %v6082 = vadd.f32 %v5882, %v6081
      %v6083 = vpop.f32.mrf.mxu0
      %6084 = vmatprep.mubr.bf16.mxu0 0
      %6085 = vmatmul.mubr.bf16.gmra.mxu0 %v5797
      %v6086 = vpop.f32.mrf.mxu0
      %v6087 = vadd.f32 %v5887, %v6086
      %v6088 = vpop.f32.mrf.mxu0
      %v6089 = vpop.f32.mrf.mxu0
      %v6090 = vadd.f32 %v5890, %v6089
      %v6091 = vpop.f32.mrf.mxu0
      %6092 = vmatprep.mubr.bf16.mxu0 0
      %6093 = vmatmul.mubr.bf16.gmra.mxu0 %v5800
      %v6094 = vpop.f32.mrf.mxu0
      %v6095 = vadd.f32 %v5895, %v6094
      %v6096 = vpop.f32.mrf.mxu0
      %v6097 = vpop.f32.mrf.mxu0
      %v6098 = vadd.f32 %v5898, %v6097
      %v6099 = vpop.f32.mrf.mxu0
      %6100 = vmatprep.mubr.bf16.mxu0 0
      %6101 = vmatmul.mubr.bf16.gmra.mxu0 %v5803
      %v6102 = vpop.f32.mrf.mxu0
      %v6103 = vadd.f32 %v5903, %v6102
      %v6104 = vpop.f32.mrf.mxu0
      %v6105 = vpop.f32.mrf.mxu0
      %v6106 = vadd.f32 %v5906, %v6105
      %v6107 = vpop.f32.mrf.mxu0
      %6108 = vmatprep.mubr.bf16.mxu0 0
      %6109 = vmatmul.mubr.bf16.gmra.mxu0 %v5806
      %v6110 = vpop.f32.mrf.mxu0
      %v6111 = vadd.f32 %v5911, %v6110
      %v6112 = vpop.f32.mrf.mxu0
      %v6113 = vpop.f32.mrf.mxu0
      %v6114 = vadd.f32 %v5914, %v6113
      %v6115 = vpop.f32.mrf.mxu0
      %6116 = vmatprep.mubr.bf16.mxu0 0
      %6117 = vmatmul.mubr.bf16.gmra.mxu0 %v5809
      %v6118 = vpop.f32.mrf.mxu0
      %v6119 = vadd.f32 %v5919, %v6118
      %v6120 = vpop.f32.mrf.mxu0
      %v6121 = vpop.f32.mrf.mxu0
      %v6122 = vadd.f32 %v5922, %v6121
      %v6123 = vpop.f32.mrf.mxu0
      %6124 = vmatprep.mubr.bf16.mxu0 0
      %6125 = vmatmul.mubr.bf16.gmra.mxu0 %v5812
      %v6126 = vpop.f32.mrf.mxu0
      %v6127 = vadd.f32 %v5927, %v6126
      %v6128 = vpop.f32.mrf.mxu0
      %v6129 = vpop.f32.mrf.mxu0
      %v6130 = vadd.f32 %v5930, %v6129
      %v6131 = vpop.f32.mrf.mxu0
      %6132 = vmatprep.mubr.bf16.mxu0 0
      %6133 = vmatmul.mubr.bf16.gmra.mxu0 %v5815
      %v6134 = vpop.f32.mrf.mxu0
      %v6135 = vadd.f32 %v5935, %v6134
      %v6136 = vpop.f32.mrf.mxu0
      %v6137 = vpop.f32.mrf.mxu0
      %v6138 = vadd.f32 %v5938, %v6137
      %v6139 = vpop.f32.mrf.mxu0
      %6140 = vmatprep.mubr.bf16.mxu0 0
      %6141 = vmatmul.mubr.bf16.gmra.mxu0 %v5818
      %v6142 = vpop.f32.mrf.mxu0
      %v6143 = vadd.f32 %v5943, %v6142
      %v6144 = vpop.f32.mrf.mxu0
      %v6145 = vpop.f32.mrf.mxu0
      %v6146 = vadd.f32 %v5946, %v6145
      %v6147 = vpop.f32.mrf.mxu0
      %6148 = vmatprep.mubr.bf16.mxu0 0
      %6149 = vmatmul.mubr.bf16.gmra.mxu0 %v5821
      %v6150 = vpop.f32.mrf.mxu0
      %v6151 = vadd.f32 %v5951, %v6150
      %v6152 = vpop.f32.mrf.mxu0
      %v6153 = vpop.f32.mrf.mxu0
      %v6154 = vadd.f32 %v5954, %v6153
      %v6155 = vpop.f32.mrf.mxu0
      %6156 = vmatprep.mubr.bf16.mxu0 0
      %6157 = vmatmul.mubr.bf16.gmra.mxu0 %v5824
      %v6158 = vpop.f32.mrf.mxu0
      %v6159 = vadd.f32 %v5959, %v6158
      %v6160 = vpop.f32.mrf.mxu0
      %v6161 = vpop.f32.mrf.mxu0
      %v6162 = vadd.f32 %v5962, %v6161
      %v6163 = vpop.f32.mrf.mxu0
      %6164 = vmatprep.mubr.bf16.mxu0 0
      %6165 = vmatmul.mubr.bf16.gmra.mxu0 %v5827
      %v6166 = vpop.f32.mrf.mxu0
      %v6167 = vadd.f32 %v5967, %v6166
      %v6168 = vpop.f32.mrf.mxu0
      %v6169 = vpop.f32.mrf.mxu0
      %v6170 = vadd.f32 %v5970, %v6169
      %v6171 = vpop.f32.mrf.mxu0
      %6172 = vmatprep.mubr.bf16.mxu0 0
      %6173 = vmatmul.mubr.bf16.gmra.mxu0 %v5830
      %v6174 = vpop.f32.mrf.mxu0
      %v6175 = vadd.f32 %v5975, %v6174
      %v6176 = vpop.f32.mrf.mxu0
      %v6177 = vpop.f32.mrf.mxu0
      %v6178 = vadd.f32 %v5978, %v6177
      %v6179 = vpop.f32.mrf.mxu0
      %6180 = vmatprep.mubr.bf16.mxu0 0
      %6181 = vmatmul.mubr.bf16.gmra.mxu0 %v5833
      %v6182 = vpop.f32.mrf.mxu0
      %v6183 = vadd.f32 %v5983, %v6182
      %v6184 = vpop.f32.mrf.mxu0
      %v6185 = vpop.f32.mrf.mxu0
      %v6186 = vadd.f32 %v5986, %v6185
      %v6187 = vpop.f32.mrf.mxu0
      %6188 = vmatprep.mubr.bf16.mxu0 0
      %6189 = vmatmul.mubr.bf16.gmra.mxu0 %v5836
      %v6190 = vpop.f32.mrf.mxu0
      %v6191 = vadd.f32 %v5991, %v6190
      %v6192 = vpop.f32.mrf.mxu0
      %v6193 = vpop.f32.mrf.mxu0
      %v6194 = vadd.f32 %v5994, %v6193
      %v6195 = vpop.f32.mrf.mxu0
      %6196 = vmatprep.mubr.bf16.mxu0 0
      %6197 = vmatmul.mubr.bf16.gmra.mxu0 %v5839
      %v6198 = vpop.f32.mrf.mxu0
      %v6199 = vadd.f32 %v5999, %v6198
      %v6200 = vpop.f32.mrf.mxu0
      %v6201 = vpop.f32.mrf.mxu0
      %v6202 = vadd.f32 %v6002, %v6201
      %v6203 = vpop.f32.mrf.mxu0
      %6204 = vdwg.mxu0
      %s6205 = scalar_lea.vmem %s1, 768
      %v6206 = vld [vmem:[%s6205] sm:$0xf]
      %v6207 = vld [vmem:[%s6205 + $0x4] sm:$0xf]
      %v6208 = vld [vmem:[%s6205 + $0x8] sm:$0xf]
      %v6209 = vld [vmem:[%s6205 + $0xc] sm:$0xf]
      %v6210 = vld [vmem:[%s6205 + $0x10] sm:$0xf]
      %v6211 = vld [vmem:[%s6205 + $0x14] sm:$0xf]
      %v6212 = vld [vmem:[%s6205 + $0x18] sm:$0xf]
      %v6213 = vld [vmem:[%s6205 + $0x1c] sm:$0xf]
      %v6214 = vld [vmem:[%s6205 + $0x20] sm:$0xf]
      %v6215 = vld [vmem:[%s6205 + $0x24] sm:$0xf]
      %v6216 = vld [vmem:[%s6205 + $0x28] sm:$0xf]
      %v6217 = vld [vmem:[%s6205 + $0x2c] sm:$0xf]
      %v6230 = vunpack.c.l.b16 %v6206
      %v6231 = vunpack.c.l.b16 %v6207
      %v6232 = vunpack.c.l.b16 %v6208
      %v6233 = vunpack.c.l.b16 %v6209
      %v6234 = vunpack.c.l.b16 %v6210
      %v6235 = vunpack.c.l.b16 %v6211
      %v6236 = vunpack.c.l.b16 %v6212
      %v6237 = vunpack.c.l.b16 %v6213
      %v6238 = vunpack.c.l.b16 %v6214
      %v6239 = vunpack.c.l.b16 %v6215
      %v6240 = vunpack.c.l.b16 %v6216
      %v6241 = vunpack.c.l.b16 %v6217
      %v6242 = vpack.c.b16 %v6231, %v6230
      %v6243 = vpack.c.b16 %v6233, %v6232
      %v6244 = vpack.c.b16 %v6235, %v6234
      %v6245 = vpack.c.b16 %v6237, %v6236
      %v6246 = vpack.c.b16 %v6239, %v6238
      %v6247 = vpack.c.b16 %v6241, %v6240
      %v6255 = vsel %vm1006, %v5729, 0
      %6257 = vmatprep.subr.bf16.mxu0 0
      %6258 = vmatpush1.bf16.msra.mxu0 0
      %6259 = vmatprep.subr.bf16.mxu0 0
      %6260 = vmatpush1.bf16.msra.mxu0 0
      %6261 = vmatprep.subr.bf16.mxu0 0
      %6262 = vmatpush1.bf16.msra.mxu0 %v6247
      %6263 = vmatprep.subr.bf16.mxu0 0
      %6264 = vmatpush1.bf16.msra.mxu0 %v6246
      %6265 = vmatprep.subr.bf16.mxu0 0
      %6266 = vmatpush1.bf16.msra.mxu0 %v6245
      %6267 = vmatprep.subr.bf16.mxu0 0
      %6268 = vmatpush1.bf16.msra.mxu0 %v6244
      %6269 = vmatprep.subr.bf16.mxu0 0
      %6270 = vmatpush1.bf16.msra.mxu0 %v6243
      %6271 = vmatprep.subr.bf16.mxu0 0
      %6272 = vmatpush1.bf16.msra.mxu0 %v6242
      %6273 = vmatprep.subr.bf16.mxu0 0
      %6274 = vmatpush2.bf16.msra.mxu0 0
      %6275 = vmatprep.subr.bf16.mxu0 0
      %6276 = vmatpush2.bf16.msra.mxu0 0
      %6277 = vmatprep.subr.bf16.mxu0 0
      %6278 = vmatpush2.bf16.msra.mxu0 0
      %6279 = vmatprep.subr.bf16.mxu0 0
      %6280 = vmatpush2.bf16.msra.mxu0 0
      %6281 = vmatprep.subr.bf16.mxu0 0
      %6282 = vmatpush2.bf16.msra.mxu0 0
      %6283 = vmatprep.subr.bf16.mxu0 0
      %6284 = vmatpush2.bf16.msra.mxu0 0
      %6285 = vmatprep.subr.bf16.mxu0 0
      %6286 = vmatpush2.bf16.msra.mxu0 0
      %6287 = vmatprep.subr.bf16.mxu0 0
      %6288 = vmatpush2.bf16.msra.mxu0 0
      %6289 = vmatprep.mubr.bf16.mxu0 0
      %6290 = vmatmul.mubr.bf16.gmra.mxu0 %v5800
      %v6291 = vpop.f32.mrf.mxu0
      %v6292 = vadd.f32 0.0, %v6291
      %v6293 = vpop.f32.mrf.mxu0
      %v6294 = vpop.f32.mrf.mxu0
      %v6295 = vadd.f32 0.0, %v6294
      %v6296 = vpop.f32.mrf.mxu0
      %6297 = vmatprep.mubr.bf16.mxu0 0
      %6298 = vmatmul.mubr.bf16.gmra.mxu0 %v5803
      %v6299 = vpop.f32.mrf.mxu0
      %v6300 = vadd.f32 0.0, %v6299
      %v6301 = vpop.f32.mrf.mxu0
      %v6302 = vpop.f32.mrf.mxu0
      %v6303 = vadd.f32 0.0, %v6302
      %v6304 = vpop.f32.mrf.mxu0
      %6305 = vmatprep.mubr.bf16.mxu0 0
      %6306 = vmatmul.mubr.bf16.gmra.mxu0 %v5806
      %v6307 = vpop.f32.mrf.mxu0
      %v6308 = vadd.f32 0.0, %v6307
      %v6309 = vpop.f32.mrf.mxu0
      %v6310 = vpop.f32.mrf.mxu0
      %v6311 = vadd.f32 0.0, %v6310
      %v6312 = vpop.f32.mrf.mxu0
      %6313 = vmatprep.mubr.bf16.mxu0 0
      %6314 = vmatmul.mubr.bf16.gmra.mxu0 %v5809
      %v6315 = vpop.f32.mrf.mxu0
      %v6316 = vadd.f32 0.0, %v6315
      %v6317 = vpop.f32.mrf.mxu0
      %v6318 = vpop.f32.mrf.mxu0
      %v6319 = vadd.f32 0.0, %v6318
      %v6320 = vpop.f32.mrf.mxu0
      %6321 = vmatprep.mubr.bf16.mxu0 0
      %6322 = vmatmul.mubr.bf16.gmra.mxu0 %v5812
      %v6323 = vpop.f32.mrf.mxu0
      %v6324 = vadd.f32 0.0, %v6323
      %v6325 = vpop.f32.mrf.mxu0
      %v6326 = vpop.f32.mrf.mxu0
      %v6327 = vadd.f32 0.0, %v6326
      %v6328 = vpop.f32.mrf.mxu0
      %6329 = vmatprep.mubr.bf16.mxu0 0
      %6330 = vmatmul.mubr.bf16.gmra.mxu0 %v5815
      %v6331 = vpop.f32.mrf.mxu0
      %v6332 = vadd.f32 0.0, %v6331
      %v6333 = vpop.f32.mrf.mxu0
      %v6334 = vpop.f32.mrf.mxu0
      %v6335 = vadd.f32 0.0, %v6334
      %v6336 = vpop.f32.mrf.mxu0
      %6337 = vmatprep.mubr.bf16.mxu0 0
      %6338 = vmatmul.mubr.bf16.gmra.mxu0 %v5818
      %v6339 = vpop.f32.mrf.mxu0
      %v6340 = vadd.f32 0.0, %v6339
      %v6341 = vpop.f32.mrf.mxu0
      %v6342 = vpop.f32.mrf.mxu0
      %v6343 = vadd.f32 0.0, %v6342
      %v6344 = vpop.f32.mrf.mxu0
      %6345 = vmatprep.mubr.bf16.mxu0 0
      %6346 = vmatmul.mubr.bf16.gmra.mxu0 %v5821
      %v6347 = vpop.f32.mrf.mxu0
      %v6348 = vadd.f32 0.0, %v6347
      %v6349 = vpop.f32.mrf.mxu0
      %v6350 = vpop.f32.mrf.mxu0
      %v6351 = vadd.f32 0.0, %v6350
      %v6352 = vpop.f32.mrf.mxu0
      %6353 = vmatprep.mubr.bf16.mxu0 0
      %6354 = vmatmul.mubr.bf16.gmra.mxu0 %v5824
      %v6355 = vpop.f32.mrf.mxu0
      %v6356 = vadd.f32 0.0, %v6355
      %v6357 = vpop.f32.mrf.mxu0
      %v6358 = vpop.f32.mrf.mxu0
      %v6359 = vadd.f32 0.0, %v6358
      %v6360 = vpop.f32.mrf.mxu0
      %6361 = vmatprep.mubr.bf16.mxu0 0
      %6362 = vmatmul.mubr.bf16.gmra.mxu0 %v5827
      %v6363 = vpop.f32.mrf.mxu0
      %v6364 = vadd.f32 0.0, %v6363
      %v6365 = vpop.f32.mrf.mxu0
      %v6366 = vpop.f32.mrf.mxu0
      %v6367 = vadd.f32 0.0, %v6366
      %v6368 = vpop.f32.mrf.mxu0
      %6369 = vmatprep.mubr.bf16.mxu0 0
      %6370 = vmatmul.mubr.bf16.gmra.mxu0 %v5830
      %v6371 = vpop.f32.mrf.mxu0
      %v6372 = vadd.f32 0.0, %v6371
      %v6373 = vpop.f32.mrf.mxu0
      %v6374 = vpop.f32.mrf.mxu0
      %v6375 = vadd.f32 0.0, %v6374
      %v6376 = vpop.f32.mrf.mxu0
      %6377 = vmatprep.mubr.bf16.mxu0 0
      %6378 = vmatmul.mubr.bf16.gmra.mxu0 %v5833
      %v6379 = vpop.f32.mrf.mxu0
      %v6380 = vadd.f32 0.0, %v6379
      %v6381 = vpop.f32.mrf.mxu0
      %v6382 = vpop.f32.mrf.mxu0
      %v6383 = vadd.f32 0.0, %v6382
      %v6384 = vpop.f32.mrf.mxu0
      %6385 = vmatprep.mubr.bf16.mxu0 0
      %6386 = vmatmul.mubr.bf16.gmra.mxu0 %v5836
      %v6387 = vpop.f32.mrf.mxu0
      %v6388 = vadd.f32 0.0, %v6387
      %v6389 = vpop.f32.mrf.mxu0
      %v6390 = vpop.f32.mrf.mxu0
      %v6391 = vadd.f32 0.0, %v6390
      %v6392 = vpop.f32.mrf.mxu0
      %6393 = vmatprep.mubr.bf16.mxu0 0
      %6394 = vmatmul.mubr.bf16.gmra.mxu0 %v5839
      %v6395 = vpop.f32.mrf.mxu0
      %v6396 = vadd.f32 0.0, %v6395
      %v6397 = vpop.f32.mrf.mxu0
      %v6398 = vpop.f32.mrf.mxu0
      %v6399 = vadd.f32 0.0, %v6398
      %v6400 = vpop.f32.mrf.mxu0
      %6401 = vmatprep.mubr.bf16.mxu0 0
      %6402 = vmatmul.mubr.bf16.gmra.mxu0 %v5842
      %v6403 = vpop.f32.mrf.mxu0
      %v6404 = vadd.f32 0.0, %v6403
      %v6405 = vpop.f32.mrf.mxu0
      %v6406 = vpop.f32.mrf.mxu0
      %v6407 = vadd.f32 0.0, %v6406
      %v6408 = vpop.f32.mrf.mxu0
      %6409 = vmatprep.mubr.bf16.mxu0 0
      %6410 = vmatmul.mubr.bf16.gmra.mxu0 %v6255
      %v6411 = vpop.f32.mrf.mxu0
      %v6412 = vadd.f32 0.0, %v6411
      %v6413 = vpop.f32.mrf.mxu0
      %v6414 = vpop.f32.mrf.mxu0
      %v6415 = vadd.f32 0.0, %v6414
      %v6416 = vpop.f32.mrf.mxu0
      %6417 = vdwg.mxu0
      %v6418 = vadd.f32 %v6079, %v6292
      %v6419 = vadd.f32 %v6082, %v6295
      %v6420 = vadd.f32 %v6087, %v6300
      %v6421 = vadd.f32 %v6090, %v6303
      %v6422 = vadd.f32 %v6095, %v6308
      %v6423 = vadd.f32 %v6098, %v6311
      %v6424 = vadd.f32 %v6103, %v6316
      %v6425 = vadd.f32 %v6106, %v6319
      %v6426 = vadd.f32 %v6111, %v6324
      %v6427 = vadd.f32 %v6114, %v6327
      %v6428 = vadd.f32 %v6119, %v6332
      %v6429 = vadd.f32 %v6122, %v6335
      %v6430 = vadd.f32 %v6127, %v6340
      %v6431 = vadd.f32 %v6130, %v6343
      %v6432 = vadd.f32 %v6135, %v6348
      %v6433 = vadd.f32 %v6138, %v6351
      %v6434 = vadd.f32 %v6143, %v6356
      %v6435 = vadd.f32 %v6146, %v6359
      %v6436 = vadd.f32 %v6151, %v6364
      %v6437 = vadd.f32 %v6154, %v6367
      %v6438 = vadd.f32 %v6159, %v6372
      %v6439 = vadd.f32 %v6162, %v6375
      %v6440 = vadd.f32 %v6167, %v6380
      %v6441 = vadd.f32 %v6170, %v6383
      %v6442 = vadd.f32 %v6175, %v6388
      %v6443 = vadd.f32 %v6178, %v6391
      %v6444 = vadd.f32 %v6183, %v6396
      %v6445 = vadd.f32 %v6186, %v6399
      %v6446 = vadd.f32 %v6191, %v6404
      %v6447 = vadd.f32 %v6194, %v6407
      %v6448 = vadd.f32 %v6199, %v6412
      %v6449 = vadd.f32 %v6202, %v6415
      %s6450 = scalar_lea.vmem %s1, 816
      %v6451 = vld [vmem:[%s6450] sm:$0xf]
      %v6452 = vld [vmem:[%s6450 + $0x4] sm:$0xf]
      %v6453 = vld [vmem:[%s6450 + $0x8] sm:$0xf]
      %v6454 = vld [vmem:[%s6450 + $0xc] sm:$0xf]
      %v6455 = vld [vmem:[%s6450 + $0x10] sm:$0xf]
      %v6456 = vld [vmem:[%s6450 + $0x14] sm:$0xf]
      %v6457 = vld [vmem:[%s6450 + $0x18] sm:$0xf]
      %v6458 = vld [vmem:[%s6450 + $0x1c] sm:$0xf]
      %v6459 = vld [vmem:[%s6450 + $0x20] sm:$0xf]
      %v6460 = vld [vmem:[%s6450 + $0x24] sm:$0xf]
      %v6461 = vld [vmem:[%s6450 + $0x28] sm:$0xf]
      %v6462 = vld [vmem:[%s6450 + $0x2c] sm:$0xf]
      %v6475 = vunpack.c.l.b16 %v6451
      %v6476 = vunpack.c.l.b16 %v6452
      %v6477 = vunpack.c.l.b16 %v6453
      %v6478 = vunpack.c.l.b16 %v6454
      %v6479 = vunpack.c.l.b16 %v6455
      %v6480 = vunpack.c.l.b16 %v6456
      %v6481 = vunpack.c.l.b16 %v6457
      %v6482 = vunpack.c.l.b16 %v6458
      %v6483 = vunpack.c.l.b16 %v6459
      %v6484 = vunpack.c.l.b16 %v6460
      %v6485 = vunpack.c.l.b16 %v6461
      %v6486 = vunpack.c.l.b16 %v6462
      %v6487 = vpack.c.b16 %v6476, %v6475
      %v6488 = vpack.c.b16 %v6478, %v6477
      %v6489 = vpack.c.b16 %v6480, %v6479
      %v6490 = vpack.c.b16 %v6482, %v6481
      %v6491 = vpack.c.b16 %v6484, %v6483
      %v6492 = vpack.c.b16 %v6486, %v6485
      %v6500 = vsel %vm1006, %v5730, 0
      %6502 = vmatprep.subr.bf16.mxu0 0
      %6503 = vmatpush1.bf16.msra.mxu0 0
      %6504 = vmatprep.subr.bf16.mxu0 0
      %6505 = vmatpush1.bf16.msra.mxu0 0
      %6506 = vmatprep.subr.bf16.mxu0 0
      %6507 = vmatpush1.bf16.msra.mxu0 %v6492
      %6508 = vmatprep.subr.bf16.mxu0 0
      %6509 = vmatpush1.bf16.msra.mxu0 %v6491
      %6510 = vmatprep.subr.bf16.mxu0 0
      %6511 = vmatpush1.bf16.msra.mxu0 %v6490
      %6512 = vmatprep.subr.bf16.mxu0 0
      %6513 = vmatpush1.bf16.msra.mxu0 %v6489
      %6514 = vmatprep.subr.bf16.mxu0 0
      %6515 = vmatpush1.bf16.msra.mxu0 %v6488
      %6516 = vmatprep.subr.bf16.mxu0 0
      %6517 = vmatpush1.bf16.msra.mxu0 %v6487
      %6518 = vmatprep.subr.bf16.mxu0 0
      %6519 = vmatpush2.bf16.msra.mxu0 0
      %6520 = vmatprep.subr.bf16.mxu0 0
      %6521 = vmatpush2.bf16.msra.mxu0 0
      %6522 = vmatprep.subr.bf16.mxu0 0
      %6523 = vmatpush2.bf16.msra.mxu0 0
      %6524 = vmatprep.subr.bf16.mxu0 0
      %6525 = vmatpush2.bf16.msra.mxu0 0
      %6526 = vmatprep.subr.bf16.mxu0 0
      %6527 = vmatpush2.bf16.msra.mxu0 0
      %6528 = vmatprep.subr.bf16.mxu0 0
      %6529 = vmatpush2.bf16.msra.mxu0 0
      %6530 = vmatprep.subr.bf16.mxu0 0
      %6531 = vmatpush2.bf16.msra.mxu0 0
      %6532 = vmatprep.subr.bf16.mxu0 0
      %6533 = vmatpush2.bf16.msra.mxu0 0
      %6534 = vmatprep.mubr.bf16.mxu0 0
      %6535 = vmatmul.mubr.bf16.gmra.mxu0 %v5803
      %v6536 = vpop.f32.mrf.mxu0
      %v6537 = vadd.f32 0.0, %v6536
      %v6538 = vpop.f32.mrf.mxu0
      %v6539 = vpop.f32.mrf.mxu0
      %v6540 = vadd.f32 0.0, %v6539
      %v6541 = vpop.f32.mrf.mxu0
      %6542 = vmatprep.mubr.bf16.mxu0 0
      %6543 = vmatmul.mubr.bf16.gmra.mxu0 %v5806
      %v6544 = vpop.f32.mrf.mxu0
      %v6545 = vadd.f32 0.0, %v6544
      %v6546 = vpop.f32.mrf.mxu0
      %v6547 = vpop.f32.mrf.mxu0
      %v6548 = vadd.f32 0.0, %v6547
      %v6549 = vpop.f32.mrf.mxu0
      %6550 = vmatprep.mubr.bf16.mxu0 0
      %6551 = vmatmul.mubr.bf16.gmra.mxu0 %v5809
      %v6552 = vpop.f32.mrf.mxu0
      %v6553 = vadd.f32 0.0, %v6552
      %v6554 = vpop.f32.mrf.mxu0
      %v6555 = vpop.f32.mrf.mxu0
      %v6556 = vadd.f32 0.0, %v6555
      %v6557 = vpop.f32.mrf.mxu0
      %6558 = vmatprep.mubr.bf16.mxu0 0
      %6559 = vmatmul.mubr.bf16.gmra.mxu0 %v5812
      %v6560 = vpop.f32.mrf.mxu0
      %v6561 = vadd.f32 0.0, %v6560
      %v6562 = vpop.f32.mrf.mxu0
      %v6563 = vpop.f32.mrf.mxu0
      %v6564 = vadd.f32 0.0, %v6563
      %v6565 = vpop.f32.mrf.mxu0
      %6566 = vmatprep.mubr.bf16.mxu0 0
      %6567 = vmatmul.mubr.bf16.gmra.mxu0 %v5815
      %v6568 = vpop.f32.mrf.mxu0
      %v6569 = vadd.f32 0.0, %v6568
      %v6570 = vpop.f32.mrf.mxu0
      %v6571 = vpop.f32.mrf.mxu0
      %v6572 = vadd.f32 0.0, %v6571
      %v6573 = vpop.f32.mrf.mxu0
      %6574 = vmatprep.mubr.bf16.mxu0 0
      %6575 = vmatmul.mubr.bf16.gmra.mxu0 %v5818
      %v6576 = vpop.f32.mrf.mxu0
      %v6577 = vadd.f32 0.0, %v6576
      %v6578 = vpop.f32.mrf.mxu0
      %v6579 = vpop.f32.mrf.mxu0
      %v6580 = vadd.f32 0.0, %v6579
      %v6581 = vpop.f32.mrf.mxu0
      %6582 = vmatprep.mubr.bf16.mxu0 0
      %6583 = vmatmul.mubr.bf16.gmra.mxu0 %v5821
      %v6584 = vpop.f32.mrf.mxu0
      %v6585 = vadd.f32 0.0, %v6584
      %v6586 = vpop.f32.mrf.mxu0
      %v6587 = vpop.f32.mrf.mxu0
      %v6588 = vadd.f32 0.0, %v6587
      %v6589 = vpop.f32.mrf.mxu0
      %6590 = vmatprep.mubr.bf16.mxu0 0
      %6591 = vmatmul.mubr.bf16.gmra.mxu0 %v5824
      %v6592 = vpop.f32.mrf.mxu0
      %v6593 = vadd.f32 0.0, %v6592
      %v6594 = vpop.f32.mrf.mxu0
      %v6595 = vpop.f32.mrf.mxu0
      %v6596 = vadd.f32 0.0, %v6595
      %v6597 = vpop.f32.mrf.mxu0
      %6598 = vmatprep.mubr.bf16.mxu0 0
      %6599 = vmatmul.mubr.bf16.gmra.mxu0 %v5827
      %v6600 = vpop.f32.mrf.mxu0
      %v6601 = vadd.f32 0.0, %v6600
      %v6602 = vpop.f32.mrf.mxu0
      %v6603 = vpop.f32.mrf.mxu0
      %v6604 = vadd.f32 0.0, %v6603
      %v6605 = vpop.f32.mrf.mxu0
      %6606 = vmatprep.mubr.bf16.mxu0 0
      %6607 = vmatmul.mubr.bf16.gmra.mxu0 %v5830
      %v6608 = vpop.f32.mrf.mxu0
      %v6609 = vadd.f32 0.0, %v6608
      %v6610 = vpop.f32.mrf.mxu0
      %v6611 = vpop.f32.mrf.mxu0
      %v6612 = vadd.f32 0.0, %v6611
      %v6613 = vpop.f32.mrf.mxu0
      %6614 = vmatprep.mubr.bf16.mxu0 0
      %6615 = vmatmul.mubr.bf16.gmra.mxu0 %v5833
      %v6616 = vpop.f32.mrf.mxu0
      %v6617 = vadd.f32 0.0, %v6616
      %v6618 = vpop.f32.mrf.mxu0
      %v6619 = vpop.f32.mrf.mxu0
      %v6620 = vadd.f32 0.0, %v6619
      %v6621 = vpop.f32.mrf.mxu0
      %6622 = vmatprep.mubr.bf16.mxu0 0
      %6623 = vmatmul.mubr.bf16.gmra.mxu0 %v5836
      %v6624 = vpop.f32.mrf.mxu0
      %v6625 = vadd.f32 0.0, %v6624
      %v6626 = vpop.f32.mrf.mxu0
      %v6627 = vpop.f32.mrf.mxu0
      %v6628 = vadd.f32 0.0, %v6627
      %v6629 = vpop.f32.mrf.mxu0
      %6630 = vmatprep.mubr.bf16.mxu0 0
      %6631 = vmatmul.mubr.bf16.gmra.mxu0 %v5839
      %v6632 = vpop.f32.mrf.mxu0
      %v6633 = vadd.f32 0.0, %v6632
      %v6634 = vpop.f32.mrf.mxu0
      %v6635 = vpop.f32.mrf.mxu0
      %v6636 = vadd.f32 0.0, %v6635
      %v6637 = vpop.f32.mrf.mxu0
      %6638 = vmatprep.mubr.bf16.mxu0 0
      %6639 = vmatmul.mubr.bf16.gmra.mxu0 %v5842
      %v6640 = vpop.f32.mrf.mxu0
      %v6641 = vadd.f32 0.0, %v6640
      %v6642 = vpop.f32.mrf.mxu0
      %v6643 = vpop.f32.mrf.mxu0
      %v6644 = vadd.f32 0.0, %v6643
      %v6645 = vpop.f32.mrf.mxu0
      %6646 = vmatprep.mubr.bf16.mxu0 0
      %6647 = vmatmul.mubr.bf16.gmra.mxu0 %v6255
      %v6648 = vpop.f32.mrf.mxu0
      %v6649 = vadd.f32 0.0, %v6648
      %v6650 = vpop.f32.mrf.mxu0
      %v6651 = vpop.f32.mrf.mxu0
      %v6652 = vadd.f32 0.0, %v6651
      %v6653 = vpop.f32.mrf.mxu0
      %6654 = vmatprep.mubr.bf16.mxu0 0
      %6655 = vmatmul.mubr.bf16.gmra.mxu0 %v6500
      %v6656 = vpop.f32.mrf.mxu0
      %v6657 = vadd.f32 0.0, %v6656
      %v6658 = vpop.f32.mrf.mxu0
      %v6659 = vpop.f32.mrf.mxu0
      %v6660 = vadd.f32 0.0, %v6659
      %v6661 = vpop.f32.mrf.mxu0
      %6662 = vdwg.mxu0
      %v6663 = vadd.f32 %v6418, %v6537
      %v6664 = vadd.f32 %v6419, %v6540
      %v6665 = vadd.f32 %v6420, %v6545
      %v6666 = vadd.f32 %v6421, %v6548
      %v6667 = vadd.f32 %v6422, %v6553
      %v6668 = vadd.f32 %v6423, %v6556
      %v6669 = vadd.f32 %v6424, %v6561
      %v6670 = vadd.f32 %v6425, %v6564
      %v6671 = vadd.f32 %v6426, %v6569
      %v6672 = vadd.f32 %v6427, %v6572
      %v6673 = vadd.f32 %v6428, %v6577
      %v6674 = vadd.f32 %v6429, %v6580
      %v6675 = vadd.f32 %v6430, %v6585
      %v6676 = vadd.f32 %v6431, %v6588
      %v6677 = vadd.f32 %v6432, %v6593
      %v6678 = vadd.f32 %v6433, %v6596
      %v6679 = vadd.f32 %v6434, %v6601
      %v6680 = vadd.f32 %v6435, %v6604
      %v6681 = vadd.f32 %v6436, %v6609
      %v6682 = vadd.f32 %v6437, %v6612
      %v6683 = vadd.f32 %v6438, %v6617
      %v6684 = vadd.f32 %v6439, %v6620
      %v6685 = vadd.f32 %v6440, %v6625
      %v6686 = vadd.f32 %v6441, %v6628
      %v6687 = vadd.f32 %v6442, %v6633
      %v6688 = vadd.f32 %v6443, %v6636
      %v6689 = vadd.f32 %v6444, %v6641
      %v6690 = vadd.f32 %v6445, %v6644
      %v6691 = vadd.f32 %v6446, %v6649
      %v6692 = vadd.f32 %v6447, %v6652
      %v6693 = vadd.f32 %v6448, %v6657
      %v6694 = vadd.f32 %v6449, %v6660
      %s6695 = scalar_lea.vmem %s1, 864
      %v6696 = vld [vmem:[%s6695] sm:$0xf]
      %v6697 = vld [vmem:[%s6695 + $0x4] sm:$0xf]
      %v6698 = vld [vmem:[%s6695 + $0x8] sm:$0xf]
      %v6699 = vld [vmem:[%s6695 + $0xc] sm:$0xf]
      %v6700 = vld [vmem:[%s6695 + $0x10] sm:$0xf]
      %v6701 = vld [vmem:[%s6695 + $0x14] sm:$0xf]
      %v6702 = vld [vmem:[%s6695 + $0x18] sm:$0xf]
      %v6703 = vld [vmem:[%s6695 + $0x1c] sm:$0xf]
      %v6704 = vld [vmem:[%s6695 + $0x20] sm:$0xf]
      %v6705 = vld [vmem:[%s6695 + $0x24] sm:$0xf]
      %v6706 = vld [vmem:[%s6695 + $0x28] sm:$0xf]
      %v6707 = vld [vmem:[%s6695 + $0x2c] sm:$0xf]
      %v6720 = vunpack.c.l.b16 %v6696
      %v6721 = vunpack.c.l.b16 %v6697
      %v6722 = vunpack.c.l.b16 %v6698
      %v6723 = vunpack.c.l.b16 %v6699
      %v6724 = vunpack.c.l.b16 %v6700
      %v6725 = vunpack.c.l.b16 %v6701
      %v6726 = vunpack.c.l.b16 %v6702
      %v6727 = vunpack.c.l.b16 %v6703
      %v6728 = vunpack.c.l.b16 %v6704
      %v6729 = vunpack.c.l.b16 %v6705
      %v6730 = vunpack.c.l.b16 %v6706
      %v6731 = vunpack.c.l.b16 %v6707
      %v6732 = vpack.c.b16 %v6721, %v6720
      %v6733 = vpack.c.b16 %v6723, %v6722
      %v6734 = vpack.c.b16 %v6725, %v6724
      %v6735 = vpack.c.b16 %v6727, %v6726
      %v6736 = vpack.c.b16 %v6729, %v6728
      %v6737 = vpack.c.b16 %v6731, %v6730
      %v6745 = vsel %vm1006, %v5731, 0
      %6747 = vmatprep.subr.bf16.mxu0 0
      %6748 = vmatpush1.bf16.msra.mxu0 0
      %6749 = vmatprep.subr.bf16.mxu0 0
      %6750 = vmatpush1.bf16.msra.mxu0 0
      %6751 = vmatprep.subr.bf16.mxu0 0
      %6752 = vmatpush1.bf16.msra.mxu0 %v6737
      %6753 = vmatprep.subr.bf16.mxu0 0
      %6754 = vmatpush1.bf16.msra.mxu0 %v6736
      %6755 = vmatprep.subr.bf16.mxu0 0
      %6756 = vmatpush1.bf16.msra.mxu0 %v6735
      %6757 = vmatprep.subr.bf16.mxu0 0
      %6758 = vmatpush1.bf16.msra.mxu0 %v6734
      %6759 = vmatprep.subr.bf16.mxu0 0
      %6760 = vmatpush1.bf16.msra.mxu0 %v6733
      %6761 = vmatprep.subr.bf16.mxu0 0
      %6762 = vmatpush1.bf16.msra.mxu0 %v6732
      %6763 = vmatprep.subr.bf16.mxu0 0
      %6764 = vmatpush2.bf16.msra.mxu0 0
      %6765 = vmatprep.subr.bf16.mxu0 0
      %6766 = vmatpush2.bf16.msra.mxu0 0
      %6767 = vmatprep.subr.bf16.mxu0 0
      %6768 = vmatpush2.bf16.msra.mxu0 0
      %6769 = vmatprep.subr.bf16.mxu0 0
      %6770 = vmatpush2.bf16.msra.mxu0 0
      %6771 = vmatprep.subr.bf16.mxu0 0
      %6772 = vmatpush2.bf16.msra.mxu0 0
      %6773 = vmatprep.subr.bf16.mxu0 0
      %6774 = vmatpush2.bf16.msra.mxu0 0
      %6775 = vmatprep.subr.bf16.mxu0 0
      %6776 = vmatpush2.bf16.msra.mxu0 0
      %6777 = vmatprep.subr.bf16.mxu0 0
      %6778 = vmatpush2.bf16.msra.mxu0 0
      %6779 = vmatprep.mubr.bf16.mxu0 0
      %6780 = vmatmul.mubr.bf16.gmra.mxu0 %v5806
      %v6781 = vpop.f32.mrf.mxu0
      %v6782 = vadd.f32 0.0, %v6781
      %v6783 = vpop.f32.mrf.mxu0
      %v6784 = vpop.f32.mrf.mxu0
      %v6785 = vadd.f32 0.0, %v6784
      %v6786 = vpop.f32.mrf.mxu0
      %6787 = vmatprep.mubr.bf16.mxu0 0
      %6788 = vmatmul.mubr.bf16.gmra.mxu0 %v5809
      %v6789 = vpop.f32.mrf.mxu0
      %v6790 = vadd.f32 0.0, %v6789
      %v6791 = vpop.f32.mrf.mxu0
      %v6792 = vpop.f32.mrf.mxu0
      %v6793 = vadd.f32 0.0, %v6792
      %v6794 = vpop.f32.mrf.mxu0
      %6795 = vmatprep.mubr.bf16.mxu0 0
      %6796 = vmatmul.mubr.bf16.gmra.mxu0 %v5812
      %v6797 = vpop.f32.mrf.mxu0
      %v6798 = vadd.f32 0.0, %v6797
      %v6799 = vpop.f32.mrf.mxu0
      %v6800 = vpop.f32.mrf.mxu0
      %v6801 = vadd.f32 0.0, %v6800
      %v6802 = vpop.f32.mrf.mxu0
      %6803 = vmatprep.mubr.bf16.mxu0 0
      %6804 = vmatmul.mubr.bf16.gmra.mxu0 %v5815
      %v6805 = vpop.f32.mrf.mxu0
      %v6806 = vadd.f32 0.0, %v6805
      %v6807 = vpop.f32.mrf.mxu0
      %v6808 = vpop.f32.mrf.mxu0
      %v6809 = vadd.f32 0.0, %v6808
      %v6810 = vpop.f32.mrf.mxu0
      %6811 = vmatprep.mubr.bf16.mxu0 0
      %6812 = vmatmul.mubr.bf16.gmra.mxu0 %v5818
      %v6813 = vpop.f32.mrf.mxu0
      %v6814 = vadd.f32 0.0, %v6813
      %v6815 = vpop.f32.mrf.mxu0
      %v6816 = vpop.f32.mrf.mxu0
      %v6817 = vadd.f32 0.0, %v6816
      %v6818 = vpop.f32.mrf.mxu0
      %6819 = vmatprep.mubr.bf16.mxu0 0
      %6820 = vmatmul.mubr.bf16.gmra.mxu0 %v5821
      %v6821 = vpop.f32.mrf.mxu0
      %v6822 = vadd.f32 0.0, %v6821
      %v6823 = vpop.f32.mrf.mxu0
      %v6824 = vpop.f32.mrf.mxu0
      %v6825 = vadd.f32 0.0, %v6824
      %v6826 = vpop.f32.mrf.mxu0
      %6827 = vmatprep.mubr.bf16.mxu0 0
      %6828 = vmatmul.mubr.bf16.gmra.mxu0 %v5824
      %v6829 = vpop.f32.mrf.mxu0
      %v6830 = vadd.f32 0.0, %v6829
      %v6831 = vpop.f32.mrf.mxu0
      %v6832 = vpop.f32.mrf.mxu0
      %v6833 = vadd.f32 0.0, %v6832
      %v6834 = vpop.f32.mrf.mxu0
      %6835 = vmatprep.mubr.bf16.mxu0 0
      %6836 = vmatmul.mubr.bf16.gmra.mxu0 %v5827
      %v6837 = vpop.f32.mrf.mxu0
      %v6838 = vadd.f32 0.0, %v6837
      %v6839 = vpop.f32.mrf.mxu0
      %v6840 = vpop.f32.mrf.mxu0
      %v6841 = vadd.f32 0.0, %v6840
      %v6842 = vpop.f32.mrf.mxu0
      %6843 = vmatprep.mubr.bf16.mxu0 0
      %6844 = vmatmul.mubr.bf16.gmra.mxu0 %v5830
      %v6845 = vpop.f32.mrf.mxu0
      %v6846 = vadd.f32 0.0, %v6845
      %v6847 = vpop.f32.mrf.mxu0
      %v6848 = vpop.f32.mrf.mxu0
      %v6849 = vadd.f32 0.0, %v6848
      %v6850 = vpop.f32.mrf.mxu0
      %6851 = vmatprep.mubr.bf16.mxu0 0
      %6852 = vmatmul.mubr.bf16.gmra.mxu0 %v5833
      %v6853 = vpop.f32.mrf.mxu0
      %v6854 = vadd.f32 0.0, %v6853
      %v6855 = vpop.f32.mrf.mxu0
      %v6856 = vpop.f32.mrf.mxu0
      %v6857 = vadd.f32 0.0, %v6856
      %v6858 = vpop.f32.mrf.mxu0
      %6859 = vmatprep.mubr.bf16.mxu0 0
      %6860 = vmatmul.mubr.bf16.gmra.mxu0 %v5836
      %v6861 = vpop.f32.mrf.mxu0
      %v6862 = vadd.f32 0.0, %v6861
      %v6863 = vpop.f32.mrf.mxu0
      %v6864 = vpop.f32.mrf.mxu0
      %v6865 = vadd.f32 0.0, %v6864
      %v6866 = vpop.f32.mrf.mxu0
      %6867 = vmatprep.mubr.bf16.mxu0 0
      %6868 = vmatmul.mubr.bf16.gmra.mxu0 %v5839
      %v6869 = vpop.f32.mrf.mxu0
      %v6870 = vadd.f32 0.0, %v6869
      %v6871 = vpop.f32.mrf.mxu0
      %v6872 = vpop.f32.mrf.mxu0
      %v6873 = vadd.f32 0.0, %v6872
      %v6874 = vpop.f32.mrf.mxu0
      %6875 = vmatprep.mubr.bf16.mxu0 0
      %6876 = vmatmul.mubr.bf16.gmra.mxu0 %v5842
      %v6877 = vpop.f32.mrf.mxu0
      %v6878 = vadd.f32 0.0, %v6877
      %v6879 = vpop.f32.mrf.mxu0
      %v6880 = vpop.f32.mrf.mxu0
      %v6881 = vadd.f32 0.0, %v6880
      %v6882 = vpop.f32.mrf.mxu0
      %6883 = vmatprep.mubr.bf16.mxu0 0
      %6884 = vmatmul.mubr.bf16.gmra.mxu0 %v6255
      %v6885 = vpop.f32.mrf.mxu0
      %v6886 = vadd.f32 0.0, %v6885
      %v6887 = vpop.f32.mrf.mxu0
      %v6888 = vpop.f32.mrf.mxu0
      %v6889 = vadd.f32 0.0, %v6888
      %v6890 = vpop.f32.mrf.mxu0
      %6891 = vmatprep.mubr.bf16.mxu0 0
      %6892 = vmatmul.mubr.bf16.gmra.mxu0 %v6500
      %v6893 = vpop.f32.mrf.mxu0
      %v6894 = vadd.f32 0.0, %v6893
      %v6895 = vpop.f32.mrf.mxu0
      %v6896 = vpop.f32.mrf.mxu0
      %v6897 = vadd.f32 0.0, %v6896
      %v6898 = vpop.f32.mrf.mxu0
      %6899 = vmatprep.mubr.bf16.mxu0 0
      %6900 = vmatmul.mubr.bf16.gmra.mxu0 %v6745
      %v6901 = vpop.f32.mrf.mxu0
      %v6902 = vadd.f32 0.0, %v6901
      %v6903 = vpop.f32.mrf.mxu0
      %v6904 = vpop.f32.mrf.mxu0
      %v6905 = vadd.f32 0.0, %v6904
      %v6906 = vpop.f32.mrf.mxu0
      %6907 = vdwg.mxu0
      %v6908 = vadd.f32 %v6663, %v6782
      %v6909 = vadd.f32 %v6664, %v6785
      %v6910 = vadd.f32 %v6665, %v6790
      %v6911 = vadd.f32 %v6666, %v6793
      %v6912 = vadd.f32 %v6667, %v6798
      %v6913 = vadd.f32 %v6668, %v6801
      %v6914 = vadd.f32 %v6669, %v6806
      %v6915 = vadd.f32 %v6670, %v6809
      %v6916 = vadd.f32 %v6671, %v6814
      %v6917 = vadd.f32 %v6672, %v6817
      %v6918 = vadd.f32 %v6673, %v6822
      %v6919 = vadd.f32 %v6674, %v6825
      %v6920 = vadd.f32 %v6675, %v6830
      %v6921 = vadd.f32 %v6676, %v6833
      %v6922 = vadd.f32 %v6677, %v6838
      %v6923 = vadd.f32 %v6678, %v6841
      %v6924 = vadd.f32 %v6679, %v6846
      %v6925 = vadd.f32 %v6680, %v6849
      %v6926 = vadd.f32 %v6681, %v6854
      %v6927 = vadd.f32 %v6682, %v6857
      %v6928 = vadd.f32 %v6683, %v6862
      %v6929 = vadd.f32 %v6684, %v6865
      %v6930 = vadd.f32 %v6685, %v6870
      %v6931 = vadd.f32 %v6686, %v6873
      %v6932 = vadd.f32 %v6687, %v6878
      %v6933 = vadd.f32 %v6688, %v6881
      %v6934 = vadd.f32 %v6689, %v6886
      %v6935 = vadd.f32 %v6690, %v6889
      %v6936 = vadd.f32 %v6691, %v6894
      %v6937 = vadd.f32 %v6692, %v6897
      %v6938 = vadd.f32 %v6693, %v6902
      %v6939 = vadd.f32 %v6694, %v6905
      %s6940 = scalar_lea.vmem %s1, 912
      %v6941 = vld [vmem:[%s6940] sm:$0xf]
      %v6942 = vld [vmem:[%s6940 + $0x4] sm:$0xf]
      %v6943 = vld [vmem:[%s6940 + $0x8] sm:$0xf]
      %v6944 = vld [vmem:[%s6940 + $0xc] sm:$0xf]
      %v6945 = vld [vmem:[%s6940 + $0x10] sm:$0xf]
      %v6946 = vld [vmem:[%s6940 + $0x14] sm:$0xf]
      %v6947 = vld [vmem:[%s6940 + $0x18] sm:$0xf]
      %v6948 = vld [vmem:[%s6940 + $0x1c] sm:$0xf]
      %v6949 = vld [vmem:[%s6940 + $0x20] sm:$0xf]
      %v6950 = vld [vmem:[%s6940 + $0x24] sm:$0xf]
      %v6951 = vld [vmem:[%s6940 + $0x28] sm:$0xf]
      %v6952 = vld [vmem:[%s6940 + $0x2c] sm:$0xf]
      %v6965 = vunpack.c.l.b16 %v6941
      %v6966 = vunpack.c.l.b16 %v6942
      %v6967 = vunpack.c.l.b16 %v6943
      %v6968 = vunpack.c.l.b16 %v6944
      %v6969 = vunpack.c.l.b16 %v6945
      %v6970 = vunpack.c.l.b16 %v6946
      %v6971 = vunpack.c.l.b16 %v6947
      %v6972 = vunpack.c.l.b16 %v6948
      %v6973 = vunpack.c.l.b16 %v6949
      %v6974 = vunpack.c.l.b16 %v6950
      %v6975 = vunpack.c.l.b16 %v6951
      %v6976 = vunpack.c.l.b16 %v6952
      %v6977 = vpack.c.b16 %v6966, %v6965
      %v6978 = vpack.c.b16 %v6968, %v6967
      %v6979 = vpack.c.b16 %v6970, %v6969
      %v6980 = vpack.c.b16 %v6972, %v6971
      %v6981 = vpack.c.b16 %v6974, %v6973
      %v6982 = vpack.c.b16 %v6976, %v6975
      %v6990 = vsel %vm1006, %v5732, 0
      %6992 = vmatprep.subr.bf16.mxu0 0
      %6993 = vmatpush1.bf16.msra.mxu0 0
      %6994 = vmatprep.subr.bf16.mxu0 0
      %6995 = vmatpush1.bf16.msra.mxu0 0
      %6996 = vmatprep.subr.bf16.mxu0 0
      %6997 = vmatpush1.bf16.msra.mxu0 %v6982
      %6998 = vmatprep.subr.bf16.mxu0 0
      %6999 = vmatpush1.bf16.msra.mxu0 %v6981
      %7000 = vmatprep.subr.bf16.mxu0 0
      %7001 = vmatpush1.bf16.msra.mxu0 %v6980
      %7002 = vmatprep.subr.bf16.mxu0 0
      %7003 = vmatpush1.bf16.msra.mxu0 %v6979
      %7004 = vmatprep.subr.bf16.mxu0 0
      %7005 = vmatpush1.bf16.msra.mxu0 %v6978
      %7006 = vmatprep.subr.bf16.mxu0 0
      %7007 = vmatpush1.bf16.msra.mxu0 %v6977
      %7008 = vmatprep.subr.bf16.mxu0 0
      %7009 = vmatpush2.bf16.msra.mxu0 0
      %7010 = vmatprep.subr.bf16.mxu0 0
      %7011 = vmatpush2.bf16.msra.mxu0 0
      %7012 = vmatprep.subr.bf16.mxu0 0
      %7013 = vmatpush2.bf16.msra.mxu0 0
      %7014 = vmatprep.subr.bf16.mxu0 0
      %7015 = vmatpush2.bf16.msra.mxu0 0
      %7016 = vmatprep.subr.bf16.mxu0 0
      %7017 = vmatpush2.bf16.msra.mxu0 0
      %7018 = vmatprep.subr.bf16.mxu0 0
      %7019 = vmatpush2.bf16.msra.mxu0 0
      %7020 = vmatprep.subr.bf16.mxu0 0
      %7021 = vmatpush2.bf16.msra.mxu0 0
      %7022 = vmatprep.subr.bf16.mxu0 0
      %7023 = vmatpush2.bf16.msra.mxu0 0
      %7024 = vmatprep.mubr.bf16.mxu0 0
      %7025 = vmatmul.mubr.bf16.gmra.mxu0 %v5809
      %v7026 = vpop.f32.mrf.mxu0
      %v7027 = vadd.f32 0.0, %v7026
      %v7028 = vpop.f32.mrf.mxu0
      %v7029 = vpop.f32.mrf.mxu0
      %v7030 = vadd.f32 0.0, %v7029
      %v7031 = vpop.f32.mrf.mxu0
      %7032 = vmatprep.mubr.bf16.mxu0 0
      %7033 = vmatmul.mubr.bf16.gmra.mxu0 %v5812
      %v7034 = vpop.f32.mrf.mxu0
      %v7035 = vadd.f32 0.0, %v7034
      %v7036 = vpop.f32.mrf.mxu0
      %v7037 = vpop.f32.mrf.mxu0
      %v7038 = vadd.f32 0.0, %v7037
      %v7039 = vpop.f32.mrf.mxu0
      %7040 = vmatprep.mubr.bf16.mxu0 0
      %7041 = vmatmul.mubr.bf16.gmra.mxu0 %v5815
      %v7042 = vpop.f32.mrf.mxu0
      %v7043 = vadd.f32 0.0, %v7042
      %v7044 = vpop.f32.mrf.mxu0
      %v7045 = vpop.f32.mrf.mxu0
      %v7046 = vadd.f32 0.0, %v7045
      %v7047 = vpop.f32.mrf.mxu0
      %7048 = vmatprep.mubr.bf16.mxu0 0
      %7049 = vmatmul.mubr.bf16.gmra.mxu0 %v5818
      %v7050 = vpop.f32.mrf.mxu0
      %v7051 = vadd.f32 0.0, %v7050
      %v7052 = vpop.f32.mrf.mxu0
      %v7053 = vpop.f32.mrf.mxu0
      %v7054 = vadd.f32 0.0, %v7053
      %v7055 = vpop.f32.mrf.mxu0
      %7056 = vmatprep.mubr.bf16.mxu0 0
      %7057 = vmatmul.mubr.bf16.gmra.mxu0 %v5821
      %v7058 = vpop.f32.mrf.mxu0
      %v7059 = vadd.f32 0.0, %v7058
      %v7060 = vpop.f32.mrf.mxu0
      %v7061 = vpop.f32.mrf.mxu0
      %v7062 = vadd.f32 0.0, %v7061
      %v7063 = vpop.f32.mrf.mxu0
      %7064 = vmatprep.mubr.bf16.mxu0 0
      %7065 = vmatmul.mubr.bf16.gmra.mxu0 %v5824
      %v7066 = vpop.f32.mrf.mxu0
      %v7067 = vadd.f32 0.0, %v7066
      %v7068 = vpop.f32.mrf.mxu0
      %v7069 = vpop.f32.mrf.mxu0
      %v7070 = vadd.f32 0.0, %v7069
      %v7071 = vpop.f32.mrf.mxu0
      %7072 = vmatprep.mubr.bf16.mxu0 0
      %7073 = vmatmul.mubr.bf16.gmra.mxu0 %v5827
      %v7074 = vpop.f32.mrf.mxu0
      %v7075 = vadd.f32 0.0, %v7074
      %v7076 = vpop.f32.mrf.mxu0
      %v7077 = vpop.f32.mrf.mxu0
      %v7078 = vadd.f32 0.0, %v7077
      %v7079 = vpop.f32.mrf.mxu0
      %7080 = vmatprep.mubr.bf16.mxu0 0
      %7081 = vmatmul.mubr.bf16.gmra.mxu0 %v5830
      %v7082 = vpop.f32.mrf.mxu0
      %v7083 = vadd.f32 0.0, %v7082
      %v7084 = vpop.f32.mrf.mxu0
      %v7085 = vpop.f32.mrf.mxu0
      %v7086 = vadd.f32 0.0, %v7085
      %v7087 = vpop.f32.mrf.mxu0
      %7088 = vmatprep.mubr.bf16.mxu0 0
      %7089 = vmatmul.mubr.bf16.gmra.mxu0 %v5833
      %v7090 = vpop.f32.mrf.mxu0
      %v7091 = vadd.f32 0.0, %v7090
      %v7092 = vpop.f32.mrf.mxu0
      %v7093 = vpop.f32.mrf.mxu0
      %v7094 = vadd.f32 0.0, %v7093
      %v7095 = vpop.f32.mrf.mxu0
      %7096 = vmatprep.mubr.bf16.mxu0 0
      %7097 = vmatmul.mubr.bf16.gmra.mxu0 %v5836
      %v7098 = vpop.f32.mrf.mxu0
      %v7099 = vadd.f32 0.0, %v7098
      %v7100 = vpop.f32.mrf.mxu0
      %v7101 = vpop.f32.mrf.mxu0
      %v7102 = vadd.f32 0.0, %v7101
      %v7103 = vpop.f32.mrf.mxu0
      %7104 = vmatprep.mubr.bf16.mxu0 0
      %7105 = vmatmul.mubr.bf16.gmra.mxu0 %v5839
      %v7106 = vpop.f32.mrf.mxu0
      %v7107 = vadd.f32 0.0, %v7106
      %v7108 = vpop.f32.mrf.mxu0
      %v7109 = vpop.f32.mrf.mxu0
      %v7110 = vadd.f32 0.0, %v7109
      %v7111 = vpop.f32.mrf.mxu0
      %7112 = vmatprep.mubr.bf16.mxu0 0
      %7113 = vmatmul.mubr.bf16.gmra.mxu0 %v5842
      %v7114 = vpop.f32.mrf.mxu0
      %v7115 = vadd.f32 0.0, %v7114
      %v7116 = vpop.f32.mrf.mxu0
      %v7117 = vpop.f32.mrf.mxu0
      %v7118 = vadd.f32 0.0, %v7117
      %v7119 = vpop.f32.mrf.mxu0
      %7120 = vmatprep.mubr.bf16.mxu0 0
      %7121 = vmatmul.mubr.bf16.gmra.mxu0 %v6255
      %v7122 = vpop.f32.mrf.mxu0
      %v7123 = vadd.f32 0.0, %v7122
      %v7124 = vpop.f32.mrf.mxu0
      %v7125 = vpop.f32.mrf.mxu0
      %v7126 = vadd.f32 0.0, %v7125
      %v7127 = vpop.f32.mrf.mxu0
      %7128 = vmatprep.mubr.bf16.mxu0 0
      %7129 = vmatmul.mubr.bf16.gmra.mxu0 %v6500
      %v7130 = vpop.f32.mrf.mxu0
      %v7131 = vadd.f32 0.0, %v7130
      %v7132 = vpop.f32.mrf.mxu0
      %v7133 = vpop.f32.mrf.mxu0
      %v7134 = vadd.f32 0.0, %v7133
      %v7135 = vpop.f32.mrf.mxu0
      %7136 = vmatprep.mubr.bf16.mxu0 0
      %7137 = vmatmul.mubr.bf16.gmra.mxu0 %v6745
      %v7138 = vpop.f32.mrf.mxu0
      %v7139 = vadd.f32 0.0, %v7138
      %v7140 = vpop.f32.mrf.mxu0
      %v7141 = vpop.f32.mrf.mxu0
      %v7142 = vadd.f32 0.0, %v7141
      %v7143 = vpop.f32.mrf.mxu0
      %7144 = vmatprep.mubr.bf16.mxu0 0
      %7145 = vmatmul.mubr.bf16.gmra.mxu0 %v6990
      %v7146 = vpop.f32.mrf.mxu0
      %v7147 = vadd.f32 0.0, %v7146
      %v7148 = vpop.f32.mrf.mxu0
      %v7149 = vpop.f32.mrf.mxu0
      %v7150 = vadd.f32 0.0, %v7149
      %v7151 = vpop.f32.mrf.mxu0
      %7152 = vdwg.mxu0
      %v7153 = vadd.f32 %v6908, %v7027
      %v7154 = vadd.f32 %v6909, %v7030
      %v7155 = vadd.f32 %v6910, %v7035
      %v7156 = vadd.f32 %v6911, %v7038
      %v7157 = vadd.f32 %v6912, %v7043
      %v7158 = vadd.f32 %v6913, %v7046
      %v7159 = vadd.f32 %v6914, %v7051
      %v7160 = vadd.f32 %v6915, %v7054
      %v7161 = vadd.f32 %v6916, %v7059
      %v7162 = vadd.f32 %v6917, %v7062
      %v7163 = vadd.f32 %v6918, %v7067
      %v7164 = vadd.f32 %v6919, %v7070
      %v7165 = vadd.f32 %v6920, %v7075
      %v7166 = vadd.f32 %v6921, %v7078
      %v7167 = vadd.f32 %v6922, %v7083
      %v7168 = vadd.f32 %v6923, %v7086
      %v7169 = vadd.f32 %v6924, %v7091
      %v7170 = vadd.f32 %v6925, %v7094
      %v7171 = vadd.f32 %v6926, %v7099
      %v7172 = vadd.f32 %v6927, %v7102
      %v7173 = vadd.f32 %v6928, %v7107
      %v7174 = vadd.f32 %v6929, %v7110
      %v7175 = vadd.f32 %v6930, %v7115
      %v7176 = vadd.f32 %v6931, %v7118
      %v7177 = vadd.f32 %v6932, %v7123
      %v7178 = vadd.f32 %v6933, %v7126
      %v7179 = vadd.f32 %v6934, %v7131
      %v7180 = vadd.f32 %v6935, %v7134
      %v7181 = vadd.f32 %v6936, %v7139
      %v7182 = vadd.f32 %v6937, %v7142
      %v7183 = vadd.f32 %v6938, %v7147
      %v7184 = vadd.f32 %v6939, %v7150
      %s7185 = scalar_lea.vmem %s1, 960
      %v7186 = vld [vmem:[%s7185] sm:$0xf]
      %v7187 = vld [vmem:[%s7185 + $0x4] sm:$0xf]
      %v7188 = vld [vmem:[%s7185 + $0x8] sm:$0xf]
      %v7189 = vld [vmem:[%s7185 + $0xc] sm:$0xf]
      %v7190 = vld [vmem:[%s7185 + $0x10] sm:$0xf]
      %v7191 = vld [vmem:[%s7185 + $0x14] sm:$0xf]
      %v7192 = vld [vmem:[%s7185 + $0x18] sm:$0xf]
      %v7193 = vld [vmem:[%s7185 + $0x1c] sm:$0xf]
      %v7194 = vld [vmem:[%s7185 + $0x20] sm:$0xf]
      %v7195 = vld [vmem:[%s7185 + $0x24] sm:$0xf]
      %v7196 = vld [vmem:[%s7185 + $0x28] sm:$0xf]
      %v7197 = vld [vmem:[%s7185 + $0x2c] sm:$0xf]
      %v7210 = vunpack.c.l.b16 %v7186
      %v7211 = vunpack.c.l.b16 %v7187
      %v7212 = vunpack.c.l.b16 %v7188
      %v7213 = vunpack.c.l.b16 %v7189
      %v7214 = vunpack.c.l.b16 %v7190
      %v7215 = vunpack.c.l.b16 %v7191
      %v7216 = vunpack.c.l.b16 %v7192
      %v7217 = vunpack.c.l.b16 %v7193
      %v7218 = vunpack.c.l.b16 %v7194
      %v7219 = vunpack.c.l.b16 %v7195
      %v7220 = vunpack.c.l.b16 %v7196
      %v7221 = vunpack.c.l.b16 %v7197
      %v7222 = vpack.c.b16 %v7211, %v7210
      %v7223 = vpack.c.b16 %v7213, %v7212
      %v7224 = vpack.c.b16 %v7215, %v7214
      %v7225 = vpack.c.b16 %v7217, %v7216
      %v7226 = vpack.c.b16 %v7219, %v7218
      %v7227 = vpack.c.b16 %v7221, %v7220
      %v7235 = vsel %vm1006, %v5733, 0
      %7237 = vmatprep.subr.bf16.mxu0 0
      %7238 = vmatpush1.bf16.msra.mxu0 0
      %7239 = vmatprep.subr.bf16.mxu0 0
      %7240 = vmatpush1.bf16.msra.mxu0 0
      %7241 = vmatprep.subr.bf16.mxu0 0
      %7242 = vmatpush1.bf16.msra.mxu0 %v7227
      %7243 = vmatprep.subr.bf16.mxu0 0
      %7244 = vmatpush1.bf16.msra.mxu0 %v7226
      %7245 = vmatprep.subr.bf16.mxu0 0
      %7246 = vmatpush1.bf16.msra.mxu0 %v7225
      %7247 = vmatprep.subr.bf16.mxu0 0
      %7248 = vmatpush1.bf16.msra.mxu0 %v7224
      %7249 = vmatprep.subr.bf16.mxu0 0
      %7250 = vmatpush1.bf16.msra.mxu0 %v7223
      %7251 = vmatprep.subr.bf16.mxu0 0
      %7252 = vmatpush1.bf16.msra.mxu0 %v7222
      %7253 = vmatprep.subr.bf16.mxu0 0
      %7254 = vmatpush2.bf16.msra.mxu0 0
      %7255 = vmatprep.subr.bf16.mxu0 0
      %7256 = vmatpush2.bf16.msra.mxu0 0
      %7257 = vmatprep.subr.bf16.mxu0 0
      %7258 = vmatpush2.bf16.msra.mxu0 0
      %7259 = vmatprep.subr.bf16.mxu0 0
      %7260 = vmatpush2.bf16.msra.mxu0 0
      %7261 = vmatprep.subr.bf16.mxu0 0
      %7262 = vmatpush2.bf16.msra.mxu0 0
      %7263 = vmatprep.subr.bf16.mxu0 0
      %7264 = vmatpush2.bf16.msra.mxu0 0
      %7265 = vmatprep.subr.bf16.mxu0 0
      %7266 = vmatpush2.bf16.msra.mxu0 0
      %7267 = vmatprep.subr.bf16.mxu0 0
      %7268 = vmatpush2.bf16.msra.mxu0 0
      %7269 = vmatprep.mubr.bf16.mxu0 0
      %7270 = vmatmul.mubr.bf16.gmra.mxu0 %v5812
      %v7271 = vpop.f32.mrf.mxu0
      %v7272 = vadd.f32 0.0, %v7271
      %v7273 = vpop.f32.mrf.mxu0
      %v7274 = vpop.f32.mrf.mxu0
      %v7275 = vadd.f32 0.0, %v7274
      %v7276 = vpop.f32.mrf.mxu0
      %7277 = vmatprep.mubr.bf16.mxu0 0
      %7278 = vmatmul.mubr.bf16.gmra.mxu0 %v5815
      %v7279 = vpop.f32.mrf.mxu0
      %v7280 = vadd.f32 0.0, %v7279
      %v7281 = vpop.f32.mrf.mxu0
      %v7282 = vpop.f32.mrf.mxu0
      %v7283 = vadd.f32 0.0, %v7282
      %v7284 = vpop.f32.mrf.mxu0
      %7285 = vmatprep.mubr.bf16.mxu0 0
      %7286 = vmatmul.mubr.bf16.gmra.mxu0 %v5818
      %v7287 = vpop.f32.mrf.mxu0
      %v7288 = vadd.f32 0.0, %v7287
      %v7289 = vpop.f32.mrf.mxu0
      %v7290 = vpop.f32.mrf.mxu0
      %v7291 = vadd.f32 0.0, %v7290
      %v7292 = vpop.f32.mrf.mxu0
      %7293 = vmatprep.mubr.bf16.mxu0 0
      %7294 = vmatmul.mubr.bf16.gmra.mxu0 %v5821
      %v7295 = vpop.f32.mrf.mxu0
      %v7296 = vadd.f32 0.0, %v7295
      %v7297 = vpop.f32.mrf.mxu0
      %v7298 = vpop.f32.mrf.mxu0
      %v7299 = vadd.f32 0.0, %v7298
      %v7300 = vpop.f32.mrf.mxu0
      %7301 = vmatprep.mubr.bf16.mxu0 0
      %7302 = vmatmul.mubr.bf16.gmra.mxu0 %v5824
      %v7303 = vpop.f32.mrf.mxu0
      %v7304 = vadd.f32 0.0, %v7303
      %v7305 = vpop.f32.mrf.mxu0
      %v7306 = vpop.f32.mrf.mxu0
      %v7307 = vadd.f32 0.0, %v7306
      %v7308 = vpop.f32.mrf.mxu0
      %7309 = vmatprep.mubr.bf16.mxu0 0
      %7310 = vmatmul.mubr.bf16.gmra.mxu0 %v5827
      %v7311 = vpop.f32.mrf.mxu0
      %v7312 = vadd.f32 0.0, %v7311
      %v7313 = vpop.f32.mrf.mxu0
      %v7314 = vpop.f32.mrf.mxu0
      %v7315 = vadd.f32 0.0, %v7314
      %v7316 = vpop.f32.mrf.mxu0
      %7317 = vmatprep.mubr.bf16.mxu0 0
      %7318 = vmatmul.mubr.bf16.gmra.mxu0 %v5830
      %v7319 = vpop.f32.mrf.mxu0
      %v7320 = vadd.f32 0.0, %v7319
      %v7321 = vpop.f32.mrf.mxu0
      %v7322 = vpop.f32.mrf.mxu0
      %v7323 = vadd.f32 0.0, %v7322
      %v7324 = vpop.f32.mrf.mxu0
      %7325 = vmatprep.mubr.bf16.mxu0 0
      %7326 = vmatmul.mubr.bf16.gmra.mxu0 %v5833
      %v7327 = vpop.f32.mrf.mxu0
      %v7328 = vadd.f32 0.0, %v7327
      %v7329 = vpop.f32.mrf.mxu0
      %v7330 = vpop.f32.mrf.mxu0
      %v7331 = vadd.f32 0.0, %v7330
      %v7332 = vpop.f32.mrf.mxu0
      %7333 = vmatprep.mubr.bf16.mxu0 0
      %7334 = vmatmul.mubr.bf16.gmra.mxu0 %v5836
      %v7335 = vpop.f32.mrf.mxu0
      %v7336 = vadd.f32 0.0, %v7335
      %v7337 = vpop.f32.mrf.mxu0
      %v7338 = vpop.f32.mrf.mxu0
      %v7339 = vadd.f32 0.0, %v7338
      %v7340 = vpop.f32.mrf.mxu0
      %7341 = vmatprep.mubr.bf16.mxu0 0
      %7342 = vmatmul.mubr.bf16.gmra.mxu0 %v5839
      %v7343 = vpop.f32.mrf.mxu0
      %v7344 = vadd.f32 0.0, %v7343
      %v7345 = vpop.f32.mrf.mxu0
      %v7346 = vpop.f32.mrf.mxu0
      %v7347 = vadd.f32 0.0, %v7346
      %v7348 = vpop.f32.mrf.mxu0
      %7349 = vmatprep.mubr.bf16.mxu0 0
      %7350 = vmatmul.mubr.bf16.gmra.mxu0 %v5842
      %v7351 = vpop.f32.mrf.mxu0
      %v7352 = vadd.f32 0.0, %v7351
      %v7353 = vpop.f32.mrf.mxu0
      %v7354 = vpop.f32.mrf.mxu0
      %v7355 = vadd.f32 0.0, %v7354
      %v7356 = vpop.f32.mrf.mxu0
      %7357 = vmatprep.mubr.bf16.mxu0 0
      %7358 = vmatmul.mubr.bf16.gmra.mxu0 %v6255
      %v7359 = vpop.f32.mrf.mxu0
      %v7360 = vadd.f32 0.0, %v7359
      %v7361 = vpop.f32.mrf.mxu0
      %v7362 = vpop.f32.mrf.mxu0
      %v7363 = vadd.f32 0.0, %v7362
      %v7364 = vpop.f32.mrf.mxu0
      %7365 = vmatprep.mubr.bf16.mxu0 0
      %7366 = vmatmul.mubr.bf16.gmra.mxu0 %v6500
      %v7367 = vpop.f32.mrf.mxu0
      %v7368 = vadd.f32 0.0, %v7367
      %v7369 = vpop.f32.mrf.mxu0
      %v7370 = vpop.f32.mrf.mxu0
      %v7371 = vadd.f32 0.0, %v7370
      %v7372 = vpop.f32.mrf.mxu0
      %7373 = vmatprep.mubr.bf16.mxu0 0
      %7374 = vmatmul.mubr.bf16.gmra.mxu0 %v6745
      %v7375 = vpop.f32.mrf.mxu0
      %v7376 = vadd.f32 0.0, %v7375
      %v7377 = vpop.f32.mrf.mxu0
      %v7378 = vpop.f32.mrf.mxu0
      %v7379 = vadd.f32 0.0, %v7378
      %v7380 = vpop.f32.mrf.mxu0
      %7381 = vmatprep.mubr.bf16.mxu0 0
      %7382 = vmatmul.mubr.bf16.gmra.mxu0 %v6990
      %v7383 = vpop.f32.mrf.mxu0
      %v7384 = vadd.f32 0.0, %v7383
      %v7385 = vpop.f32.mrf.mxu0
      %v7386 = vpop.f32.mrf.mxu0
      %v7387 = vadd.f32 0.0, %v7386
      %v7388 = vpop.f32.mrf.mxu0
      %7389 = vmatprep.mubr.bf16.mxu0 0
      %7390 = vmatmul.mubr.bf16.gmra.mxu0 %v7235
      %v7391 = vpop.f32.mrf.mxu0
      %v7392 = vadd.f32 0.0, %v7391
      %v7393 = vpop.f32.mrf.mxu0
      %v7394 = vpop.f32.mrf.mxu0
      %v7395 = vadd.f32 0.0, %v7394
      %v7396 = vpop.f32.mrf.mxu0
      %7397 = vdwg.mxu0
      %v7398 = vadd.f32 %v7153, %v7272
      %v7399 = vadd.f32 %v7154, %v7275
      %v7400 = vadd.f32 %v7155, %v7280
      %v7401 = vadd.f32 %v7156, %v7283
      %v7402 = vadd.f32 %v7157, %v7288
      %v7403 = vadd.f32 %v7158, %v7291
      %v7404 = vadd.f32 %v7159, %v7296
      %v7405 = vadd.f32 %v7160, %v7299
      %v7406 = vadd.f32 %v7161, %v7304
      %v7407 = vadd.f32 %v7162, %v7307
      %v7408 = vadd.f32 %v7163, %v7312
      %v7409 = vadd.f32 %v7164, %v7315
      %v7410 = vadd.f32 %v7165, %v7320
      %v7411 = vadd.f32 %v7166, %v7323
      %v7412 = vadd.f32 %v7167, %v7328
      %v7413 = vadd.f32 %v7168, %v7331
      %v7414 = vadd.f32 %v7169, %v7336
      %v7415 = vadd.f32 %v7170, %v7339
      %v7416 = vadd.f32 %v7171, %v7344
      %v7417 = vadd.f32 %v7172, %v7347
      %v7418 = vadd.f32 %v7173, %v7352
      %v7419 = vadd.f32 %v7174, %v7355
      %v7420 = vadd.f32 %v7175, %v7360
      %v7421 = vadd.f32 %v7176, %v7363
      %v7422 = vadd.f32 %v7177, %v7368
      %v7423 = vadd.f32 %v7178, %v7371
      %v7424 = vadd.f32 %v7179, %v7376
      %v7425 = vadd.f32 %v7180, %v7379
      %v7426 = vadd.f32 %v7181, %v7384
      %v7427 = vadd.f32 %v7182, %v7387
      %v7428 = vadd.f32 %v7183, %v7392
      %v7429 = vadd.f32 %v7184, %v7395
      %s7430 = scalar_lea.vmem %s2, 2
      %v7431 = vld [vmem:[%s7430] sm:$0x1]
      %v7433 = vlaneseq
      %v7434 = vshrl.u32 %v7433, 7
      %v7435 = vsub.s32 0, %v7434
      %v7436 = vrot.slane %v7431, %v7435
      %v7438 = vadd.f32 %v7398, %v7436
      %v7439 = vadd.f32 %v7399, %v7436
      %v7440 = vadd.f32 %v7400, %v7436
      %v7441 = vadd.f32 %v7401, %v7436
      %v7442 = vadd.f32 %v7402, %v7436
      %v7443 = vadd.f32 %v7403, %v7436
      %v7444 = vadd.f32 %v7404, %v7436
      %v7445 = vadd.f32 %v7405, %v7436
      %v7446 = vadd.f32 %v7406, %v7436
      %v7447 = vadd.f32 %v7407, %v7436
      %v7448 = vadd.f32 %v7408, %v7436
      %v7449 = vadd.f32 %v7409, %v7436
      %v7450 = vadd.f32 %v7410, %v7436
      %v7451 = vadd.f32 %v7411, %v7436
      %v7452 = vadd.f32 %v7412, %v7436
      %v7453 = vadd.f32 %v7413, %v7436
      %v7454 = vadd.f32 %v7414, %v7436
      %v7455 = vadd.f32 %v7415, %v7436
      %v7456 = vadd.f32 %v7416, %v7436
      %v7457 = vadd.f32 %v7417, %v7436
      %v7458 = vadd.f32 %v7418, %v7436
      %v7459 = vadd.f32 %v7419, %v7436
      %v7460 = vadd.f32 %v7420, %v7436
      %v7461 = vadd.f32 %v7421, %v7436
      %v7462 = vadd.f32 %v7422, %v7436
      %v7463 = vadd.f32 %v7423, %v7436
      %v7464 = vadd.f32 %v7424, %v7436
      %v7465 = vadd.f32 %v7425, %v7436
      %v7466 = vadd.f32 %v7426, %v7436
      %v7467 = vadd.f32 %v7427, %v7436
      %v7468 = vadd.f32 %v7428, %v7436
      %v7469 = vadd.f32 %v7429, %v7436
      %v7470 = vmax.f32 %v7438, 0.0
      %v7471 = vmax.f32 %v7439, 0.0
      %v7472 = vmax.f32 %v7440, 0.0
      %v7473 = vmax.f32 %v7441, 0.0
      %v7474 = vmax.f32 %v7442, 0.0
      %v7475 = vmax.f32 %v7443, 0.0
      %v7476 = vmax.f32 %v7444, 0.0
      %v7477 = vmax.f32 %v7445, 0.0
      %v7478 = vmax.f32 %v7446, 0.0
      %v7479 = vmax.f32 %v7447, 0.0
      %v7480 = vmax.f32 %v7448, 0.0
      %v7481 = vmax.f32 %v7449, 0.0
      %v7482 = vmax.f32 %v7450, 0.0
      %v7483 = vmax.f32 %v7451, 0.0
      %v7484 = vmax.f32 %v7452, 0.0
      %v7485 = vmax.f32 %v7453, 0.0
      %v7486 = vmax.f32 %v7454, 0.0
      %v7487 = vmax.f32 %v7455, 0.0
      %v7488 = vmax.f32 %v7456, 0.0
      %v7489 = vmax.f32 %v7457, 0.0
      %v7490 = vmax.f32 %v7458, 0.0
      %v7491 = vmax.f32 %v7459, 0.0
      %v7492 = vmax.f32 %v7460, 0.0
      %v7493 = vmax.f32 %v7461, 0.0
      %v7494 = vmax.f32 %v7462, 0.0
      %v7495 = vmax.f32 %v7463, 0.0
      %v7496 = vmax.f32 %v7464, 0.0
      %v7497 = vmax.f32 %v7465, 0.0
      %v7498 = vmax.f32 %v7466, 0.0
      %v7499 = vmax.f32 %v7467, 0.0
      %v7500 = vmax.f32 %v7468, 0.0
      %v7501 = vmax.f32 %v7469, 0.0
      %7502 = vst.msk [vmem:[%s2712 + $0x8] sm:$0xff] %vm172, %v7470
      %7503 = vst.msk [vmem:[%s2712 + $0x10] sm:$0xff] %vm172, %v7471
      %7504 = vst.msk [vmem:[%s2712 + $0x28] sm:$0xff] %vm172, %v7472
      %7505 = vst.msk [vmem:[%s2712 + $0x30] sm:$0xff] %vm172, %v7473
      %7506 = vst.msk [vmem:[%s2712 + $0x48] sm:$0xff] %vm172, %v7474
      %7507 = vst.msk [vmem:[%s2712 + $0x50] sm:$0xff] %vm172, %v7475
      %7508 = vst.msk [vmem:[%s2712 + $0x68] sm:$0xff] %vm172, %v7476
      %7509 = vst.msk [vmem:[%s2712 + $0x70] sm:$0xff] %vm172, %v7477
      %7510 = vst.msk [vmem:[%s2712 + $0x88] sm:$0xff] %vm172, %v7478
      %7511 = vst.msk [vmem:[%s2712 + $0x90] sm:$0xff] %vm172, %v7479
      %7512 = vst.msk [vmem:[%s2712 + $0xa8] sm:$0xff] %vm172, %v7480
      %7513 = vst.msk [vmem:[%s2712 + $0xb0] sm:$0xff] %vm172, %v7481
      %7514 = vst.msk [vmem:[%s2712 + $0xc8] sm:$0xff] %vm172, %v7482
      %7515 = vst.msk [vmem:[%s2712 + $0xd0] sm:$0xff] %vm172, %v7483
      %7516 = vst.msk [vmem:[%s2712 + $0xe8] sm:$0xff] %vm172, %v7484
      %7517 = vst.msk [vmem:[%s2712 + $0xf0] sm:$0xff] %vm172, %v7485
      %7518 = vst.msk [vmem:[%s2712 + $0x108] sm:$0xff] %vm172, %v7486
      %7519 = vst.msk [vmem:[%s2712 + $0x110] sm:$0xff] %vm172, %v7487
      %7520 = vst.msk [vmem:[%s2712 + $0x128] sm:$0xff] %vm172, %v7488
      %7521 = vst.msk [vmem:[%s2712 + $0x130] sm:$0xff] %vm172, %v7489
      %7522 = vst.msk [vmem:[%s2712 + $0x148] sm:$0xff] %vm172, %v7490
      %7523 = vst.msk [vmem:[%s2712 + $0x150] sm:$0xff] %vm172, %v7491
      %7524 = vst.msk [vmem:[%s2712 + $0x168] sm:$0xff] %vm172, %v7492
      %7525 = vst.msk [vmem:[%s2712 + $0x170] sm:$0xff] %vm172, %v7493
      %7526 = vst.msk [vmem:[%s2712 + $0x188] sm:$0xff] %vm172, %v7494
      %7527 = vst.msk [vmem:[%s2712 + $0x190] sm:$0xff] %vm172, %v7495
      %7528 = vst.msk [vmem:[%s2712 + $0x1a8] sm:$0xff] %vm172, %v7496
      %7529 = vst.msk [vmem:[%s2712 + $0x1b0] sm:$0xff] %vm172, %v7497
      %7530 = vst.msk [vmem:[%s2712 + $0x1c8] sm:$0xff] %vm172, %v7498
      %7531 = vst.msk [vmem:[%s2712 + $0x1d0] sm:$0xff] %vm172, %v7499
      %7532 = vst.msk [vmem:[%s2712 + $0x1e8] sm:$0xff] %vm172, %v7500
      %7533 = vst.msk [vmem:[%s2712 + $0x1f0] sm:$0xff] %vm172, %v7501
      %v7534 = vld [vmem:[#allocation2 + $0x7] sm:$0xff]
      %v7535 = vld [vmem:[#allocation2 + $0xf] sm:$0xff]
      %v7536 = vld [vmem:[#allocation2 + $0x27] sm:$0xff]
      %v7537 = vld [vmem:[#allocation2 + $0x2f] sm:$0xff]
      %v7538 = vld [vmem:[#allocation2 + $0x47] sm:$0xff]
      %v7539 = vld [vmem:[#allocation2 + $0x4f] sm:$0xff]
      %v7540 = vld [vmem:[#allocation2 + $0x67] sm:$0xff]
      %v7541 = vld [vmem:[#allocation2 + $0x6f] sm:$0xff]
      %v7542 = vld [vmem:[#allocation2 + $0x87] sm:$0xff]
      %v7543 = vld [vmem:[#allocation2 + $0x8f] sm:$0xff]
      %v7544 = vld [vmem:[#allocation2 + $0xa7] sm:$0xff]
      %v7545 = vld [vmem:[#allocation2 + $0xaf] sm:$0xff]
      %v7546 = vld [vmem:[#allocation2 + $0xc7] sm:$0xff]
      %v7547 = vld [vmem:[#allocation2 + $0xcf] sm:$0xff]
      %v7548 = vld [vmem:[#allocation2 + $0xe7] sm:$0xff]
      %v7549 = vld [vmem:[#allocation2 + $0xef] sm:$0xff]
      %v7550 = vld [vmem:[#allocation2 + $0x107] sm:$0xff]
      %v7551 = vld [vmem:[#allocation2 + $0x10f] sm:$0xff]
      %v7552 = vld [vmem:[#allocation2 + $0x127] sm:$0xff]
      %v7553 = vld [vmem:[#allocation2 + $0x12f] sm:$0xff]
      %v7554 = vld [vmem:[#allocation2 + $0x147] sm:$0xff]
      %v7555 = vld [vmem:[#allocation2 + $0x14f] sm:$0xff]
      %v7556 = vld [vmem:[#allocation2 + $0x167] sm:$0xff]
      %v7557 = vld [vmem:[#allocation2 + $0x16f] sm:$0xff]
      %v7558 = vld [vmem:[#allocation2 + $0x187] sm:$0xff]
      %v7559 = vld [vmem:[#allocation2 + $0x18f] sm:$0xff]
      %v7560 = vld [vmem:[#allocation2 + $0x1a7] sm:$0xff]
      %v7561 = vld [vmem:[#allocation2 + $0x1af] sm:$0xff]
      %v7562 = vld [vmem:[#allocation2 + $0x1c7] sm:$0xff]
      %v7563 = vld [vmem:[#allocation2 + $0x1cf] sm:$0xff]
      %v7564 = vld [vmem:[#allocation2 + $0x1e7] sm:$0xff]
      %v7565 = vld [vmem:[#allocation2 + $0x1ef] sm:$0xff]
      %v7566 = vld [vmem:[#allocation2 + $0x207] sm:$0xff]
      %v7567 = vld [vmem:[#allocation2 + $0x20f] sm:$0xff]
      %v7568 = vld [vmem:[#allocation2 + $0x227] sm:$0xff]
      %v7569 = vld [vmem:[#allocation2 + $0x22f] sm:$0xff]
      %v7570 = vld [vmem:[#allocation2 + $0x247] sm:$0xff]
      %v7571 = vld [vmem:[#allocation2 + $0x24f] sm:$0xff]
      %v7572 = vld [vmem:[#allocation2 + $0x267] sm:$0xff]
      %v7573 = vld [vmem:[#allocation2 + $0x26f] sm:$0xff]
      %v7574 = vld [vmem:[#allocation2 + $0x287] sm:$0xff]
      %v7575 = vld [vmem:[#allocation2 + $0x28f] sm:$0xff]
      %v7576 = vld [vmem:[#allocation2 + $0x2a7] sm:$0xff]
      %v7577 = vld [vmem:[#allocation2 + $0x2af] sm:$0xff]
      %v7578 = vld [vmem:[#allocation2 + $0x8] sm:$0xff]
      %v7579 = vld [vmem:[#allocation2 + $0x10] sm:$0xff]
      %v7580 = vld [vmem:[#allocation2 + $0x28] sm:$0xff]
      %v7581 = vld [vmem:[#allocation2 + $0x30] sm:$0xff]
      %v7582 = vld [vmem:[#allocation2 + $0x48] sm:$0xff]
      %v7583 = vld [vmem:[#allocation2 + $0x50] sm:$0xff]
      %v7584 = vld [vmem:[#allocation2 + $0x68] sm:$0xff]
      %v7585 = vld [vmem:[#allocation2 + $0x70] sm:$0xff]
      %v7586 = vld [vmem:[#allocation2 + $0x88] sm:$0xff]
      %v7587 = vld [vmem:[#allocation2 + $0x90] sm:$0xff]
      %v7588 = vld [vmem:[#allocation2 + $0xa8] sm:$0xff]
      %v7589 = vld [vmem:[#allocation2 + $0xb0] sm:$0xff]
      %v7590 = vld [vmem:[#allocation2 + $0xc8] sm:$0xff]
      %v7591 = vld [vmem:[#allocation2 + $0xd0] sm:$0xff]
      %v7592 = vld [vmem:[#allocation2 + $0xe8] sm:$0xff]
      %v7593 = vld [vmem:[#allocation2 + $0xf0] sm:$0xff]
      %v7594 = vld [vmem:[#allocation2 + $0x108] sm:$0xff]
      %v7595 = vld [vmem:[#allocation2 + $0x110] sm:$0xff]
      %v7596 = vld [vmem:[#allocation2 + $0x128] sm:$0xff]
      %v7597 = vld [vmem:[#allocation2 + $0x130] sm:$0xff]
      %v7598 = vld [vmem:[#allocation2 + $0x148] sm:$0xff]
      %v7599 = vld [vmem:[#allocation2 + $0x150] sm:$0xff]
      %v7600 = vld [vmem:[#allocation2 + $0x168] sm:$0xff]
      %v7601 = vld [vmem:[#allocation2 + $0x170] sm:$0xff]
      %v7602 = vld [vmem:[#allocation2 + $0x188] sm:$0xff]
      %v7603 = vld [vmem:[#allocation2 + $0x190] sm:$0xff]
      %v7604 = vld [vmem:[#allocation2 + $0x1a8] sm:$0xff]
      %v7605 = vld [vmem:[#allocation2 + $0x1b0] sm:$0xff]
      %v7606 = vld [vmem:[#allocation2 + $0x1c8] sm:$0xff]
      %v7607 = vld [vmem:[#allocation2 + $0x1d0] sm:$0xff]
      %v7608 = vld [vmem:[#allocation2 + $0x1e8] sm:$0xff]
      %v7609 = vld [vmem:[#allocation2 + $0x1f0] sm:$0xff]
      %v7610 = vld [vmem:[#allocation2 + $0x208] sm:$0xff]
      %v7611 = vld [vmem:[#allocation2 + $0x210] sm:$0xff]
      %v7612 = vld [vmem:[#allocation2 + $0x228] sm:$0xff]
      %v7613 = vld [vmem:[#allocation2 + $0x230] sm:$0xff]
      %v7614 = vld [vmem:[#allocation2 + $0x248] sm:$0xff]
      %v7615 = vld [vmem:[#allocation2 + $0x250] sm:$0xff]
      %v7616 = vld [vmem:[#allocation2 + $0x268] sm:$0xff]
      %v7617 = vld [vmem:[#allocation2 + $0x270] sm:$0xff]
      %v7618 = vld [vmem:[#allocation2 + $0x288] sm:$0xff]
      %v7619 = vld [vmem:[#allocation2 + $0x290] sm:$0xff]
      %v7620 = vld [vmem:[#allocation2 + $0x2a8] sm:$0xff]
      %v7621 = vld [vmem:[#allocation2 + $0x2b0] sm:$0xff]
      %v7622 = vld [vmem:[#allocation2 + $0x9] sm:$0xff]
      %v7623 = vld [vmem:[#allocation2 + $0x11] sm:$0xff]
      %v7624 = vld [vmem:[#allocation2 + $0x29] sm:$0xff]
      %v7625 = vld [vmem:[#allocation2 + $0x31] sm:$0xff]
      %v7626 = vld [vmem:[#allocation2 + $0x49] sm:$0xff]
      %v7627 = vld [vmem:[#allocation2 + $0x51] sm:$0xff]
      %v7628 = vld [vmem:[#allocation2 + $0x69] sm:$0xff]
      %v7629 = vld [vmem:[#allocation2 + $0x71] sm:$0xff]
      %v7630 = vld [vmem:[#allocation2 + $0x89] sm:$0xff]
      %v7631 = vld [vmem:[#allocation2 + $0x91] sm:$0xff]
      %v7632 = vld [vmem:[#allocation2 + $0xa9] sm:$0xff]
      %v7633 = vld [vmem:[#allocation2 + $0xb1] sm:$0xff]
      %v7634 = vld [vmem:[#allocation2 + $0xc9] sm:$0xff]
      %v7635 = vld [vmem:[#allocation2 + $0xd1] sm:$0xff]
      %v7636 = vld [vmem:[#allocation2 + $0xe9] sm:$0xff]
      %v7637 = vld [vmem:[#allocation2 + $0xf1] sm:$0xff]
      %v7638 = vld [vmem:[#allocation2 + $0x109] sm:$0xff]
      %v7639 = vld [vmem:[#allocation2 + $0x111] sm:$0xff]
      %v7640 = vld [vmem:[#allocation2 + $0x129] sm:$0xff]
      %v7641 = vld [vmem:[#allocation2 + $0x131] sm:$0xff]
      %v7642 = vld [vmem:[#allocation2 + $0x149] sm:$0xff]
      %v7643 = vld [vmem:[#allocation2 + $0x151] sm:$0xff]
      %v7644 = vld [vmem:[#allocation2 + $0x169] sm:$0xff]
      %v7645 = vld [vmem:[#allocation2 + $0x171] sm:$0xff]
      %v7646 = vld [vmem:[#allocation2 + $0x189] sm:$0xff]
      %v7647 = vld [vmem:[#allocation2 + $0x191] sm:$0xff]
      %v7648 = vld [vmem:[#allocation2 + $0x1a9] sm:$0xff]
      %v7649 = vld [vmem:[#allocation2 + $0x1b1] sm:$0xff]
      %v7650 = vld [vmem:[#allocation2 + $0x1c9] sm:$0xff]
      %v7651 = vld [vmem:[#allocation2 + $0x1d1] sm:$0xff]
      %v7652 = vld [vmem:[#allocation2 + $0x1e9] sm:$0xff]
      %v7653 = vld [vmem:[#allocation2 + $0x1f1] sm:$0xff]
      %v7654 = vld [vmem:[#allocation2 + $0x209] sm:$0xff]
      %v7655 = vld [vmem:[#allocation2 + $0x211] sm:$0xff]
      %v7656 = vld [vmem:[#allocation2 + $0x229] sm:$0xff]
      %v7657 = vld [vmem:[#allocation2 + $0x231] sm:$0xff]
      %v7658 = vld [vmem:[#allocation2 + $0x249] sm:$0xff]
      %v7659 = vld [vmem:[#allocation2 + $0x251] sm:$0xff]
      %v7660 = vld [vmem:[#allocation2 + $0x269] sm:$0xff]
      %v7661 = vld [vmem:[#allocation2 + $0x271] sm:$0xff]
      %v7662 = vld [vmem:[#allocation2 + $0x289] sm:$0xff]
      %v7663 = vld [vmem:[#allocation2 + $0x291] sm:$0xff]
      %v7664 = vld [vmem:[#allocation2 + $0x2a9] sm:$0xff]
      %v7665 = vld [vmem:[#allocation2 + $0x2b1] sm:$0xff]
      %7710 = vrot.lane.b32.xlu0 %v7578, 32
      %v7711 = vpop.permute.xlu0 %7710
      %7712 = vrot.lane.b32.xlu0 %v7579, 32
      %v7713 = vpop.permute.xlu0 %7712
      %7714 = vrot.lane.b32.xlu0 %v7580, 32
      %v7715 = vpop.permute.xlu0 %7714
      %7716 = vrot.lane.b32.xlu0 %v7581, 32
      %v7717 = vpop.permute.xlu0 %7716
      %7718 = vrot.lane.b32.xlu0 %v7582, 32
      %v7719 = vpop.permute.xlu0 %7718
      %7720 = vrot.lane.b32.xlu0 %v7583, 32
      %v7721 = vpop.permute.xlu0 %7720
      %7722 = vrot.lane.b32.xlu0 %v7584, 32
      %v7723 = vpop.permute.xlu0 %7722
      %7724 = vrot.lane.b32.xlu0 %v7585, 32
      %v7725 = vpop.permute.xlu0 %7724
      %7726 = vrot.lane.b32.xlu0 %v7586, 32
      %v7727 = vpop.permute.xlu0 %7726
      %7728 = vrot.lane.b32.xlu0 %v7587, 32
      %v7729 = vpop.permute.xlu0 %7728
      %7730 = vrot.lane.b32.xlu0 %v7588, 32
      %v7731 = vpop.permute.xlu0 %7730
      %7732 = vrot.lane.b32.xlu0 %v7589, 32
      %v7733 = vpop.permute.xlu0 %7732
      %7734 = vrot.lane.b32.xlu0 %v7590, 32
      %v7735 = vpop.permute.xlu0 %7734
      %7736 = vrot.lane.b32.xlu0 %v7591, 32
      %v7737 = vpop.permute.xlu0 %7736
      %7738 = vrot.lane.b32.xlu0 %v7592, 32
      %v7739 = vpop.permute.xlu0 %7738
      %7740 = vrot.lane.b32.xlu0 %v7593, 32
      %v7741 = vpop.permute.xlu0 %7740
      %7742 = vrot.lane.b32.xlu0 %v7594, 32
      %v7743 = vpop.permute.xlu0 %7742
      %7744 = vrot.lane.b32.xlu0 %v7595, 32
      %v7745 = vpop.permute.xlu0 %7744
      %7746 = vrot.lane.b32.xlu0 %v7596, 32
      %v7747 = vpop.permute.xlu0 %7746
      %7748 = vrot.lane.b32.xlu0 %v7597, 32
      %v7749 = vpop.permute.xlu0 %7748
      %7750 = vrot.lane.b32.xlu0 %v7598, 32
      %v7751 = vpop.permute.xlu0 %7750
      %7752 = vrot.lane.b32.xlu0 %v7599, 32
      %v7753 = vpop.permute.xlu0 %7752
      %7754 = vrot.lane.b32.xlu0 %v7600, 32
      %v7755 = vpop.permute.xlu0 %7754
      %7756 = vrot.lane.b32.xlu0 %v7601, 32
      %v7757 = vpop.permute.xlu0 %7756
      %7758 = vrot.lane.b32.xlu0 %v7602, 32
      %v7759 = vpop.permute.xlu0 %7758
      %7760 = vrot.lane.b32.xlu0 %v7603, 32
      %v7761 = vpop.permute.xlu0 %7760
      %7762 = vrot.lane.b32.xlu0 %v7604, 32
      %v7763 = vpop.permute.xlu0 %7762
      %7764 = vrot.lane.b32.xlu0 %v7605, 32
      %v7765 = vpop.permute.xlu0 %7764
      %7766 = vrot.lane.b32.xlu0 %v7606, 32
      %v7767 = vpop.permute.xlu0 %7766
      %7768 = vrot.lane.b32.xlu0 %v7607, 32
      %v7769 = vpop.permute.xlu0 %7768
      %7770 = vrot.lane.b32.xlu0 %v7608, 32
      %v7771 = vpop.permute.xlu0 %7770
      %7772 = vrot.lane.b32.xlu0 %v7609, 32
      %v7773 = vpop.permute.xlu0 %7772
      %7774 = vrot.lane.b32.xlu0 %v7610, 32
      %v7775 = vpop.permute.xlu0 %7774
      %7776 = vrot.lane.b32.xlu0 %v7611, 32
      %v7777 = vpop.permute.xlu0 %7776
      %7778 = vrot.lane.b32.xlu0 %v7612, 32
      %v7779 = vpop.permute.xlu0 %7778
      %7780 = vrot.lane.b32.xlu0 %v7613, 32
      %v7781 = vpop.permute.xlu0 %7780
      %7782 = vrot.lane.b32.xlu0 %v7614, 32
      %v7783 = vpop.permute.xlu0 %7782
      %7784 = vrot.lane.b32.xlu0 %v7615, 32
      %v7785 = vpop.permute.xlu0 %7784
      %7786 = vrot.lane.b32.xlu0 %v7616, 32
      %v7787 = vpop.permute.xlu0 %7786
      %7788 = vrot.lane.b32.xlu0 %v7617, 32
      %v7789 = vpop.permute.xlu0 %7788
      %7790 = vrot.lane.b32.xlu0 %v7618, 32
      %v7791 = vpop.permute.xlu0 %7790
      %7792 = vrot.lane.b32.xlu0 %v7619, 32
      %v7793 = vpop.permute.xlu0 %7792
      %7794 = vrot.lane.b32.xlu0 %v7620, 32
      %v7795 = vpop.permute.xlu0 %7794
      %7796 = vrot.lane.b32.xlu0 %v7621, 32
      %v7797 = vpop.permute.xlu0 %7796
      %7886 = vrot.lane.b32.xlu0 %v7622, 64
      %v7887 = vpop.permute.xlu0 %7886
      %7888 = vrot.lane.b32.xlu0 %v7623, 64
      %v7889 = vpop.permute.xlu0 %7888
      %7890 = vrot.lane.b32.xlu0 %v7624, 64
      %v7891 = vpop.permute.xlu0 %7890
      %7892 = vrot.lane.b32.xlu0 %v7625, 64
      %v7893 = vpop.permute.xlu0 %7892
      %7894 = vrot.lane.b32.xlu0 %v7626, 64
      %v7895 = vpop.permute.xlu0 %7894
      %7896 = vrot.lane.b32.xlu0 %v7627, 64
      %v7897 = vpop.permute.xlu0 %7896
      %7898 = vrot.lane.b32.xlu0 %v7628, 64
      %v7899 = vpop.permute.xlu0 %7898
      %7900 = vrot.lane.b32.xlu0 %v7629, 64
      %v7901 = vpop.permute.xlu0 %7900
      %7902 = vrot.lane.b32.xlu0 %v7630, 64
      %v7903 = vpop.permute.xlu0 %7902
      %7904 = vrot.lane.b32.xlu0 %v7631, 64
      %v7905 = vpop.permute.xlu0 %7904
      %7906 = vrot.lane.b32.xlu0 %v7632, 64
      %v7907 = vpop.permute.xlu0 %7906
      %7908 = vrot.lane.b32.xlu0 %v7633, 64
      %v7909 = vpop.permute.xlu0 %7908
      %7910 = vrot.lane.b32.xlu0 %v7634, 64
      %v7911 = vpop.permute.xlu0 %7910
      %7912 = vrot.lane.b32.xlu0 %v7635, 64
      %v7913 = vpop.permute.xlu0 %7912
      %7914 = vrot.lane.b32.xlu0 %v7636, 64
      %v7915 = vpop.permute.xlu0 %7914
      %7916 = vrot.lane.b32.xlu0 %v7637, 64
      %v7917 = vpop.permute.xlu0 %7916
      %7918 = vrot.lane.b32.xlu0 %v7638, 64
      %v7919 = vpop.permute.xlu0 %7918
      %7920 = vrot.lane.b32.xlu0 %v7639, 64
      %v7921 = vpop.permute.xlu0 %7920
      %7922 = vrot.lane.b32.xlu0 %v7640, 64
      %v7923 = vpop.permute.xlu0 %7922
      %7924 = vrot.lane.b32.xlu0 %v7641, 64
      %v7925 = vpop.permute.xlu0 %7924
      %7926 = vrot.lane.b32.xlu0 %v7642, 64
      %v7927 = vpop.permute.xlu0 %7926
      %7928 = vrot.lane.b32.xlu0 %v7643, 64
      %v7929 = vpop.permute.xlu0 %7928
      %7930 = vrot.lane.b32.xlu0 %v7644, 64
      %v7931 = vpop.permute.xlu0 %7930
      %7932 = vrot.lane.b32.xlu0 %v7645, 64
      %v7933 = vpop.permute.xlu0 %7932
      %7934 = vrot.lane.b32.xlu0 %v7646, 64
      %v7935 = vpop.permute.xlu0 %7934
      %7936 = vrot.lane.b32.xlu0 %v7647, 64
      %v7937 = vpop.permute.xlu0 %7936
      %7938 = vrot.lane.b32.xlu0 %v7648, 64
      %v7939 = vpop.permute.xlu0 %7938
      %7940 = vrot.lane.b32.xlu0 %v7649, 64
      %v7941 = vpop.permute.xlu0 %7940
      %7942 = vrot.lane.b32.xlu0 %v7650, 64
      %v7943 = vpop.permute.xlu0 %7942
      %7944 = vrot.lane.b32.xlu0 %v7651, 64
      %v7945 = vpop.permute.xlu0 %7944
      %7946 = vrot.lane.b32.xlu0 %v7652, 64
      %v7947 = vpop.permute.xlu0 %7946
      %7948 = vrot.lane.b32.xlu0 %v7653, 64
      %v7949 = vpop.permute.xlu0 %7948
      %7950 = vrot.lane.b32.xlu0 %v7654, 64
      %v7951 = vpop.permute.xlu0 %7950
      %7952 = vrot.lane.b32.xlu0 %v7655, 64
      %v7953 = vpop.permute.xlu0 %7952
      %7954 = vrot.lane.b32.xlu0 %v7656, 64
      %v7955 = vpop.permute.xlu0 %7954
      %7956 = vrot.lane.b32.xlu0 %v7657, 64
      %v7957 = vpop.permute.xlu0 %7956
      %7958 = vrot.lane.b32.xlu0 %v7658, 64
      %v7959 = vpop.permute.xlu0 %7958
      %7960 = vrot.lane.b32.xlu0 %v7659, 64
      %v7961 = vpop.permute.xlu0 %7960
      %7962 = vrot.lane.b32.xlu0 %v7660, 64
      %v7963 = vpop.permute.xlu0 %7962
      %7964 = vrot.lane.b32.xlu0 %v7661, 64
      %v7965 = vpop.permute.xlu0 %7964
      %7966 = vrot.lane.b32.xlu0 %v7662, 64
      %v7967 = vpop.permute.xlu0 %7966
      %7968 = vrot.lane.b32.xlu0 %v7663, 64
      %v7969 = vpop.permute.xlu0 %7968
      %7970 = vrot.lane.b32.xlu0 %v7664, 64
      %v7971 = vpop.permute.xlu0 %7970
      %7972 = vrot.lane.b32.xlu0 %v7665, 64
      %v7973 = vpop.permute.xlu0 %7972
      %v8018 = vsel %vm172, %v7534, %v7711
      %v8019 = vsel %vm172, %v7535, %v7713
      %v8020 = vsel %vm172, %v7536, %v7715
      %v8021 = vsel %vm172, %v7537, %v7717
      %v8022 = vsel %vm172, %v7538, %v7719
      %v8023 = vsel %vm172, %v7539, %v7721
      %v8024 = vsel %vm172, %v7540, %v7723
      %v8025 = vsel %vm172, %v7541, %v7725
      %v8026 = vsel %vm172, %v7542, %v7727
      %v8027 = vsel %vm172, %v7543, %v7729
      %v8028 = vsel %vm172, %v7544, %v7731
      %v8029 = vsel %vm172, %v7545, %v7733
      %v8030 = vsel %vm172, %v7546, %v7735
      %v8031 = vsel %vm172, %v7547, %v7737
      %v8032 = vsel %vm172, %v7548, %v7739
      %v8033 = vsel %vm172, %v7549, %v7741
      %v8034 = vsel %vm172, %v7550, %v7743
      %v8035 = vsel %vm172, %v7551, %v7745
      %v8036 = vsel %vm172, %v7552, %v7747
      %v8037 = vsel %vm172, %v7553, %v7749
      %v8038 = vsel %vm172, %v7554, %v7751
      %v8039 = vsel %vm172, %v7555, %v7753
      %v8040 = vsel %vm172, %v7556, %v7755
      %v8041 = vsel %vm172, %v7557, %v7757
      %v8042 = vsel %vm172, %v7558, %v7759
      %v8043 = vsel %vm172, %v7559, %v7761
      %v8044 = vsel %vm172, %v7560, %v7763
      %v8045 = vsel %vm172, %v7561, %v7765
      %v8046 = vsel %vm172, %v7562, %v7767
      %v8047 = vsel %vm172, %v7563, %v7769
      %v8048 = vsel %vm172, %v7564, %v7771
      %v8049 = vsel %vm172, %v7565, %v7773
      %v8050 = vsel %vm172, %v7566, %v7775
      %v8051 = vsel %vm172, %v7567, %v7777
      %v8052 = vsel %vm172, %v7568, %v7779
      %v8053 = vsel %vm172, %v7569, %v7781
      %v8054 = vsel %vm172, %v7570, %v7783
      %v8055 = vsel %vm172, %v7571, %v7785
      %v8056 = vsel %vm172, %v7572, %v7787
      %v8057 = vsel %vm172, %v7573, %v7789
      %v8058 = vsel %vm172, %v7574, %v7791
      %v8059 = vsel %vm172, %v7575, %v7793
      %v8060 = vsel %vm172, %v7576, %v7795
      %v8061 = vsel %vm172, %v7577, %v7797
      %v8062 = vsel %vm878, %v8018, %v7887
      %v8063 = vsel %vm878, %v8019, %v7889
      %v8064 = vsel %vm878, %v8020, %v7891
      %v8065 = vsel %vm878, %v8021, %v7893
      %v8066 = vsel %vm878, %v8022, %v7895
      %v8067 = vsel %vm878, %v8023, %v7897
      %v8068 = vsel %vm878, %v8024, %v7899
      %v8069 = vsel %vm878, %v8025, %v7901
      %v8070 = vsel %vm878, %v8026, %v7903
      %v8071 = vsel %vm878, %v8027, %v7905
      %v8072 = vsel %vm878, %v8028, %v7907
      %v8073 = vsel %vm878, %v8029, %v7909
      %v8074 = vsel %vm878, %v8030, %v7911
      %v8075 = vsel %vm878, %v8031, %v7913
      %v8076 = vsel %vm878, %v8032, %v7915
      %v8077 = vsel %vm878, %v8033, %v7917
      %v8078 = vsel %vm878, %v8034, %v7919
      %v8079 = vsel %vm878, %v8035, %v7921
      %v8080 = vsel %vm878, %v8036, %v7923
      %v8081 = vsel %vm878, %v8037, %v7925
      %v8082 = vsel %vm878, %v8038, %v7927
      %v8083 = vsel %vm878, %v8039, %v7929
      %v8084 = vsel %vm878, %v8040, %v7931
      %v8085 = vsel %vm878, %v8041, %v7933
      %v8086 = vsel %vm878, %v8042, %v7935
      %v8087 = vsel %vm878, %v8043, %v7937
      %v8088 = vsel %vm878, %v8044, %v7939
      %v8089 = vsel %vm878, %v8045, %v7941
      %v8090 = vsel %vm878, %v8046, %v7943
      %v8091 = vsel %vm878, %v8047, %v7945
      %v8092 = vsel %vm878, %v8048, %v7947
      %v8093 = vsel %vm878, %v8049, %v7949
      %v8094 = vsel %vm878, %v8050, %v7951
      %v8095 = vsel %vm878, %v8051, %v7953
      %v8096 = vsel %vm878, %v8052, %v7955
      %v8097 = vsel %vm878, %v8053, %v7957
      %v8098 = vsel %vm878, %v8054, %v7959
      %v8099 = vsel %vm878, %v8055, %v7961
      %v8100 = vsel %vm878, %v8056, %v7963
      %v8101 = vsel %vm878, %v8057, %v7965
      %v8102 = vsel %vm878, %v8058, %v7967
      %v8103 = vsel %vm878, %v8059, %v7969
      %v8104 = vsel %vm878, %v8060, %v7971
      %v8105 = vsel %vm878, %v8061, %v7973
      %v8106 = vpack.c.bf16 %v8063, %v8062
      %v8107 = vpack.c.bf16 %v8065, %v8064
      %v8108 = vpack.c.bf16 %v8067, %v8066
      %v8109 = vpack.c.bf16 %v8069, %v8068
      %v8110 = vpack.c.bf16 %v8071, %v8070
      %v8111 = vpack.c.bf16 %v8073, %v8072
      %v8112 = vpack.c.bf16 %v8075, %v8074
      %v8113 = vpack.c.bf16 %v8077, %v8076
      %v8114 = vpack.c.bf16 %v8079, %v8078
      %v8115 = vpack.c.bf16 %v8081, %v8080
      %v8116 = vpack.c.bf16 %v8083, %v8082
      %v8117 = vpack.c.bf16 %v8085, %v8084
      %v8118 = vpack.c.bf16 %v8087, %v8086
      %v8119 = vpack.c.bf16 %v8089, %v8088
      %v8120 = vpack.c.bf16 %v8091, %v8090
      %v8121 = vpack.c.bf16 %v8093, %v8092
      %v8122 = vpack.c.bf16 %v8095, %v8094
      %v8123 = vpack.c.bf16 %v8097, %v8096
      %v8124 = vpack.c.bf16 %v8099, %v8098
      %v8125 = vpack.c.bf16 %v8101, %v8100
      %v8126 = vpack.c.bf16 %v8103, %v8102
      %v8127 = vpack.c.bf16 %v8105, %v8104
      %s8128 = scalar_lea.vmem %s1, 1008
      %v8129 = vld [vmem:[%s8128] sm:$0xf]
      %v8130 = vld [vmem:[%s8128 + $0x4] sm:$0xf]
      %v8131 = vld [vmem:[%s8128 + $0x8] sm:$0xf]
      %v8132 = vld [vmem:[%s8128 + $0xc] sm:$0xf]
      %v8133 = vld [vmem:[%s8128 + $0x10] sm:$0xf]
      %v8134 = vld [vmem:[%s8128 + $0x14] sm:$0xf]
      %v8135 = vld [vmem:[%s8128 + $0x18] sm:$0xf]
      %v8136 = vld [vmem:[%s8128 + $0x1c] sm:$0xf]
      %v8137 = vld [vmem:[%s8128 + $0x20] sm:$0xf]
      %v8138 = vld [vmem:[%s8128 + $0x24] sm:$0xf]
      %v8139 = vld [vmem:[%s8128 + $0x28] sm:$0xf]
      %v8140 = vld [vmem:[%s8128 + $0x2c] sm:$0xf]
      %s8141 = scalar_lea.vmem %s1, 1056
      %v8142 = vld [vmem:[%s8141] sm:$0xf]
      %v8143 = vld [vmem:[%s8141 + $0x4] sm:$0xf]
      %v8144 = vld [vmem:[%s8141 + $0x8] sm:$0xf]
      %v8145 = vld [vmem:[%s8141 + $0xc] sm:$0xf]
      %v8146 = vld [vmem:[%s8141 + $0x10] sm:$0xf]
      %v8147 = vld [vmem:[%s8141 + $0x14] sm:$0xf]
      %v8148 = vld [vmem:[%s8141 + $0x18] sm:$0xf]
      %v8149 = vld [vmem:[%s8141 + $0x1c] sm:$0xf]
      %v8150 = vld [vmem:[%s8141 + $0x20] sm:$0xf]
      %v8151 = vld [vmem:[%s8141 + $0x24] sm:$0xf]
      %v8152 = vld [vmem:[%s8141 + $0x28] sm:$0xf]
      %v8153 = vld [vmem:[%s8141 + $0x2c] sm:$0xf]
      %v8166 = vunpack.c.l.b16 %v8142
      %v8167 = vunpack.c.l.b16 %v8143
      %v8168 = vunpack.c.l.b16 %v8144
      %v8169 = vunpack.c.l.b16 %v8145
      %v8170 = vunpack.c.l.b16 %v8146
      %v8171 = vunpack.c.l.b16 %v8147
      %v8172 = vunpack.c.l.b16 %v8148
      %v8173 = vunpack.c.l.b16 %v8149
      %v8174 = vunpack.c.l.b16 %v8150
      %v8175 = vunpack.c.l.b16 %v8151
      %v8176 = vunpack.c.l.b16 %v8152
      %v8177 = vunpack.c.l.b16 %v8153
      %v8178 = vpack.c.b16 %v8167, %v8166
      %v8179 = vpack.c.b16 %v8169, %v8168
      %v8180 = vpack.c.b16 %v8171, %v8170
      %v8181 = vpack.c.b16 %v8173, %v8172
      %v8182 = vpack.c.b16 %v8175, %v8174
      %v8183 = vpack.c.b16 %v8177, %v8176
      %v8191 = vsel %vm1006, %v8107, 0
      %v8194 = vsel %vm1006, %v8108, 0
      %v8197 = vsel %vm1006, %v8109, 0
      %v8200 = vsel %vm1006, %v8110, 0
      %v8203 = vsel %vm1006, %v8111, 0
      %v8206 = vsel %vm1006, %v8112, 0
      %v8209 = vsel %vm1006, %v8113, 0
      %v8212 = vsel %vm1006, %v8114, 0
      %v8215 = vsel %vm1006, %v8115, 0
      %v8218 = vsel %vm1006, %v8116, 0
      %v8221 = vsel %vm1006, %v8117, 0
      %v8224 = vsel %vm1006, %v8118, 0
      %v8227 = vsel %vm1006, %v8119, 0
      %v8230 = vsel %vm1006, %v8120, 0
      %v8233 = vsel %vm1006, %v8121, 0
      %v8236 = vsel %vm1006, %v8122, 0
      %8238 = vmatprep.subr.bf16.mxu0 0
      %8239 = vmatpush1.bf16.msra.mxu0 0
      %8240 = vmatprep.subr.bf16.mxu0 0
      %8241 = vmatpush1.bf16.msra.mxu0 0
      %8242 = vmatprep.subr.bf16.mxu0 0
      %8243 = vmatpush1.bf16.msra.mxu0 %v8183
      %8244 = vmatprep.subr.bf16.mxu0 0
      %8245 = vmatpush1.bf16.msra.mxu0 %v8182
      %8246 = vmatprep.subr.bf16.mxu0 0
      %8247 = vmatpush1.bf16.msra.mxu0 %v8181
      %8248 = vmatprep.subr.bf16.mxu0 0
      %8249 = vmatpush1.bf16.msra.mxu0 %v8180
      %8250 = vmatprep.subr.bf16.mxu0 0
      %8251 = vmatpush1.bf16.msra.mxu0 %v8179
      %8252 = vmatprep.subr.bf16.mxu0 0
      %8253 = vmatpush1.bf16.msra.mxu0 %v8178
      %8254 = vmatprep.subr.bf16.mxu0 0
      %8255 = vmatpush2.bf16.msra.mxu0 0
      %8256 = vmatprep.subr.bf16.mxu0 0
      %8257 = vmatpush2.bf16.msra.mxu0 0
      %8258 = vmatprep.subr.bf16.mxu0 0
      %8259 = vmatpush2.bf16.msra.mxu0 0
      %8260 = vmatprep.subr.bf16.mxu0 0
      %8261 = vmatpush2.bf16.msra.mxu0 0
      %8262 = vmatprep.subr.bf16.mxu0 0
      %8263 = vmatpush2.bf16.msra.mxu0 0
      %8264 = vmatprep.subr.bf16.mxu0 0
      %8265 = vmatpush2.bf16.msra.mxu0 0
      %8266 = vmatprep.subr.bf16.mxu0 0
      %8267 = vmatpush2.bf16.msra.mxu0 0
      %8268 = vmatprep.subr.bf16.mxu0 0
      %8269 = vmatpush2.bf16.msra.mxu0 0
      %8270 = vmatprep.mubr.bf16.mxu0 0
      %8271 = vmatmul.mubr.bf16.gmra.mxu0 %v8191
      %v8272 = vpop.f32.mrf.mxu0
      %v8273 = vadd.f32 0.0, %v8272
      %v8274 = vpop.f32.mrf.mxu0
      %v8275 = vpop.f32.mrf.mxu0
      %v8276 = vadd.f32 0.0, %v8275
      %v8277 = vpop.f32.mrf.mxu0
      %8278 = vmatprep.mubr.bf16.mxu0 0
      %8279 = vmatmul.mubr.bf16.gmra.mxu0 %v8194
      %v8280 = vpop.f32.mrf.mxu0
      %v8281 = vadd.f32 0.0, %v8280
      %v8282 = vpop.f32.mrf.mxu0
      %v8283 = vpop.f32.mrf.mxu0
      %v8284 = vadd.f32 0.0, %v8283
      %v8285 = vpop.f32.mrf.mxu0
      %8286 = vmatprep.mubr.bf16.mxu0 0
      %8287 = vmatmul.mubr.bf16.gmra.mxu0 %v8197
      %v8288 = vpop.f32.mrf.mxu0
      %v8289 = vadd.f32 0.0, %v8288
      %v8290 = vpop.f32.mrf.mxu0
      %v8291 = vpop.f32.mrf.mxu0
      %v8292 = vadd.f32 0.0, %v8291
      %v8293 = vpop.f32.mrf.mxu0
      %8294 = vmatprep.mubr.bf16.mxu0 0
      %8295 = vmatmul.mubr.bf16.gmra.mxu0 %v8200
      %v8296 = vpop.f32.mrf.mxu0
      %v8297 = vadd.f32 0.0, %v8296
      %v8298 = vpop.f32.mrf.mxu0
      %v8299 = vpop.f32.mrf.mxu0
      %v8300 = vadd.f32 0.0, %v8299
      %v8301 = vpop.f32.mrf.mxu0
      %8302 = vmatprep.mubr.bf16.mxu0 0
      %8303 = vmatmul.mubr.bf16.gmra.mxu0 %v8203
      %v8304 = vpop.f32.mrf.mxu0
      %v8305 = vadd.f32 0.0, %v8304
      %v8306 = vpop.f32.mrf.mxu0
      %v8307 = vpop.f32.mrf.mxu0
      %v8308 = vadd.f32 0.0, %v8307
      %v8309 = vpop.f32.mrf.mxu0
      %8310 = vmatprep.mubr.bf16.mxu0 0
      %8311 = vmatmul.mubr.bf16.gmra.mxu0 %v8206
      %v8312 = vpop.f32.mrf.mxu0
      %v8313 = vadd.f32 0.0, %v8312
      %v8314 = vpop.f32.mrf.mxu0
      %v8315 = vpop.f32.mrf.mxu0
      %v8316 = vadd.f32 0.0, %v8315
      %v8317 = vpop.f32.mrf.mxu0
      %8318 = vmatprep.mubr.bf16.mxu0 0
      %8319 = vmatmul.mubr.bf16.gmra.mxu0 %v8209
      %v8320 = vpop.f32.mrf.mxu0
      %v8321 = vadd.f32 0.0, %v8320
      %v8322 = vpop.f32.mrf.mxu0
      %v8323 = vpop.f32.mrf.mxu0
      %v8324 = vadd.f32 0.0, %v8323
      %v8325 = vpop.f32.mrf.mxu0
      %8326 = vmatprep.mubr.bf16.mxu0 0
      %8327 = vmatmul.mubr.bf16.gmra.mxu0 %v8212
      %v8328 = vpop.f32.mrf.mxu0
      %v8329 = vadd.f32 0.0, %v8328
      %v8330 = vpop.f32.mrf.mxu0
      %v8331 = vpop.f32.mrf.mxu0
      %v8332 = vadd.f32 0.0, %v8331
      %v8333 = vpop.f32.mrf.mxu0
      %8334 = vmatprep.mubr.bf16.mxu0 0
      %8335 = vmatmul.mubr.bf16.gmra.mxu0 %v8215
      %v8336 = vpop.f32.mrf.mxu0
      %v8337 = vadd.f32 0.0, %v8336
      %v8338 = vpop.f32.mrf.mxu0
      %v8339 = vpop.f32.mrf.mxu0
      %v8340 = vadd.f32 0.0, %v8339
      %v8341 = vpop.f32.mrf.mxu0
      %8342 = vmatprep.mubr.bf16.mxu0 0
      %8343 = vmatmul.mubr.bf16.gmra.mxu0 %v8218
      %v8344 = vpop.f32.mrf.mxu0
      %v8345 = vadd.f32 0.0, %v8344
      %v8346 = vpop.f32.mrf.mxu0
      %v8347 = vpop.f32.mrf.mxu0
      %v8348 = vadd.f32 0.0, %v8347
      %v8349 = vpop.f32.mrf.mxu0
      %8350 = vmatprep.mubr.bf16.mxu0 0
      %8351 = vmatmul.mubr.bf16.gmra.mxu0 %v8221
      %v8352 = vpop.f32.mrf.mxu0
      %v8353 = vadd.f32 0.0, %v8352
      %v8354 = vpop.f32.mrf.mxu0
      %v8355 = vpop.f32.mrf.mxu0
      %v8356 = vadd.f32 0.0, %v8355
      %v8357 = vpop.f32.mrf.mxu0
      %8358 = vmatprep.mubr.bf16.mxu0 0
      %8359 = vmatmul.mubr.bf16.gmra.mxu0 %v8224
      %v8360 = vpop.f32.mrf.mxu0
      %v8361 = vadd.f32 0.0, %v8360
      %v8362 = vpop.f32.mrf.mxu0
      %v8363 = vpop.f32.mrf.mxu0
      %v8364 = vadd.f32 0.0, %v8363
      %v8365 = vpop.f32.mrf.mxu0
      %8366 = vmatprep.mubr.bf16.mxu0 0
      %8367 = vmatmul.mubr.bf16.gmra.mxu0 %v8227
      %v8368 = vpop.f32.mrf.mxu0
      %v8369 = vadd.f32 0.0, %v8368
      %v8370 = vpop.f32.mrf.mxu0
      %v8371 = vpop.f32.mrf.mxu0
      %v8372 = vadd.f32 0.0, %v8371
      %v8373 = vpop.f32.mrf.mxu0
      %8374 = vmatprep.mubr.bf16.mxu0 0
      %8375 = vmatmul.mubr.bf16.gmra.mxu0 %v8230
      %v8376 = vpop.f32.mrf.mxu0
      %v8377 = vadd.f32 0.0, %v8376
      %v8378 = vpop.f32.mrf.mxu0
      %v8379 = vpop.f32.mrf.mxu0
      %v8380 = vadd.f32 0.0, %v8379
      %v8381 = vpop.f32.mrf.mxu0
      %8382 = vmatprep.mubr.bf16.mxu0 0
      %8383 = vmatmul.mubr.bf16.gmra.mxu0 %v8233
      %v8384 = vpop.f32.mrf.mxu0
      %v8385 = vadd.f32 0.0, %v8384
      %v8386 = vpop.f32.mrf.mxu0
      %v8387 = vpop.f32.mrf.mxu0
      %v8388 = vadd.f32 0.0, %v8387
      %v8389 = vpop.f32.mrf.mxu0
      %8390 = vmatprep.mubr.bf16.mxu0 0
      %8391 = vmatmul.mubr.bf16.gmra.mxu0 %v8236
      %v8392 = vpop.f32.mrf.mxu0
      %v8393 = vadd.f32 0.0, %v8392
      %v8394 = vpop.f32.mrf.mxu0
      %v8395 = vpop.f32.mrf.mxu0
      %v8396 = vadd.f32 0.0, %v8395
      %v8397 = vpop.f32.mrf.mxu0
      %8398 = vdwg.mxu0
      %v8411 = vunpack.c.l.b16 %v8129
      %v8412 = vunpack.c.l.b16 %v8130
      %v8413 = vunpack.c.l.b16 %v8131
      %v8414 = vunpack.c.l.b16 %v8132
      %v8415 = vunpack.c.l.b16 %v8133
      %v8416 = vunpack.c.l.b16 %v8134
      %v8417 = vunpack.c.l.b16 %v8135
      %v8418 = vunpack.c.l.b16 %v8136
      %v8419 = vunpack.c.l.b16 %v8137
      %v8420 = vunpack.c.l.b16 %v8138
      %v8421 = vunpack.c.l.b16 %v8139
      %v8422 = vunpack.c.l.b16 %v8140
      %v8423 = vpack.c.b16 %v8412, %v8411
      %v8424 = vpack.c.b16 %v8414, %v8413
      %v8425 = vpack.c.b16 %v8416, %v8415
      %v8426 = vpack.c.b16 %v8418, %v8417
      %v8427 = vpack.c.b16 %v8420, %v8419
      %v8428 = vpack.c.b16 %v8422, %v8421
      %v8436 = vsel %vm1006, %v8106, 0
      %8438 = vmatprep.subr.bf16.mxu0 0
      %8439 = vmatpush1.bf16.msra.mxu0 0
      %8440 = vmatprep.subr.bf16.mxu0 0
      %8441 = vmatpush1.bf16.msra.mxu0 0
      %8442 = vmatprep.subr.bf16.mxu0 0
      %8443 = vmatpush1.bf16.msra.mxu0 %v8428
      %8444 = vmatprep.subr.bf16.mxu0 0
      %8445 = vmatpush1.bf16.msra.mxu0 %v8427
      %8446 = vmatprep.subr.bf16.mxu0 0
      %8447 = vmatpush1.bf16.msra.mxu0 %v8426
      %8448 = vmatprep.subr.bf16.mxu0 0
      %8449 = vmatpush1.bf16.msra.mxu0 %v8425
      %8450 = vmatprep.subr.bf16.mxu0 0
      %8451 = vmatpush1.bf16.msra.mxu0 %v8424
      %8452 = vmatprep.subr.bf16.mxu0 0
      %8453 = vmatpush1.bf16.msra.mxu0 %v8423
      %8454 = vmatprep.subr.bf16.mxu0 0
      %8455 = vmatpush2.bf16.msra.mxu0 0
      %8456 = vmatprep.subr.bf16.mxu0 0
      %8457 = vmatpush2.bf16.msra.mxu0 0
      %8458 = vmatprep.subr.bf16.mxu0 0
      %8459 = vmatpush2.bf16.msra.mxu0 0
      %8460 = vmatprep.subr.bf16.mxu0 0
      %8461 = vmatpush2.bf16.msra.mxu0 0
      %8462 = vmatprep.subr.bf16.mxu0 0
      %8463 = vmatpush2.bf16.msra.mxu0 0
      %8464 = vmatprep.subr.bf16.mxu0 0
      %8465 = vmatpush2.bf16.msra.mxu0 0
      %8466 = vmatprep.subr.bf16.mxu0 0
      %8467 = vmatpush2.bf16.msra.mxu0 0
      %8468 = vmatprep.subr.bf16.mxu0 0
      %8469 = vmatpush2.bf16.msra.mxu0 0
      %8470 = vmatprep.mubr.bf16.mxu0 0
      %8471 = vmatmul.mubr.bf16.gmra.mxu0 %v8436
      %v8472 = vpop.f32.mrf.mxu0
      %v8473 = vadd.f32 %v8273, %v8472
      %v8474 = vpop.f32.mrf.mxu0
      %v8475 = vpop.f32.mrf.mxu0
      %v8476 = vadd.f32 %v8276, %v8475
      %v8477 = vpop.f32.mrf.mxu0
      %8478 = vmatprep.mubr.bf16.mxu0 0
      %8479 = vmatmul.mubr.bf16.gmra.mxu0 %v8191
      %v8480 = vpop.f32.mrf.mxu0
      %v8481 = vadd.f32 %v8281, %v8480
      %v8482 = vpop.f32.mrf.mxu0
      %v8483 = vpop.f32.mrf.mxu0
      %v8484 = vadd.f32 %v8284, %v8483
      %v8485 = vpop.f32.mrf.mxu0
      %8486 = vmatprep.mubr.bf16.mxu0 0
      %8487 = vmatmul.mubr.bf16.gmra.mxu0 %v8194
      %v8488 = vpop.f32.mrf.mxu0
      %v8489 = vadd.f32 %v8289, %v8488
      %v8490 = vpop.f32.mrf.mxu0
      %v8491 = vpop.f32.mrf.mxu0
      %v8492 = vadd.f32 %v8292, %v8491
      %v8493 = vpop.f32.mrf.mxu0
      %8494 = vmatprep.mubr.bf16.mxu0 0
      %8495 = vmatmul.mubr.bf16.gmra.mxu0 %v8197
      %v8496 = vpop.f32.mrf.mxu0
      %v8497 = vadd.f32 %v8297, %v8496
      %v8498 = vpop.f32.mrf.mxu0
      %v8499 = vpop.f32.mrf.mxu0
      %v8500 = vadd.f32 %v8300, %v8499
      %v8501 = vpop.f32.mrf.mxu0
      %8502 = vmatprep.mubr.bf16.mxu0 0
      %8503 = vmatmul.mubr.bf16.gmra.mxu0 %v8200
      %v8504 = vpop.f32.mrf.mxu0
      %v8505 = vadd.f32 %v8305, %v8504
      %v8506 = vpop.f32.mrf.mxu0
      %v8507 = vpop.f32.mrf.mxu0
      %v8508 = vadd.f32 %v8308, %v8507
      %v8509 = vpop.f32.mrf.mxu0
      %8510 = vmatprep.mubr.bf16.mxu0 0
      %8511 = vmatmul.mubr.bf16.gmra.mxu0 %v8203
      %v8512 = vpop.f32.mrf.mxu0
      %v8513 = vadd.f32 %v8313, %v8512
      %v8514 = vpop.f32.mrf.mxu0
      %v8515 = vpop.f32.mrf.mxu0
      %v8516 = vadd.f32 %v8316, %v8515
      %v8517 = vpop.f32.mrf.mxu0
      %8518 = vmatprep.mubr.bf16.mxu0 0
      %8519 = vmatmul.mubr.bf16.gmra.mxu0 %v8206
      %v8520 = vpop.f32.mrf.mxu0
      %v8521 = vadd.f32 %v8321, %v8520
      %v8522 = vpop.f32.mrf.mxu0
      %v8523 = vpop.f32.mrf.mxu0
      %v8524 = vadd.f32 %v8324, %v8523
      %v8525 = vpop.f32.mrf.mxu0
      %8526 = vmatprep.mubr.bf16.mxu0 0
      %8527 = vmatmul.mubr.bf16.gmra.mxu0 %v8209
      %v8528 = vpop.f32.mrf.mxu0
      %v8529 = vadd.f32 %v8329, %v8528
      %v8530 = vpop.f32.mrf.mxu0
      %v8531 = vpop.f32.mrf.mxu0
      %v8532 = vadd.f32 %v8332, %v8531
      %v8533 = vpop.f32.mrf.mxu0
      %8534 = vmatprep.mubr.bf16.mxu0 0
      %8535 = vmatmul.mubr.bf16.gmra.mxu0 %v8212
      %v8536 = vpop.f32.mrf.mxu0
      %v8537 = vadd.f32 %v8337, %v8536
      %v8538 = vpop.f32.mrf.mxu0
      %v8539 = vpop.f32.mrf.mxu0
      %v8540 = vadd.f32 %v8340, %v8539
      %v8541 = vpop.f32.mrf.mxu0
      %8542 = vmatprep.mubr.bf16.mxu0 0
      %8543 = vmatmul.mubr.bf16.gmra.mxu0 %v8215
      %v8544 = vpop.f32.mrf.mxu0
      %v8545 = vadd.f32 %v8345, %v8544
      %v8546 = vpop.f32.mrf.mxu0
      %v8547 = vpop.f32.mrf.mxu0
      %v8548 = vadd.f32 %v8348, %v8547
      %v8549 = vpop.f32.mrf.mxu0
      %8550 = vmatprep.mubr.bf16.mxu0 0
      %8551 = vmatmul.mubr.bf16.gmra.mxu0 %v8218
      %v8552 = vpop.f32.mrf.mxu0
      %v8553 = vadd.f32 %v8353, %v8552
      %v8554 = vpop.f32.mrf.mxu0
      %v8555 = vpop.f32.mrf.mxu0
      %v8556 = vadd.f32 %v8356, %v8555
      %v8557 = vpop.f32.mrf.mxu0
      %8558 = vmatprep.mubr.bf16.mxu0 0
      %8559 = vmatmul.mubr.bf16.gmra.mxu0 %v8221
      %v8560 = vpop.f32.mrf.mxu0
      %v8561 = vadd.f32 %v8361, %v8560
      %v8562 = vpop.f32.mrf.mxu0
      %v8563 = vpop.f32.mrf.mxu0
      %v8564 = vadd.f32 %v8364, %v8563
      %v8565 = vpop.f32.mrf.mxu0
      %8566 = vmatprep.mubr.bf16.mxu0 0
      %8567 = vmatmul.mubr.bf16.gmra.mxu0 %v8224
      %v8568 = vpop.f32.mrf.mxu0
      %v8569 = vadd.f32 %v8369, %v8568
      %v8570 = vpop.f32.mrf.mxu0
      %v8571 = vpop.f32.mrf.mxu0
      %v8572 = vadd.f32 %v8372, %v8571
      %v8573 = vpop.f32.mrf.mxu0
      %8574 = vmatprep.mubr.bf16.mxu0 0
      %8575 = vmatmul.mubr.bf16.gmra.mxu0 %v8227
      %v8576 = vpop.f32.mrf.mxu0
      %v8577 = vadd.f32 %v8377, %v8576
      %v8578 = vpop.f32.mrf.mxu0
      %v8579 = vpop.f32.mrf.mxu0
      %v8580 = vadd.f32 %v8380, %v8579
      %v8581 = vpop.f32.mrf.mxu0
      %8582 = vmatprep.mubr.bf16.mxu0 0
      %8583 = vmatmul.mubr.bf16.gmra.mxu0 %v8230
      %v8584 = vpop.f32.mrf.mxu0
      %v8585 = vadd.f32 %v8385, %v8584
      %v8586 = vpop.f32.mrf.mxu0
      %v8587 = vpop.f32.mrf.mxu0
      %v8588 = vadd.f32 %v8388, %v8587
      %v8589 = vpop.f32.mrf.mxu0
      %8590 = vmatprep.mubr.bf16.mxu0 0
      %8591 = vmatmul.mubr.bf16.gmra.mxu0 %v8233
      %v8592 = vpop.f32.mrf.mxu0
      %v8593 = vadd.f32 %v8393, %v8592
      %v8594 = vpop.f32.mrf.mxu0
      %v8595 = vpop.f32.mrf.mxu0
      %v8596 = vadd.f32 %v8396, %v8595
      %v8597 = vpop.f32.mrf.mxu0
      %8598 = vdwg.mxu0
      %s8599 = scalar_lea.vmem %s1, 1104
      %v8600 = vld [vmem:[%s8599] sm:$0xf]
      %v8601 = vld [vmem:[%s8599 + $0x4] sm:$0xf]
      %v8602 = vld [vmem:[%s8599 + $0x8] sm:$0xf]
      %v8603 = vld [vmem:[%s8599 + $0xc] sm:$0xf]
      %v8604 = vld [vmem:[%s8599 + $0x10] sm:$0xf]
      %v8605 = vld [vmem:[%s8599 + $0x14] sm:$0xf]
      %v8606 = vld [vmem:[%s8599 + $0x18] sm:$0xf]
      %v8607 = vld [vmem:[%s8599 + $0x1c] sm:$0xf]
      %v8608 = vld [vmem:[%s8599 + $0x20] sm:$0xf]
      %v8609 = vld [vmem:[%s8599 + $0x24] sm:$0xf]
      %v8610 = vld [vmem:[%s8599 + $0x28] sm:$0xf]
      %v8611 = vld [vmem:[%s8599 + $0x2c] sm:$0xf]
      %v8624 = vunpack.c.l.b16 %v8600
      %v8625 = vunpack.c.l.b16 %v8601
      %v8626 = vunpack.c.l.b16 %v8602
      %v8627 = vunpack.c.l.b16 %v8603
      %v8628 = vunpack.c.l.b16 %v8604
      %v8629 = vunpack.c.l.b16 %v8605
      %v8630 = vunpack.c.l.b16 %v8606
      %v8631 = vunpack.c.l.b16 %v8607
      %v8632 = vunpack.c.l.b16 %v8608
      %v8633 = vunpack.c.l.b16 %v8609
      %v8634 = vunpack.c.l.b16 %v8610
      %v8635 = vunpack.c.l.b16 %v8611
      %v8636 = vpack.c.b16 %v8625, %v8624
      %v8637 = vpack.c.b16 %v8627, %v8626
      %v8638 = vpack.c.b16 %v8629, %v8628
      %v8639 = vpack.c.b16 %v8631, %v8630
      %v8640 = vpack.c.b16 %v8633, %v8632
      %v8641 = vpack.c.b16 %v8635, %v8634
      %v8649 = vsel %vm1006, %v8123, 0
      %8651 = vmatprep.subr.bf16.mxu0 0
      %8652 = vmatpush1.bf16.msra.mxu0 0
      %8653 = vmatprep.subr.bf16.mxu0 0
      %8654 = vmatpush1.bf16.msra.mxu0 0
      %8655 = vmatprep.subr.bf16.mxu0 0
      %8656 = vmatpush1.bf16.msra.mxu0 %v8641
      %8657 = vmatprep.subr.bf16.mxu0 0
      %8658 = vmatpush1.bf16.msra.mxu0 %v8640
      %8659 = vmatprep.subr.bf16.mxu0 0
      %8660 = vmatpush1.bf16.msra.mxu0 %v8639
      %8661 = vmatprep.subr.bf16.mxu0 0
      %8662 = vmatpush1.bf16.msra.mxu0 %v8638
      %8663 = vmatprep.subr.bf16.mxu0 0
      %8664 = vmatpush1.bf16.msra.mxu0 %v8637
      %8665 = vmatprep.subr.bf16.mxu0 0
      %8666 = vmatpush1.bf16.msra.mxu0 %v8636
      %8667 = vmatprep.subr.bf16.mxu0 0
      %8668 = vmatpush2.bf16.msra.mxu0 0
      %8669 = vmatprep.subr.bf16.mxu0 0
      %8670 = vmatpush2.bf16.msra.mxu0 0
      %8671 = vmatprep.subr.bf16.mxu0 0
      %8672 = vmatpush2.bf16.msra.mxu0 0
      %8673 = vmatprep.subr.bf16.mxu0 0
      %8674 = vmatpush2.bf16.msra.mxu0 0
      %8675 = vmatprep.subr.bf16.mxu0 0
      %8676 = vmatpush2.bf16.msra.mxu0 0
      %8677 = vmatprep.subr.bf16.mxu0 0
      %8678 = vmatpush2.bf16.msra.mxu0 0
      %8679 = vmatprep.subr.bf16.mxu0 0
      %8680 = vmatpush2.bf16.msra.mxu0 0
      %8681 = vmatprep.subr.bf16.mxu0 0
      %8682 = vmatpush2.bf16.msra.mxu0 0
      %8683 = vmatprep.mubr.bf16.mxu0 0
      %8684 = vmatmul.mubr.bf16.gmra.mxu0 %v8194
      %v8685 = vpop.f32.mrf.mxu0
      %v8686 = vadd.f32 0.0, %v8685
      %v8687 = vpop.f32.mrf.mxu0
      %v8688 = vpop.f32.mrf.mxu0
      %v8689 = vadd.f32 0.0, %v8688
      %v8690 = vpop.f32.mrf.mxu0
      %8691 = vmatprep.mubr.bf16.mxu0 0
      %8692 = vmatmul.mubr.bf16.gmra.mxu0 %v8197
      %v8693 = vpop.f32.mrf.mxu0
      %v8694 = vadd.f32 0.0, %v8693
      %v8695 = vpop.f32.mrf.mxu0
      %v8696 = vpop.f32.mrf.mxu0
      %v8697 = vadd.f32 0.0, %v8696
      %v8698 = vpop.f32.mrf.mxu0
      %8699 = vmatprep.mubr.bf16.mxu0 0
      %8700 = vmatmul.mubr.bf16.gmra.mxu0 %v8200
      %v8701 = vpop.f32.mrf.mxu0
      %v8702 = vadd.f32 0.0, %v8701
      %v8703 = vpop.f32.mrf.mxu0
      %v8704 = vpop.f32.mrf.mxu0
      %v8705 = vadd.f32 0.0, %v8704
      %v8706 = vpop.f32.mrf.mxu0
      %8707 = vmatprep.mubr.bf16.mxu0 0
      %8708 = vmatmul.mubr.bf16.gmra.mxu0 %v8203
      %v8709 = vpop.f32.mrf.mxu0
      %v8710 = vadd.f32 0.0, %v8709
      %v8711 = vpop.f32.mrf.mxu0
      %v8712 = vpop.f32.mrf.mxu0
      %v8713 = vadd.f32 0.0, %v8712
      %v8714 = vpop.f32.mrf.mxu0
      %8715 = vmatprep.mubr.bf16.mxu0 0
      %8716 = vmatmul.mubr.bf16.gmra.mxu0 %v8206
      %v8717 = vpop.f32.mrf.mxu0
      %v8718 = vadd.f32 0.0, %v8717
      %v8719 = vpop.f32.mrf.mxu0
      %v8720 = vpop.f32.mrf.mxu0
      %v8721 = vadd.f32 0.0, %v8720
      %v8722 = vpop.f32.mrf.mxu0
      %8723 = vmatprep.mubr.bf16.mxu0 0
      %8724 = vmatmul.mubr.bf16.gmra.mxu0 %v8209
      %v8725 = vpop.f32.mrf.mxu0
      %v8726 = vadd.f32 0.0, %v8725
      %v8727 = vpop.f32.mrf.mxu0
      %v8728 = vpop.f32.mrf.mxu0
      %v8729 = vadd.f32 0.0, %v8728
      %v8730 = vpop.f32.mrf.mxu0
      %8731 = vmatprep.mubr.bf16.mxu0 0
      %8732 = vmatmul.mubr.bf16.gmra.mxu0 %v8212
      %v8733 = vpop.f32.mrf.mxu0
      %v8734 = vadd.f32 0.0, %v8733
      %v8735 = vpop.f32.mrf.mxu0
      %v8736 = vpop.f32.mrf.mxu0
      %v8737 = vadd.f32 0.0, %v8736
      %v8738 = vpop.f32.mrf.mxu0
      %8739 = vmatprep.mubr.bf16.mxu0 0
      %8740 = vmatmul.mubr.bf16.gmra.mxu0 %v8215
      %v8741 = vpop.f32.mrf.mxu0
      %v8742 = vadd.f32 0.0, %v8741
      %v8743 = vpop.f32.mrf.mxu0
      %v8744 = vpop.f32.mrf.mxu0
      %v8745 = vadd.f32 0.0, %v8744
      %v8746 = vpop.f32.mrf.mxu0
      %8747 = vmatprep.mubr.bf16.mxu0 0
      %8748 = vmatmul.mubr.bf16.gmra.mxu0 %v8218
      %v8749 = vpop.f32.mrf.mxu0
      %v8750 = vadd.f32 0.0, %v8749
      %v8751 = vpop.f32.mrf.mxu0
      %v8752 = vpop.f32.mrf.mxu0
      %v8753 = vadd.f32 0.0, %v8752
      %v8754 = vpop.f32.mrf.mxu0
      %8755 = vmatprep.mubr.bf16.mxu0 0
      %8756 = vmatmul.mubr.bf16.gmra.mxu0 %v8221
      %v8757 = vpop.f32.mrf.mxu0
      %v8758 = vadd.f32 0.0, %v8757
      %v8759 = vpop.f32.mrf.mxu0
      %v8760 = vpop.f32.mrf.mxu0
      %v8761 = vadd.f32 0.0, %v8760
      %v8762 = vpop.f32.mrf.mxu0
      %8763 = vmatprep.mubr.bf16.mxu0 0
      %8764 = vmatmul.mubr.bf16.gmra.mxu0 %v8224
      %v8765 = vpop.f32.mrf.mxu0
      %v8766 = vadd.f32 0.0, %v8765
      %v8767 = vpop.f32.mrf.mxu0
      %v8768 = vpop.f32.mrf.mxu0
      %v8769 = vadd.f32 0.0, %v8768
      %v8770 = vpop.f32.mrf.mxu0
      %8771 = vmatprep.mubr.bf16.mxu0 0
      %8772 = vmatmul.mubr.bf16.gmra.mxu0 %v8227
      %v8773 = vpop.f32.mrf.mxu0
      %v8774 = vadd.f32 0.0, %v8773
      %v8775 = vpop.f32.mrf.mxu0
      %v8776 = vpop.f32.mrf.mxu0
      %v8777 = vadd.f32 0.0, %v8776
      %v8778 = vpop.f32.mrf.mxu0
      %8779 = vmatprep.mubr.bf16.mxu0 0
      %8780 = vmatmul.mubr.bf16.gmra.mxu0 %v8230
      %v8781 = vpop.f32.mrf.mxu0
      %v8782 = vadd.f32 0.0, %v8781
      %v8783 = vpop.f32.mrf.mxu0
      %v8784 = vpop.f32.mrf.mxu0
      %v8785 = vadd.f32 0.0, %v8784
      %v8786 = vpop.f32.mrf.mxu0
      %8787 = vmatprep.mubr.bf16.mxu0 0
      %8788 = vmatmul.mubr.bf16.gmra.mxu0 %v8233
      %v8789 = vpop.f32.mrf.mxu0
      %v8790 = vadd.f32 0.0, %v8789
      %v8791 = vpop.f32.mrf.mxu0
      %v8792 = vpop.f32.mrf.mxu0
      %v8793 = vadd.f32 0.0, %v8792
      %v8794 = vpop.f32.mrf.mxu0
      %8795 = vmatprep.mubr.bf16.mxu0 0
      %8796 = vmatmul.mubr.bf16.gmra.mxu0 %v8236
      %v8797 = vpop.f32.mrf.mxu0
      %v8798 = vadd.f32 0.0, %v8797
      %v8799 = vpop.f32.mrf.mxu0
      %v8800 = vpop.f32.mrf.mxu0
      %v8801 = vadd.f32 0.0, %v8800
      %v8802 = vpop.f32.mrf.mxu0
      %8803 = vmatprep.mubr.bf16.mxu0 0
      %8804 = vmatmul.mubr.bf16.gmra.mxu0 %v8649
      %v8805 = vpop.f32.mrf.mxu0
      %v8806 = vadd.f32 0.0, %v8805
      %v8807 = vpop.f32.mrf.mxu0
      %v8808 = vpop.f32.mrf.mxu0
      %v8809 = vadd.f32 0.0, %v8808
      %v8810 = vpop.f32.mrf.mxu0
      %8811 = vdwg.mxu0
      %v8812 = vadd.f32 %v8473, %v8686
      %v8813 = vadd.f32 %v8476, %v8689
      %v8814 = vadd.f32 %v8481, %v8694
      %v8815 = vadd.f32 %v8484, %v8697
      %v8816 = vadd.f32 %v8489, %v8702
      %v8817 = vadd.f32 %v8492, %v8705
      %v8818 = vadd.f32 %v8497, %v8710
      %v8819 = vadd.f32 %v8500, %v8713
      %v8820 = vadd.f32 %v8505, %v8718
      %v8821 = vadd.f32 %v8508, %v8721
      %v8822 = vadd.f32 %v8513, %v8726
      %v8823 = vadd.f32 %v8516, %v8729
      %v8824 = vadd.f32 %v8521, %v8734
      %v8825 = vadd.f32 %v8524, %v8737
      %v8826 = vadd.f32 %v8529, %v8742
      %v8827 = vadd.f32 %v8532, %v8745
      %v8828 = vadd.f32 %v8537, %v8750
      %v8829 = vadd.f32 %v8540, %v8753
      %v8830 = vadd.f32 %v8545, %v8758
      %v8831 = vadd.f32 %v8548, %v8761
      %v8832 = vadd.f32 %v8553, %v8766
      %v8833 = vadd.f32 %v8556, %v8769
      %v8834 = vadd.f32 %v8561, %v8774
      %v8835 = vadd.f32 %v8564, %v8777
      %v8836 = vadd.f32 %v8569, %v8782
      %v8837 = vadd.f32 %v8572, %v8785
      %v8838 = vadd.f32 %v8577, %v8790
      %v8839 = vadd.f32 %v8580, %v8793
      %v8840 = vadd.f32 %v8585, %v8798
      %v8841 = vadd.f32 %v8588, %v8801
      %v8842 = vadd.f32 %v8593, %v8806
      %v8843 = vadd.f32 %v8596, %v8809
      %s8844 = scalar_lea.vmem %s1, 1152
      %v8845 = vld [vmem:[%s8844] sm:$0xf]
      %v8846 = vld [vmem:[%s8844 + $0x4] sm:$0xf]
      %v8847 = vld [vmem:[%s8844 + $0x8] sm:$0xf]
      %v8848 = vld [vmem:[%s8844 + $0xc] sm:$0xf]
      %v8849 = vld [vmem:[%s8844 + $0x10] sm:$0xf]
      %v8850 = vld [vmem:[%s8844 + $0x14] sm:$0xf]
      %v8851 = vld [vmem:[%s8844 + $0x18] sm:$0xf]
      %v8852 = vld [vmem:[%s8844 + $0x1c] sm:$0xf]
      %v8853 = vld [vmem:[%s8844 + $0x20] sm:$0xf]
      %v8854 = vld [vmem:[%s8844 + $0x24] sm:$0xf]
      %v8855 = vld [vmem:[%s8844 + $0x28] sm:$0xf]
      %v8856 = vld [vmem:[%s8844 + $0x2c] sm:$0xf]
      %v8869 = vunpack.c.l.b16 %v8845
      %v8870 = vunpack.c.l.b16 %v8846
      %v8871 = vunpack.c.l.b16 %v8847
      %v8872 = vunpack.c.l.b16 %v8848
      %v8873 = vunpack.c.l.b16 %v8849
      %v8874 = vunpack.c.l.b16 %v8850
      %v8875 = vunpack.c.l.b16 %v8851
      %v8876 = vunpack.c.l.b16 %v8852
      %v8877 = vunpack.c.l.b16 %v8853
      %v8878 = vunpack.c.l.b16 %v8854
      %v8879 = vunpack.c.l.b16 %v8855
      %v8880 = vunpack.c.l.b16 %v8856
      %v8881 = vpack.c.b16 %v8870, %v8869
      %v8882 = vpack.c.b16 %v8872, %v8871
      %v8883 = vpack.c.b16 %v8874, %v8873
      %v8884 = vpack.c.b16 %v8876, %v8875
      %v8885 = vpack.c.b16 %v8878, %v8877
      %v8886 = vpack.c.b16 %v8880, %v8879
      %v8894 = vsel %vm1006, %v8124, 0
      %8896 = vmatprep.subr.bf16.mxu0 0
      %8897 = vmatpush1.bf16.msra.mxu0 0
      %8898 = vmatprep.subr.bf16.mxu0 0
      %8899 = vmatpush1.bf16.msra.mxu0 0
      %8900 = vmatprep.subr.bf16.mxu0 0
      %8901 = vmatpush1.bf16.msra.mxu0 %v8886
      %8902 = vmatprep.subr.bf16.mxu0 0
      %8903 = vmatpush1.bf16.msra.mxu0 %v8885
      %8904 = vmatprep.subr.bf16.mxu0 0
      %8905 = vmatpush1.bf16.msra.mxu0 %v8884
      %8906 = vmatprep.subr.bf16.mxu0 0
      %8907 = vmatpush1.bf16.msra.mxu0 %v8883
      %8908 = vmatprep.subr.bf16.mxu0 0
      %8909 = vmatpush1.bf16.msra.mxu0 %v8882
      %8910 = vmatprep.subr.bf16.mxu0 0
      %8911 = vmatpush1.bf16.msra.mxu0 %v8881
      %8912 = vmatprep.subr.bf16.mxu0 0
      %8913 = vmatpush2.bf16.msra.mxu0 0
      %8914 = vmatprep.subr.bf16.mxu0 0
      %8915 = vmatpush2.bf16.msra.mxu0 0
      %8916 = vmatprep.subr.bf16.mxu0 0
      %8917 = vmatpush2.bf16.msra.mxu0 0
      %8918 = vmatprep.subr.bf16.mxu0 0
      %8919 = vmatpush2.bf16.msra.mxu0 0
      %8920 = vmatprep.subr.bf16.mxu0 0
      %8921 = vmatpush2.bf16.msra.mxu0 0
      %8922 = vmatprep.subr.bf16.mxu0 0
      %8923 = vmatpush2.bf16.msra.mxu0 0
      %8924 = vmatprep.subr.bf16.mxu0 0
      %8925 = vmatpush2.bf16.msra.mxu0 0
      %8926 = vmatprep.subr.bf16.mxu0 0
      %8927 = vmatpush2.bf16.msra.mxu0 0
      %8928 = vmatprep.mubr.bf16.mxu0 0
      %8929 = vmatmul.mubr.bf16.gmra.mxu0 %v8197
      %v8930 = vpop.f32.mrf.mxu0
      %v8931 = vadd.f32 0.0, %v8930
      %v8932 = vpop.f32.mrf.mxu0
      %v8933 = vpop.f32.mrf.mxu0
      %v8934 = vadd.f32 0.0, %v8933
      %v8935 = vpop.f32.mrf.mxu0
      %8936 = vmatprep.mubr.bf16.mxu0 0
      %8937 = vmatmul.mubr.bf16.gmra.mxu0 %v8200
      %v8938 = vpop.f32.mrf.mxu0
      %v8939 = vadd.f32 0.0, %v8938
      %v8940 = vpop.f32.mrf.mxu0
      %v8941 = vpop.f32.mrf.mxu0
      %v8942 = vadd.f32 0.0, %v8941
      %v8943 = vpop.f32.mrf.mxu0
      %8944 = vmatprep.mubr.bf16.mxu0 0
      %8945 = vmatmul.mubr.bf16.gmra.mxu0 %v8203
      %v8946 = vpop.f32.mrf.mxu0
      %v8947 = vadd.f32 0.0, %v8946
      %v8948 = vpop.f32.mrf.mxu0
      %v8949 = vpop.f32.mrf.mxu0
      %v8950 = vadd.f32 0.0, %v8949
      %v8951 = vpop.f32.mrf.mxu0
      %8952 = vmatprep.mubr.bf16.mxu0 0
      %8953 = vmatmul.mubr.bf16.gmra.mxu0 %v8206
      %v8954 = vpop.f32.mrf.mxu0
      %v8955 = vadd.f32 0.0, %v8954
      %v8956 = vpop.f32.mrf.mxu0
      %v8957 = vpop.f32.mrf.mxu0
      %v8958 = vadd.f32 0.0, %v8957
      %v8959 = vpop.f32.mrf.mxu0
      %8960 = vmatprep.mubr.bf16.mxu0 0
      %8961 = vmatmul.mubr.bf16.gmra.mxu0 %v8209
      %v8962 = vpop.f32.mrf.mxu0
      %v8963 = vadd.f32 0.0, %v8962
      %v8964 = vpop.f32.mrf.mxu0
      %v8965 = vpop.f32.mrf.mxu0
      %v8966 = vadd.f32 0.0, %v8965
      %v8967 = vpop.f32.mrf.mxu0
      %8968 = vmatprep.mubr.bf16.mxu0 0
      %8969 = vmatmul.mubr.bf16.gmra.mxu0 %v8212
      %v8970 = vpop.f32.mrf.mxu0
      %v8971 = vadd.f32 0.0, %v8970
      %v8972 = vpop.f32.mrf.mxu0
      %v8973 = vpop.f32.mrf.mxu0
      %v8974 = vadd.f32 0.0, %v8973
      %v8975 = vpop.f32.mrf.mxu0
      %8976 = vmatprep.mubr.bf16.mxu0 0
      %8977 = vmatmul.mubr.bf16.gmra.mxu0 %v8215
      %v8978 = vpop.f32.mrf.mxu0
      %v8979 = vadd.f32 0.0, %v8978
      %v8980 = vpop.f32.mrf.mxu0
      %v8981 = vpop.f32.mrf.mxu0
      %v8982 = vadd.f32 0.0, %v8981
      %v8983 = vpop.f32.mrf.mxu0
      %8984 = vmatprep.mubr.bf16.mxu0 0
      %8985 = vmatmul.mubr.bf16.gmra.mxu0 %v8218
      %v8986 = vpop.f32.mrf.mxu0
      %v8987 = vadd.f32 0.0, %v8986
      %v8988 = vpop.f32.mrf.mxu0
      %v8989 = vpop.f32.mrf.mxu0
      %v8990 = vadd.f32 0.0, %v8989
      %v8991 = vpop.f32.mrf.mxu0
      %8992 = vmatprep.mubr.bf16.mxu0 0
      %8993 = vmatmul.mubr.bf16.gmra.mxu0 %v8221
      %v8994 = vpop.f32.mrf.mxu0
      %v8995 = vadd.f32 0.0, %v8994
      %v8996 = vpop.f32.mrf.mxu0
      %v8997 = vpop.f32.mrf.mxu0
      %v8998 = vadd.f32 0.0, %v8997
      %v8999 = vpop.f32.mrf.mxu0
      %9000 = vmatprep.mubr.bf16.mxu0 0
      %9001 = vmatmul.mubr.bf16.gmra.mxu0 %v8224
      %v9002 = vpop.f32.mrf.mxu0
      %v9003 = vadd.f32 0.0, %v9002
      %v9004 = vpop.f32.mrf.mxu0
      %v9005 = vpop.f32.mrf.mxu0
      %v9006 = vadd.f32 0.0, %v9005
      %v9007 = vpop.f32.mrf.mxu0
      %9008 = vmatprep.mubr.bf16.mxu0 0
      %9009 = vmatmul.mubr.bf16.gmra.mxu0 %v8227
      %v9010 = vpop.f32.mrf.mxu0
      %v9011 = vadd.f32 0.0, %v9010
      %v9012 = vpop.f32.mrf.mxu0
      %v9013 = vpop.f32.mrf.mxu0
      %v9014 = vadd.f32 0.0, %v9013
      %v9015 = vpop.f32.mrf.mxu0
      %9016 = vmatprep.mubr.bf16.mxu0 0
      %9017 = vmatmul.mubr.bf16.gmra.mxu0 %v8230
      %v9018 = vpop.f32.mrf.mxu0
      %v9019 = vadd.f32 0.0, %v9018
      %v9020 = vpop.f32.mrf.mxu0
      %v9021 = vpop.f32.mrf.mxu0
      %v9022 = vadd.f32 0.0, %v9021
      %v9023 = vpop.f32.mrf.mxu0
      %9024 = vmatprep.mubr.bf16.mxu0 0
      %9025 = vmatmul.mubr.bf16.gmra.mxu0 %v8233
      %v9026 = vpop.f32.mrf.mxu0
      %v9027 = vadd.f32 0.0, %v9026
      %v9028 = vpop.f32.mrf.mxu0
      %v9029 = vpop.f32.mrf.mxu0
      %v9030 = vadd.f32 0.0, %v9029
      %v9031 = vpop.f32.mrf.mxu0
      %9032 = vmatprep.mubr.bf16.mxu0 0
      %9033 = vmatmul.mubr.bf16.gmra.mxu0 %v8236
      %v9034 = vpop.f32.mrf.mxu0
      %v9035 = vadd.f32 0.0, %v9034
      %v9036 = vpop.f32.mrf.mxu0
      %v9037 = vpop.f32.mrf.mxu0
      %v9038 = vadd.f32 0.0, %v9037
      %v9039 = vpop.f32.mrf.mxu0
      %9040 = vmatprep.mubr.bf16.mxu0 0
      %9041 = vmatmul.mubr.bf16.gmra.mxu0 %v8649
      %v9042 = vpop.f32.mrf.mxu0
      %v9043 = vadd.f32 0.0, %v9042
      %v9044 = vpop.f32.mrf.mxu0
      %v9045 = vpop.f32.mrf.mxu0
      %v9046 = vadd.f32 0.0, %v9045
      %v9047 = vpop.f32.mrf.mxu0
      %9048 = vmatprep.mubr.bf16.mxu0 0
      %9049 = vmatmul.mubr.bf16.gmra.mxu0 %v8894
      %v9050 = vpop.f32.mrf.mxu0
      %v9051 = vadd.f32 0.0, %v9050
      %v9052 = vpop.f32.mrf.mxu0
      %v9053 = vpop.f32.mrf.mxu0
      %v9054 = vadd.f32 0.0, %v9053
      %v9055 = vpop.f32.mrf.mxu0
      %9056 = vdwg.mxu0
      %v9057 = vadd.f32 %v8812, %v8931
      %v9058 = vadd.f32 %v8813, %v8934
      %v9059 = vadd.f32 %v8814, %v8939
      %v9060 = vadd.f32 %v8815, %v8942
      %v9061 = vadd.f32 %v8816, %v8947
      %v9062 = vadd.f32 %v8817, %v8950
      %v9063 = vadd.f32 %v8818, %v8955
      %v9064 = vadd.f32 %v8819, %v8958
      %v9065 = vadd.f32 %v8820, %v8963
      %v9066 = vadd.f32 %v8821, %v8966
      %v9067 = vadd.f32 %v8822, %v8971
      %v9068 = vadd.f32 %v8823, %v8974
      %v9069 = vadd.f32 %v8824, %v8979
      %v9070 = vadd.f32 %v8825, %v8982
      %v9071 = vadd.f32 %v8826, %v8987
      %v9072 = vadd.f32 %v8827, %v8990
      %v9073 = vadd.f32 %v8828, %v8995
      %v9074 = vadd.f32 %v8829, %v8998
      %v9075 = vadd.f32 %v8830, %v9003
      %v9076 = vadd.f32 %v8831, %v9006
      %v9077 = vadd.f32 %v8832, %v9011
      %v9078 = vadd.f32 %v8833, %v9014
      %v9079 = vadd.f32 %v8834, %v9019
      %v9080 = vadd.f32 %v8835, %v9022
      %v9081 = vadd.f32 %v8836, %v9027
      %v9082 = vadd.f32 %v8837, %v9030
      %v9083 = vadd.f32 %v8838, %v9035
      %v9084 = vadd.f32 %v8839, %v9038
      %v9085 = vadd.f32 %v8840, %v9043
      %v9086 = vadd.f32 %v8841, %v9046
      %v9087 = vadd.f32 %v8842, %v9051
      %v9088 = vadd.f32 %v8843, %v9054
      %s9089 = scalar_lea.vmem %s1, 1200
      %v9090 = vld [vmem:[%s9089] sm:$0xf]
      %v9091 = vld [vmem:[%s9089 + $0x4] sm:$0xf]
      %v9092 = vld [vmem:[%s9089 + $0x8] sm:$0xf]
      %v9093 = vld [vmem:[%s9089 + $0xc] sm:$0xf]
      %v9094 = vld [vmem:[%s9089 + $0x10] sm:$0xf]
      %v9095 = vld [vmem:[%s9089 + $0x14] sm:$0xf]
      %v9096 = vld [vmem:[%s9089 + $0x18] sm:$0xf]
      %v9097 = vld [vmem:[%s9089 + $0x1c] sm:$0xf]
      %v9098 = vld [vmem:[%s9089 + $0x20] sm:$0xf]
      %v9099 = vld [vmem:[%s9089 + $0x24] sm:$0xf]
      %v9100 = vld [vmem:[%s9089 + $0x28] sm:$0xf]
      %v9101 = vld [vmem:[%s9089 + $0x2c] sm:$0xf]
      %v9114 = vunpack.c.l.b16 %v9090
      %v9115 = vunpack.c.l.b16 %v9091
      %v9116 = vunpack.c.l.b16 %v9092
      %v9117 = vunpack.c.l.b16 %v9093
      %v9118 = vunpack.c.l.b16 %v9094
      %v9119 = vunpack.c.l.b16 %v9095
      %v9120 = vunpack.c.l.b16 %v9096
      %v9121 = vunpack.c.l.b16 %v9097
      %v9122 = vunpack.c.l.b16 %v9098
      %v9123 = vunpack.c.l.b16 %v9099
      %v9124 = vunpack.c.l.b16 %v9100
      %v9125 = vunpack.c.l.b16 %v9101
      %v9126 = vpack.c.b16 %v9115, %v9114
      %v9127 = vpack.c.b16 %v9117, %v9116
      %v9128 = vpack.c.b16 %v9119, %v9118
      %v9129 = vpack.c.b16 %v9121, %v9120
      %v9130 = vpack.c.b16 %v9123, %v9122
      %v9131 = vpack.c.b16 %v9125, %v9124
      %v9139 = vsel %vm1006, %v8125, 0
      %9141 = vmatprep.subr.bf16.mxu0 0
      %9142 = vmatpush1.bf16.msra.mxu0 0
      %9143 = vmatprep.subr.bf16.mxu0 0
      %9144 = vmatpush1.bf16.msra.mxu0 0
      %9145 = vmatprep.subr.bf16.mxu0 0
      %9146 = vmatpush1.bf16.msra.mxu0 %v9131
      %9147 = vmatprep.subr.bf16.mxu0 0
      %9148 = vmatpush1.bf16.msra.mxu0 %v9130
      %9149 = vmatprep.subr.bf16.mxu0 0
      %9150 = vmatpush1.bf16.msra.mxu0 %v9129
      %9151 = vmatprep.subr.bf16.mxu0 0
      %9152 = vmatpush1.bf16.msra.mxu0 %v9128
      %9153 = vmatprep.subr.bf16.mxu0 0
      %9154 = vmatpush1.bf16.msra.mxu0 %v9127
      %9155 = vmatprep.subr.bf16.mxu0 0
      %9156 = vmatpush1.bf16.msra.mxu0 %v9126
      %9157 = vmatprep.subr.bf16.mxu0 0
      %9158 = vmatpush2.bf16.msra.mxu0 0
      %9159 = vmatprep.subr.bf16.mxu0 0
      %9160 = vmatpush2.bf16.msra.mxu0 0
      %9161 = vmatprep.subr.bf16.mxu0 0
      %9162 = vmatpush2.bf16.msra.mxu0 0
      %9163 = vmatprep.subr.bf16.mxu0 0
      %9164 = vmatpush2.bf16.msra.mxu0 0
      %9165 = vmatprep.subr.bf16.mxu0 0
      %9166 = vmatpush2.bf16.msra.mxu0 0
      %9167 = vmatprep.subr.bf16.mxu0 0
      %9168 = vmatpush2.bf16.msra.mxu0 0
      %9169 = vmatprep.subr.bf16.mxu0 0
      %9170 = vmatpush2.bf16.msra.mxu0 0
      %9171 = vmatprep.subr.bf16.mxu0 0
      %9172 = vmatpush2.bf16.msra.mxu0 0
      %9173 = vmatprep.mubr.bf16.mxu0 0
      %9174 = vmatmul.mubr.bf16.gmra.mxu0 %v8200
      %v9175 = vpop.f32.mrf.mxu0
      %v9176 = vadd.f32 0.0, %v9175
      %v9177 = vpop.f32.mrf.mxu0
      %v9178 = vpop.f32.mrf.mxu0
      %v9179 = vadd.f32 0.0, %v9178
      %v9180 = vpop.f32.mrf.mxu0
      %9181 = vmatprep.mubr.bf16.mxu0 0
      %9182 = vmatmul.mubr.bf16.gmra.mxu0 %v8203
      %v9183 = vpop.f32.mrf.mxu0
      %v9184 = vadd.f32 0.0, %v9183
      %v9185 = vpop.f32.mrf.mxu0
      %v9186 = vpop.f32.mrf.mxu0
      %v9187 = vadd.f32 0.0, %v9186
      %v9188 = vpop.f32.mrf.mxu0
      %9189 = vmatprep.mubr.bf16.mxu0 0
      %9190 = vmatmul.mubr.bf16.gmra.mxu0 %v8206
      %v9191 = vpop.f32.mrf.mxu0
      %v9192 = vadd.f32 0.0, %v9191
      %v9193 = vpop.f32.mrf.mxu0
      %v9194 = vpop.f32.mrf.mxu0
      %v9195 = vadd.f32 0.0, %v9194
      %v9196 = vpop.f32.mrf.mxu0
      %9197 = vmatprep.mubr.bf16.mxu0 0
      %9198 = vmatmul.mubr.bf16.gmra.mxu0 %v8209
      %v9199 = vpop.f32.mrf.mxu0
      %v9200 = vadd.f32 0.0, %v9199
      %v9201 = vpop.f32.mrf.mxu0
      %v9202 = vpop.f32.mrf.mxu0
      %v9203 = vadd.f32 0.0, %v9202
      %v9204 = vpop.f32.mrf.mxu0
      %9205 = vmatprep.mubr.bf16.mxu0 0
      %9206 = vmatmul.mubr.bf16.gmra.mxu0 %v8212
      %v9207 = vpop.f32.mrf.mxu0
      %v9208 = vadd.f32 0.0, %v9207
      %v9209 = vpop.f32.mrf.mxu0
      %v9210 = vpop.f32.mrf.mxu0
      %v9211 = vadd.f32 0.0, %v9210
      %v9212 = vpop.f32.mrf.mxu0
      %9213 = vmatprep.mubr.bf16.mxu0 0
      %9214 = vmatmul.mubr.bf16.gmra.mxu0 %v8215
      %v9215 = vpop.f32.mrf.mxu0
      %v9216 = vadd.f32 0.0, %v9215
      %v9217 = vpop.f32.mrf.mxu0
      %v9218 = vpop.f32.mrf.mxu0
      %v9219 = vadd.f32 0.0, %v9218
      %v9220 = vpop.f32.mrf.mxu0
      %9221 = vmatprep.mubr.bf16.mxu0 0
      %9222 = vmatmul.mubr.bf16.gmra.mxu0 %v8218
      %v9223 = vpop.f32.mrf.mxu0
      %v9224 = vadd.f32 0.0, %v9223
      %v9225 = vpop.f32.mrf.mxu0
      %v9226 = vpop.f32.mrf.mxu0
      %v9227 = vadd.f32 0.0, %v9226
      %v9228 = vpop.f32.mrf.mxu0
      %9229 = vmatprep.mubr.bf16.mxu0 0
      %9230 = vmatmul.mubr.bf16.gmra.mxu0 %v8221
      %v9231 = vpop.f32.mrf.mxu0
      %v9232 = vadd.f32 0.0, %v9231
      %v9233 = vpop.f32.mrf.mxu0
      %v9234 = vpop.f32.mrf.mxu0
      %v9235 = vadd.f32 0.0, %v9234
      %v9236 = vpop.f32.mrf.mxu0
      %9237 = vmatprep.mubr.bf16.mxu0 0
      %9238 = vmatmul.mubr.bf16.gmra.mxu0 %v8224
      %v9239 = vpop.f32.mrf.mxu0
      %v9240 = vadd.f32 0.0, %v9239
      %v9241 = vpop.f32.mrf.mxu0
      %v9242 = vpop.f32.mrf.mxu0
      %v9243 = vadd.f32 0.0, %v9242
      %v9244 = vpop.f32.mrf.mxu0
      %9245 = vmatprep.mubr.bf16.mxu0 0
      %9246 = vmatmul.mubr.bf16.gmra.mxu0 %v8227
      %v9247 = vpop.f32.mrf.mxu0
      %v9248 = vadd.f32 0.0, %v9247
      %v9249 = vpop.f32.mrf.mxu0
      %v9250 = vpop.f32.mrf.mxu0
      %v9251 = vadd.f32 0.0, %v9250
      %v9252 = vpop.f32.mrf.mxu0
      %9253 = vmatprep.mubr.bf16.mxu0 0
      %9254 = vmatmul.mubr.bf16.gmra.mxu0 %v8230
      %v9255 = vpop.f32.mrf.mxu0
      %v9256 = vadd.f32 0.0, %v9255
      %v9257 = vpop.f32.mrf.mxu0
      %v9258 = vpop.f32.mrf.mxu0
      %v9259 = vadd.f32 0.0, %v9258
      %v9260 = vpop.f32.mrf.mxu0
      %9261 = vmatprep.mubr.bf16.mxu0 0
      %9262 = vmatmul.mubr.bf16.gmra.mxu0 %v8233
      %v9263 = vpop.f32.mrf.mxu0
      %v9264 = vadd.f32 0.0, %v9263
      %v9265 = vpop.f32.mrf.mxu0
      %v9266 = vpop.f32.mrf.mxu0
      %v9267 = vadd.f32 0.0, %v9266
      %v9268 = vpop.f32.mrf.mxu0
      %9269 = vmatprep.mubr.bf16.mxu0 0
      %9270 = vmatmul.mubr.bf16.gmra.mxu0 %v8236
      %v9271 = vpop.f32.mrf.mxu0
      %v9272 = vadd.f32 0.0, %v9271
      %v9273 = vpop.f32.mrf.mxu0
      %v9274 = vpop.f32.mrf.mxu0
      %v9275 = vadd.f32 0.0, %v9274
      %v9276 = vpop.f32.mrf.mxu0
      %9277 = vmatprep.mubr.bf16.mxu0 0
      %9278 = vmatmul.mubr.bf16.gmra.mxu0 %v8649
      %v9279 = vpop.f32.mrf.mxu0
      %v9280 = vadd.f32 0.0, %v9279
      %v9281 = vpop.f32.mrf.mxu0
      %v9282 = vpop.f32.mrf.mxu0
      %v9283 = vadd.f32 0.0, %v9282
      %v9284 = vpop.f32.mrf.mxu0
      %9285 = vmatprep.mubr.bf16.mxu0 0
      %9286 = vmatmul.mubr.bf16.gmra.mxu0 %v8894
      %v9287 = vpop.f32.mrf.mxu0
      %v9288 = vadd.f32 0.0, %v9287
      %v9289 = vpop.f32.mrf.mxu0
      %v9290 = vpop.f32.mrf.mxu0
      %v9291 = vadd.f32 0.0, %v9290
      %v9292 = vpop.f32.mrf.mxu0
      %9293 = vmatprep.mubr.bf16.mxu0 0
      %9294 = vmatmul.mubr.bf16.gmra.mxu0 %v9139
      %v9295 = vpop.f32.mrf.mxu0
      %v9296 = vadd.f32 0.0, %v9295
      %v9297 = vpop.f32.mrf.mxu0
      %v9298 = vpop.f32.mrf.mxu0
      %v9299 = vadd.f32 0.0, %v9298
      %v9300 = vpop.f32.mrf.mxu0
      %9301 = vdwg.mxu0
      %v9302 = vadd.f32 %v9057, %v9176
      %v9303 = vadd.f32 %v9058, %v9179
      %v9304 = vadd.f32 %v9059, %v9184
      %v9305 = vadd.f32 %v9060, %v9187
      %v9306 = vadd.f32 %v9061, %v9192
      %v9307 = vadd.f32 %v9062, %v9195
      %v9308 = vadd.f32 %v9063, %v9200
      %v9309 = vadd.f32 %v9064, %v9203
      %v9310 = vadd.f32 %v9065, %v9208
      %v9311 = vadd.f32 %v9066, %v9211
      %v9312 = vadd.f32 %v9067, %v9216
      %v9313 = vadd.f32 %v9068, %v9219
      %v9314 = vadd.f32 %v9069, %v9224
      %v9315 = vadd.f32 %v9070, %v9227
      %v9316 = vadd.f32 %v9071, %v9232
      %v9317 = vadd.f32 %v9072, %v9235
      %v9318 = vadd.f32 %v9073, %v9240
      %v9319 = vadd.f32 %v9074, %v9243
      %v9320 = vadd.f32 %v9075, %v9248
      %v9321 = vadd.f32 %v9076, %v9251
      %v9322 = vadd.f32 %v9077, %v9256
      %v9323 = vadd.f32 %v9078, %v9259
      %v9324 = vadd.f32 %v9079, %v9264
      %v9325 = vadd.f32 %v9080, %v9267
      %v9326 = vadd.f32 %v9081, %v9272
      %v9327 = vadd.f32 %v9082, %v9275
      %v9328 = vadd.f32 %v9083, %v9280
      %v9329 = vadd.f32 %v9084, %v9283
      %v9330 = vadd.f32 %v9085, %v9288
      %v9331 = vadd.f32 %v9086, %v9291
      %v9332 = vadd.f32 %v9087, %v9296
      %v9333 = vadd.f32 %v9088, %v9299
      %s9334 = scalar_lea.vmem %s1, 1248
      %v9335 = vld [vmem:[%s9334] sm:$0xf]
      %v9336 = vld [vmem:[%s9334 + $0x4] sm:$0xf]
      %v9337 = vld [vmem:[%s9334 + $0x8] sm:$0xf]
      %v9338 = vld [vmem:[%s9334 + $0xc] sm:$0xf]
      %v9339 = vld [vmem:[%s9334 + $0x10] sm:$0xf]
      %v9340 = vld [vmem:[%s9334 + $0x14] sm:$0xf]
      %v9341 = vld [vmem:[%s9334 + $0x18] sm:$0xf]
      %v9342 = vld [vmem:[%s9334 + $0x1c] sm:$0xf]
      %v9343 = vld [vmem:[%s9334 + $0x20] sm:$0xf]
      %v9344 = vld [vmem:[%s9334 + $0x24] sm:$0xf]
      %v9345 = vld [vmem:[%s9334 + $0x28] sm:$0xf]
      %v9346 = vld [vmem:[%s9334 + $0x2c] sm:$0xf]
      %v9359 = vunpack.c.l.b16 %v9335
      %v9360 = vunpack.c.l.b16 %v9336
      %v9361 = vunpack.c.l.b16 %v9337
      %v9362 = vunpack.c.l.b16 %v9338
      %v9363 = vunpack.c.l.b16 %v9339
      %v9364 = vunpack.c.l.b16 %v9340
      %v9365 = vunpack.c.l.b16 %v9341
      %v9366 = vunpack.c.l.b16 %v9342
      %v9367 = vunpack.c.l.b16 %v9343
      %v9368 = vunpack.c.l.b16 %v9344
      %v9369 = vunpack.c.l.b16 %v9345
      %v9370 = vunpack.c.l.b16 %v9346
      %v9371 = vpack.c.b16 %v9360, %v9359
      %v9372 = vpack.c.b16 %v9362, %v9361
      %v9373 = vpack.c.b16 %v9364, %v9363
      %v9374 = vpack.c.b16 %v9366, %v9365
      %v9375 = vpack.c.b16 %v9368, %v9367
      %v9376 = vpack.c.b16 %v9370, %v9369
      %v9384 = vsel %vm1006, %v8126, 0
      %9386 = vmatprep.subr.bf16.mxu0 0
      %9387 = vmatpush1.bf16.msra.mxu0 0
      %9388 = vmatprep.subr.bf16.mxu0 0
      %9389 = vmatpush1.bf16.msra.mxu0 0
      %9390 = vmatprep.subr.bf16.mxu0 0
      %9391 = vmatpush1.bf16.msra.mxu0 %v9376
      %9392 = vmatprep.subr.bf16.mxu0 0
      %9393 = vmatpush1.bf16.msra.mxu0 %v9375
      %9394 = vmatprep.subr.bf16.mxu0 0
      %9395 = vmatpush1.bf16.msra.mxu0 %v9374
      %9396 = vmatprep.subr.bf16.mxu0 0
      %9397 = vmatpush1.bf16.msra.mxu0 %v9373
      %9398 = vmatprep.subr.bf16.mxu0 0
      %9399 = vmatpush1.bf16.msra.mxu0 %v9372
      %9400 = vmatprep.subr.bf16.mxu0 0
      %9401 = vmatpush1.bf16.msra.mxu0 %v9371
      %9402 = vmatprep.subr.bf16.mxu0 0
      %9403 = vmatpush2.bf16.msra.mxu0 0
      %9404 = vmatprep.subr.bf16.mxu0 0
      %9405 = vmatpush2.bf16.msra.mxu0 0
      %9406 = vmatprep.subr.bf16.mxu0 0
      %9407 = vmatpush2.bf16.msra.mxu0 0
      %9408 = vmatprep.subr.bf16.mxu0 0
      %9409 = vmatpush2.bf16.msra.mxu0 0
      %9410 = vmatprep.subr.bf16.mxu0 0
      %9411 = vmatpush2.bf16.msra.mxu0 0
      %9412 = vmatprep.subr.bf16.mxu0 0
      %9413 = vmatpush2.bf16.msra.mxu0 0
      %9414 = vmatprep.subr.bf16.mxu0 0
      %9415 = vmatpush2.bf16.msra.mxu0 0
      %9416 = vmatprep.subr.bf16.mxu0 0
      %9417 = vmatpush2.bf16.msra.mxu0 0
      %9418 = vmatprep.mubr.bf16.mxu0 0
      %9419 = vmatmul.mubr.bf16.gmra.mxu0 %v8203
      %v9420 = vpop.f32.mrf.mxu0
      %v9421 = vadd.f32 0.0, %v9420
      %v9422 = vpop.f32.mrf.mxu0
      %v9423 = vpop.f32.mrf.mxu0
      %v9424 = vadd.f32 0.0, %v9423
      %v9425 = vpop.f32.mrf.mxu0
      %9426 = vmatprep.mubr.bf16.mxu0 0
      %9427 = vmatmul.mubr.bf16.gmra.mxu0 %v8206
      %v9428 = vpop.f32.mrf.mxu0
      %v9429 = vadd.f32 0.0, %v9428
      %v9430 = vpop.f32.mrf.mxu0
      %v9431 = vpop.f32.mrf.mxu0
      %v9432 = vadd.f32 0.0, %v9431
      %v9433 = vpop.f32.mrf.mxu0
      %9434 = vmatprep.mubr.bf16.mxu0 0
      %9435 = vmatmul.mubr.bf16.gmra.mxu0 %v8209
      %v9436 = vpop.f32.mrf.mxu0
      %v9437 = vadd.f32 0.0, %v9436
      %v9438 = vpop.f32.mrf.mxu0
      %v9439 = vpop.f32.mrf.mxu0
      %v9440 = vadd.f32 0.0, %v9439
      %v9441 = vpop.f32.mrf.mxu0
      %9442 = vmatprep.mubr.bf16.mxu0 0
      %9443 = vmatmul.mubr.bf16.gmra.mxu0 %v8212
      %v9444 = vpop.f32.mrf.mxu0
      %v9445 = vadd.f32 0.0, %v9444
      %v9446 = vpop.f32.mrf.mxu0
      %v9447 = vpop.f32.mrf.mxu0
      %v9448 = vadd.f32 0.0, %v9447
      %v9449 = vpop.f32.mrf.mxu0
      %9450 = vmatprep.mubr.bf16.mxu0 0
      %9451 = vmatmul.mubr.bf16.gmra.mxu0 %v8215
      %v9452 = vpop.f32.mrf.mxu0
      %v9453 = vadd.f32 0.0, %v9452
      %v9454 = vpop.f32.mrf.mxu0
      %v9455 = vpop.f32.mrf.mxu0
      %v9456 = vadd.f32 0.0, %v9455
      %v9457 = vpop.f32.mrf.mxu0
      %9458 = vmatprep.mubr.bf16.mxu0 0
      %9459 = vmatmul.mubr.bf16.gmra.mxu0 %v8218
      %v9460 = vpop.f32.mrf.mxu0
      %v9461 = vadd.f32 0.0, %v9460
      %v9462 = vpop.f32.mrf.mxu0
      %v9463 = vpop.f32.mrf.mxu0
      %v9464 = vadd.f32 0.0, %v9463
      %v9465 = vpop.f32.mrf.mxu0
      %9466 = vmatprep.mubr.bf16.mxu0 0
      %9467 = vmatmul.mubr.bf16.gmra.mxu0 %v8221
      %v9468 = vpop.f32.mrf.mxu0
      %v9469 = vadd.f32 0.0, %v9468
      %v9470 = vpop.f32.mrf.mxu0
      %v9471 = vpop.f32.mrf.mxu0
      %v9472 = vadd.f32 0.0, %v9471
      %v9473 = vpop.f32.mrf.mxu0
      %9474 = vmatprep.mubr.bf16.mxu0 0
      %9475 = vmatmul.mubr.bf16.gmra.mxu0 %v8224
      %v9476 = vpop.f32.mrf.mxu0
      %v9477 = vadd.f32 0.0, %v9476
      %v9478 = vpop.f32.mrf.mxu0
      %v9479 = vpop.f32.mrf.mxu0
      %v9480 = vadd.f32 0.0, %v9479
      %v9481 = vpop.f32.mrf.mxu0
      %9482 = vmatprep.mubr.bf16.mxu0 0
      %9483 = vmatmul.mubr.bf16.gmra.mxu0 %v8227
      %v9484 = vpop.f32.mrf.mxu0
      %v9485 = vadd.f32 0.0, %v9484
      %v9486 = vpop.f32.mrf.mxu0
      %v9487 = vpop.f32.mrf.mxu0
      %v9488 = vadd.f32 0.0, %v9487
      %v9489 = vpop.f32.mrf.mxu0
      %9490 = vmatprep.mubr.bf16.mxu0 0
      %9491 = vmatmul.mubr.bf16.gmra.mxu0 %v8230
      %v9492 = vpop.f32.mrf.mxu0
      %v9493 = vadd.f32 0.0, %v9492
      %v9494 = vpop.f32.mrf.mxu0
      %v9495 = vpop.f32.mrf.mxu0
      %v9496 = vadd.f32 0.0, %v9495
      %v9497 = vpop.f32.mrf.mxu0
      %9498 = vmatprep.mubr.bf16.mxu0 0
      %9499 = vmatmul.mubr.bf16.gmra.mxu0 %v8233
      %v9500 = vpop.f32.mrf.mxu0
      %v9501 = vadd.f32 0.0, %v9500
      %v9502 = vpop.f32.mrf.mxu0
      %v9503 = vpop.f32.mrf.mxu0
      %v9504 = vadd.f32 0.0, %v9503
      %v9505 = vpop.f32.mrf.mxu0
      %9506 = vmatprep.mubr.bf16.mxu0 0
      %9507 = vmatmul.mubr.bf16.gmra.mxu0 %v8236
      %v9508 = vpop.f32.mrf.mxu0
      %v9509 = vadd.f32 0.0, %v9508
      %v9510 = vpop.f32.mrf.mxu0
      %v9511 = vpop.f32.mrf.mxu0
      %v9512 = vadd.f32 0.0, %v9511
      %v9513 = vpop.f32.mrf.mxu0
      %9514 = vmatprep.mubr.bf16.mxu0 0
      %9515 = vmatmul.mubr.bf16.gmra.mxu0 %v8649
      %v9516 = vpop.f32.mrf.mxu0
      %v9517 = vadd.f32 0.0, %v9516
      %v9518 = vpop.f32.mrf.mxu0
      %v9519 = vpop.f32.mrf.mxu0
      %v9520 = vadd.f32 0.0, %v9519
      %v9521 = vpop.f32.mrf.mxu0
      %9522 = vmatprep.mubr.bf16.mxu0 0
      %9523 = vmatmul.mubr.bf16.gmra.mxu0 %v8894
      %v9524 = vpop.f32.mrf.mxu0
      %v9525 = vadd.f32 0.0, %v9524
      %v9526 = vpop.f32.mrf.mxu0
      %v9527 = vpop.f32.mrf.mxu0
      %v9528 = vadd.f32 0.0, %v9527
      %v9529 = vpop.f32.mrf.mxu0
      %9530 = vmatprep.mubr.bf16.mxu0 0
      %9531 = vmatmul.mubr.bf16.gmra.mxu0 %v9139
      %v9532 = vpop.f32.mrf.mxu0
      %v9533 = vadd.f32 0.0, %v9532
      %v9534 = vpop.f32.mrf.mxu0
      %v9535 = vpop.f32.mrf.mxu0
      %v9536 = vadd.f32 0.0, %v9535
      %v9537 = vpop.f32.mrf.mxu0
      %9538 = vmatprep.mubr.bf16.mxu0 0
      %9539 = vmatmul.mubr.bf16.gmra.mxu0 %v9384
      %v9540 = vpop.f32.mrf.mxu0
      %v9541 = vadd.f32 0.0, %v9540
      %v9542 = vpop.f32.mrf.mxu0
      %v9543 = vpop.f32.mrf.mxu0
      %v9544 = vadd.f32 0.0, %v9543
      %v9545 = vpop.f32.mrf.mxu0
      %9546 = vdwg.mxu0
      %v9547 = vadd.f32 %v9302, %v9421
      %v9548 = vadd.f32 %v9303, %v9424
      %v9549 = vadd.f32 %v9304, %v9429
      %v9550 = vadd.f32 %v9305, %v9432
      %v9551 = vadd.f32 %v9306, %v9437
      %v9552 = vadd.f32 %v9307, %v9440
      %v9553 = vadd.f32 %v9308, %v9445
      %v9554 = vadd.f32 %v9309, %v9448
      %v9555 = vadd.f32 %v9310, %v9453
      %v9556 = vadd.f32 %v9311, %v9456
      %v9557 = vadd.f32 %v9312, %v9461
      %v9558 = vadd.f32 %v9313, %v9464
      %v9559 = vadd.f32 %v9314, %v9469
      %v9560 = vadd.f32 %v9315, %v9472
      %v9561 = vadd.f32 %v9316, %v9477
      %v9562 = vadd.f32 %v9317, %v9480
      %v9563 = vadd.f32 %v9318, %v9485
      %v9564 = vadd.f32 %v9319, %v9488
      %v9565 = vadd.f32 %v9320, %v9493
      %v9566 = vadd.f32 %v9321, %v9496
      %v9567 = vadd.f32 %v9322, %v9501
      %v9568 = vadd.f32 %v9323, %v9504
      %v9569 = vadd.f32 %v9324, %v9509
      %v9570 = vadd.f32 %v9325, %v9512
      %v9571 = vadd.f32 %v9326, %v9517
      %v9572 = vadd.f32 %v9327, %v9520
      %v9573 = vadd.f32 %v9328, %v9525
      %v9574 = vadd.f32 %v9329, %v9528
      %v9575 = vadd.f32 %v9330, %v9533
      %v9576 = vadd.f32 %v9331, %v9536
      %v9577 = vadd.f32 %v9332, %v9541
      %v9578 = vadd.f32 %v9333, %v9544
      %s9579 = scalar_lea.vmem %s1, 1296
      %v9580 = vld [vmem:[%s9579] sm:$0xf]
      %v9581 = vld [vmem:[%s9579 + $0x4] sm:$0xf]
      %v9582 = vld [vmem:[%s9579 + $0x8] sm:$0xf]
      %v9583 = vld [vmem:[%s9579 + $0xc] sm:$0xf]
      %v9584 = vld [vmem:[%s9579 + $0x10] sm:$0xf]
      %v9585 = vld [vmem:[%s9579 + $0x14] sm:$0xf]
      %v9586 = vld [vmem:[%s9579 + $0x18] sm:$0xf]
      %v9587 = vld [vmem:[%s9579 + $0x1c] sm:$0xf]
      %v9588 = vld [vmem:[%s9579 + $0x20] sm:$0xf]
      %v9589 = vld [vmem:[%s9579 + $0x24] sm:$0xf]
      %v9590 = vld [vmem:[%s9579 + $0x28] sm:$0xf]
      %v9591 = vld [vmem:[%s9579 + $0x2c] sm:$0xf]
      %v9604 = vunpack.c.l.b16 %v9580
      %v9605 = vunpack.c.l.b16 %v9581
      %v9606 = vunpack.c.l.b16 %v9582
      %v9607 = vunpack.c.l.b16 %v9583
      %v9608 = vunpack.c.l.b16 %v9584
      %v9609 = vunpack.c.l.b16 %v9585
      %v9610 = vunpack.c.l.b16 %v9586
      %v9611 = vunpack.c.l.b16 %v9587
      %v9612 = vunpack.c.l.b16 %v9588
      %v9613 = vunpack.c.l.b16 %v9589
      %v9614 = vunpack.c.l.b16 %v9590
      %v9615 = vunpack.c.l.b16 %v9591
      %v9616 = vpack.c.b16 %v9605, %v9604
      %v9617 = vpack.c.b16 %v9607, %v9606
      %v9618 = vpack.c.b16 %v9609, %v9608
      %v9619 = vpack.c.b16 %v9611, %v9610
      %v9620 = vpack.c.b16 %v9613, %v9612
      %v9621 = vpack.c.b16 %v9615, %v9614
      %v9629 = vsel %vm1006, %v8127, 0
      %9631 = vmatprep.subr.bf16.mxu0 0
      %9632 = vmatpush1.bf16.msra.mxu0 0
      %9633 = vmatprep.subr.bf16.mxu0 0
      %9634 = vmatpush1.bf16.msra.mxu0 0
      %9635 = vmatprep.subr.bf16.mxu0 0
      %9636 = vmatpush1.bf16.msra.mxu0 %v9621
      %9637 = vmatprep.subr.bf16.mxu0 0
      %9638 = vmatpush1.bf16.msra.mxu0 %v9620
      %9639 = vmatprep.subr.bf16.mxu0 0
      %9640 = vmatpush1.bf16.msra.mxu0 %v9619
      %9641 = vmatprep.subr.bf16.mxu0 0
      %9642 = vmatpush1.bf16.msra.mxu0 %v9618
      %9643 = vmatprep.subr.bf16.mxu0 0
      %9644 = vmatpush1.bf16.msra.mxu0 %v9617
      %9645 = vmatprep.subr.bf16.mxu0 0
      %9646 = vmatpush1.bf16.msra.mxu0 %v9616
      %9647 = vmatprep.subr.bf16.mxu0 0
      %9648 = vmatpush2.bf16.msra.mxu0 0
      %9649 = vmatprep.subr.bf16.mxu0 0
      %9650 = vmatpush2.bf16.msra.mxu0 0
      %9651 = vmatprep.subr.bf16.mxu0 0
      %9652 = vmatpush2.bf16.msra.mxu0 0
      %9653 = vmatprep.subr.bf16.mxu0 0
      %9654 = vmatpush2.bf16.msra.mxu0 0
      %9655 = vmatprep.subr.bf16.mxu0 0
      %9656 = vmatpush2.bf16.msra.mxu0 0
      %9657 = vmatprep.subr.bf16.mxu0 0
      %9658 = vmatpush2.bf16.msra.mxu0 0
      %9659 = vmatprep.subr.bf16.mxu0 0
      %9660 = vmatpush2.bf16.msra.mxu0 0
      %9661 = vmatprep.subr.bf16.mxu0 0
      %9662 = vmatpush2.bf16.msra.mxu0 0
      %9663 = vmatprep.mubr.bf16.mxu0 0
      %9664 = vmatmul.mubr.bf16.gmra.mxu0 %v8206
      %v9665 = vpop.f32.mrf.mxu0
      %v9666 = vadd.f32 0.0, %v9665
      %v9667 = vpop.f32.mrf.mxu0
      %v9668 = vpop.f32.mrf.mxu0
      %v9669 = vadd.f32 0.0, %v9668
      %v9670 = vpop.f32.mrf.mxu0
      %9671 = vmatprep.mubr.bf16.mxu0 0
      %9672 = vmatmul.mubr.bf16.gmra.mxu0 %v8209
      %v9673 = vpop.f32.mrf.mxu0
      %v9674 = vadd.f32 0.0, %v9673
      %v9675 = vpop.f32.mrf.mxu0
      %v9676 = vpop.f32.mrf.mxu0
      %v9677 = vadd.f32 0.0, %v9676
      %v9678 = vpop.f32.mrf.mxu0
      %9679 = vmatprep.mubr.bf16.mxu0 0
      %9680 = vmatmul.mubr.bf16.gmra.mxu0 %v8212
      %v9681 = vpop.f32.mrf.mxu0
      %v9682 = vadd.f32 0.0, %v9681
      %v9683 = vpop.f32.mrf.mxu0
      %v9684 = vpop.f32.mrf.mxu0
      %v9685 = vadd.f32 0.0, %v9684
      %v9686 = vpop.f32.mrf.mxu0
      %9687 = vmatprep.mubr.bf16.mxu0 0
      %9688 = vmatmul.mubr.bf16.gmra.mxu0 %v8215
      %v9689 = vpop.f32.mrf.mxu0
      %v9690 = vadd.f32 0.0, %v9689
      %v9691 = vpop.f32.mrf.mxu0
      %v9692 = vpop.f32.mrf.mxu0
      %v9693 = vadd.f32 0.0, %v9692
      %v9694 = vpop.f32.mrf.mxu0
      %9695 = vmatprep.mubr.bf16.mxu0 0
      %9696 = vmatmul.mubr.bf16.gmra.mxu0 %v8218
      %v9697 = vpop.f32.mrf.mxu0
      %v9698 = vadd.f32 0.0, %v9697
      %v9699 = vpop.f32.mrf.mxu0
      %v9700 = vpop.f32.mrf.mxu0
      %v9701 = vadd.f32 0.0, %v9700
      %v9702 = vpop.f32.mrf.mxu0
      %9703 = vmatprep.mubr.bf16.mxu0 0
      %9704 = vmatmul.mubr.bf16.gmra.mxu0 %v8221
      %v9705 = vpop.f32.mrf.mxu0
      %v9706 = vadd.f32 0.0, %v9705
      %v9707 = vpop.f32.mrf.mxu0
      %v9708 = vpop.f32.mrf.mxu0
      %v9709 = vadd.f32 0.0, %v9708
      %v9710 = vpop.f32.mrf.mxu0
      %9711 = vmatprep.mubr.bf16.mxu0 0
      %9712 = vmatmul.mubr.bf16.gmra.mxu0 %v8224
      %v9713 = vpop.f32.mrf.mxu0
      %v9714 = vadd.f32 0.0, %v9713
      %v9715 = vpop.f32.mrf.mxu0
      %v9716 = vpop.f32.mrf.mxu0
      %v9717 = vadd.f32 0.0, %v9716
      %v9718 = vpop.f32.mrf.mxu0
      %9719 = vmatprep.mubr.bf16.mxu0 0
      %9720 = vmatmul.mubr.bf16.gmra.mxu0 %v8227
      %v9721 = vpop.f32.mrf.mxu0
      %v9722 = vadd.f32 0.0, %v9721
      %v9723 = vpop.f32.mrf.mxu0
      %v9724 = vpop.f32.mrf.mxu0
      %v9725 = vadd.f32 0.0, %v9724
      %v9726 = vpop.f32.mrf.mxu0
      %9727 = vmatprep.mubr.bf16.mxu0 0
      %9728 = vmatmul.mubr.bf16.gmra.mxu0 %v8230
      %v9729 = vpop.f32.mrf.mxu0
      %v9730 = vadd.f32 0.0, %v9729
      %v9731 = vpop.f32.mrf.mxu0
      %v9732 = vpop.f32.mrf.mxu0
      %v9733 = vadd.f32 0.0, %v9732
      %v9734 = vpop.f32.mrf.mxu0
      %9735 = vmatprep.mubr.bf16.mxu0 0
      %9736 = vmatmul.mubr.bf16.gmra.mxu0 %v8233
      %v9737 = vpop.f32.mrf.mxu0
      %v9738 = vadd.f32 0.0, %v9737
      %v9739 = vpop.f32.mrf.mxu0
      %v9740 = vpop.f32.mrf.mxu0
      %v9741 = vadd.f32 0.0, %v9740
      %v9742 = vpop.f32.mrf.mxu0
      %9743 = vmatprep.mubr.bf16.mxu0 0
      %9744 = vmatmul.mubr.bf16.gmra.mxu0 %v8236
      %v9745 = vpop.f32.mrf.mxu0
      %v9746 = vadd.f32 0.0, %v9745
      %v9747 = vpop.f32.mrf.mxu0
      %v9748 = vpop.f32.mrf.mxu0
      %v9749 = vadd.f32 0.0, %v9748
      %v9750 = vpop.f32.mrf.mxu0
      %9751 = vmatprep.mubr.bf16.mxu0 0
      %9752 = vmatmul.mubr.bf16.gmra.mxu0 %v8649
      %v9753 = vpop.f32.mrf.mxu0
      %v9754 = vadd.f32 0.0, %v9753
      %v9755 = vpop.f32.mrf.mxu0
      %v9756 = vpop.f32.mrf.mxu0
      %v9757 = vadd.f32 0.0, %v9756
      %v9758 = vpop.f32.mrf.mxu0
      %9759 = vmatprep.mubr.bf16.mxu0 0
      %9760 = vmatmul.mubr.bf16.gmra.mxu0 %v8894
      %v9761 = vpop.f32.mrf.mxu0
      %v9762 = vadd.f32 0.0, %v9761
      %v9763 = vpop.f32.mrf.mxu0
      %v9764 = vpop.f32.mrf.mxu0
      %v9765 = vadd.f32 0.0, %v9764
      %v9766 = vpop.f32.mrf.mxu0
      %9767 = vmatprep.mubr.bf16.mxu0 0
      %9768 = vmatmul.mubr.bf16.gmra.mxu0 %v9139
      %v9769 = vpop.f32.mrf.mxu0
      %v9770 = vadd.f32 0.0, %v9769
      %v9771 = vpop.f32.mrf.mxu0
      %v9772 = vpop.f32.mrf.mxu0
      %v9773 = vadd.f32 0.0, %v9772
      %v9774 = vpop.f32.mrf.mxu0
      %9775 = vmatprep.mubr.bf16.mxu0 0
      %9776 = vmatmul.mubr.bf16.gmra.mxu0 %v9384
      %v9777 = vpop.f32.mrf.mxu0
      %v9778 = vadd.f32 0.0, %v9777
      %v9779 = vpop.f32.mrf.mxu0
      %v9780 = vpop.f32.mrf.mxu0
      %v9781 = vadd.f32 0.0, %v9780
      %v9782 = vpop.f32.mrf.mxu0
      %9783 = vmatprep.mubr.bf16.mxu0 0
      %9784 = vmatmul.mubr.bf16.gmra.mxu0 %v9629
      %v9785 = vpop.f32.mrf.mxu0
      %v9786 = vadd.f32 0.0, %v9785
      %v9787 = vpop.f32.mrf.mxu0
      %v9788 = vpop.f32.mrf.mxu0
      %v9789 = vadd.f32 0.0, %v9788
      %v9790 = vpop.f32.mrf.mxu0
      %9791 = vdwg.mxu0
      %v9792 = vadd.f32 %v9547, %v9666
      %v9793 = vadd.f32 %v9548, %v9669
      %v9794 = vadd.f32 %v9549, %v9674
      %v9795 = vadd.f32 %v9550, %v9677
      %v9796 = vadd.f32 %v9551, %v9682
      %v9797 = vadd.f32 %v9552, %v9685
      %v9798 = vadd.f32 %v9553, %v9690
      %v9799 = vadd.f32 %v9554, %v9693
      %v9800 = vadd.f32 %v9555, %v9698
      %v9801 = vadd.f32 %v9556, %v9701
      %v9802 = vadd.f32 %v9557, %v9706
      %v9803 = vadd.f32 %v9558, %v9709
      %v9804 = vadd.f32 %v9559, %v9714
      %v9805 = vadd.f32 %v9560, %v9717
      %v9806 = vadd.f32 %v9561, %v9722
      %v9807 = vadd.f32 %v9562, %v9725
      %v9808 = vadd.f32 %v9563, %v9730
      %v9809 = vadd.f32 %v9564, %v9733
      %v9810 = vadd.f32 %v9565, %v9738
      %v9811 = vadd.f32 %v9566, %v9741
      %v9812 = vadd.f32 %v9567, %v9746
      %v9813 = vadd.f32 %v9568, %v9749
      %v9814 = vadd.f32 %v9569, %v9754
      %v9815 = vadd.f32 %v9570, %v9757
      %v9816 = vadd.f32 %v9571, %v9762
      %v9817 = vadd.f32 %v9572, %v9765
      %v9818 = vadd.f32 %v9573, %v9770
      %v9819 = vadd.f32 %v9574, %v9773
      %v9820 = vadd.f32 %v9575, %v9778
      %v9821 = vadd.f32 %v9576, %v9781
      %v9822 = vadd.f32 %v9577, %v9786
      %v9823 = vadd.f32 %v9578, %v9789
      %s9824 = scalar_lea.vmem %s2, 3
      %v9825 = vld [vmem:[%s9824] sm:$0x1]
      %v9827 = vlaneseq
      %v9828 = vshrl.u32 %v9827, 7
      %v9829 = vsub.s32 0, %v9828
      %v9830 = vrot.slane %v9825, %v9829
      %v9832 = vadd.f32 %v9792, %v9830
      %v9833 = vadd.f32 %v9793, %v9830
      %v9834 = vadd.f32 %v9794, %v9830
      %v9835 = vadd.f32 %v9795, %v9830
      %v9836 = vadd.f32 %v9796, %v9830
      %v9837 = vadd.f32 %v9797, %v9830
      %v9838 = vadd.f32 %v9798, %v9830
      %v9839 = vadd.f32 %v9799, %v9830
      %v9840 = vadd.f32 %v9800, %v9830
      %v9841 = vadd.f32 %v9801, %v9830
      %v9842 = vadd.f32 %v9802, %v9830
      %v9843 = vadd.f32 %v9803, %v9830
      %v9844 = vadd.f32 %v9804, %v9830
      %v9845 = vadd.f32 %v9805, %v9830
      %v9846 = vadd.f32 %v9806, %v9830
      %v9847 = vadd.f32 %v9807, %v9830
      %v9848 = vadd.f32 %v9808, %v9830
      %v9849 = vadd.f32 %v9809, %v9830
      %v9850 = vadd.f32 %v9810, %v9830
      %v9851 = vadd.f32 %v9811, %v9830
      %v9852 = vadd.f32 %v9812, %v9830
      %v9853 = vadd.f32 %v9813, %v9830
      %v9854 = vadd.f32 %v9814, %v9830
      %v9855 = vadd.f32 %v9815, %v9830
      %v9856 = vadd.f32 %v9816, %v9830
      %v9857 = vadd.f32 %v9817, %v9830
      %v9858 = vadd.f32 %v9818, %v9830
      %v9859 = vadd.f32 %v9819, %v9830
      %v9860 = vadd.f32 %v9820, %v9830
      %v9861 = vadd.f32 %v9821, %v9830
      %v9862 = vadd.f32 %v9822, %v9830
      %v9863 = vadd.f32 %v9823, %v9830
      %v9864 = vmax.f32 %v9832, 0.0
      %v9865 = vmax.f32 %v9833, 0.0
      %v9866 = vmax.f32 %v9834, 0.0
      %v9867 = vmax.f32 %v9835, 0.0
      %v9868 = vmax.f32 %v9836, 0.0
      %v9869 = vmax.f32 %v9837, 0.0
      %v9870 = vmax.f32 %v9838, 0.0
      %v9871 = vmax.f32 %v9839, 0.0
      %v9872 = vmax.f32 %v9840, 0.0
      %v9873 = vmax.f32 %v9841, 0.0
      %v9874 = vmax.f32 %v9842, 0.0
      %v9875 = vmax.f32 %v9843, 0.0
      %v9876 = vmax.f32 %v9844, 0.0
      %v9877 = vmax.f32 %v9845, 0.0
      %v9878 = vmax.f32 %v9846, 0.0
      %v9879 = vmax.f32 %v9847, 0.0
      %v9880 = vmax.f32 %v9848, 0.0
      %v9881 = vmax.f32 %v9849, 0.0
      %v9882 = vmax.f32 %v9850, 0.0
      %v9883 = vmax.f32 %v9851, 0.0
      %v9884 = vmax.f32 %v9852, 0.0
      %v9885 = vmax.f32 %v9853, 0.0
      %v9886 = vmax.f32 %v9854, 0.0
      %v9887 = vmax.f32 %v9855, 0.0
      %v9888 = vmax.f32 %v9856, 0.0
      %v9889 = vmax.f32 %v9857, 0.0
      %v9890 = vmax.f32 %v9858, 0.0
      %v9891 = vmax.f32 %v9859, 0.0
      %v9892 = vmax.f32 %v9860, 0.0
      %v9893 = vmax.f32 %v9861, 0.0
      %v9894 = vmax.f32 %v9862, 0.0
      %v9895 = vmax.f32 %v9863, 0.0
      %9896 = vst.msk [vmem:[%s5107 + $0x8] sm:$0xff] %vm172, %v9864
      %9897 = vst.msk [vmem:[%s5107 + $0x10] sm:$0xff] %vm172, %v9865
      %9898 = vst.msk [vmem:[%s5107 + $0x28] sm:$0xff] %vm172, %v9866
      %9899 = vst.msk [vmem:[%s5107 + $0x30] sm:$0xff] %vm172, %v9867
      %9900 = vst.msk [vmem:[%s5107 + $0x48] sm:$0xff] %vm172, %v9868
      %9901 = vst.msk [vmem:[%s5107 + $0x50] sm:$0xff] %vm172, %v9869
      %9902 = vst.msk [vmem:[%s5107 + $0x68] sm:$0xff] %vm172, %v9870
      %9903 = vst.msk [vmem:[%s5107 + $0x70] sm:$0xff] %vm172, %v9871
      %9904 = vst.msk [vmem:[%s5107 + $0x88] sm:$0xff] %vm172, %v9872
      %9905 = vst.msk [vmem:[%s5107 + $0x90] sm:$0xff] %vm172, %v9873
      %9906 = vst.msk [vmem:[%s5107 + $0xa8] sm:$0xff] %vm172, %v9874
      %9907 = vst.msk [vmem:[%s5107 + $0xb0] sm:$0xff] %vm172, %v9875
      %9908 = vst.msk [vmem:[%s5107 + $0xc8] sm:$0xff] %vm172, %v9876
      %9909 = vst.msk [vmem:[%s5107 + $0xd0] sm:$0xff] %vm172, %v9877
      %9910 = vst.msk [vmem:[%s5107 + $0xe8] sm:$0xff] %vm172, %v9878
      %9911 = vst.msk [vmem:[%s5107 + $0xf0] sm:$0xff] %vm172, %v9879
      %9912 = vst.msk [vmem:[%s5107 + $0x108] sm:$0xff] %vm172, %v9880
      %9913 = vst.msk [vmem:[%s5107 + $0x110] sm:$0xff] %vm172, %v9881
      %9914 = vst.msk [vmem:[%s5107 + $0x128] sm:$0xff] %vm172, %v9882
      %9915 = vst.msk [vmem:[%s5107 + $0x130] sm:$0xff] %vm172, %v9883
      %9916 = vst.msk [vmem:[%s5107 + $0x148] sm:$0xff] %vm172, %v9884
      %9917 = vst.msk [vmem:[%s5107 + $0x150] sm:$0xff] %vm172, %v9885
      %9918 = vst.msk [vmem:[%s5107 + $0x168] sm:$0xff] %vm172, %v9886
      %9919 = vst.msk [vmem:[%s5107 + $0x170] sm:$0xff] %vm172, %v9887
      %9920 = vst.msk [vmem:[%s5107 + $0x188] sm:$0xff] %vm172, %v9888
      %9921 = vst.msk [vmem:[%s5107 + $0x190] sm:$0xff] %vm172, %v9889
      %9922 = vst.msk [vmem:[%s5107 + $0x1a8] sm:$0xff] %vm172, %v9890
      %9923 = vst.msk [vmem:[%s5107 + $0x1b0] sm:$0xff] %vm172, %v9891
      %9924 = vst.msk [vmem:[%s5107 + $0x1c8] sm:$0xff] %vm172, %v9892
      %9925 = vst.msk [vmem:[%s5107 + $0x1d0] sm:$0xff] %vm172, %v9893
      %9926 = vst.msk [vmem:[%s5107 + $0x1e8] sm:$0xff] %vm172, %v9894
      %9927 = vst.msk [vmem:[%s5107 + $0x1f0] sm:$0xff] %vm172, %v9895
      %v9928 = vld [vmem:[#allocation3 + $0x7] sm:$0xff]
      %v9929 = vld [vmem:[#allocation3 + $0xf] sm:$0xff]
      %v9930 = vld [vmem:[#allocation3 + $0x27] sm:$0xff]
      %v9931 = vld [vmem:[#allocation3 + $0x2f] sm:$0xff]
      %v9932 = vld [vmem:[#allocation3 + $0x47] sm:$0xff]
      %v9933 = vld [vmem:[#allocation3 + $0x4f] sm:$0xff]
      %v9934 = vld [vmem:[#allocation3 + $0x67] sm:$0xff]
      %v9935 = vld [vmem:[#allocation3 + $0x6f] sm:$0xff]
      %v9936 = vld [vmem:[#allocation3 + $0x87] sm:$0xff]
      %v9937 = vld [vmem:[#allocation3 + $0x8f] sm:$0xff]
      %v9938 = vld [vmem:[#allocation3 + $0xa7] sm:$0xff]
      %v9939 = vld [vmem:[#allocation3 + $0xaf] sm:$0xff]
      %v9940 = vld [vmem:[#allocation3 + $0xc7] sm:$0xff]
      %v9941 = vld [vmem:[#allocation3 + $0xcf] sm:$0xff]
      %v9942 = vld [vmem:[#allocation3 + $0xe7] sm:$0xff]
      %v9943 = vld [vmem:[#allocation3 + $0xef] sm:$0xff]
      %v9944 = vld [vmem:[#allocation3 + $0x107] sm:$0xff]
      %v9945 = vld [vmem:[#allocation3 + $0x10f] sm:$0xff]
      %v9946 = vld [vmem:[#allocation3 + $0x127] sm:$0xff]
      %v9947 = vld [vmem:[#allocation3 + $0x12f] sm:$0xff]
      %v9948 = vld [vmem:[#allocation3 + $0x147] sm:$0xff]
      %v9949 = vld [vmem:[#allocation3 + $0x14f] sm:$0xff]
      %v9950 = vld [vmem:[#allocation3 + $0x167] sm:$0xff]
      %v9951 = vld [vmem:[#allocation3 + $0x16f] sm:$0xff]
      %v9952 = vld [vmem:[#allocation3 + $0x187] sm:$0xff]
      %v9953 = vld [vmem:[#allocation3 + $0x18f] sm:$0xff]
      %v9954 = vld [vmem:[#allocation3 + $0x1a7] sm:$0xff]
      %v9955 = vld [vmem:[#allocation3 + $0x1af] sm:$0xff]
      %v9956 = vld [vmem:[#allocation3 + $0x1c7] sm:$0xff]
      %v9957 = vld [vmem:[#allocation3 + $0x1cf] sm:$0xff]
      %v9958 = vld [vmem:[#allocation3 + $0x1e7] sm:$0xff]
      %v9959 = vld [vmem:[#allocation3 + $0x1ef] sm:$0xff]
      %v9960 = vld [vmem:[#allocation3 + $0x207] sm:$0xff]
      %v9961 = vld [vmem:[#allocation3 + $0x20f] sm:$0xff]
      %v9962 = vld [vmem:[#allocation3 + $0x227] sm:$0xff]
      %v9963 = vld [vmem:[#allocation3 + $0x22f] sm:$0xff]
      %v9964 = vld [vmem:[#allocation3 + $0x247] sm:$0xff]
      %v9965 = vld [vmem:[#allocation3 + $0x24f] sm:$0xff]
      %v9966 = vld [vmem:[#allocation3 + $0x267] sm:$0xff]
      %v9967 = vld [vmem:[#allocation3 + $0x26f] sm:$0xff]
      %v9968 = vld [vmem:[#allocation3 + $0x287] sm:$0xff]
      %v9969 = vld [vmem:[#allocation3 + $0x28f] sm:$0xff]
      %v9970 = vld [vmem:[#allocation3 + $0x2a7] sm:$0xff]
      %v9971 = vld [vmem:[#allocation3 + $0x2af] sm:$0xff]
      %v9972 = vld [vmem:[#allocation3 + $0x8] sm:$0xff]
      %v9973 = vld [vmem:[#allocation3 + $0x10] sm:$0xff]
      %v9974 = vld [vmem:[#allocation3 + $0x28] sm:$0xff]
      %v9975 = vld [vmem:[#allocation3 + $0x30] sm:$0xff]
      %v9976 = vld [vmem:[#allocation3 + $0x48] sm:$0xff]
      %v9977 = vld [vmem:[#allocation3 + $0x50] sm:$0xff]
      %v9978 = vld [vmem:[#allocation3 + $0x68] sm:$0xff]
      %v9979 = vld [vmem:[#allocation3 + $0x70] sm:$0xff]
      %v9980 = vld [vmem:[#allocation3 + $0x88] sm:$0xff]
      %v9981 = vld [vmem:[#allocation3 + $0x90] sm:$0xff]
      %v9982 = vld [vmem:[#allocation3 + $0xa8] sm:$0xff]
      %v9983 = vld [vmem:[#allocation3 + $0xb0] sm:$0xff]
      %v9984 = vld [vmem:[#allocation3 + $0xc8] sm:$0xff]
      %v9985 = vld [vmem:[#allocation3 + $0xd0] sm:$0xff]
      %v9986 = vld [vmem:[#allocation3 + $0xe8] sm:$0xff]
      %v9987 = vld [vmem:[#allocation3 + $0xf0] sm:$0xff]
      %v9988 = vld [vmem:[#allocation3 + $0x108] sm:$0xff]
      %v9989 = vld [vmem:[#allocation3 + $0x110] sm:$0xff]
      %v9990 = vld [vmem:[#allocation3 + $0x128] sm:$0xff]
      %v9991 = vld [vmem:[#allocation3 + $0x130] sm:$0xff]
      %v9992 = vld [vmem:[#allocation3 + $0x148] sm:$0xff]
      %v9993 = vld [vmem:[#allocation3 + $0x150] sm:$0xff]
      %v9994 = vld [vmem:[#allocation3 + $0x168] sm:$0xff]
      %v9995 = vld [vmem:[#allocation3 + $0x170] sm:$0xff]
      %v9996 = vld [vmem:[#allocation3 + $0x188] sm:$0xff]
      %v9997 = vld [vmem:[#allocation3 + $0x190] sm:$0xff]
      %v9998 = vld [vmem:[#allocation3 + $0x1a8] sm:$0xff]
      %v9999 = vld [vmem:[#allocation3 + $0x1b0] sm:$0xff]
      %v10000 = vld [vmem:[#allocation3 + $0x1c8] sm:$0xff]
      %v10001 = vld [vmem:[#allocation3 + $0x1d0] sm:$0xff]
      %v10002 = vld [vmem:[#allocation3 + $0x1e8] sm:$0xff]
      %v10003 = vld [vmem:[#allocation3 + $0x1f0] sm:$0xff]
      %v10004 = vld [vmem:[#allocation3 + $0x208] sm:$0xff]
      %v10005 = vld [vmem:[#allocation3 + $0x210] sm:$0xff]
      %v10006 = vld [vmem:[#allocation3 + $0x228] sm:$0xff]
      %v10007 = vld [vmem:[#allocation3 + $0x230] sm:$0xff]
      %v10008 = vld [vmem:[#allocation3 + $0x248] sm:$0xff]
      %v10009 = vld [vmem:[#allocation3 + $0x250] sm:$0xff]
      %v10010 = vld [vmem:[#allocation3 + $0x268] sm:$0xff]
      %v10011 = vld [vmem:[#allocation3 + $0x270] sm:$0xff]
      %v10012 = vld [vmem:[#allocation3 + $0x288] sm:$0xff]
      %v10013 = vld [vmem:[#allocation3 + $0x290] sm:$0xff]
      %v10014 = vld [vmem:[#allocation3 + $0x2a8] sm:$0xff]
      %v10015 = vld [vmem:[#allocation3 + $0x2b0] sm:$0xff]
      %v10016 = vld [vmem:[#allocation3 + $0x9] sm:$0xff]
      %v10017 = vld [vmem:[#allocation3 + $0x11] sm:$0xff]
      %v10018 = vld [vmem:[#allocation3 + $0x29] sm:$0xff]
      %v10019 = vld [vmem:[#allocation3 + $0x31] sm:$0xff]
      %v10020 = vld [vmem:[#allocation3 + $0x49] sm:$0xff]
      %v10021 = vld [vmem:[#allocation3 + $0x51] sm:$0xff]
      %v10022 = vld [vmem:[#allocation3 + $0x69] sm:$0xff]
      %v10023 = vld [vmem:[#allocation3 + $0x71] sm:$0xff]
      %v10024 = vld [vmem:[#allocation3 + $0x89] sm:$0xff]
      %v10025 = vld [vmem:[#allocation3 + $0x91] sm:$0xff]
      %v10026 = vld [vmem:[#allocation3 + $0xa9] sm:$0xff]
      %v10027 = vld [vmem:[#allocation3 + $0xb1] sm:$0xff]
      %v10028 = vld [vmem:[#allocation3 + $0xc9] sm:$0xff]
      %v10029 = vld [vmem:[#allocation3 + $0xd1] sm:$0xff]
      %v10030 = vld [vmem:[#allocation3 + $0xe9] sm:$0xff]
      %v10031 = vld [vmem:[#allocation3 + $0xf1] sm:$0xff]
      %v10032 = vld [vmem:[#allocation3 + $0x109] sm:$0xff]
      %v10033 = vld [vmem:[#allocation3 + $0x111] sm:$0xff]
      %v10034 = vld [vmem:[#allocation3 + $0x129] sm:$0xff]
      %v10035 = vld [vmem:[#allocation3 + $0x131] sm:$0xff]
      %v10036 = vld [vmem:[#allocation3 + $0x149] sm:$0xff]
      %v10037 = vld [vmem:[#allocation3 + $0x151] sm:$0xff]
      %v10038 = vld [vmem:[#allocation3 + $0x169] sm:$0xff]
      %v10039 = vld [vmem:[#allocation3 + $0x171] sm:$0xff]
      %v10040 = vld [vmem:[#allocation3 + $0x189] sm:$0xff]
      %v10041 = vld [vmem:[#allocation3 + $0x191] sm:$0xff]
      %v10042 = vld [vmem:[#allocation3 + $0x1a9] sm:$0xff]
      %v10043 = vld [vmem:[#allocation3 + $0x1b1] sm:$0xff]
      %v10044 = vld [vmem:[#allocation3 + $0x1c9] sm:$0xff]
      %v10045 = vld [vmem:[#allocation3 + $0x1d1] sm:$0xff]
      %v10046 = vld [vmem:[#allocation3 + $0x1e9] sm:$0xff]
      %v10047 = vld [vmem:[#allocation3 + $0x1f1] sm:$0xff]
      %v10048 = vld [vmem:[#allocation3 + $0x209] sm:$0xff]
      %v10049 = vld [vmem:[#allocation3 + $0x211] sm:$0xff]
      %v10050 = vld [vmem:[#allocation3 + $0x229] sm:$0xff]
      %v10051 = vld [vmem:[#allocation3 + $0x231] sm:$0xff]
      %v10052 = vld [vmem:[#allocation3 + $0x249] sm:$0xff]
      %v10053 = vld [vmem:[#allocation3 + $0x251] sm:$0xff]
      %v10054 = vld [vmem:[#allocation3 + $0x269] sm:$0xff]
      %v10055 = vld [vmem:[#allocation3 + $0x271] sm:$0xff]
      %v10056 = vld [vmem:[#allocation3 + $0x289] sm:$0xff]
      %v10057 = vld [vmem:[#allocation3 + $0x291] sm:$0xff]
      %v10058 = vld [vmem:[#allocation3 + $0x2a9] sm:$0xff]
      %v10059 = vld [vmem:[#allocation3 + $0x2b1] sm:$0xff]
      %10104 = vrot.lane.b32.xlu0 %v9972, 32
      %v10105 = vpop.permute.xlu0 %10104
      %10106 = vrot.lane.b32.xlu0 %v9973, 32
      %v10107 = vpop.permute.xlu0 %10106
      %10108 = vrot.lane.b32.xlu0 %v9974, 32
      %v10109 = vpop.permute.xlu0 %10108
      %10110 = vrot.lane.b32.xlu0 %v9975, 32
      %v10111 = vpop.permute.xlu0 %10110
      %10112 = vrot.lane.b32.xlu0 %v9976, 32
      %v10113 = vpop.permute.xlu0 %10112
      %10114 = vrot.lane.b32.xlu0 %v9977, 32
      %v10115 = vpop.permute.xlu0 %10114
      %10116 = vrot.lane.b32.xlu0 %v9978, 32
      %v10117 = vpop.permute.xlu0 %10116
      %10118 = vrot.lane.b32.xlu0 %v9979, 32
      %v10119 = vpop.permute.xlu0 %10118
      %10120 = vrot.lane.b32.xlu0 %v9980, 32
      %v10121 = vpop.permute.xlu0 %10120
      %10122 = vrot.lane.b32.xlu0 %v9981, 32
      %v10123 = vpop.permute.xlu0 %10122
      %10124 = vrot.lane.b32.xlu0 %v9982, 32
      %v10125 = vpop.permute.xlu0 %10124
      %10126 = vrot.lane.b32.xlu0 %v9983, 32
      %v10127 = vpop.permute.xlu0 %10126
      %10128 = vrot.lane.b32.xlu0 %v9984, 32
      %v10129 = vpop.permute.xlu0 %10128
      %10130 = vrot.lane.b32.xlu0 %v9985, 32
      %v10131 = vpop.permute.xlu0 %10130
      %10132 = vrot.lane.b32.xlu0 %v9986, 32
      %v10133 = vpop.permute.xlu0 %10132
      %10134 = vrot.lane.b32.xlu0 %v9987, 32
      %v10135 = vpop.permute.xlu0 %10134
      %10136 = vrot.lane.b32.xlu0 %v9988, 32
      %v10137 = vpop.permute.xlu0 %10136
      %10138 = vrot.lane.b32.xlu0 %v9989, 32
      %v10139 = vpop.permute.xlu0 %10138
      %10140 = vrot.lane.b32.xlu0 %v9990, 32
      %v10141 = vpop.permute.xlu0 %10140
      %10142 = vrot.lane.b32.xlu0 %v9991, 32
      %v10143 = vpop.permute.xlu0 %10142
      %10144 = vrot.lane.b32.xlu0 %v9992, 32
      %v10145 = vpop.permute.xlu0 %10144
      %10146 = vrot.lane.b32.xlu0 %v9993, 32
      %v10147 = vpop.permute.xlu0 %10146
      %10148 = vrot.lane.b32.xlu0 %v9994, 32
      %v10149 = vpop.permute.xlu0 %10148
      %10150 = vrot.lane.b32.xlu0 %v9995, 32
      %v10151 = vpop.permute.xlu0 %10150
      %10152 = vrot.lane.b32.xlu0 %v9996, 32
      %v10153 = vpop.permute.xlu0 %10152
      %10154 = vrot.lane.b32.xlu0 %v9997, 32
      %v10155 = vpop.permute.xlu0 %10154
      %10156 = vrot.lane.b32.xlu0 %v9998, 32
      %v10157 = vpop.permute.xlu0 %10156
      %10158 = vrot.lane.b32.xlu0 %v9999, 32
      %v10159 = vpop.permute.xlu0 %10158
      %10160 = vrot.lane.b32.xlu0 %v10000, 32
      %v10161 = vpop.permute.xlu0 %10160
      %10162 = vrot.lane.b32.xlu0 %v10001, 32
      %v10163 = vpop.permute.xlu0 %10162
      %10164 = vrot.lane.b32.xlu0 %v10002, 32
      %v10165 = vpop.permute.xlu0 %10164
      %10166 = vrot.lane.b32.xlu0 %v10003, 32
      %v10167 = vpop.permute.xlu0 %10166
      %10168 = vrot.lane.b32.xlu0 %v10004, 32
      %v10169 = vpop.permute.xlu0 %10168
      %10170 = vrot.lane.b32.xlu0 %v10005, 32
      %v10171 = vpop.permute.xlu0 %10170
      %10172 = vrot.lane.b32.xlu0 %v10006, 32
      %v10173 = vpop.permute.xlu0 %10172
      %10174 = vrot.lane.b32.xlu0 %v10007, 32
      %v10175 = vpop.permute.xlu0 %10174
      %10176 = vrot.lane.b32.xlu0 %v10008, 32
      %v10177 = vpop.permute.xlu0 %10176
      %10178 = vrot.lane.b32.xlu0 %v10009, 32
      %v10179 = vpop.permute.xlu0 %10178
      %10180 = vrot.lane.b32.xlu0 %v10010, 32
      %v10181 = vpop.permute.xlu0 %10180
      %10182 = vrot.lane.b32.xlu0 %v10011, 32
      %v10183 = vpop.permute.xlu0 %10182
      %10184 = vrot.lane.b32.xlu0 %v10012, 32
      %v10185 = vpop.permute.xlu0 %10184
      %10186 = vrot.lane.b32.xlu0 %v10013, 32
      %v10187 = vpop.permute.xlu0 %10186
      %10188 = vrot.lane.b32.xlu0 %v10014, 32
      %v10189 = vpop.permute.xlu0 %10188
      %10190 = vrot.lane.b32.xlu0 %v10015, 32
      %v10191 = vpop.permute.xlu0 %10190
      %10280 = vrot.lane.b32.xlu0 %v10016, 64
      %v10281 = vpop.permute.xlu0 %10280
      %10282 = vrot.lane.b32.xlu0 %v10017, 64
      %v10283 = vpop.permute.xlu0 %10282
      %10284 = vrot.lane.b32.xlu0 %v10018, 64
      %v10285 = vpop.permute.xlu0 %10284
      %10286 = vrot.lane.b32.xlu0 %v10019, 64
      %v10287 = vpop.permute.xlu0 %10286
      %10288 = vrot.lane.b32.xlu0 %v10020, 64
      %v10289 = vpop.permute.xlu0 %10288
      %10290 = vrot.lane.b32.xlu0 %v10021, 64
      %v10291 = vpop.permute.xlu0 %10290
      %10292 = vrot.lane.b32.xlu0 %v10022, 64
      %v10293 = vpop.permute.xlu0 %10292
      %10294 = vrot.lane.b32.xlu0 %v10023, 64
      %v10295 = vpop.permute.xlu0 %10294
      %10296 = vrot.lane.b32.xlu0 %v10024, 64
      %v10297 = vpop.permute.xlu0 %10296
      %10298 = vrot.lane.b32.xlu0 %v10025, 64
      %v10299 = vpop.permute.xlu0 %10298
      %10300 = vrot.lane.b32.xlu0 %v10026, 64
      %v10301 = vpop.permute.xlu0 %10300
      %10302 = vrot.lane.b32.xlu0 %v10027, 64
      %v10303 = vpop.permute.xlu0 %10302
      %10304 = vrot.lane.b32.xlu0 %v10028, 64
      %v10305 = vpop.permute.xlu0 %10304
      %10306 = vrot.lane.b32.xlu0 %v10029, 64
      %v10307 = vpop.permute.xlu0 %10306
      %10308 = vrot.lane.b32.xlu0 %v10030, 64
      %v10309 = vpop.permute.xlu0 %10308
      %10310 = vrot.lane.b32.xlu0 %v10031, 64
      %v10311 = vpop.permute.xlu0 %10310
      %10312 = vrot.lane.b32.xlu0 %v10032, 64
      %v10313 = vpop.permute.xlu0 %10312
      %10314 = vrot.lane.b32.xlu0 %v10033, 64
      %v10315 = vpop.permute.xlu0 %10314
      %10316 = vrot.lane.b32.xlu0 %v10034, 64
      %v10317 = vpop.permute.xlu0 %10316
      %10318 = vrot.lane.b32.xlu0 %v10035, 64
      %v10319 = vpop.permute.xlu0 %10318
      %10320 = vrot.lane.b32.xlu0 %v10036, 64
      %v10321 = vpop.permute.xlu0 %10320
      %10322 = vrot.lane.b32.xlu0 %v10037, 64
      %v10323 = vpop.permute.xlu0 %10322
      %10324 = vrot.lane.b32.xlu0 %v10038, 64
      %v10325 = vpop.permute.xlu0 %10324
      %10326 = vrot.lane.b32.xlu0 %v10039, 64
      %v10327 = vpop.permute.xlu0 %10326
      %10328 = vrot.lane.b32.xlu0 %v10040, 64
      %v10329 = vpop.permute.xlu0 %10328
      %10330 = vrot.lane.b32.xlu0 %v10041, 64
      %v10331 = vpop.permute.xlu0 %10330
      %10332 = vrot.lane.b32.xlu0 %v10042, 64
      %v10333 = vpop.permute.xlu0 %10332
      %10334 = vrot.lane.b32.xlu0 %v10043, 64
      %v10335 = vpop.permute.xlu0 %10334
      %10336 = vrot.lane.b32.xlu0 %v10044, 64
      %v10337 = vpop.permute.xlu0 %10336
      %10338 = vrot.lane.b32.xlu0 %v10045, 64
      %v10339 = vpop.permute.xlu0 %10338
      %10340 = vrot.lane.b32.xlu0 %v10046, 64
      %v10341 = vpop.permute.xlu0 %10340
      %10342 = vrot.lane.b32.xlu0 %v10047, 64
      %v10343 = vpop.permute.xlu0 %10342
      %10344 = vrot.lane.b32.xlu0 %v10048, 64
      %v10345 = vpop.permute.xlu0 %10344
      %10346 = vrot.lane.b32.xlu0 %v10049, 64
      %v10347 = vpop.permute.xlu0 %10346
      %10348 = vrot.lane.b32.xlu0 %v10050, 64
      %v10349 = vpop.permute.xlu0 %10348
      %10350 = vrot.lane.b32.xlu0 %v10051, 64
      %v10351 = vpop.permute.xlu0 %10350
      %10352 = vrot.lane.b32.xlu0 %v10052, 64
      %v10353 = vpop.permute.xlu0 %10352
      %10354 = vrot.lane.b32.xlu0 %v10053, 64
      %v10355 = vpop.permute.xlu0 %10354
      %10356 = vrot.lane.b32.xlu0 %v10054, 64
      %v10357 = vpop.permute.xlu0 %10356
      %10358 = vrot.lane.b32.xlu0 %v10055, 64
      %v10359 = vpop.permute.xlu0 %10358
      %10360 = vrot.lane.b32.xlu0 %v10056, 64
      %v10361 = vpop.permute.xlu0 %10360
      %10362 = vrot.lane.b32.xlu0 %v10057, 64
      %v10363 = vpop.permute.xlu0 %10362
      %10364 = vrot.lane.b32.xlu0 %v10058, 64
      %v10365 = vpop.permute.xlu0 %10364
      %10366 = vrot.lane.b32.xlu0 %v10059, 64
      %v10367 = vpop.permute.xlu0 %10366
      %v10412 = vsel %vm172, %v9928, %v10105
      %v10413 = vsel %vm172, %v9929, %v10107
      %v10414 = vsel %vm172, %v9930, %v10109
      %v10415 = vsel %vm172, %v9931, %v10111
      %v10416 = vsel %vm172, %v9932, %v10113
      %v10417 = vsel %vm172, %v9933, %v10115
      %v10418 = vsel %vm172, %v9934, %v10117
      %v10419 = vsel %vm172, %v9935, %v10119
      %v10420 = vsel %vm172, %v9936, %v10121
      %v10421 = vsel %vm172, %v9937, %v10123
      %v10422 = vsel %vm172, %v9938, %v10125
      %v10423 = vsel %vm172, %v9939, %v10127
      %v10424 = vsel %vm172, %v9940, %v10129
      %v10425 = vsel %vm172, %v9941, %v10131
      %v10426 = vsel %vm172, %v9942, %v10133
      %v10427 = vsel %vm172, %v9943, %v10135
      %v10428 = vsel %vm172, %v9944, %v10137
      %v10429 = vsel %vm172, %v9945, %v10139
      %v10430 = vsel %vm172, %v9946, %v10141
      %v10431 = vsel %vm172, %v9947, %v10143
      %v10432 = vsel %vm172, %v9948, %v10145
      %v10433 = vsel %vm172, %v9949, %v10147
      %v10434 = vsel %vm172, %v9950, %v10149
      %v10435 = vsel %vm172, %v9951, %v10151
      %v10436 = vsel %vm172, %v9952, %v10153
      %v10437 = vsel %vm172, %v9953, %v10155
      %v10438 = vsel %vm172, %v9954, %v10157
      %v10439 = vsel %vm172, %v9955, %v10159
      %v10440 = vsel %vm172, %v9956, %v10161
      %v10441 = vsel %vm172, %v9957, %v10163
      %v10442 = vsel %vm172, %v9958, %v10165
      %v10443 = vsel %vm172, %v9959, %v10167
      %v10444 = vsel %vm172, %v9960, %v10169
      %v10445 = vsel %vm172, %v9961, %v10171
      %v10446 = vsel %vm172, %v9962, %v10173
      %v10447 = vsel %vm172, %v9963, %v10175
      %v10448 = vsel %vm172, %v9964, %v10177
      %v10449 = vsel %vm172, %v9965, %v10179
      %v10450 = vsel %vm172, %v9966, %v10181
      %v10451 = vsel %vm172, %v9967, %v10183
      %v10452 = vsel %vm172, %v9968, %v10185
      %v10453 = vsel %vm172, %v9969, %v10187
      %v10454 = vsel %vm172, %v9970, %v10189
      %v10455 = vsel %vm172, %v9971, %v10191
      %v10456 = vsel %vm878, %v10412, %v10281
      %v10457 = vsel %vm878, %v10413, %v10283
      %v10458 = vsel %vm878, %v10414, %v10285
      %v10459 = vsel %vm878, %v10415, %v10287
      %v10460 = vsel %vm878, %v10416, %v10289
      %v10461 = vsel %vm878, %v10417, %v10291
      %v10462 = vsel %vm878, %v10418, %v10293
      %v10463 = vsel %vm878, %v10419, %v10295
      %v10464 = vsel %vm878, %v10420, %v10297
      %v10465 = vsel %vm878, %v10421, %v10299
      %v10466 = vsel %vm878, %v10422, %v10301
      %v10467 = vsel %vm878, %v10423, %v10303
      %v10468 = vsel %vm878, %v10424, %v10305
      %v10469 = vsel %vm878, %v10425, %v10307
      %v10470 = vsel %vm878, %v10426, %v10309
      %v10471 = vsel %vm878, %v10427, %v10311
      %v10472 = vsel %vm878, %v10428, %v10313
      %v10473 = vsel %vm878, %v10429, %v10315
      %v10474 = vsel %vm878, %v10430, %v10317
      %v10475 = vsel %vm878, %v10431, %v10319
      %v10476 = vsel %vm878, %v10432, %v10321
      %v10477 = vsel %vm878, %v10433, %v10323
      %v10478 = vsel %vm878, %v10434, %v10325
      %v10479 = vsel %vm878, %v10435, %v10327
      %v10480 = vsel %vm878, %v10436, %v10329
      %v10481 = vsel %vm878, %v10437, %v10331
      %v10482 = vsel %vm878, %v10438, %v10333
      %v10483 = vsel %vm878, %v10439, %v10335
      %v10484 = vsel %vm878, %v10440, %v10337
      %v10485 = vsel %vm878, %v10441, %v10339
      %v10486 = vsel %vm878, %v10442, %v10341
      %v10487 = vsel %vm878, %v10443, %v10343
      %v10488 = vsel %vm878, %v10444, %v10345
      %v10489 = vsel %vm878, %v10445, %v10347
      %v10490 = vsel %vm878, %v10446, %v10349
      %v10491 = vsel %vm878, %v10447, %v10351
      %v10492 = vsel %vm878, %v10448, %v10353
      %v10493 = vsel %vm878, %v10449, %v10355
      %v10494 = vsel %vm878, %v10450, %v10357
      %v10495 = vsel %vm878, %v10451, %v10359
      %v10496 = vsel %vm878, %v10452, %v10361
      %v10497 = vsel %vm878, %v10453, %v10363
      %v10498 = vsel %vm878, %v10454, %v10365
      %v10499 = vsel %vm878, %v10455, %v10367
      %v10500 = vpack.c.bf16 %v10457, %v10456
      %v10501 = vpack.c.bf16 %v10459, %v10458
      %v10502 = vpack.c.bf16 %v10461, %v10460
      %v10503 = vpack.c.bf16 %v10463, %v10462
      %v10504 = vpack.c.bf16 %v10465, %v10464
      %v10505 = vpack.c.bf16 %v10467, %v10466
      %v10506 = vpack.c.bf16 %v10469, %v10468
      %v10507 = vpack.c.bf16 %v10471, %v10470
      %v10508 = vpack.c.bf16 %v10473, %v10472
      %v10509 = vpack.c.bf16 %v10475, %v10474
      %v10510 = vpack.c.bf16 %v10477, %v10476
      %v10511 = vpack.c.bf16 %v10479, %v10478
      %v10512 = vpack.c.bf16 %v10481, %v10480
      %v10513 = vpack.c.bf16 %v10483, %v10482
      %v10514 = vpack.c.bf16 %v10485, %v10484
      %v10515 = vpack.c.bf16 %v10487, %v10486
      %v10516 = vpack.c.bf16 %v10489, %v10488
      %v10517 = vpack.c.bf16 %v10491, %v10490
      %v10518 = vpack.c.bf16 %v10493, %v10492
      %v10519 = vpack.c.bf16 %v10495, %v10494
      %v10520 = vpack.c.bf16 %v10497, %v10496
      %v10521 = vpack.c.bf16 %v10499, %v10498
      %s10522 = scalar_lea.vmem %s1, 1344
      %v10523 = vld [vmem:[%s10522] sm:$0xf]
      %v10524 = vld [vmem:[%s10522 + $0x4] sm:$0xf]
      %v10525 = vld [vmem:[%s10522 + $0x8] sm:$0xf]
      %v10526 = vld [vmem:[%s10522 + $0xc] sm:$0xf]
      %v10527 = vld [vmem:[%s10522 + $0x10] sm:$0xf]
      %v10528 = vld [vmem:[%s10522 + $0x14] sm:$0xf]
      %v10529 = vld [vmem:[%s10522 + $0x18] sm:$0xf]
      %v10530 = vld [vmem:[%s10522 + $0x1c] sm:$0xf]
      %v10531 = vld [vmem:[%s10522 + $0x20] sm:$0xf]
      %v10532 = vld [vmem:[%s10522 + $0x24] sm:$0xf]
      %v10533 = vld [vmem:[%s10522 + $0x28] sm:$0xf]
      %v10534 = vld [vmem:[%s10522 + $0x2c] sm:$0xf]
      %s10535 = scalar_lea.vmem %s1, 1392
      %v10536 = vld [vmem:[%s10535] sm:$0xf]
      %v10537 = vld [vmem:[%s10535 + $0x4] sm:$0xf]
      %v10538 = vld [vmem:[%s10535 + $0x8] sm:$0xf]
      %v10539 = vld [vmem:[%s10535 + $0xc] sm:$0xf]
      %v10540 = vld [vmem:[%s10535 + $0x10] sm:$0xf]
      %v10541 = vld [vmem:[%s10535 + $0x14] sm:$0xf]
      %v10542 = vld [vmem:[%s10535 + $0x18] sm:$0xf]
      %v10543 = vld [vmem:[%s10535 + $0x1c] sm:$0xf]
      %v10544 = vld [vmem:[%s10535 + $0x20] sm:$0xf]
      %v10545 = vld [vmem:[%s10535 + $0x24] sm:$0xf]
      %v10546 = vld [vmem:[%s10535 + $0x28] sm:$0xf]
      %v10547 = vld [vmem:[%s10535 + $0x2c] sm:$0xf]
      %v10560 = vunpack.c.l.b16 %v10536
      %v10561 = vunpack.c.l.b16 %v10537
      %v10562 = vunpack.c.l.b16 %v10538
      %v10563 = vunpack.c.l.b16 %v10539
      %v10564 = vunpack.c.l.b16 %v10540
      %v10565 = vunpack.c.l.b16 %v10541
      %v10566 = vunpack.c.l.b16 %v10542
      %v10567 = vunpack.c.l.b16 %v10543
      %v10568 = vunpack.c.l.b16 %v10544
      %v10569 = vunpack.c.l.b16 %v10545
      %v10570 = vunpack.c.l.b16 %v10546
      %v10571 = vunpack.c.l.b16 %v10547
      %v10572 = vpack.c.b16 %v10561, %v10560
      %v10573 = vpack.c.b16 %v10563, %v10562
      %v10574 = vpack.c.b16 %v10565, %v10564
      %v10575 = vpack.c.b16 %v10567, %v10566
      %v10576 = vpack.c.b16 %v10569, %v10568
      %v10577 = vpack.c.b16 %v10571, %v10570
      %v10585 = vsel %vm1006, %v10501, 0
      %v10588 = vsel %vm1006, %v10502, 0
      %v10591 = vsel %vm1006, %v10503, 0
      %v10594 = vsel %vm1006, %v10504, 0
      %v10597 = vsel %vm1006, %v10505, 0
      %v10600 = vsel %vm1006, %v10506, 0
      %v10603 = vsel %vm1006, %v10507, 0
      %v10606 = vsel %vm1006, %v10508, 0
      %v10609 = vsel %vm1006, %v10509, 0
      %v10612 = vsel %vm1006, %v10510, 0
      %v10615 = vsel %vm1006, %v10511, 0
      %v10618 = vsel %vm1006, %v10512, 0
      %v10621 = vsel %vm1006, %v10513, 0
      %v10624 = vsel %vm1006, %v10514, 0
      %v10627 = vsel %vm1006, %v10515, 0
      %v10630 = vsel %vm1006, %v10516, 0
      %10632 = vmatprep.subr.bf16.mxu0 0
      %10633 = vmatpush1.bf16.msra.mxu0 0
      %10634 = vmatprep.subr.bf16.mxu0 0
      %10635 = vmatpush1.bf16.msra.mxu0 0
      %10636 = vmatprep.subr.bf16.mxu0 0
      %10637 = vmatpush1.bf16.msra.mxu0 %v10577
      %10638 = vmatprep.subr.bf16.mxu0 0
      %10639 = vmatpush1.bf16.msra.mxu0 %v10576
      %10640 = vmatprep.subr.bf16.mxu0 0
      %10641 = vmatpush1.bf16.msra.mxu0 %v10575
      %10642 = vmatprep.subr.bf16.mxu0 0
      %10643 = vmatpush1.bf16.msra.mxu0 %v10574
      %10644 = vmatprep.subr.bf16.mxu0 0
      %10645 = vmatpush1.bf16.msra.mxu0 %v10573
      %10646 = vmatprep.subr.bf16.mxu0 0
      %10647 = vmatpush1.bf16.msra.mxu0 %v10572
      %10648 = vmatprep.subr.bf16.mxu0 0
      %10649 = vmatpush2.bf16.msra.mxu0 0
      %10650 = vmatprep.subr.bf16.mxu0 0
      %10651 = vmatpush2.bf16.msra.mxu0 0
      %10652 = vmatprep.subr.bf16.mxu0 0
      %10653 = vmatpush2.bf16.msra.mxu0 0
      %10654 = vmatprep.subr.bf16.mxu0 0
      %10655 = vmatpush2.bf16.msra.mxu0 0
      %10656 = vmatprep.subr.bf16.mxu0 0
      %10657 = vmatpush2.bf16.msra.mxu0 0
      %10658 = vmatprep.subr.bf16.mxu0 0
      %10659 = vmatpush2.bf16.msra.mxu0 0
      %10660 = vmatprep.subr.bf16.mxu0 0
      %10661 = vmatpush2.bf16.msra.mxu0 0
      %10662 = vmatprep.subr.bf16.mxu0 0
      %10663 = vmatpush2.bf16.msra.mxu0 0
      %10664 = vmatprep.mubr.bf16.mxu0 0
      %10665 = vmatmul.mubr.bf16.gmra.mxu0 %v10585
      %v10666 = vpop.f32.mrf.mxu0
      %v10667 = vadd.f32 0.0, %v10666
      %v10668 = vpop.f32.mrf.mxu0
      %v10669 = vpop.f32.mrf.mxu0
      %v10670 = vadd.f32 0.0, %v10669
      %v10671 = vpop.f32.mrf.mxu0
      %10672 = vmatprep.mubr.bf16.mxu0 0
      %10673 = vmatmul.mubr.bf16.gmra.mxu0 %v10588
      %v10674 = vpop.f32.mrf.mxu0
      %v10675 = vadd.f32 0.0, %v10674
      %v10676 = vpop.f32.mrf.mxu0
      %v10677 = vpop.f32.mrf.mxu0
      %v10678 = vadd.f32 0.0, %v10677
      %v10679 = vpop.f32.mrf.mxu0
      %10680 = vmatprep.mubr.bf16.mxu0 0
      %10681 = vmatmul.mubr.bf16.gmra.mxu0 %v10591
      %v10682 = vpop.f32.mrf.mxu0
      %v10683 = vadd.f32 0.0, %v10682
      %v10684 = vpop.f32.mrf.mxu0
      %v10685 = vpop.f32.mrf.mxu0
      %v10686 = vadd.f32 0.0, %v10685
      %v10687 = vpop.f32.mrf.mxu0
      %10688 = vmatprep.mubr.bf16.mxu0 0
      %10689 = vmatmul.mubr.bf16.gmra.mxu0 %v10594
      %v10690 = vpop.f32.mrf.mxu0
      %v10691 = vadd.f32 0.0, %v10690
      %v10692 = vpop.f32.mrf.mxu0
      %v10693 = vpop.f32.mrf.mxu0
      %v10694 = vadd.f32 0.0, %v10693
      %v10695 = vpop.f32.mrf.mxu0
      %10696 = vmatprep.mubr.bf16.mxu0 0
      %10697 = vmatmul.mubr.bf16.gmra.mxu0 %v10597
      %v10698 = vpop.f32.mrf.mxu0
      %v10699 = vadd.f32 0.0, %v10698
      %v10700 = vpop.f32.mrf.mxu0
      %v10701 = vpop.f32.mrf.mxu0
      %v10702 = vadd.f32 0.0, %v10701
      %v10703 = vpop.f32.mrf.mxu0
      %10704 = vmatprep.mubr.bf16.mxu0 0
      %10705 = vmatmul.mubr.bf16.gmra.mxu0 %v10600
      %v10706 = vpop.f32.mrf.mxu0
      %v10707 = vadd.f32 0.0, %v10706
      %v10708 = vpop.f32.mrf.mxu0
      %v10709 = vpop.f32.mrf.mxu0
      %v10710 = vadd.f32 0.0, %v10709
      %v10711 = vpop.f32.mrf.mxu0
      %10712 = vmatprep.mubr.bf16.mxu0 0
      %10713 = vmatmul.mubr.bf16.gmra.mxu0 %v10603
      %v10714 = vpop.f32.mrf.mxu0
      %v10715 = vadd.f32 0.0, %v10714
      %v10716 = vpop.f32.mrf.mxu0
      %v10717 = vpop.f32.mrf.mxu0
      %v10718 = vadd.f32 0.0, %v10717
      %v10719 = vpop.f32.mrf.mxu0
      %10720 = vmatprep.mubr.bf16.mxu0 0
      %10721 = vmatmul.mubr.bf16.gmra.mxu0 %v10606
      %v10722 = vpop.f32.mrf.mxu0
      %v10723 = vadd.f32 0.0, %v10722
      %v10724 = vpop.f32.mrf.mxu0
      %v10725 = vpop.f32.mrf.mxu0
      %v10726 = vadd.f32 0.0, %v10725
      %v10727 = vpop.f32.mrf.mxu0
      %10728 = vmatprep.mubr.bf16.mxu0 0
      %10729 = vmatmul.mubr.bf16.gmra.mxu0 %v10609
      %v10730 = vpop.f32.mrf.mxu0
      %v10731 = vadd.f32 0.0, %v10730
      %v10732 = vpop.f32.mrf.mxu0
      %v10733 = vpop.f32.mrf.mxu0
      %v10734 = vadd.f32 0.0, %v10733
      %v10735 = vpop.f32.mrf.mxu0
      %10736 = vmatprep.mubr.bf16.mxu0 0
      %10737 = vmatmul.mubr.bf16.gmra.mxu0 %v10612
      %v10738 = vpop.f32.mrf.mxu0
      %v10739 = vadd.f32 0.0, %v10738
      %v10740 = vpop.f32.mrf.mxu0
      %v10741 = vpop.f32.mrf.mxu0
      %v10742 = vadd.f32 0.0, %v10741
      %v10743 = vpop.f32.mrf.mxu0
      %10744 = vmatprep.mubr.bf16.mxu0 0
      %10745 = vmatmul.mubr.bf16.gmra.mxu0 %v10615
      %v10746 = vpop.f32.mrf.mxu0
      %v10747 = vadd.f32 0.0, %v10746
      %v10748 = vpop.f32.mrf.mxu0
      %v10749 = vpop.f32.mrf.mxu0
      %v10750 = vadd.f32 0.0, %v10749
      %v10751 = vpop.f32.mrf.mxu0
      %10752 = vmatprep.mubr.bf16.mxu0 0
      %10753 = vmatmul.mubr.bf16.gmra.mxu0 %v10618
      %v10754 = vpop.f32.mrf.mxu0
      %v10755 = vadd.f32 0.0, %v10754
      %v10756 = vpop.f32.mrf.mxu0
      %v10757 = vpop.f32.mrf.mxu0
      %v10758 = vadd.f32 0.0, %v10757
      %v10759 = vpop.f32.mrf.mxu0
      %10760 = vmatprep.mubr.bf16.mxu0 0
      %10761 = vmatmul.mubr.bf16.gmra.mxu0 %v10621
      %v10762 = vpop.f32.mrf.mxu0
      %v10763 = vadd.f32 0.0, %v10762
      %v10764 = vpop.f32.mrf.mxu0
      %v10765 = vpop.f32.mrf.mxu0
      %v10766 = vadd.f32 0.0, %v10765
      %v10767 = vpop.f32.mrf.mxu0
      %10768 = vmatprep.mubr.bf16.mxu0 0
      %10769 = vmatmul.mubr.bf16.gmra.mxu0 %v10624
      %v10770 = vpop.f32.mrf.mxu0
      %v10771 = vadd.f32 0.0, %v10770
      %v10772 = vpop.f32.mrf.mxu0
      %v10773 = vpop.f32.mrf.mxu0
      %v10774 = vadd.f32 0.0, %v10773
      %v10775 = vpop.f32.mrf.mxu0
      %10776 = vmatprep.mubr.bf16.mxu0 0
      %10777 = vmatmul.mubr.bf16.gmra.mxu0 %v10627
      %v10778 = vpop.f32.mrf.mxu0
      %v10779 = vadd.f32 0.0, %v10778
      %v10780 = vpop.f32.mrf.mxu0
      %v10781 = vpop.f32.mrf.mxu0
      %v10782 = vadd.f32 0.0, %v10781
      %v10783 = vpop.f32.mrf.mxu0
      %10784 = vmatprep.mubr.bf16.mxu0 0
      %10785 = vmatmul.mubr.bf16.gmra.mxu0 %v10630
      %v10786 = vpop.f32.mrf.mxu0
      %v10787 = vadd.f32 0.0, %v10786
      %v10788 = vpop.f32.mrf.mxu0
      %v10789 = vpop.f32.mrf.mxu0
      %v10790 = vadd.f32 0.0, %v10789
      %v10791 = vpop.f32.mrf.mxu0
      %10792 = vdwg.mxu0
      %v10805 = vunpack.c.l.b16 %v10523
      %v10806 = vunpack.c.l.b16 %v10524
      %v10807 = vunpack.c.l.b16 %v10525
      %v10808 = vunpack.c.l.b16 %v10526
      %v10809 = vunpack.c.l.b16 %v10527
      %v10810 = vunpack.c.l.b16 %v10528
      %v10811 = vunpack.c.l.b16 %v10529
      %v10812 = vunpack.c.l.b16 %v10530
      %v10813 = vunpack.c.l.b16 %v10531
      %v10814 = vunpack.c.l.b16 %v10532
      %v10815 = vunpack.c.l.b16 %v10533
      %v10816 = vunpack.c.l.b16 %v10534
      %v10817 = vpack.c.b16 %v10806, %v10805
      %v10818 = vpack.c.b16 %v10808, %v10807
      %v10819 = vpack.c.b16 %v10810, %v10809
      %v10820 = vpack.c.b16 %v10812, %v10811
      %v10821 = vpack.c.b16 %v10814, %v10813
      %v10822 = vpack.c.b16 %v10816, %v10815
      %v10830 = vsel %vm1006, %v10500, 0
      %10832 = vmatprep.subr.bf16.mxu0 0
      %10833 = vmatpush1.bf16.msra.mxu0 0
      %10834 = vmatprep.subr.bf16.mxu0 0
      %10835 = vmatpush1.bf16.msra.mxu0 0
      %10836 = vmatprep.subr.bf16.mxu0 0
      %10837 = vmatpush1.bf16.msra.mxu0 %v10822
      %10838 = vmatprep.subr.bf16.mxu0 0
      %10839 = vmatpush1.bf16.msra.mxu0 %v10821
      %10840 = vmatprep.subr.bf16.mxu0 0
      %10841 = vmatpush1.bf16.msra.mxu0 %v10820
      %10842 = vmatprep.subr.bf16.mxu0 0
      %10843 = vmatpush1.bf16.msra.mxu0 %v10819
      %10844 = vmatprep.subr.bf16.mxu0 0
      %10845 = vmatpush1.bf16.msra.mxu0 %v10818
      %10846 = vmatprep.subr.bf16.mxu0 0
      %10847 = vmatpush1.bf16.msra.mxu0 %v10817
      %10848 = vmatprep.subr.bf16.mxu0 0
      %10849 = vmatpush2.bf16.msra.mxu0 0
      %10850 = vmatprep.subr.bf16.mxu0 0
      %10851 = vmatpush2.bf16.msra.mxu0 0
      %10852 = vmatprep.subr.bf16.mxu0 0
      %10853 = vmatpush2.bf16.msra.mxu0 0
      %10854 = vmatprep.subr.bf16.mxu0 0
      %10855 = vmatpush2.bf16.msra.mxu0 0
      %10856 = vmatprep.subr.bf16.mxu0 0
      %10857 = vmatpush2.bf16.msra.mxu0 0
      %10858 = vmatprep.subr.bf16.mxu0 0
      %10859 = vmatpush2.bf16.msra.mxu0 0
      %10860 = vmatprep.subr.bf16.mxu0 0
      %10861 = vmatpush2.bf16.msra.mxu0 0
      %10862 = vmatprep.subr.bf16.mxu0 0
      %10863 = vmatpush2.bf16.msra.mxu0 0
      %10864 = vmatprep.mubr.bf16.mxu0 0
      %10865 = vmatmul.mubr.bf16.gmra.mxu0 %v10830
      %v10866 = vpop.f32.mrf.mxu0
      %v10867 = vadd.f32 %v10667, %v10866
      %v10868 = vpop.f32.mrf.mxu0
      %v10869 = vpop.f32.mrf.mxu0
      %v10870 = vadd.f32 %v10670, %v10869
      %v10871 = vpop.f32.mrf.mxu0
      %10872 = vmatprep.mubr.bf16.mxu0 0
      %10873 = vmatmul.mubr.bf16.gmra.mxu0 %v10585
      %v10874 = vpop.f32.mrf.mxu0
      %v10875 = vadd.f32 %v10675, %v10874
      %v10876 = vpop.f32.mrf.mxu0
      %v10877 = vpop.f32.mrf.mxu0
      %v10878 = vadd.f32 %v10678, %v10877
      %v10879 = vpop.f32.mrf.mxu0
      %10880 = vmatprep.mubr.bf16.mxu0 0
      %10881 = vmatmul.mubr.bf16.gmra.mxu0 %v10588
      %v10882 = vpop.f32.mrf.mxu0
      %v10883 = vadd.f32 %v10683, %v10882
      %v10884 = vpop.f32.mrf.mxu0
      %v10885 = vpop.f32.mrf.mxu0
      %v10886 = vadd.f32 %v10686, %v10885
      %v10887 = vpop.f32.mrf.mxu0
      %10888 = vmatprep.mubr.bf16.mxu0 0
      %10889 = vmatmul.mubr.bf16.gmra.mxu0 %v10591
      %v10890 = vpop.f32.mrf.mxu0
      %v10891 = vadd.f32 %v10691, %v10890
      %v10892 = vpop.f32.mrf.mxu0
      %v10893 = vpop.f32.mrf.mxu0
      %v10894 = vadd.f32 %v10694, %v10893
      %v10895 = vpop.f32.mrf.mxu0
      %10896 = vmatprep.mubr.bf16.mxu0 0
      %10897 = vmatmul.mubr.bf16.gmra.mxu0 %v10594
      %v10898 = vpop.f32.mrf.mxu0
      %v10899 = vadd.f32 %v10699, %v10898
      %v10900 = vpop.f32.mrf.mxu0
      %v10901 = vpop.f32.mrf.mxu0
      %v10902 = vadd.f32 %v10702, %v10901
      %v10903 = vpop.f32.mrf.mxu0
      %10904 = vmatprep.mubr.bf16.mxu0 0
      %10905 = vmatmul.mubr.bf16.gmra.mxu0 %v10597
      %v10906 = vpop.f32.mrf.mxu0
      %v10907 = vadd.f32 %v10707, %v10906
      %v10908 = vpop.f32.mrf.mxu0
      %v10909 = vpop.f32.mrf.mxu0
      %v10910 = vadd.f32 %v10710, %v10909
      %v10911 = vpop.f32.mrf.mxu0
      %10912 = vmatprep.mubr.bf16.mxu0 0
      %10913 = vmatmul.mubr.bf16.gmra.mxu0 %v10600
      %v10914 = vpop.f32.mrf.mxu0
      %v10915 = vadd.f32 %v10715, %v10914
      %v10916 = vpop.f32.mrf.mxu0
      %v10917 = vpop.f32.mrf.mxu0
      %v10918 = vadd.f32 %v10718, %v10917
      %v10919 = vpop.f32.mrf.mxu0
      %10920 = vmatprep.mubr.bf16.mxu0 0
      %10921 = vmatmul.mubr.bf16.gmra.mxu0 %v10603
      %v10922 = vpop.f32.mrf.mxu0
      %v10923 = vadd.f32 %v10723, %v10922
      %v10924 = vpop.f32.mrf.mxu0
      %v10925 = vpop.f32.mrf.mxu0
      %v10926 = vadd.f32 %v10726, %v10925
      %v10927 = vpop.f32.mrf.mxu0
      %10928 = vmatprep.mubr.bf16.mxu0 0
      %10929 = vmatmul.mubr.bf16.gmra.mxu0 %v10606
      %v10930 = vpop.f32.mrf.mxu0
      %v10931 = vadd.f32 %v10731, %v10930
      %v10932 = vpop.f32.mrf.mxu0
      %v10933 = vpop.f32.mrf.mxu0
      %v10934 = vadd.f32 %v10734, %v10933
      %v10935 = vpop.f32.mrf.mxu0
      %10936 = vmatprep.mubr.bf16.mxu0 0
      %10937 = vmatmul.mubr.bf16.gmra.mxu0 %v10609
      %v10938 = vpop.f32.mrf.mxu0
      %v10939 = vadd.f32 %v10739, %v10938
      %v10940 = vpop.f32.mrf.mxu0
      %v10941 = vpop.f32.mrf.mxu0
      %v10942 = vadd.f32 %v10742, %v10941
      %v10943 = vpop.f32.mrf.mxu0
      %10944 = vmatprep.mubr.bf16.mxu0 0
      %10945 = vmatmul.mubr.bf16.gmra.mxu0 %v10612
      %v10946 = vpop.f32.mrf.mxu0
      %v10947 = vadd.f32 %v10747, %v10946
      %v10948 = vpop.f32.mrf.mxu0
      %v10949 = vpop.f32.mrf.mxu0
      %v10950 = vadd.f32 %v10750, %v10949
      %v10951 = vpop.f32.mrf.mxu0
      %10952 = vmatprep.mubr.bf16.mxu0 0
      %10953 = vmatmul.mubr.bf16.gmra.mxu0 %v10615
      %v10954 = vpop.f32.mrf.mxu0
      %v10955 = vadd.f32 %v10755, %v10954
      %v10956 = vpop.f32.mrf.mxu0
      %v10957 = vpop.f32.mrf.mxu0
      %v10958 = vadd.f32 %v10758, %v10957
      %v10959 = vpop.f32.mrf.mxu0
      %10960 = vmatprep.mubr.bf16.mxu0 0
      %10961 = vmatmul.mubr.bf16.gmra.mxu0 %v10618
      %v10962 = vpop.f32.mrf.mxu0
      %v10963 = vadd.f32 %v10763, %v10962
      %v10964 = vpop.f32.mrf.mxu0
      %v10965 = vpop.f32.mrf.mxu0
      %v10966 = vadd.f32 %v10766, %v10965
      %v10967 = vpop.f32.mrf.mxu0
      %10968 = vmatprep.mubr.bf16.mxu0 0
      %10969 = vmatmul.mubr.bf16.gmra.mxu0 %v10621
      %v10970 = vpop.f32.mrf.mxu0
      %v10971 = vadd.f32 %v10771, %v10970
      %v10972 = vpop.f32.mrf.mxu0
      %v10973 = vpop.f32.mrf.mxu0
      %v10974 = vadd.f32 %v10774, %v10973
      %v10975 = vpop.f32.mrf.mxu0
      %10976 = vmatprep.mubr.bf16.mxu0 0
      %10977 = vmatmul.mubr.bf16.gmra.mxu0 %v10624
      %v10978 = vpop.f32.mrf.mxu0
      %v10979 = vadd.f32 %v10779, %v10978
      %v10980 = vpop.f32.mrf.mxu0
      %v10981 = vpop.f32.mrf.mxu0
      %v10982 = vadd.f32 %v10782, %v10981
      %v10983 = vpop.f32.mrf.mxu0
      %10984 = vmatprep.mubr.bf16.mxu0 0
      %10985 = vmatmul.mubr.bf16.gmra.mxu0 %v10627
      %v10986 = vpop.f32.mrf.mxu0
      %v10987 = vadd.f32 %v10787, %v10986
      %v10988 = vpop.f32.mrf.mxu0
      %v10989 = vpop.f32.mrf.mxu0
      %v10990 = vadd.f32 %v10790, %v10989
      %v10991 = vpop.f32.mrf.mxu0
      %10992 = vdwg.mxu0
      %s10993 = scalar_lea.vmem %s1, 1440
      %v10994 = vld [vmem:[%s10993] sm:$0xf]
      %v10995 = vld [vmem:[%s10993 + $0x4] sm:$0xf]
      %v10996 = vld [vmem:[%s10993 + $0x8] sm:$0xf]
      %v10997 = vld [vmem:[%s10993 + $0xc] sm:$0xf]
      %v10998 = vld [vmem:[%s10993 + $0x10] sm:$0xf]
      %v10999 = vld [vmem:[%s10993 + $0x14] sm:$0xf]
      %v11000 = vld [vmem:[%s10993 + $0x18] sm:$0xf]
      %v11001 = vld [vmem:[%s10993 + $0x1c] sm:$0xf]
      %v11002 = vld [vmem:[%s10993 + $0x20] sm:$0xf]
      %v11003 = vld [vmem:[%s10993 + $0x24] sm:$0xf]
      %v11004 = vld [vmem:[%s10993 + $0x28] sm:$0xf]
      %v11005 = vld [vmem:[%s10993 + $0x2c] sm:$0xf]
      %v11018 = vunpack.c.l.b16 %v10994
      %v11019 = vunpack.c.l.b16 %v10995
      %v11020 = vunpack.c.l.b16 %v10996
      %v11021 = vunpack.c.l.b16 %v10997
      %v11022 = vunpack.c.l.b16 %v10998
      %v11023 = vunpack.c.l.b16 %v10999
      %v11024 = vunpack.c.l.b16 %v11000
      %v11025 = vunpack.c.l.b16 %v11001
      %v11026 = vunpack.c.l.b16 %v11002
      %v11027 = vunpack.c.l.b16 %v11003
      %v11028 = vunpack.c.l.b16 %v11004
      %v11029 = vunpack.c.l.b16 %v11005
      %v11030 = vpack.c.b16 %v11019, %v11018
      %v11031 = vpack.c.b16 %v11021, %v11020
      %v11032 = vpack.c.b16 %v11023, %v11022
      %v11033 = vpack.c.b16 %v11025, %v11024
      %v11034 = vpack.c.b16 %v11027, %v11026
      %v11035 = vpack.c.b16 %v11029, %v11028
      %v11043 = vsel %vm1006, %v10517, 0
      %11045 = vmatprep.subr.bf16.mxu0 0
      %11046 = vmatpush1.bf16.msra.mxu0 0
      %11047 = vmatprep.subr.bf16.mxu0 0
      %11048 = vmatpush1.bf16.msra.mxu0 0
      %11049 = vmatprep.subr.bf16.mxu0 0
      %11050 = vmatpush1.bf16.msra.mxu0 %v11035
      %11051 = vmatprep.subr.bf16.mxu0 0
      %11052 = vmatpush1.bf16.msra.mxu0 %v11034
      %11053 = vmatprep.subr.bf16.mxu0 0
      %11054 = vmatpush1.bf16.msra.mxu0 %v11033
      %11055 = vmatprep.subr.bf16.mxu0 0
      %11056 = vmatpush1.bf16.msra.mxu0 %v11032
      %11057 = vmatprep.subr.bf16.mxu0 0
      %11058 = vmatpush1.bf16.msra.mxu0 %v11031
      %11059 = vmatprep.subr.bf16.mxu0 0
      %11060 = vmatpush1.bf16.msra.mxu0 %v11030
      %11061 = vmatprep.subr.bf16.mxu0 0
      %11062 = vmatpush2.bf16.msra.mxu0 0
      %11063 = vmatprep.subr.bf16.mxu0 0
      %11064 = vmatpush2.bf16.msra.mxu0 0
      %11065 = vmatprep.subr.bf16.mxu0 0
      %11066 = vmatpush2.bf16.msra.mxu0 0
      %11067 = vmatprep.subr.bf16.mxu0 0
      %11068 = vmatpush2.bf16.msra.mxu0 0
      %11069 = vmatprep.subr.bf16.mxu0 0
      %11070 = vmatpush2.bf16.msra.mxu0 0
      %11071 = vmatprep.subr.bf16.mxu0 0
      %11072 = vmatpush2.bf16.msra.mxu0 0
      %11073 = vmatprep.subr.bf16.mxu0 0
      %11074 = vmatpush2.bf16.msra.mxu0 0
      %11075 = vmatprep.subr.bf16.mxu0 0
      %11076 = vmatpush2.bf16.msra.mxu0 0
      %11077 = vmatprep.mubr.bf16.mxu0 0
      %11078 = vmatmul.mubr.bf16.gmra.mxu0 %v10588
      %v11079 = vpop.f32.mrf.mxu0
      %v11080 = vadd.f32 0.0, %v11079
      %v11081 = vpop.f32.mrf.mxu0
      %v11082 = vpop.f32.mrf.mxu0
      %v11083 = vadd.f32 0.0, %v11082
      %v11084 = vpop.f32.mrf.mxu0
      %11085 = vmatprep.mubr.bf16.mxu0 0
      %11086 = vmatmul.mubr.bf16.gmra.mxu0 %v10591
      %v11087 = vpop.f32.mrf.mxu0
      %v11088 = vadd.f32 0.0, %v11087
      %v11089 = vpop.f32.mrf.mxu0
      %v11090 = vpop.f32.mrf.mxu0
      %v11091 = vadd.f32 0.0, %v11090
      %v11092 = vpop.f32.mrf.mxu0
      %11093 = vmatprep.mubr.bf16.mxu0 0
      %11094 = vmatmul.mubr.bf16.gmra.mxu0 %v10594
      %v11095 = vpop.f32.mrf.mxu0
      %v11096 = vadd.f32 0.0, %v11095
      %v11097 = vpop.f32.mrf.mxu0
      %v11098 = vpop.f32.mrf.mxu0
      %v11099 = vadd.f32 0.0, %v11098
      %v11100 = vpop.f32.mrf.mxu0
      %11101 = vmatprep.mubr.bf16.mxu0 0
      %11102 = vmatmul.mubr.bf16.gmra.mxu0 %v10597
      %v11103 = vpop.f32.mrf.mxu0
      %v11104 = vadd.f32 0.0, %v11103
      %v11105 = vpop.f32.mrf.mxu0
      %v11106 = vpop.f32.mrf.mxu0
      %v11107 = vadd.f32 0.0, %v11106
      %v11108 = vpop.f32.mrf.mxu0
      %11109 = vmatprep.mubr.bf16.mxu0 0
      %11110 = vmatmul.mubr.bf16.gmra.mxu0 %v10600
      %v11111 = vpop.f32.mrf.mxu0
      %v11112 = vadd.f32 0.0, %v11111
      %v11113 = vpop.f32.mrf.mxu0
      %v11114 = vpop.f32.mrf.mxu0
      %v11115 = vadd.f32 0.0, %v11114
      %v11116 = vpop.f32.mrf.mxu0
      %11117 = vmatprep.mubr.bf16.mxu0 0
      %11118 = vmatmul.mubr.bf16.gmra.mxu0 %v10603
      %v11119 = vpop.f32.mrf.mxu0
      %v11120 = vadd.f32 0.0, %v11119
      %v11121 = vpop.f32.mrf.mxu0
      %v11122 = vpop.f32.mrf.mxu0
      %v11123 = vadd.f32 0.0, %v11122
      %v11124 = vpop.f32.mrf.mxu0
      %11125 = vmatprep.mubr.bf16.mxu0 0
      %11126 = vmatmul.mubr.bf16.gmra.mxu0 %v10606
      %v11127 = vpop.f32.mrf.mxu0
      %v11128 = vadd.f32 0.0, %v11127
      %v11129 = vpop.f32.mrf.mxu0
      %v11130 = vpop.f32.mrf.mxu0
      %v11131 = vadd.f32 0.0, %v11130
      %v11132 = vpop.f32.mrf.mxu0
      %11133 = vmatprep.mubr.bf16.mxu0 0
      %11134 = vmatmul.mubr.bf16.gmra.mxu0 %v10609
      %v11135 = vpop.f32.mrf.mxu0
      %v11136 = vadd.f32 0.0, %v11135
      %v11137 = vpop.f32.mrf.mxu0
      %v11138 = vpop.f32.mrf.mxu0
      %v11139 = vadd.f32 0.0, %v11138
      %v11140 = vpop.f32.mrf.mxu0
      %11141 = vmatprep.mubr.bf16.mxu0 0
      %11142 = vmatmul.mubr.bf16.gmra.mxu0 %v10612
      %v11143 = vpop.f32.mrf.mxu0
      %v11144 = vadd.f32 0.0, %v11143
      %v11145 = vpop.f32.mrf.mxu0
      %v11146 = vpop.f32.mrf.mxu0
      %v11147 = vadd.f32 0.0, %v11146
      %v11148 = vpop.f32.mrf.mxu0
      %11149 = vmatprep.mubr.bf16.mxu0 0
      %11150 = vmatmul.mubr.bf16.gmra.mxu0 %v10615
      %v11151 = vpop.f32.mrf.mxu0
      %v11152 = vadd.f32 0.0, %v11151
      %v11153 = vpop.f32.mrf.mxu0
      %v11154 = vpop.f32.mrf.mxu0
      %v11155 = vadd.f32 0.0, %v11154
      %v11156 = vpop.f32.mrf.mxu0
      %11157 = vmatprep.mubr.bf16.mxu0 0
      %11158 = vmatmul.mubr.bf16.gmra.mxu0 %v10618
      %v11159 = vpop.f32.mrf.mxu0
      %v11160 = vadd.f32 0.0, %v11159
      %v11161 = vpop.f32.mrf.mxu0
      %v11162 = vpop.f32.mrf.mxu0
      %v11163 = vadd.f32 0.0, %v11162
      %v11164 = vpop.f32.mrf.mxu0
      %11165 = vmatprep.mubr.bf16.mxu0 0
      %11166 = vmatmul.mubr.bf16.gmra.mxu0 %v10621
      %v11167 = vpop.f32.mrf.mxu0
      %v11168 = vadd.f32 0.0, %v11167
      %v11169 = vpop.f32.mrf.mxu0
      %v11170 = vpop.f32.mrf.mxu0
      %v11171 = vadd.f32 0.0, %v11170
      %v11172 = vpop.f32.mrf.mxu0
      %11173 = vmatprep.mubr.bf16.mxu0 0
      %11174 = vmatmul.mubr.bf16.gmra.mxu0 %v10624
      %v11175 = vpop.f32.mrf.mxu0
      %v11176 = vadd.f32 0.0, %v11175
      %v11177 = vpop.f32.mrf.mxu0
      %v11178 = vpop.f32.mrf.mxu0
      %v11179 = vadd.f32 0.0, %v11178
      %v11180 = vpop.f32.mrf.mxu0
      %11181 = vmatprep.mubr.bf16.mxu0 0
      %11182 = vmatmul.mubr.bf16.gmra.mxu0 %v10627
      %v11183 = vpop.f32.mrf.mxu0
      %v11184 = vadd.f32 0.0, %v11183
      %v11185 = vpop.f32.mrf.mxu0
      %v11186 = vpop.f32.mrf.mxu0
      %v11187 = vadd.f32 0.0, %v11186
      %v11188 = vpop.f32.mrf.mxu0
      %11189 = vmatprep.mubr.bf16.mxu0 0
      %11190 = vmatmul.mubr.bf16.gmra.mxu0 %v10630
      %v11191 = vpop.f32.mrf.mxu0
      %v11192 = vadd.f32 0.0, %v11191
      %v11193 = vpop.f32.mrf.mxu0
      %v11194 = vpop.f32.mrf.mxu0
      %v11195 = vadd.f32 0.0, %v11194
      %v11196 = vpop.f32.mrf.mxu0
      %11197 = vmatprep.mubr.bf16.mxu0 0
      %11198 = vmatmul.mubr.bf16.gmra.mxu0 %v11043
      %v11199 = vpop.f32.mrf.mxu0
      %v11200 = vadd.f32 0.0, %v11199
      %v11201 = vpop.f32.mrf.mxu0
      %v11202 = vpop.f32.mrf.mxu0
      %v11203 = vadd.f32 0.0, %v11202
      %v11204 = vpop.f32.mrf.mxu0
      %11205 = vdwg.mxu0
      %v11206 = vadd.f32 %v10867, %v11080
      %v11207 = vadd.f32 %v10870, %v11083
      %v11208 = vadd.f32 %v10875, %v11088
      %v11209 = vadd.f32 %v10878, %v11091
      %v11210 = vadd.f32 %v10883, %v11096
      %v11211 = vadd.f32 %v10886, %v11099
      %v11212 = vadd.f32 %v10891, %v11104
      %v11213 = vadd.f32 %v10894, %v11107
      %v11214 = vadd.f32 %v10899, %v11112
      %v11215 = vadd.f32 %v10902, %v11115
      %v11216 = vadd.f32 %v10907, %v11120
      %v11217 = vadd.f32 %v10910, %v11123
      %v11218 = vadd.f32 %v10915, %v11128
      %v11219 = vadd.f32 %v10918, %v11131
      %v11220 = vadd.f32 %v10923, %v11136
      %v11221 = vadd.f32 %v10926, %v11139
      %v11222 = vadd.f32 %v10931, %v11144
      %v11223 = vadd.f32 %v10934, %v11147
      %v11224 = vadd.f32 %v10939, %v11152
      %v11225 = vadd.f32 %v10942, %v11155
      %v11226 = vadd.f32 %v10947, %v11160
      %v11227 = vadd.f32 %v10950, %v11163
      %v11228 = vadd.f32 %v10955, %v11168
      %v11229 = vadd.f32 %v10958, %v11171
      %v11230 = vadd.f32 %v10963, %v11176
      %v11231 = vadd.f32 %v10966, %v11179
      %v11232 = vadd.f32 %v10971, %v11184
      %v11233 = vadd.f32 %v10974, %v11187
      %v11234 = vadd.f32 %v10979, %v11192
      %v11235 = vadd.f32 %v10982, %v11195
      %v11236 = vadd.f32 %v10987, %v11200
      %v11237 = vadd.f32 %v10990, %v11203
      %s11238 = scalar_lea.vmem %s1, 1488
      %v11239 = vld [vmem:[%s11238] sm:$0xf]
      %v11240 = vld [vmem:[%s11238 + $0x4] sm:$0xf]
      %v11241 = vld [vmem:[%s11238 + $0x8] sm:$0xf]
      %v11242 = vld [vmem:[%s11238 + $0xc] sm:$0xf]
      %v11243 = vld [vmem:[%s11238 + $0x10] sm:$0xf]
      %v11244 = vld [vmem:[%s11238 + $0x14] sm:$0xf]
      %v11245 = vld [vmem:[%s11238 + $0x18] sm:$0xf]
      %v11246 = vld [vmem:[%s11238 + $0x1c] sm:$0xf]
      %v11247 = vld [vmem:[%s11238 + $0x20] sm:$0xf]
      %v11248 = vld [vmem:[%s11238 + $0x24] sm:$0xf]
      %v11249 = vld [vmem:[%s11238 + $0x28] sm:$0xf]
      %v11250 = vld [vmem:[%s11238 + $0x2c] sm:$0xf]
      %v11263 = vunpack.c.l.b16 %v11239
      %v11264 = vunpack.c.l.b16 %v11240
      %v11265 = vunpack.c.l.b16 %v11241
      %v11266 = vunpack.c.l.b16 %v11242
      %v11267 = vunpack.c.l.b16 %v11243
      %v11268 = vunpack.c.l.b16 %v11244
      %v11269 = vunpack.c.l.b16 %v11245
      %v11270 = vunpack.c.l.b16 %v11246
      %v11271 = vunpack.c.l.b16 %v11247
      %v11272 = vunpack.c.l.b16 %v11248
      %v11273 = vunpack.c.l.b16 %v11249
      %v11274 = vunpack.c.l.b16 %v11250
      %v11275 = vpack.c.b16 %v11264, %v11263
      %v11276 = vpack.c.b16 %v11266, %v11265
      %v11277 = vpack.c.b16 %v11268, %v11267
      %v11278 = vpack.c.b16 %v11270, %v11269
      %v11279 = vpack.c.b16 %v11272, %v11271
      %v11280 = vpack.c.b16 %v11274, %v11273
      %v11288 = vsel %vm1006, %v10518, 0
      %11290 = vmatprep.subr.bf16.mxu0 0
      %11291 = vmatpush1.bf16.msra.mxu0 0
      %11292 = vmatprep.subr.bf16.mxu0 0
      %11293 = vmatpush1.bf16.msra.mxu0 0
      %11294 = vmatprep.subr.bf16.mxu0 0
      %11295 = vmatpush1.bf16.msra.mxu0 %v11280
      %11296 = vmatprep.subr.bf16.mxu0 0
      %11297 = vmatpush1.bf16.msra.mxu0 %v11279
      %11298 = vmatprep.subr.bf16.mxu0 0
      %11299 = vmatpush1.bf16.msra.mxu0 %v11278
      %11300 = vmatprep.subr.bf16.mxu0 0
      %11301 = vmatpush1.bf16.msra.mxu0 %v11277
      %11302 = vmatprep.subr.bf16.mxu0 0
      %11303 = vmatpush1.bf16.msra.mxu0 %v11276
      %11304 = vmatprep.subr.bf16.mxu0 0
      %11305 = vmatpush1.bf16.msra.mxu0 %v11275
      %11306 = vmatprep.subr.bf16.mxu0 0
      %11307 = vmatpush2.bf16.msra.mxu0 0
      %11308 = vmatprep.subr.bf16.mxu0 0
      %11309 = vmatpush2.bf16.msra.mxu0 0
      %11310 = vmatprep.subr.bf16.mxu0 0
      %11311 = vmatpush2.bf16.msra.mxu0 0
      %11312 = vmatprep.subr.bf16.mxu0 0
      %11313 = vmatpush2.bf16.msra.mxu0 0
      %11314 = vmatprep.subr.bf16.mxu0 0
      %11315 = vmatpush2.bf16.msra.mxu0 0
      %11316 = vmatprep.subr.bf16.mxu0 0
      %11317 = vmatpush2.bf16.msra.mxu0 0
      %11318 = vmatprep.subr.bf16.mxu0 0
      %11319 = vmatpush2.bf16.msra.mxu0 0
      %11320 = vmatprep.subr.bf16.mxu0 0
      %11321 = vmatpush2.bf16.msra.mxu0 0
      %11322 = vmatprep.mubr.bf16.mxu0 0
      %11323 = vmatmul.mubr.bf16.gmra.mxu0 %v10591
      %v11324 = vpop.f32.mrf.mxu0
      %v11325 = vadd.f32 0.0, %v11324
      %v11326 = vpop.f32.mrf.mxu0
      %v11327 = vpop.f32.mrf.mxu0
      %v11328 = vadd.f32 0.0, %v11327
      %v11329 = vpop.f32.mrf.mxu0
      %11330 = vmatprep.mubr.bf16.mxu0 0
      %11331 = vmatmul.mubr.bf16.gmra.mxu0 %v10594
      %v11332 = vpop.f32.mrf.mxu0
      %v11333 = vadd.f32 0.0, %v11332
      %v11334 = vpop.f32.mrf.mxu0
      %v11335 = vpop.f32.mrf.mxu0
      %v11336 = vadd.f32 0.0, %v11335
      %v11337 = vpop.f32.mrf.mxu0
      %11338 = vmatprep.mubr.bf16.mxu0 0
      %11339 = vmatmul.mubr.bf16.gmra.mxu0 %v10597
      %v11340 = vpop.f32.mrf.mxu0
      %v11341 = vadd.f32 0.0, %v11340
      %v11342 = vpop.f32.mrf.mxu0
      %v11343 = vpop.f32.mrf.mxu0
      %v11344 = vadd.f32 0.0, %v11343
      %v11345 = vpop.f32.mrf.mxu0
      %11346 = vmatprep.mubr.bf16.mxu0 0
      %11347 = vmatmul.mubr.bf16.gmra.mxu0 %v10600
      %v11348 = vpop.f32.mrf.mxu0
      %v11349 = vadd.f32 0.0, %v11348
      %v11350 = vpop.f32.mrf.mxu0
      %v11351 = vpop.f32.mrf.mxu0
      %v11352 = vadd.f32 0.0, %v11351
      %v11353 = vpop.f32.mrf.mxu0
      %11354 = vmatprep.mubr.bf16.mxu0 0
      %11355 = vmatmul.mubr.bf16.gmra.mxu0 %v10603
      %v11356 = vpop.f32.mrf.mxu0
      %v11357 = vadd.f32 0.0, %v11356
      %v11358 = vpop.f32.mrf.mxu0
      %v11359 = vpop.f32.mrf.mxu0
      %v11360 = vadd.f32 0.0, %v11359
      %v11361 = vpop.f32.mrf.mxu0
      %11362 = vmatprep.mubr.bf16.mxu0 0
      %11363 = vmatmul.mubr.bf16.gmra.mxu0 %v10606
      %v11364 = vpop.f32.mrf.mxu0
      %v11365 = vadd.f32 0.0, %v11364
      %v11366 = vpop.f32.mrf.mxu0
      %v11367 = vpop.f32.mrf.mxu0
      %v11368 = vadd.f32 0.0, %v11367
      %v11369 = vpop.f32.mrf.mxu0
      %11370 = vmatprep.mubr.bf16.mxu0 0
      %11371 = vmatmul.mubr.bf16.gmra.mxu0 %v10609
      %v11372 = vpop.f32.mrf.mxu0
      %v11373 = vadd.f32 0.0, %v11372
      %v11374 = vpop.f32.mrf.mxu0
      %v11375 = vpop.f32.mrf.mxu0
      %v11376 = vadd.f32 0.0, %v11375
      %v11377 = vpop.f32.mrf.mxu0
      %11378 = vmatprep.mubr.bf16.mxu0 0
      %11379 = vmatmul.mubr.bf16.gmra.mxu0 %v10612
      %v11380 = vpop.f32.mrf.mxu0
      %v11381 = vadd.f32 0.0, %v11380
      %v11382 = vpop.f32.mrf.mxu0
      %v11383 = vpop.f32.mrf.mxu0
      %v11384 = vadd.f32 0.0, %v11383
      %v11385 = vpop.f32.mrf.mxu0
      %11386 = vmatprep.mubr.bf16.mxu0 0
      %11387 = vmatmul.mubr.bf16.gmra.mxu0 %v10615
      %v11388 = vpop.f32.mrf.mxu0
      %v11389 = vadd.f32 0.0, %v11388
      %v11390 = vpop.f32.mrf.mxu0
      %v11391 = vpop.f32.mrf.mxu0
      %v11392 = vadd.f32 0.0, %v11391
      %v11393 = vpop.f32.mrf.mxu0
      %11394 = vmatprep.mubr.bf16.mxu0 0
      %11395 = vmatmul.mubr.bf16.gmra.mxu0 %v10618
      %v11396 = vpop.f32.mrf.mxu0
      %v11397 = vadd.f32 0.0, %v11396
      %v11398 = vpop.f32.mrf.mxu0
      %v11399 = vpop.f32.mrf.mxu0
      %v11400 = vadd.f32 0.0, %v11399
      %v11401 = vpop.f32.mrf.mxu0
      %11402 = vmatprep.mubr.bf16.mxu0 0
      %11403 = vmatmul.mubr.bf16.gmra.mxu0 %v10621
      %v11404 = vpop.f32.mrf.mxu0
      %v11405 = vadd.f32 0.0, %v11404
      %v11406 = vpop.f32.mrf.mxu0
      %v11407 = vpop.f32.mrf.mxu0
      %v11408 = vadd.f32 0.0, %v11407
      %v11409 = vpop.f32.mrf.mxu0
      %11410 = vmatprep.mubr.bf16.mxu0 0
      %11411 = vmatmul.mubr.bf16.gmra.mxu0 %v10624
      %v11412 = vpop.f32.mrf.mxu0
      %v11413 = vadd.f32 0.0, %v11412
      %v11414 = vpop.f32.mrf.mxu0
      %v11415 = vpop.f32.mrf.mxu0
      %v11416 = vadd.f32 0.0, %v11415
      %v11417 = vpop.f32.mrf.mxu0
      %11418 = vmatprep.mubr.bf16.mxu0 0
      %11419 = vmatmul.mubr.bf16.gmra.mxu0 %v10627
      %v11420 = vpop.f32.mrf.mxu0
      %v11421 = vadd.f32 0.0, %v11420
      %v11422 = vpop.f32.mrf.mxu0
      %v11423 = vpop.f32.mrf.mxu0
      %v11424 = vadd.f32 0.0, %v11423
      %v11425 = vpop.f32.mrf.mxu0
      %11426 = vmatprep.mubr.bf16.mxu0 0
      %11427 = vmatmul.mubr.bf16.gmra.mxu0 %v10630
      %v11428 = vpop.f32.mrf.mxu0
      %v11429 = vadd.f32 0.0, %v11428
      %v11430 = vpop.f32.mrf.mxu0
      %v11431 = vpop.f32.mrf.mxu0
      %v11432 = vadd.f32 0.0, %v11431
      %v11433 = vpop.f32.mrf.mxu0
      %11434 = vmatprep.mubr.bf16.mxu0 0
      %11435 = vmatmul.mubr.bf16.gmra.mxu0 %v11043
      %v11436 = vpop.f32.mrf.mxu0
      %v11437 = vadd.f32 0.0, %v11436
      %v11438 = vpop.f32.mrf.mxu0
      %v11439 = vpop.f32.mrf.mxu0
      %v11440 = vadd.f32 0.0, %v11439
      %v11441 = vpop.f32.mrf.mxu0
      %11442 = vmatprep.mubr.bf16.mxu0 0
      %11443 = vmatmul.mubr.bf16.gmra.mxu0 %v11288
      %v11444 = vpop.f32.mrf.mxu0
      %v11445 = vadd.f32 0.0, %v11444
      %v11446 = vpop.f32.mrf.mxu0
      %v11447 = vpop.f32.mrf.mxu0
      %v11448 = vadd.f32 0.0, %v11447
      %v11449 = vpop.f32.mrf.mxu0
      %11450 = vdwg.mxu0
      %v11451 = vadd.f32 %v11206, %v11325
      %v11452 = vadd.f32 %v11207, %v11328
      %v11453 = vadd.f32 %v11208, %v11333
      %v11454 = vadd.f32 %v11209, %v11336
      %v11455 = vadd.f32 %v11210, %v11341
      %v11456 = vadd.f32 %v11211, %v11344
      %v11457 = vadd.f32 %v11212, %v11349
      %v11458 = vadd.f32 %v11213, %v11352
      %v11459 = vadd.f32 %v11214, %v11357
      %v11460 = vadd.f32 %v11215, %v11360
      %v11461 = vadd.f32 %v11216, %v11365
      %v11462 = vadd.f32 %v11217, %v11368
      %v11463 = vadd.f32 %v11218, %v11373
      %v11464 = vadd.f32 %v11219, %v11376
      %v11465 = vadd.f32 %v11220, %v11381
      %v11466 = vadd.f32 %v11221, %v11384
      %v11467 = vadd.f32 %v11222, %v11389
      %v11468 = vadd.f32 %v11223, %v11392
      %v11469 = vadd.f32 %v11224, %v11397
      %v11470 = vadd.f32 %v11225, %v11400
      %v11471 = vadd.f32 %v11226, %v11405
      %v11472 = vadd.f32 %v11227, %v11408
      %v11473 = vadd.f32 %v11228, %v11413
      %v11474 = vadd.f32 %v11229, %v11416
      %v11475 = vadd.f32 %v11230, %v11421
      %v11476 = vadd.f32 %v11231, %v11424
      %v11477 = vadd.f32 %v11232, %v11429
      %v11478 = vadd.f32 %v11233, %v11432
      %v11479 = vadd.f32 %v11234, %v11437
      %v11480 = vadd.f32 %v11235, %v11440
      %v11481 = vadd.f32 %v11236, %v11445
      %v11482 = vadd.f32 %v11237, %v11448
      %s11483 = scalar_lea.vmem %s1, 1536
      %v11484 = vld [vmem:[%s11483] sm:$0xf]
      %v11485 = vld [vmem:[%s11483 + $0x4] sm:$0xf]
      %v11486 = vld [vmem:[%s11483 + $0x8] sm:$0xf]
      %v11487 = vld [vmem:[%s11483 + $0xc] sm:$0xf]
      %v11488 = vld [vmem:[%s11483 + $0x10] sm:$0xf]
      %v11489 = vld [vmem:[%s11483 + $0x14] sm:$0xf]
      %v11490 = vld [vmem:[%s11483 + $0x18] sm:$0xf]
      %v11491 = vld [vmem:[%s11483 + $0x1c] sm:$0xf]
      %v11492 = vld [vmem:[%s11483 + $0x20] sm:$0xf]
      %v11493 = vld [vmem:[%s11483 + $0x24] sm:$0xf]
      %v11494 = vld [vmem:[%s11483 + $0x28] sm:$0xf]
      %v11495 = vld [vmem:[%s11483 + $0x2c] sm:$0xf]
      %v11508 = vunpack.c.l.b16 %v11484
      %v11509 = vunpack.c.l.b16 %v11485
      %v11510 = vunpack.c.l.b16 %v11486
      %v11511 = vunpack.c.l.b16 %v11487
      %v11512 = vunpack.c.l.b16 %v11488
      %v11513 = vunpack.c.l.b16 %v11489
      %v11514 = vunpack.c.l.b16 %v11490
      %v11515 = vunpack.c.l.b16 %v11491
      %v11516 = vunpack.c.l.b16 %v11492
      %v11517 = vunpack.c.l.b16 %v11493
      %v11518 = vunpack.c.l.b16 %v11494
      %v11519 = vunpack.c.l.b16 %v11495
      %v11520 = vpack.c.b16 %v11509, %v11508
      %v11521 = vpack.c.b16 %v11511, %v11510
      %v11522 = vpack.c.b16 %v11513, %v11512
      %v11523 = vpack.c.b16 %v11515, %v11514
      %v11524 = vpack.c.b16 %v11517, %v11516
      %v11525 = vpack.c.b16 %v11519, %v11518
      %v11533 = vsel %vm1006, %v10519, 0
      %11535 = vmatprep.subr.bf16.mxu0 0
      %11536 = vmatpush1.bf16.msra.mxu0 0
      %11537 = vmatprep.subr.bf16.mxu0 0
      %11538 = vmatpush1.bf16.msra.mxu0 0
      %11539 = vmatprep.subr.bf16.mxu0 0
      %11540 = vmatpush1.bf16.msra.mxu0 %v11525
      %11541 = vmatprep.subr.bf16.mxu0 0
      %11542 = vmatpush1.bf16.msra.mxu0 %v11524
      %11543 = vmatprep.subr.bf16.mxu0 0
      %11544 = vmatpush1.bf16.msra.mxu0 %v11523
      %11545 = vmatprep.subr.bf16.mxu0 0
      %11546 = vmatpush1.bf16.msra.mxu0 %v11522
      %11547 = vmatprep.subr.bf16.mxu0 0
      %11548 = vmatpush1.bf16.msra.mxu0 %v11521
      %11549 = vmatprep.subr.bf16.mxu0 0
      %11550 = vmatpush1.bf16.msra.mxu0 %v11520
      %11551 = vmatprep.subr.bf16.mxu0 0
      %11552 = vmatpush2.bf16.msra.mxu0 0
      %11553 = vmatprep.subr.bf16.mxu0 0
      %11554 = vmatpush2.bf16.msra.mxu0 0
      %11555 = vmatprep.subr.bf16.mxu0 0
      %11556 = vmatpush2.bf16.msra.mxu0 0
      %11557 = vmatprep.subr.bf16.mxu0 0
      %11558 = vmatpush2.bf16.msra.mxu0 0
      %11559 = vmatprep.subr.bf16.mxu0 0
      %11560 = vmatpush2.bf16.msra.mxu0 0
      %11561 = vmatprep.subr.bf16.mxu0 0
      %11562 = vmatpush2.bf16.msra.mxu0 0
      %11563 = vmatprep.subr.bf16.mxu0 0
      %11564 = vmatpush2.bf16.msra.mxu0 0
      %11565 = vmatprep.subr.bf16.mxu0 0
      %11566 = vmatpush2.bf16.msra.mxu0 0
      %11567 = vmatprep.mubr.bf16.mxu0 0
      %11568 = vmatmul.mubr.bf16.gmra.mxu0 %v10594
      %v11569 = vpop.f32.mrf.mxu0
      %v11570 = vadd.f32 0.0, %v11569
      %v11571 = vpop.f32.mrf.mxu0
      %v11572 = vpop.f32.mrf.mxu0
      %v11573 = vadd.f32 0.0, %v11572
      %v11574 = vpop.f32.mrf.mxu0
      %11575 = vmatprep.mubr.bf16.mxu0 0
      %11576 = vmatmul.mubr.bf16.gmra.mxu0 %v10597
      %v11577 = vpop.f32.mrf.mxu0
      %v11578 = vadd.f32 0.0, %v11577
      %v11579 = vpop.f32.mrf.mxu0
      %v11580 = vpop.f32.mrf.mxu0
      %v11581 = vadd.f32 0.0, %v11580
      %v11582 = vpop.f32.mrf.mxu0
      %11583 = vmatprep.mubr.bf16.mxu0 0
      %11584 = vmatmul.mubr.bf16.gmra.mxu0 %v10600
      %v11585 = vpop.f32.mrf.mxu0
      %v11586 = vadd.f32 0.0, %v11585
      %v11587 = vpop.f32.mrf.mxu0
      %v11588 = vpop.f32.mrf.mxu0
      %v11589 = vadd.f32 0.0, %v11588
      %v11590 = vpop.f32.mrf.mxu0
      %11591 = vmatprep.mubr.bf16.mxu0 0
      %11592 = vmatmul.mubr.bf16.gmra.mxu0 %v10603
      %v11593 = vpop.f32.mrf.mxu0
      %v11594 = vadd.f32 0.0, %v11593
      %v11595 = vpop.f32.mrf.mxu0
      %v11596 = vpop.f32.mrf.mxu0
      %v11597 = vadd.f32 0.0, %v11596
      %v11598 = vpop.f32.mrf.mxu0
      %11599 = vmatprep.mubr.bf16.mxu0 0
      %11600 = vmatmul.mubr.bf16.gmra.mxu0 %v10606
      %v11601 = vpop.f32.mrf.mxu0
      %v11602 = vadd.f32 0.0, %v11601
      %v11603 = vpop.f32.mrf.mxu0
      %v11604 = vpop.f32.mrf.mxu0
      %v11605 = vadd.f32 0.0, %v11604
      %v11606 = vpop.f32.mrf.mxu0
      %11607 = vmatprep.mubr.bf16.mxu0 0
      %11608 = vmatmul.mubr.bf16.gmra.mxu0 %v10609
      %v11609 = vpop.f32.mrf.mxu0
      %v11610 = vadd.f32 0.0, %v11609
      %v11611 = vpop.f32.mrf.mxu0
      %v11612 = vpop.f32.mrf.mxu0
      %v11613 = vadd.f32 0.0, %v11612
      %v11614 = vpop.f32.mrf.mxu0
      %11615 = vmatprep.mubr.bf16.mxu0 0
      %11616 = vmatmul.mubr.bf16.gmra.mxu0 %v10612
      %v11617 = vpop.f32.mrf.mxu0
      %v11618 = vadd.f32 0.0, %v11617
      %v11619 = vpop.f32.mrf.mxu0
      %v11620 = vpop.f32.mrf.mxu0
      %v11621 = vadd.f32 0.0, %v11620
      %v11622 = vpop.f32.mrf.mxu0
      %11623 = vmatprep.mubr.bf16.mxu0 0
      %11624 = vmatmul.mubr.bf16.gmra.mxu0 %v10615
      %v11625 = vpop.f32.mrf.mxu0
      %v11626 = vadd.f32 0.0, %v11625
      %v11627 = vpop.f32.mrf.mxu0
      %v11628 = vpop.f32.mrf.mxu0
      %v11629 = vadd.f32 0.0, %v11628
      %v11630 = vpop.f32.mrf.mxu0
      %11631 = vmatprep.mubr.bf16.mxu0 0
      %11632 = vmatmul.mubr.bf16.gmra.mxu0 %v10618
      %v11633 = vpop.f32.mrf.mxu0
      %v11634 = vadd.f32 0.0, %v11633
      %v11635 = vpop.f32.mrf.mxu0
      %v11636 = vpop.f32.mrf.mxu0
      %v11637 = vadd.f32 0.0, %v11636
      %v11638 = vpop.f32.mrf.mxu0
      %11639 = vmatprep.mubr.bf16.mxu0 0
      %11640 = vmatmul.mubr.bf16.gmra.mxu0 %v10621
      %v11641 = vpop.f32.mrf.mxu0
      %v11642 = vadd.f32 0.0, %v11641
      %v11643 = vpop.f32.mrf.mxu0
      %v11644 = vpop.f32.mrf.mxu0
      %v11645 = vadd.f32 0.0, %v11644
      %v11646 = vpop.f32.mrf.mxu0
      %11647 = vmatprep.mubr.bf16.mxu0 0
      %11648 = vmatmul.mubr.bf16.gmra.mxu0 %v10624
      %v11649 = vpop.f32.mrf.mxu0
      %v11650 = vadd.f32 0.0, %v11649
      %v11651 = vpop.f32.mrf.mxu0
      %v11652 = vpop.f32.mrf.mxu0
      %v11653 = vadd.f32 0.0, %v11652
      %v11654 = vpop.f32.mrf.mxu0
      %11655 = vmatprep.mubr.bf16.mxu0 0
      %11656 = vmatmul.mubr.bf16.gmra.mxu0 %v10627
      %v11657 = vpop.f32.mrf.mxu0
      %v11658 = vadd.f32 0.0, %v11657
      %v11659 = vpop.f32.mrf.mxu0
      %v11660 = vpop.f32.mrf.mxu0
      %v11661 = vadd.f32 0.0, %v11660
      %v11662 = vpop.f32.mrf.mxu0
      %11663 = vmatprep.mubr.bf16.mxu0 0
      %11664 = vmatmul.mubr.bf16.gmra.mxu0 %v10630
      %v11665 = vpop.f32.mrf.mxu0
      %v11666 = vadd.f32 0.0, %v11665
      %v11667 = vpop.f32.mrf.mxu0
      %v11668 = vpop.f32.mrf.mxu0
      %v11669 = vadd.f32 0.0, %v11668
      %v11670 = vpop.f32.mrf.mxu0
      %11671 = vmatprep.mubr.bf16.mxu0 0
      %11672 = vmatmul.mubr.bf16.gmra.mxu0 %v11043
      %v11673 = vpop.f32.mrf.mxu0
      %v11674 = vadd.f32 0.0, %v11673
      %v11675 = vpop.f32.mrf.mxu0
      %v11676 = vpop.f32.mrf.mxu0
      %v11677 = vadd.f32 0.0, %v11676
      %v11678 = vpop.f32.mrf.mxu0
      %11679 = vmatprep.mubr.bf16.mxu0 0
      %11680 = vmatmul.mubr.bf16.gmra.mxu0 %v11288
      %v11681 = vpop.f32.mrf.mxu0
      %v11682 = vadd.f32 0.0, %v11681
      %v11683 = vpop.f32.mrf.mxu0
      %v11684 = vpop.f32.mrf.mxu0
      %v11685 = vadd.f32 0.0, %v11684
      %v11686 = vpop.f32.mrf.mxu0
      %11687 = vmatprep.mubr.bf16.mxu0 0
      %11688 = vmatmul.mubr.bf16.gmra.mxu0 %v11533
      %v11689 = vpop.f32.mrf.mxu0
      %v11690 = vadd.f32 0.0, %v11689
      %v11691 = vpop.f32.mrf.mxu0
      %v11692 = vpop.f32.mrf.mxu0
      %v11693 = vadd.f32 0.0, %v11692
      %v11694 = vpop.f32.mrf.mxu0
      %11695 = vdwg.mxu0
      %v11696 = vadd.f32 %v11451, %v11570
      %v11697 = vadd.f32 %v11452, %v11573
      %v11698 = vadd.f32 %v11453, %v11578
      %v11699 = vadd.f32 %v11454, %v11581
      %v11700 = vadd.f32 %v11455, %v11586
      %v11701 = vadd.f32 %v11456, %v11589
      %v11702 = vadd.f32 %v11457, %v11594
      %v11703 = vadd.f32 %v11458, %v11597
      %v11704 = vadd.f32 %v11459, %v11602
      %v11705 = vadd.f32 %v11460, %v11605
      %v11706 = vadd.f32 %v11461, %v11610
      %v11707 = vadd.f32 %v11462, %v11613
      %v11708 = vadd.f32 %v11463, %v11618
      %v11709 = vadd.f32 %v11464, %v11621
      %v11710 = vadd.f32 %v11465, %v11626
      %v11711 = vadd.f32 %v11466, %v11629
      %v11712 = vadd.f32 %v11467, %v11634
      %v11713 = vadd.f32 %v11468, %v11637
      %v11714 = vadd.f32 %v11469, %v11642
      %v11715 = vadd.f32 %v11470, %v11645
      %v11716 = vadd.f32 %v11471, %v11650
      %v11717 = vadd.f32 %v11472, %v11653
      %v11718 = vadd.f32 %v11473, %v11658
      %v11719 = vadd.f32 %v11474, %v11661
      %v11720 = vadd.f32 %v11475, %v11666
      %v11721 = vadd.f32 %v11476, %v11669
      %v11722 = vadd.f32 %v11477, %v11674
      %v11723 = vadd.f32 %v11478, %v11677
      %v11724 = vadd.f32 %v11479, %v11682
      %v11725 = vadd.f32 %v11480, %v11685
      %v11726 = vadd.f32 %v11481, %v11690
      %v11727 = vadd.f32 %v11482, %v11693
      %s11728 = scalar_lea.vmem %s1, 1584
      %v11729 = vld [vmem:[%s11728] sm:$0xf]
      %v11730 = vld [vmem:[%s11728 + $0x4] sm:$0xf]
      %v11731 = vld [vmem:[%s11728 + $0x8] sm:$0xf]
      %v11732 = vld [vmem:[%s11728 + $0xc] sm:$0xf]
      %v11733 = vld [vmem:[%s11728 + $0x10] sm:$0xf]
      %v11734 = vld [vmem:[%s11728 + $0x14] sm:$0xf]
      %v11735 = vld [vmem:[%s11728 + $0x18] sm:$0xf]
      %v11736 = vld [vmem:[%s11728 + $0x1c] sm:$0xf]
      %v11737 = vld [vmem:[%s11728 + $0x20] sm:$0xf]
      %v11738 = vld [vmem:[%s11728 + $0x24] sm:$0xf]
      %v11739 = vld [vmem:[%s11728 + $0x28] sm:$0xf]
      %v11740 = vld [vmem:[%s11728 + $0x2c] sm:$0xf]
      %v11753 = vunpack.c.l.b16 %v11729
      %v11754 = vunpack.c.l.b16 %v11730
      %v11755 = vunpack.c.l.b16 %v11731
      %v11756 = vunpack.c.l.b16 %v11732
      %v11757 = vunpack.c.l.b16 %v11733
      %v11758 = vunpack.c.l.b16 %v11734
      %v11759 = vunpack.c.l.b16 %v11735
      %v11760 = vunpack.c.l.b16 %v11736
      %v11761 = vunpack.c.l.b16 %v11737
      %v11762 = vunpack.c.l.b16 %v11738
      %v11763 = vunpack.c.l.b16 %v11739
      %v11764 = vunpack.c.l.b16 %v11740
      %v11765 = vpack.c.b16 %v11754, %v11753
      %v11766 = vpack.c.b16 %v11756, %v11755
      %v11767 = vpack.c.b16 %v11758, %v11757
      %v11768 = vpack.c.b16 %v11760, %v11759
      %v11769 = vpack.c.b16 %v11762, %v11761
      %v11770 = vpack.c.b16 %v11764, %v11763
      %v11778 = vsel %vm1006, %v10520, 0
      %11780 = vmatprep.subr.bf16.mxu0 0
      %11781 = vmatpush1.bf16.msra.mxu0 0
      %11782 = vmatprep.subr.bf16.mxu0 0
      %11783 = vmatpush1.bf16.msra.mxu0 0
      %11784 = vmatprep.subr.bf16.mxu0 0
      %11785 = vmatpush1.bf16.msra.mxu0 %v11770
      %11786 = vmatprep.subr.bf16.mxu0 0
      %11787 = vmatpush1.bf16.msra.mxu0 %v11769
      %11788 = vmatprep.subr.bf16.mxu0 0
      %11789 = vmatpush1.bf16.msra.mxu0 %v11768
      %11790 = vmatprep.subr.bf16.mxu0 0
      %11791 = vmatpush1.bf16.msra.mxu0 %v11767
      %11792 = vmatprep.subr.bf16.mxu0 0
      %11793 = vmatpush1.bf16.msra.mxu0 %v11766
      %11794 = vmatprep.subr.bf16.mxu0 0
      %11795 = vmatpush1.bf16.msra.mxu0 %v11765
      %11796 = vmatprep.subr.bf16.mxu0 0
      %11797 = vmatpush2.bf16.msra.mxu0 0
      %11798 = vmatprep.subr.bf16.mxu0 0
      %11799 = vmatpush2.bf16.msra.mxu0 0
      %11800 = vmatprep.subr.bf16.mxu0 0
      %11801 = vmatpush2.bf16.msra.mxu0 0
      %11802 = vmatprep.subr.bf16.mxu0 0
      %11803 = vmatpush2.bf16.msra.mxu0 0
      %11804 = vmatprep.subr.bf16.mxu0 0
      %11805 = vmatpush2.bf16.msra.mxu0 0
      %11806 = vmatprep.subr.bf16.mxu0 0
      %11807 = vmatpush2.bf16.msra.mxu0 0
      %11808 = vmatprep.subr.bf16.mxu0 0
      %11809 = vmatpush2.bf16.msra.mxu0 0
      %11810 = vmatprep.subr.bf16.mxu0 0
      %11811 = vmatpush2.bf16.msra.mxu0 0
      %11812 = vmatprep.mubr.bf16.mxu0 0
      %11813 = vmatmul.mubr.bf16.gmra.mxu0 %v10597
      %v11814 = vpop.f32.mrf.mxu0
      %v11815 = vadd.f32 0.0, %v11814
      %v11816 = vpop.f32.mrf.mxu0
      %v11817 = vpop.f32.mrf.mxu0
      %v11818 = vadd.f32 0.0, %v11817
      %v11819 = vpop.f32.mrf.mxu0
      %11820 = vmatprep.mubr.bf16.mxu0 0
      %11821 = vmatmul.mubr.bf16.gmra.mxu0 %v10600
      %v11822 = vpop.f32.mrf.mxu0
      %v11823 = vadd.f32 0.0, %v11822
      %v11824 = vpop.f32.mrf.mxu0
      %v11825 = vpop.f32.mrf.mxu0
      %v11826 = vadd.f32 0.0, %v11825
      %v11827 = vpop.f32.mrf.mxu0
      %11828 = vmatprep.mubr.bf16.mxu0 0
      %11829 = vmatmul.mubr.bf16.gmra.mxu0 %v10603
      %v11830 = vpop.f32.mrf.mxu0
      %v11831 = vadd.f32 0.0, %v11830
      %v11832 = vpop.f32.mrf.mxu0
      %v11833 = vpop.f32.mrf.mxu0
      %v11834 = vadd.f32 0.0, %v11833
      %v11835 = vpop.f32.mrf.mxu0
      %11836 = vmatprep.mubr.bf16.mxu0 0
      %11837 = vmatmul.mubr.bf16.gmra.mxu0 %v10606
      %v11838 = vpop.f32.mrf.mxu0
      %v11839 = vadd.f32 0.0, %v11838
      %v11840 = vpop.f32.mrf.mxu0
      %v11841 = vpop.f32.mrf.mxu0
      %v11842 = vadd.f32 0.0, %v11841
      %v11843 = vpop.f32.mrf.mxu0
      %11844 = vmatprep.mubr.bf16.mxu0 0
      %11845 = vmatmul.mubr.bf16.gmra.mxu0 %v10609
      %v11846 = vpop.f32.mrf.mxu0
      %v11847 = vadd.f32 0.0, %v11846
      %v11848 = vpop.f32.mrf.mxu0
      %v11849 = vpop.f32.mrf.mxu0
      %v11850 = vadd.f32 0.0, %v11849
      %v11851 = vpop.f32.mrf.mxu0
      %11852 = vmatprep.mubr.bf16.mxu0 0
      %11853 = vmatmul.mubr.bf16.gmra.mxu0 %v10612
      %v11854 = vpop.f32.mrf.mxu0
      %v11855 = vadd.f32 0.0, %v11854
      %v11856 = vpop.f32.mrf.mxu0
      %v11857 = vpop.f32.mrf.mxu0
      %v11858 = vadd.f32 0.0, %v11857
      %v11859 = vpop.f32.mrf.mxu0
      %11860 = vmatprep.mubr.bf16.mxu0 0
      %11861 = vmatmul.mubr.bf16.gmra.mxu0 %v10615
      %v11862 = vpop.f32.mrf.mxu0
      %v11863 = vadd.f32 0.0, %v11862
      %v11864 = vpop.f32.mrf.mxu0
      %v11865 = vpop.f32.mrf.mxu0
      %v11866 = vadd.f32 0.0, %v11865
      %v11867 = vpop.f32.mrf.mxu0
      %11868 = vmatprep.mubr.bf16.mxu0 0
      %11869 = vmatmul.mubr.bf16.gmra.mxu0 %v10618
      %v11870 = vpop.f32.mrf.mxu0
      %v11871 = vadd.f32 0.0, %v11870
      %v11872 = vpop.f32.mrf.mxu0
      %v11873 = vpop.f32.mrf.mxu0
      %v11874 = vadd.f32 0.0, %v11873
      %v11875 = vpop.f32.mrf.mxu0
      %11876 = vmatprep.mubr.bf16.mxu0 0
      %11877 = vmatmul.mubr.bf16.gmra.mxu0 %v10621
      %v11878 = vpop.f32.mrf.mxu0
      %v11879 = vadd.f32 0.0, %v11878
      %v11880 = vpop.f32.mrf.mxu0
      %v11881 = vpop.f32.mrf.mxu0
      %v11882 = vadd.f32 0.0, %v11881
      %v11883 = vpop.f32.mrf.mxu0
      %11884 = vmatprep.mubr.bf16.mxu0 0
      %11885 = vmatmul.mubr.bf16.gmra.mxu0 %v10624
      %v11886 = vpop.f32.mrf.mxu0
      %v11887 = vadd.f32 0.0, %v11886
      %v11888 = vpop.f32.mrf.mxu0
      %v11889 = vpop.f32.mrf.mxu0
      %v11890 = vadd.f32 0.0, %v11889
      %v11891 = vpop.f32.mrf.mxu0
      %11892 = vmatprep.mubr.bf16.mxu0 0
      %11893 = vmatmul.mubr.bf16.gmra.mxu0 %v10627
      %v11894 = vpop.f32.mrf.mxu0
      %v11895 = vadd.f32 0.0, %v11894
      %v11896 = vpop.f32.mrf.mxu0
      %v11897 = vpop.f32.mrf.mxu0
      %v11898 = vadd.f32 0.0, %v11897
      %v11899 = vpop.f32.mrf.mxu0
      %11900 = vmatprep.mubr.bf16.mxu0 0
      %11901 = vmatmul.mubr.bf16.gmra.mxu0 %v10630
      %v11902 = vpop.f32.mrf.mxu0
      %v11903 = vadd.f32 0.0, %v11902
      %v11904 = vpop.f32.mrf.mxu0
      %v11905 = vpop.f32.mrf.mxu0
      %v11906 = vadd.f32 0.0, %v11905
      %v11907 = vpop.f32.mrf.mxu0
      %11908 = vmatprep.mubr.bf16.mxu0 0
      %11909 = vmatmul.mubr.bf16.gmra.mxu0 %v11043
      %v11910 = vpop.f32.mrf.mxu0
      %v11911 = vadd.f32 0.0, %v11910
      %v11912 = vpop.f32.mrf.mxu0
      %v11913 = vpop.f32.mrf.mxu0
      %v11914 = vadd.f32 0.0, %v11913
      %v11915 = vpop.f32.mrf.mxu0
      %11916 = vmatprep.mubr.bf16.mxu0 0
      %11917 = vmatmul.mubr.bf16.gmra.mxu0 %v11288
      %v11918 = vpop.f32.mrf.mxu0
      %v11919 = vadd.f32 0.0, %v11918
      %v11920 = vpop.f32.mrf.mxu0
      %v11921 = vpop.f32.mrf.mxu0
      %v11922 = vadd.f32 0.0, %v11921
      %v11923 = vpop.f32.mrf.mxu0
      %11924 = vmatprep.mubr.bf16.mxu0 0
      %11925 = vmatmul.mubr.bf16.gmra.mxu0 %v11533
      %v11926 = vpop.f32.mrf.mxu0
      %v11927 = vadd.f32 0.0, %v11926
      %v11928 = vpop.f32.mrf.mxu0
      %v11929 = vpop.f32.mrf.mxu0
      %v11930 = vadd.f32 0.0, %v11929
      %v11931 = vpop.f32.mrf.mxu0
      %11932 = vmatprep.mubr.bf16.mxu0 0
      %11933 = vmatmul.mubr.bf16.gmra.mxu0 %v11778
      %v11934 = vpop.f32.mrf.mxu0
      %v11935 = vadd.f32 0.0, %v11934
      %v11936 = vpop.f32.mrf.mxu0
      %v11937 = vpop.f32.mrf.mxu0
      %v11938 = vadd.f32 0.0, %v11937
      %v11939 = vpop.f32.mrf.mxu0
      %11940 = vdwg.mxu0
      %v11941 = vadd.f32 %v11696, %v11815
      %v11942 = vadd.f32 %v11697, %v11818
      %v11943 = vadd.f32 %v11698, %v11823
      %v11944 = vadd.f32 %v11699, %v11826
      %v11945 = vadd.f32 %v11700, %v11831
      %v11946 = vadd.f32 %v11701, %v11834
      %v11947 = vadd.f32 %v11702, %v11839
      %v11948 = vadd.f32 %v11703, %v11842
      %v11949 = vadd.f32 %v11704, %v11847
      %v11950 = vadd.f32 %v11705, %v11850
      %v11951 = vadd.f32 %v11706, %v11855
      %v11952 = vadd.f32 %v11707, %v11858
      %v11953 = vadd.f32 %v11708, %v11863
      %v11954 = vadd.f32 %v11709, %v11866
      %v11955 = vadd.f32 %v11710, %v11871
      %v11956 = vadd.f32 %v11711, %v11874
      %v11957 = vadd.f32 %v11712, %v11879
      %v11958 = vadd.f32 %v11713, %v11882
      %v11959 = vadd.f32 %v11714, %v11887
      %v11960 = vadd.f32 %v11715, %v11890
      %v11961 = vadd.f32 %v11716, %v11895
      %v11962 = vadd.f32 %v11717, %v11898
      %v11963 = vadd.f32 %v11718, %v11903
      %v11964 = vadd.f32 %v11719, %v11906
      %v11965 = vadd.f32 %v11720, %v11911
      %v11966 = vadd.f32 %v11721, %v11914
      %v11967 = vadd.f32 %v11722, %v11919
      %v11968 = vadd.f32 %v11723, %v11922
      %v11969 = vadd.f32 %v11724, %v11927
      %v11970 = vadd.f32 %v11725, %v11930
      %v11971 = vadd.f32 %v11726, %v11935
      %v11972 = vadd.f32 %v11727, %v11938
      %s11973 = scalar_lea.vmem %s1, 1632
      %v11974 = vld [vmem:[%s11973] sm:$0xf]
      %v11975 = vld [vmem:[%s11973 + $0x4] sm:$0xf]
      %v11976 = vld [vmem:[%s11973 + $0x8] sm:$0xf]
      %v11977 = vld [vmem:[%s11973 + $0xc] sm:$0xf]
      %v11978 = vld [vmem:[%s11973 + $0x10] sm:$0xf]
      %v11979 = vld [vmem:[%s11973 + $0x14] sm:$0xf]
      %v11980 = vld [vmem:[%s11973 + $0x18] sm:$0xf]
      %v11981 = vld [vmem:[%s11973 + $0x1c] sm:$0xf]
      %v11982 = vld [vmem:[%s11973 + $0x20] sm:$0xf]
      %v11983 = vld [vmem:[%s11973 + $0x24] sm:$0xf]
      %v11984 = vld [vmem:[%s11973 + $0x28] sm:$0xf]
      %v11985 = vld [vmem:[%s11973 + $0x2c] sm:$0xf]
      %v11998 = vunpack.c.l.b16 %v11974
      %v11999 = vunpack.c.l.b16 %v11975
      %v12000 = vunpack.c.l.b16 %v11976
      %v12001 = vunpack.c.l.b16 %v11977
      %v12002 = vunpack.c.l.b16 %v11978
      %v12003 = vunpack.c.l.b16 %v11979
      %v12004 = vunpack.c.l.b16 %v11980
      %v12005 = vunpack.c.l.b16 %v11981
      %v12006 = vunpack.c.l.b16 %v11982
      %v12007 = vunpack.c.l.b16 %v11983
      %v12008 = vunpack.c.l.b16 %v11984
      %v12009 = vunpack.c.l.b16 %v11985
      %v12010 = vpack.c.b16 %v11999, %v11998
      %v12011 = vpack.c.b16 %v12001, %v12000
      %v12012 = vpack.c.b16 %v12003, %v12002
      %v12013 = vpack.c.b16 %v12005, %v12004
      %v12014 = vpack.c.b16 %v12007, %v12006
      %v12015 = vpack.c.b16 %v12009, %v12008
      %v12023 = vsel %vm1006, %v10521, 0
      %12025 = vmatprep.subr.bf16.mxu0 0
      %12026 = vmatpush1.bf16.msra.mxu0 0
      %12027 = vmatprep.subr.bf16.mxu0 0
      %12028 = vmatpush1.bf16.msra.mxu0 0
      %12029 = vmatprep.subr.bf16.mxu0 0
      %12030 = vmatpush1.bf16.msra.mxu0 %v12015
      %12031 = vmatprep.subr.bf16.mxu0 0
      %12032 = vmatpush1.bf16.msra.mxu0 %v12014
      %12033 = vmatprep.subr.bf16.mxu0 0
      %12034 = vmatpush1.bf16.msra.mxu0 %v12013
      %12035 = vmatprep.subr.bf16.mxu0 0
      %12036 = vmatpush1.bf16.msra.mxu0 %v12012
      %12037 = vmatprep.subr.bf16.mxu0 0
      %12038 = vmatpush1.bf16.msra.mxu0 %v12011
      %12039 = vmatprep.subr.bf16.mxu0 0
      %12040 = vmatpush1.bf16.msra.mxu0 %v12010
      %12041 = vmatprep.subr.bf16.mxu0 0
      %12042 = vmatpush2.bf16.msra.mxu0 0
      %12043 = vmatprep.subr.bf16.mxu0 0
      %12044 = vmatpush2.bf16.msra.mxu0 0
      %12045 = vmatprep.subr.bf16.mxu0 0
      %12046 = vmatpush2.bf16.msra.mxu0 0
      %12047 = vmatprep.subr.bf16.mxu0 0
      %12048 = vmatpush2.bf16.msra.mxu0 0
      %12049 = vmatprep.subr.bf16.mxu0 0
      %12050 = vmatpush2.bf16.msra.mxu0 0
      %12051 = vmatprep.subr.bf16.mxu0 0
      %12052 = vmatpush2.bf16.msra.mxu0 0
      %12053 = vmatprep.subr.bf16.mxu0 0
      %12054 = vmatpush2.bf16.msra.mxu0 0
      %12055 = vmatprep.subr.bf16.mxu0 0
      %12056 = vmatpush2.bf16.msra.mxu0 0
      %12057 = vmatprep.mubr.bf16.mxu0 0
      %12058 = vmatmul.mubr.bf16.gmra.mxu0 %v10600
      %v12059 = vpop.f32.mrf.mxu0
      %v12060 = vadd.f32 0.0, %v12059
      %v12061 = vpop.f32.mrf.mxu0
      %v12062 = vpop.f32.mrf.mxu0
      %v12063 = vadd.f32 0.0, %v12062
      %v12064 = vpop.f32.mrf.mxu0
      %12065 = vmatprep.mubr.bf16.mxu0 0
      %12066 = vmatmul.mubr.bf16.gmra.mxu0 %v10603
      %v12067 = vpop.f32.mrf.mxu0
      %v12068 = vadd.f32 0.0, %v12067
      %v12069 = vpop.f32.mrf.mxu0
      %v12070 = vpop.f32.mrf.mxu0
      %v12071 = vadd.f32 0.0, %v12070
      %v12072 = vpop.f32.mrf.mxu0
      %12073 = vmatprep.mubr.bf16.mxu0 0
      %12074 = vmatmul.mubr.bf16.gmra.mxu0 %v10606
      %v12075 = vpop.f32.mrf.mxu0
      %v12076 = vadd.f32 0.0, %v12075
      %v12077 = vpop.f32.mrf.mxu0
      %v12078 = vpop.f32.mrf.mxu0
      %v12079 = vadd.f32 0.0, %v12078
      %v12080 = vpop.f32.mrf.mxu0
      %12081 = vmatprep.mubr.bf16.mxu0 0
      %12082 = vmatmul.mubr.bf16.gmra.mxu0 %v10609
      %v12083 = vpop.f32.mrf.mxu0
      %v12084 = vadd.f32 0.0, %v12083
      %v12085 = vpop.f32.mrf.mxu0
      %v12086 = vpop.f32.mrf.mxu0
      %v12087 = vadd.f32 0.0, %v12086
      %v12088 = vpop.f32.mrf.mxu0
      %12089 = vmatprep.mubr.bf16.mxu0 0
      %12090 = vmatmul.mubr.bf16.gmra.mxu0 %v10612
      %v12091 = vpop.f32.mrf.mxu0
      %v12092 = vadd.f32 0.0, %v12091
      %v12093 = vpop.f32.mrf.mxu0
      %v12094 = vpop.f32.mrf.mxu0
      %v12095 = vadd.f32 0.0, %v12094
      %v12096 = vpop.f32.mrf.mxu0
      %12097 = vmatprep.mubr.bf16.mxu0 0
      %12098 = vmatmul.mubr.bf16.gmra.mxu0 %v10615
      %v12099 = vpop.f32.mrf.mxu0
      %v12100 = vadd.f32 0.0, %v12099
      %v12101 = vpop.f32.mrf.mxu0
      %v12102 = vpop.f32.mrf.mxu0
      %v12103 = vadd.f32 0.0, %v12102
      %v12104 = vpop.f32.mrf.mxu0
      %12105 = vmatprep.mubr.bf16.mxu0 0
      %12106 = vmatmul.mubr.bf16.gmra.mxu0 %v10618
      %v12107 = vpop.f32.mrf.mxu0
      %v12108 = vadd.f32 0.0, %v12107
      %v12109 = vpop.f32.mrf.mxu0
      %v12110 = vpop.f32.mrf.mxu0
      %v12111 = vadd.f32 0.0, %v12110
      %v12112 = vpop.f32.mrf.mxu0
      %12113 = vmatprep.mubr.bf16.mxu0 0
      %12114 = vmatmul.mubr.bf16.gmra.mxu0 %v10621
      %v12115 = vpop.f32.mrf.mxu0
      %v12116 = vadd.f32 0.0, %v12115
      %v12117 = vpop.f32.mrf.mxu0
      %v12118 = vpop.f32.mrf.mxu0
      %v12119 = vadd.f32 0.0, %v12118
      %v12120 = vpop.f32.mrf.mxu0
      %12121 = vmatprep.mubr.bf16.mxu0 0
      %12122 = vmatmul.mubr.bf16.gmra.mxu0 %v10624
      %v12123 = vpop.f32.mrf.mxu0
      %v12124 = vadd.f32 0.0, %v12123
      %v12125 = vpop.f32.mrf.mxu0
      %v12126 = vpop.f32.mrf.mxu0
      %v12127 = vadd.f32 0.0, %v12126
      %v12128 = vpop.f32.mrf.mxu0
      %12129 = vmatprep.mubr.bf16.mxu0 0
      %12130 = vmatmul.mubr.bf16.gmra.mxu0 %v10627
      %v12131 = vpop.f32.mrf.mxu0
      %v12132 = vadd.f32 0.0, %v12131
      %v12133 = vpop.f32.mrf.mxu0
      %v12134 = vpop.f32.mrf.mxu0
      %v12135 = vadd.f32 0.0, %v12134
      %v12136 = vpop.f32.mrf.mxu0
      %12137 = vmatprep.mubr.bf16.mxu0 0
      %12138 = vmatmul.mubr.bf16.gmra.mxu0 %v10630
      %v12139 = vpop.f32.mrf.mxu0
      %v12140 = vadd.f32 0.0, %v12139
      %v12141 = vpop.f32.mrf.mxu0
      %v12142 = vpop.f32.mrf.mxu0
      %v12143 = vadd.f32 0.0, %v12142
      %v12144 = vpop.f32.mrf.mxu0
      %12145 = vmatprep.mubr.bf16.mxu0 0
      %12146 = vmatmul.mubr.bf16.gmra.mxu0 %v11043
      %v12147 = vpop.f32.mrf.mxu0
      %v12148 = vadd.f32 0.0, %v12147
      %v12149 = vpop.f32.mrf.mxu0
      %v12150 = vpop.f32.mrf.mxu0
      %v12151 = vadd.f32 0.0, %v12150
      %v12152 = vpop.f32.mrf.mxu0
      %12153 = vmatprep.mubr.bf16.mxu0 0
      %12154 = vmatmul.mubr.bf16.gmra.mxu0 %v11288
      %v12155 = vpop.f32.mrf.mxu0
      %v12156 = vadd.f32 0.0, %v12155
      %v12157 = vpop.f32.mrf.mxu0
      %v12158 = vpop.f32.mrf.mxu0
      %v12159 = vadd.f32 0.0, %v12158
      %v12160 = vpop.f32.mrf.mxu0
      %12161 = vmatprep.mubr.bf16.mxu0 0
      %12162 = vmatmul.mubr.bf16.gmra.mxu0 %v11533
      %v12163 = vpop.f32.mrf.mxu0
      %v12164 = vadd.f32 0.0, %v12163
      %v12165 = vpop.f32.mrf.mxu0
      %v12166 = vpop.f32.mrf.mxu0
      %v12167 = vadd.f32 0.0, %v12166
      %v12168 = vpop.f32.mrf.mxu0
      %12169 = vmatprep.mubr.bf16.mxu0 0
      %12170 = vmatmul.mubr.bf16.gmra.mxu0 %v11778
      %v12171 = vpop.f32.mrf.mxu0
      %v12172 = vadd.f32 0.0, %v12171
      %v12173 = vpop.f32.mrf.mxu0
      %v12174 = vpop.f32.mrf.mxu0
      %v12175 = vadd.f32 0.0, %v12174
      %v12176 = vpop.f32.mrf.mxu0
      %12177 = vmatprep.mubr.bf16.mxu0 0
      %12178 = vmatmul.mubr.bf16.gmra.mxu0 %v12023
      %v12179 = vpop.f32.mrf.mxu0
      %v12180 = vadd.f32 0.0, %v12179
      %v12181 = vpop.f32.mrf.mxu0
      %v12182 = vpop.f32.mrf.mxu0
      %v12183 = vadd.f32 0.0, %v12182
      %v12184 = vpop.f32.mrf.mxu0
      %12185 = vdwg.mxu0
      %v12186 = vadd.f32 %v11941, %v12060
      %v12187 = vadd.f32 %v11942, %v12063
      %v12188 = vadd.f32 %v11943, %v12068
      %v12189 = vadd.f32 %v11944, %v12071
      %v12190 = vadd.f32 %v11945, %v12076
      %v12191 = vadd.f32 %v11946, %v12079
      %v12192 = vadd.f32 %v11947, %v12084
      %v12193 = vadd.f32 %v11948, %v12087
      %v12194 = vadd.f32 %v11949, %v12092
      %v12195 = vadd.f32 %v11950, %v12095
      %v12196 = vadd.f32 %v11951, %v12100
      %v12197 = vadd.f32 %v11952, %v12103
      %v12198 = vadd.f32 %v11953, %v12108
      %v12199 = vadd.f32 %v11954, %v12111
      %v12200 = vadd.f32 %v11955, %v12116
      %v12201 = vadd.f32 %v11956, %v12119
      %v12202 = vadd.f32 %v11957, %v12124
      %v12203 = vadd.f32 %v11958, %v12127
      %v12204 = vadd.f32 %v11959, %v12132
      %v12205 = vadd.f32 %v11960, %v12135
      %v12206 = vadd.f32 %v11961, %v12140
      %v12207 = vadd.f32 %v11962, %v12143
      %v12208 = vadd.f32 %v11963, %v12148
      %v12209 = vadd.f32 %v11964, %v12151
      %v12210 = vadd.f32 %v11965, %v12156
      %v12211 = vadd.f32 %v11966, %v12159
      %v12212 = vadd.f32 %v11967, %v12164
      %v12213 = vadd.f32 %v11968, %v12167
      %v12214 = vadd.f32 %v11969, %v12172
      %v12215 = vadd.f32 %v11970, %v12175
      %v12216 = vadd.f32 %v11971, %v12180
      %v12217 = vadd.f32 %v11972, %v12183
      %s12218 = scalar_lea.vmem %s2, 4
      %v12219 = vld [vmem:[%s12218] sm:$0x1]
      %v12221 = vlaneseq
      %v12222 = vshrl.u32 %v12221, 7
      %v12223 = vsub.s32 0, %v12222
      %v12224 = vrot.slane %v12219, %v12223
      %v12226 = vadd.f32 %v12186, %v12224
      %v12227 = vadd.f32 %v12187, %v12224
      %v12228 = vadd.f32 %v12188, %v12224
      %v12229 = vadd.f32 %v12189, %v12224
      %v12230 = vadd.f32 %v12190, %v12224
      %v12231 = vadd.f32 %v12191, %v12224
      %v12232 = vadd.f32 %v12192, %v12224
      %v12233 = vadd.f32 %v12193, %v12224
      %v12234 = vadd.f32 %v12194, %v12224
      %v12235 = vadd.f32 %v12195, %v12224
      %v12236 = vadd.f32 %v12196, %v12224
      %v12237 = vadd.f32 %v12197, %v12224
      %v12238 = vadd.f32 %v12198, %v12224
      %v12239 = vadd.f32 %v12199, %v12224
      %v12240 = vadd.f32 %v12200, %v12224
      %v12241 = vadd.f32 %v12201, %v12224
      %v12242 = vadd.f32 %v12202, %v12224
      %v12243 = vadd.f32 %v12203, %v12224
      %v12244 = vadd.f32 %v12204, %v12224
      %v12245 = vadd.f32 %v12205, %v12224
      %v12246 = vadd.f32 %v12206, %v12224
      %v12247 = vadd.f32 %v12207, %v12224
      %v12248 = vadd.f32 %v12208, %v12224
      %v12249 = vadd.f32 %v12209, %v12224
      %v12250 = vadd.f32 %v12210, %v12224
      %v12251 = vadd.f32 %v12211, %v12224
      %v12252 = vadd.f32 %v12212, %v12224
      %v12253 = vadd.f32 %v12213, %v12224
      %v12254 = vadd.f32 %v12214, %v12224
      %v12255 = vadd.f32 %v12215, %v12224
      %v12256 = vadd.f32 %v12216, %v12224
      %v12257 = vadd.f32 %v12217, %v12224
      %vm12258 = vcmask 31744
      %12259 = vst.msk [vmem:[%s170] sm:$0xff] %vm12258, %v12226
      %12260 = vst.msk [vmem:[%s170 + $0x8] sm:$0xff] %vm12258, %v12227
      %12261 = vst.msk [vmem:[%s170 + $0x10] sm:$0xff] %vm12258, %v12228
      %12262 = vst.msk [vmem:[%s170 + $0x18] sm:$0xff] %vm12258, %v12229
      %12263 = vst.msk [vmem:[%s170 + $0x20] sm:$0xff] %vm12258, %v12230
      %12264 = vst.msk [vmem:[%s170 + $0x28] sm:$0xff] %vm12258, %v12231
      %12265 = vst.msk [vmem:[%s170 + $0x30] sm:$0xff] %vm12258, %v12232
      %12266 = vst.msk [vmem:[%s170 + $0x38] sm:$0xff] %vm12258, %v12233
      %12267 = vst.msk [vmem:[%s170 + $0x40] sm:$0xff] %vm12258, %v12234
      %12268 = vst.msk [vmem:[%s170 + $0x48] sm:$0xff] %vm12258, %v12235
      %12269 = vst.msk [vmem:[%s170 + $0x50] sm:$0xff] %vm12258, %v12236
      %12270 = vst.msk [vmem:[%s170 + $0x58] sm:$0xff] %vm12258, %v12237
      %12271 = vst.msk [vmem:[%s170 + $0x60] sm:$0xff] %vm12258, %v12238
      %12272 = vst.msk [vmem:[%s170 + $0x68] sm:$0xff] %vm12258, %v12239
      %12273 = vst.msk [vmem:[%s170 + $0x70] sm:$0xff] %vm12258, %v12240
      %12274 = vst.msk [vmem:[%s170 + $0x78] sm:$0xff] %vm12258, %v12241
      %12275 = vst.msk [vmem:[%s170 + $0x80] sm:$0xff] %vm12258, %v12242
      %12276 = vst.msk [vmem:[%s170 + $0x88] sm:$0xff] %vm12258, %v12243
      %12277 = vst.msk [vmem:[%s170 + $0x90] sm:$0xff] %vm12258, %v12244
      %12278 = vst.msk [vmem:[%s170 + $0x98] sm:$0xff] %vm12258, %v12245
      %12279 = vst.msk [vmem:[%s170 + $0xa0] sm:$0xff] %vm12258, %v12246
      %12280 = vst.msk [vmem:[%s170 + $0xa8] sm:$0xff] %vm12258, %v12247
      %12281 = vst.msk [vmem:[%s170 + $0xb0] sm:$0xff] %vm12258, %v12248
      %12282 = vst.msk [vmem:[%s170 + $0xb8] sm:$0xff] %vm12258, %v12249
      %12283 = vst.msk [vmem:[%s170 + $0xc0] sm:$0xff] %vm12258, %v12250
      %12284 = vst.msk [vmem:[%s170 + $0xc8] sm:$0xff] %vm12258, %v12251
      %12285 = vst.msk [vmem:[%s170 + $0xd0] sm:$0xff] %vm12258, %v12252
      %12286 = vst.msk [vmem:[%s170 + $0xd8] sm:$0xff] %vm12258, %v12253
      %12287 = vst.msk [vmem:[%s170 + $0xe0] sm:$0xff] %vm12258, %v12254
      %12288 = vst.msk [vmem:[%s170 + $0xe8] sm:$0xff] %vm12258, %v12255
      %12289 = vst.msk [vmem:[%s170 + $0xf0] sm:$0xff] %vm12258, %v12256
      %12290 = vst.msk [vmem:[%s170 + $0xf8] sm:$0xff] %vm12258, %v12257
      %p12291 = scmp.lt.s32.totalorder %s14, 1
      %s12292 = scalar_select %p12291, %s14, 1
      %s12293 = smul.addr %s12292, 32
      %s12294 = smul.addr %s12293, 8
      %s12295 = scalar_lea.vmem %s3, %s12294
      // Predicated region
      $region33: #{dna_sequencer_forward.1} parent=31 // pred_check
        %p12296 = pneg %p100
      $region34: #{dna_sequencer_forward.1} parent=31 // pred_check_branch
        %12298 = sbr.rel (%p12296) target = $region36
      $region35: #{dna_sequencer_forward.1} parent=31 // pred_region
        _
      $region36: #{dna_sequencer_forward.1} parent=31 // pred_fallthru
        _
    $region32: #{dna_sequencer_forward.1} parent=5 // pred_fallthru
      _
    %p12299 = scmp.le.s32.totalorder 2, %s9
    // Predicated region
    $region37: #{dna_sequencer_forward.1} parent=5 // pred_check
      %p12300 = pneg %p12299
    $region38: #{dna_sequencer_forward.1} parent=5 // pred_check_branch
      %12302 = sbr.rel (%p12300) target = $region40
    $region39: #{dna_sequencer_forward.1} parent=5 // pred_region
      %s12303 = ssub.s32 %s9, 2
      // Predicated region
      $region41: #{dna_sequencer_forward.1} parent=39 // pred_check
        %p12304 = pneg %p106
      $region42: #{dna_sequencer_forward.1} parent=39 // pred_check_branch
        %12306 = sbr.rel (%p12304) target = $region44
      $region43: #{dna_sequencer_forward.1} parent=39 // pred_region
        %p12307 = scmp.lt.s32.totalorder %s15, 1
        %s12308 = scalar_select %p12307, %s15, 1
        %s12309 = smul.addr %s12308, 32
        %s12310 = smul.addr %s12309, 8
        %s12311 = scalar_lea.vmem %s3, %s12310
      $region44: #{dna_sequencer_forward.1} parent=39 // pred_fallthru
        _
    $region40: #{dna_sequencer_forward.1} parent=5 // pred_fallthru
      _
  $region6: #{dna_sequencer_forward.1} parent=0 // loop_footer
    %s13 = sadd.s32 1, %s9
  $region7: #{dna_sequencer_forward.1} parent=0 // loop_footer_branch
    %8 = sbr.rel target = $region3
  $region8: #{dna_sequencer_forward.1} parent=0 // loop_exit
    _

</llo_original>
